<compile_context>
chip_gen: v7x
topology: tpu7x:2x2x1
jax: 0.10.0
libtpu: 0.0.40
codegen_flags: <defaults>
</compile_context>

<pallas_src>
import functools

import jax
import jax.numpy as jnp
from jax.experimental import pallas as pl
from jax.experimental.pallas import tpu as pltpu


_FC1_TK = 16 * 1024          # fc1 reduction tile (bf16 block = 4 MB, 2x buffered)
_CONV_CHUNK_BYTES = 8 << 20  # live-intermediate budget per in-kernel conv chunk


# ---------------------------------------------------------------------------
# sizing helpers
# ---------------------------------------------------------------------------
def _fc1_padded_k(k):
    """Rows of w_fc1 after zero-padding so the fc1 K-grid tiles evenly."""
    if k <= _FC1_TK:
        return k
    return ((k + _FC1_TK - 1) // _FC1_TK) * _FC1_TK


def _pick_chunk_p(hp, w_eff, cin, cout, budget=_CONV_CHUNK_BYTES):
    """Pooled rows per in-kernel chunk, sized so im2col taps/patch + f32
    accumulator stay within `budget` bytes (keeps v7x's 64 MiB VMEM safe)."""
    pad128 = lambda c: ((c + 127) // 128) * 128
    bytes_per_conv_row = w_eff * (
        2 * 9 * pad128(cin)      # 9 bf16 taps live at the concatenate
        + 2 * pad128(9 * cin)    # bf16 im2col patch
        + 4 * cout               # f32 matmul accumulator
    )
    rows = max(2, budget // max(1, bytes_per_conv_row))
    return int(max(1, min(hp, rows // 2)))


# ---------------------------------------------------------------------------
# Fused conv3x3 (pad=1) + bias + ReLU + maxpool2x2 (floor), one image per step
# ---------------------------------------------------------------------------
def _conv_pool_kernel(x_ref, w_ref, b_ref, o_ref, *, hin, win, cin, cout, chunk_p):
    """x_ref: (hin+2, (win+2)*cin) bf16 padded, lane-dense rows
       w_ref: (9*cin, cout) bf16, (kh,kw,cin)-major K
       b_ref: (1, cout) f32
       o_ref: (hp+2, (wp+2)*cout) bf16 -- written already padded for next layer."""
    hp, wp = hin // 2, win // 2
    h_eff, w_eff = 2 * hp, 2 * wp             # floor pooling (torch MaxPool2d)
    wpad_in = win + 2

    # zero the 1-pixel output border once (next layer reads it as the halo)
    zero_row = jnp.zeros((1, (wp + 2) * cout), jnp.bfloat16)
    o_ref[0:1, :] = zero_row
    o_ref[hp + 1:hp + 2, :] = zero_row
    zero_col = jnp.zeros((hp + 2, cout), jnp.bfloat16)
    o_ref[:, 0:cout] = zero_col
    o_ref[:, (wp + 1) * cout:] = zero_col

    p0 = 0
    while p0 < hp:                            # static python loop -> unrolled
        cp = min(chunk_p, hp - p0)            # pooled rows this chunk
        rows = 2 * cp                         # conv rows this chunk
        xs = x_ref[2 * p0: 2 * p0 + rows + 2, :]
        xs = xs.reshape(rows + 2, wpad_in, cin)
        # bounded im2col: 9 shifted taps -> one wide-K (9*cin) MXU matmul
        taps = [xs[kh:kh + rows, kw:kw + w_eff, :]
                for kh in range(3) for kw in range(3)]
        patch = jnp.concatenate(taps, axis=-1)            # (rows, w_eff, 9*cin)
        acc = jnp.dot(patch.reshape(rows * w_eff, 9 * cin), w_ref[...],
                      preferred_element_type=jnp.float32)  # (rows*w_eff, cout)
        y = jnp.maximum(acc + b_ref[...], 0.0).astype(jnp.bfloat16)  # bf16 epilogue
        y = y.reshape(cp, 2, w_eff, cout)
        y = jnp.maximum(y[:, 0], y[:, 1])                  # pool rows
        y = y.reshape(cp, wp, 2, cout)
        y = jnp.maximum(y[:, :, 0], y[:, :, 1])            # pool cols -> (cp, wp, cout)
        o_ref[1 + p0: 1 + p0 + cp, cout:(wp + 1) * cout] = y.reshape(cp, wp * cout)
        p0 += cp


def conv3x3_relu_pool(x_pad, w, b):
    """x_pad: (N, Hin+2, (Win+2)*Cin) padded bf16; w: (3,3,Cin,Cout); b: (Cout,).
    Returns the pooled activation, already padded: (N, HP+2, (WP+2)*Cout) bf16."""
    n, hpad, wc = x_pad.shape
    cin, cout = w.shape[2], w.shape[3]
    hin, win = hpad - 2, wc // cin - 2
    hp, wp = hin // 2, win // 2
    chunk_p = _pick_chunk_p(hp, 2 * wp, cin, cout)

    kernel = functools.partial(_conv_pool_kernel, hin=hin, win=win,
                               cin=cin, cout=cout, chunk_p=chunk_p)
    w2d = w.reshape(9 * cin, cout).astype(jnp.bfloat16)
    b2d = b.reshape(1, cout).astype(jnp.float32)

    grid_spec = pltpu.PrefetchScalarGridSpec(
        num_scalar_prefetch=0,
        grid=(n,),
        in_specs=[
            pl.BlockSpec((None, hpad, wc), lambda i: (i, 0, 0)),
            pl.BlockSpec((9 * cin, cout), lambda i: (0, 0)),
            pl.BlockSpec((1, cout), lambda i: (0, 0)),
        ],
        out_specs=pl.BlockSpec((None, hp + 2, (wp + 2) * cout),
                               lambda i: (i, 0, 0)),
    )
    return pl.pallas_call(
        kernel,
        out_shape=jax.ShapeDtypeStruct((n, hp + 2, (wp + 2) * cout), jnp.bfloat16),
        grid_spec=grid_spec,
        compiler_params=pltpu.CompilerParams(
            dimension_semantics=("parallel",),      # batch -> v7x 2-TC sharding
            vmem_limit_bytes=48 * 1024 * 1024),
    )(x_pad, w2d, b2d)


# ---------------------------------------------------------------------------
# FC head: fc1 (K-tiled, bf16) + ReLU, fc2 + sigmoid, fused
# ---------------------------------------------------------------------------
def _mlp_head_kernel(x_ref, w1_ref, b1_ref, w2_ref, b2_ref, o_ref, acc_ref):
    k = pl.program_id(0)

    @pl.when(k == 0)
    def _():
        acc_ref[...] = jnp.zeros_like(acc_ref)

    acc_ref[...] += jnp.dot(x_ref[...], w1_ref[...],
                            preferred_element_type=jnp.float32)

    @pl.when(k == pl.num_programs(0) - 1)
    def _():
        h1 = jnp.maximum(acc_ref[...] + b1_ref[...], 0.0)          # fc1 bias+ReLU
        z = jnp.dot(h1, w2_ref[...],
                    preferred_element_type=jnp.float32) + b2_ref[...]
        o_ref[...] = jax.nn.sigmoid(z)


def mlp_head(x_flat, w1, b1, w2, b2):
    b, kp = x_flat.shape
    assert w1.shape[0] == kp, "x must be padded to w_fc1's (padded) K"
    hdim = w1.shape[1]
    tk = kp if kp <= _FC1_TK else _FC1_TK
    nk = kp // tk

    grid_spec = pltpu.PrefetchScalarGridSpec(
        num_scalar_prefetch=0,
        grid=(nk,),
        in_specs=[
            pl.BlockSpec((b, tk), lambda k: (0, k)),
            pl.BlockSpec((tk, hdim), lambda k: (k, 0)),
            pl.BlockSpec((1, hdim), lambda k: (0, 0)),
            pl.BlockSpec((hdim, 1), lambda k: (0, 0)),
            pl.BlockSpec((1, 1), lambda k: (0, 0)),
        ],
        out_specs=pl.BlockSpec((b, 1), lambda k: (0, 0)),
        scratch_shapes=[pltpu.VMEM((b, hdim), jnp.float32)],
    )
    return pl.pallas_call(
        _mlp_head_kernel,
        out_shape=jax.ShapeDtypeStruct((b, 1), jnp.float32),
        grid_spec=grid_spec,
        compiler_params=pltpu.CompilerParams(
            dimension_semantics=("arbitrary",),
            vmem_limit_bytes=48 * 1024 * 1024),
    )(x_flat.astype(jnp.bfloat16), w1.astype(jnp.bfloat16),
      b1.reshape(1, hdim).astype(jnp.float32),
      w2.astype(jnp.float32), b2.reshape(1, 1).astype(jnp.float32))


# ---------------------------------------------------------------------------
# Parameters + forward
# ---------------------------------------------------------------------------
def init_params(key, spatial):
    ks = jax.random.split(key, 10)

    def norm(k, shape, scale):
        return scale * jax.random.normal(k, shape, jnp.float32)

    s = spatial // 2 // 2 // 2                 # three floor pools
    k_fc = 128 * s * s                         # torch fc_input_size (C*H*W)
    kp = _fc1_padded_k(k_fc)
    # w_fc1 rows are in NHWC (h, w, c) flatten order (a fixed permutation of
    # torch's NCHW flatten) and zero-padded once so the fc1 K grid tiles evenly.
    w_fc1 = norm(ks[6], (k_fc, 128), 0.02)
    if kp > k_fc:
        w_fc1 = jnp.pad(w_fc1, ((0, kp - k_fc), (0, 0)))
    return {
        "w_conv1": norm(ks[0], (3, 3, 3, 32), 0.10),
        "b_conv1": norm(ks[1], (32,), 0.10),
        "w_conv2": norm(ks[2], (3, 3, 32, 64), 0.05),
        "b_conv2": norm(ks[3], (64,), 0.05),
        "w_conv3": norm(ks[4], (3, 3, 64, 128), 0.05),
        "b_conv3": norm(ks[5], (128,), 0.05),
        "w_fc1": w_fc1,
        "b_fc1": norm(ks[7], (128,), 0.02),
        "w_fc2": norm(ks[8], (128, 1), 0.05),
        "b_fc2": norm(ks[9], (1,), 0.05),
    }


def cnn_forward(x_nchw, p):
    n, c, h, w = x_nchw.shape
    # only the tiny 3-channel network input is padded on the host; every later
    # layer reads/writes the padded lane-dense layout directly.
    x = jnp.transpose(x_nchw, (0, 2, 3, 1)).astype(jnp.bfloat16)
    x = jnp.pad(x, ((0, 0), (1, 1), (1, 1), (0, 0))).reshape(n, h + 2, (w + 2) * c)

    x = conv3x3_relu_pool(x, p["w_conv1"], p["b_conv1"])
    x = conv3x3_relu_pool(x, p["w_conv2"], p["b_conv2"])
    x = conv3x3_relu_pool(x, p["w_conv3"], p["b_conv3"])

    c3 = p["w_conv3"].shape[-1]
    hp3 = x.shape[1] - 2
    wp3 = x.shape[2] // c3 - 2
    # strip the zero border; NHWC (h, w, c) flatten matches w_fc1's row order
    x = x[:, 1:1 + hp3, c3:(wp3 + 1) * c3].reshape(n, hp3 * wp3 * c3)
    kp = p["w_fc1"].shape[0]
    if kp > x.shape[1]:
        x = jnp.pad(x, ((0, 0), (0, kp - x.shape[1])))
    return mlp_head(x, p["w_fc1"], p["b_fc1"], p["w_fc2"], p["b_fc2"])


# ---------------------------------------------------------------------------
# Pure-JAX reference (f32) for correctness
# ---------------------------------------------------------------------------
def reference_forward(x_nchw, p):
    x = jnp.transpose(x_nchw, (0, 2, 3, 1))

    def block(x, w, b):
        y = jax.lax.conv_general_dilated(
            x, w, window_strides=(1, 1), padding=((1, 1), (1, 1)),
            dimension_numbers=("NHWC", "HWIO", "NHWC"))
        y = jnp.maximum(y + b, 0.0)
        nb, hh, ww, c = y.shape
        y = y[:, :2 * (hh // 2), :2 * (ww // 2), :]
        return y.reshape(nb, hh // 2, 2, ww // 2, 2, c).max(axis=(2, 4))

    x = block(x, p["w_conv1"], p["b_conv1"])
    x = block(x, p["w_conv2"], p["b_conv2"])
    x = block(x, p["w_conv3"], p["b_conv3"])
    x = x.reshape(x.shape[0], -1)              # NHWC flatten (matches w_fc1 rows)
    k = x.shape[1]
    h = jnp.maximum(x @ p["w_fc1"][:k] + p["b_fc1"], 0.0)
    return jax.nn.sigmoid(h @ p["w_fc2"] + p["b_fc2"])


if __name__ == "__main__":
    SPATIAL = 16                      # small stand-in for the 300x300 spec size
    key = jax.random.PRNGKey(0)
    kx, kp = jax.random.split(key)
    x = jax.random.normal(kx, (2, 3, SPATIAL, SPATIAL), jnp.float32)
    params = init_params(kp, SPATIAL)

    out = jax.jit(cnn_forward)(x, params)
    out = jax.block_until_ready(out)

    assert out.shape == (2, 1) and out.dtype == jnp.float32
    assert bool(jnp.all((out >= 0.0) & (out <= 1.0)))

    ref = reference_forward(x, params)
    err = float(jnp.max(jnp.abs(out - ref)))
    assert err < 5e-2, f"mismatch vs reference: max abs err {err}"

    print("KERNEL_OK")
</pallas_src>

<mosaic_0001>
module attributes {stable_mosaic.version = 11 : i64} {
  func.func @_conv_pool_kernel(%arg0: i32, %arg1: memref<1x10x320xbf16, #tpu.memory_space<vmem>>, %arg2: memref<288x64xbf16, #tpu.memory_space<vmem>>, %arg3: memref<1x64xf32, #tpu.memory_space<vmem>>, %arg4: memref<1x6x384xbf16, #tpu.memory_space<vmem>>) attributes {dimension_semantics = [#tpu.dimension_semantics<parallel>], iteration_bounds = array<i64: 2>, scalar_prefetch = 0 : i64, scratch_operands = 0 : i64, tpu.core_type = #tpu.core_type<tc>, window_params = [{transform_indices = @transform_0, window_bounds = array<i64: 1, 10, 320>}, {pipeline_mode = #tpu.pipeline_mode<synchronous>, transform_indices = @transform_1, window_bounds = array<i64: 288, 64>}, {pipeline_mode = #tpu.pipeline_mode<synchronous>, transform_indices = @transform_2, window_bounds = array<i64: 1, 64>}, {transform_indices = @transform_3, window_bounds = array<i64: 1, 6, 384>}]} {
    %cst = arith.constant 0.000000e+00 : bf16
    %0 = vector.broadcast %cst : bf16 to vector<1x384xbf16>
    %c0 = arith.constant 0 : index
    %c0_0 = arith.constant 0 : index
    %c0_1 = arith.constant 0 : index
    %1 = vector.load %arg4[%c0, %c0_0, %c0_1] : memref<1x6x384xbf16, #tpu.memory_space<vmem>>, vector<1x1x384xbf16>
    %2 = vector.shape_cast %1 : vector<1x1x384xbf16> to vector<1x384xbf16>
    %3 = vector.shape_cast %0 : vector<1x384xbf16> to vector<1x1x384xbf16>
    tpu.vector_store %arg4[%c0, %c0_0, %c0_1], %3 {strides = array<i32>} : memref<1x6x384xbf16, #tpu.memory_space<vmem>>, vector<1x1x384xbf16>,
    %c0_2 = arith.constant 0 : index
    %c5 = arith.constant 5 : index
    %c0_3 = arith.constant 0 : index
    %4 = vector.load %arg4[%c0_2, %c5, %c0_3] : memref<1x6x384xbf16, #tpu.memory_space<vmem>>, vector<1x1x384xbf16>
    %5 = vector.shape_cast %4 : vector<1x1x384xbf16> to vector<1x384xbf16>
    %6 = vector.shape_cast %0 : vector<1x384xbf16> to vector<1x1x384xbf16>
    tpu.vector_store %arg4[%c0_2, %c5, %c0_3], %6 {strides = array<i32>} : memref<1x6x384xbf16, #tpu.memory_space<vmem>>, vector<1x1x384xbf16>,
    %cst_4 = arith.constant 0.000000e+00 : bf16
    %7 = vector.broadcast %cst_4 : bf16 to vector<6x64xbf16>
    %c0_5 = arith.constant 0 : index
    %c0_6 = arith.constant 0 : index
    %c0_7 = arith.constant 0 : index
    %8 = vector.load %arg4[%c0_5, %c0_6, %c0_7] : memref<1x6x384xbf16, #tpu.memory_space<vmem>>, vector<1x6x64xbf16>
    %9 = vector.shape_cast %8 : vector<1x6x64xbf16> to vector<6x64xbf16>
    %10 = vector.shape_cast %7 : vector<6x64xbf16> to vector<1x6x64xbf16>
    tpu.vector_store %arg4[%c0_5, %c0_6, %c0_7], %10 {strides = array<i32>} : memref<1x6x384xbf16, #tpu.memory_space<vmem>>, vector<1x6x64xbf16>,
    %c0_8 = arith.constant 0 : index
    %c0_9 = arith.constant 0 : index
    %c320 = arith.constant 320 : index
    %11 = vector.load %arg4[%c0_8, %c0_9, %c320] : memref<1x6x384xbf16, #tpu.memory_space<vmem>>, vector<1x6x64xbf16>
    %12 = vector.shape_cast %11 : vector<1x6x64xbf16> to vector<6x64xbf16>
    %13 = vector.shape_cast %7 : vector<6x64xbf16> to vector<1x6x64xbf16>
    tpu.vector_store %arg4[%c0_8, %c0_9, %c320], %13 {strides = array<i32>} : memref<1x6x384xbf16, #tpu.memory_space<vmem>>, vector<1x6x64xbf16>,
    %c0_10 = arith.constant 0 : index
    %c0_11 = arith.constant 0 : index
    %c0_12 = arith.constant 0 : index
    %14 = vector.load %arg1[%c0_10, %c0_11, %c0_12] : memref<1x10x320xbf16, #tpu.memory_space<vmem>>, vector<1x10x320xbf16>
    %15 = vector.shape_cast %14 : vector<1x10x320xbf16> to vector<10x320xbf16>
    %16 = vector.shape_cast %15 : vector<10x320xbf16> to vector<10x10x32xbf16>
    %17 = vector.extract_strided_slice %16 {offsets = [0, 0, 0], sizes = [8, 8, 32], strides = [1, 1, 1]} : vector<10x10x32xbf16> to vector<8x8x32xbf16>
    %18 = vector.extract_strided_slice %16 {offsets = [0, 1, 0], sizes = [8, 8, 32], strides = [1, 1, 1]} : vector<10x10x32xbf16> to vector<8x8x32xbf16>
    %19 = vector.extract_strided_slice %16 {offsets = [0, 2, 0], sizes = [8, 8, 32], strides = [1, 1, 1]} : vector<10x10x32xbf16> to vector<8x8x32xbf16>
    %20 = vector.extract_strided_slice %16 {offsets = [1, 0, 0], sizes = [8, 8, 32], strides = [1, 1, 1]} : vector<10x10x32xbf16> to vector<8x8x32xbf16>
    %21 = vector.extract_strided_slice %16 {offsets = [1, 1, 0], sizes = [8, 8, 32], strides = [1, 1, 1]} : vector<10x10x32xbf16> to vector<8x8x32xbf16>
    %22 = vector.extract_strided_slice %16 {offsets = [1, 2, 0], sizes = [8, 8, 32], strides = [1, 1, 1]} : vector<10x10x32xbf16> to vector<8x8x32xbf16>
    %23 = vector.extract_strided_slice %16 {offsets = [2, 0, 0], sizes = [8, 8, 32], strides = [1, 1, 1]} : vector<10x10x32xbf16> to vector<8x8x32xbf16>
    %24 = vector.extract_strided_slice %16 {offsets = [2, 1, 0], sizes = [8, 8, 32], strides = [1, 1, 1]} : vector<10x10x32xbf16> to vector<8x8x32xbf16>
    %25 = vector.extract_strided_slice %16 {offsets = [2, 2, 0], sizes = [8, 8, 32], strides = [1, 1, 1]} : vector<10x10x32xbf16> to vector<8x8x32xbf16>
    %26 = tpu.concatenate %17, %18, %19, %20, %21, %22, %23, %24, %25 in 2 : vector<8x8x32xbf16>, vector<8x8x32xbf16>, vector<8x8x32xbf16>, vector<8x8x32xbf16>, vector<8x8x32xbf16>, vector<8x8x32xbf16>, vector<8x8x32xbf16>, vector<8x8x32xbf16>, vector<8x8x32xbf16> -> vector<8x8x288xbf16>
    %27 = vector.shape_cast %26 : vector<8x8x288xbf16> to vector<64x288xbf16>
    %c0_13 = arith.constant 0 : index
    %c0_14 = arith.constant 0 : index
    %28 = vector.load %arg2[%c0_13, %c0_14] : memref<288x64xbf16, #tpu.memory_space<vmem>>, vector<288x64xbf16>
    %cst_15 = arith.constant dense<0.000000e+00> : vector<64x64xf32>
    %29 = tpu.matmul %27, %28, %cst_15 {dimension_numbers = #tpu.dot_dimension_numbers<[1], [0], [0], [1], [0, 0, 1, 1], [], []>} : vector<64x288xbf16>, vector<288x64xbf16>, vector<64x64xf32> -> vector<64x64xf32>
    %c0_16 = arith.constant 0 : index
    %c0_17 = arith.constant 0 : index
    %30 = vector.load %arg3[%c0_16, %c0_17] : memref<1x64xf32, #tpu.memory_space<vmem>>, vector<1x64xf32>
    %31 = vector.broadcast %30 : vector<1x64xf32> to vector<64x64xf32>
    %32 = arith.addf %29, %31 : vector<64x64xf32>
    %cst_18 = arith.constant 0.000000e+00 : f32
    %33 = vector.broadcast %cst_18 : f32 to vector<64x64xf32>
    %34 = arith.maximumf %32, %33 : vector<64x64xf32>
    %35 = arith.truncf %34 : vector<64x64xf32> to vector<64x64xbf16>
    %36 = vector.shape_cast %35 : vector<64x64xbf16> to vector<4x2x8x64xbf16>
    %37 = vector.extract_strided_slice %36 {offsets = [0, 0, 0, 0], sizes = [4, 1, 8, 64], strides = [1, 1, 1, 1]} : vector<4x2x8x64xbf16> to vector<4x1x8x64xbf16>
    %38 = vector.shape_cast %37 : vector<4x1x8x64xbf16> to vector<4x8x64xbf16>
    %39 = vector.extract_strided_slice %36 {offsets = [0, 1, 0, 0], sizes = [4, 1, 8, 64], strides = [1, 1, 1, 1]} : vector<4x2x8x64xbf16> to vector<4x1x8x64xbf16>
    %40 = vector.shape_cast %39 : vector<4x1x8x64xbf16> to vector<4x8x64xbf16>
    %41 = arith.maximumf %38, %40 : vector<4x8x64xbf16>
    %42 = vector.shape_cast %41 : vector<4x8x64xbf16> to vector<4x4x2x64xbf16>
    %43 = vector.extract_strided_slice %42 {offsets = [0, 0, 0, 0], sizes = [4, 4, 1, 64], strides = [1, 1, 1, 1]} : vector<4x4x2x64xbf16> to vector<4x4x1x64xbf16>
    %44 = vector.shape_cast %43 : vector<4x4x1x64xbf16> to vector<4x4x64xbf16>
    %45 = vector.extract_strided_slice %42 {offsets = [0, 0, 1, 0], sizes = [4, 4, 1, 64], strides = [1, 1, 1, 1]} : vector<4x4x2x64xbf16> to vector<4x4x1x64xbf16>
    %46 = vector.shape_cast %45 : vector<4x4x1x64xbf16> to vector<4x4x64xbf16>
    %47 = arith.maximumf %44, %46 : vector<4x4x64xbf16>
    %48 = vector.shape_cast %47 : vector<4x4x64xbf16> to vector<4x256xbf16>
    %c0_19 = arith.constant 0 : index
    %c1 = arith.constant 1 : index
    %c64 = arith.constant 64 : index
    %49 = vector.load %arg4[%c0_19, %c1, %c64] : memref<1x6x384xbf16, #tpu.memory_space<vmem>>, vector<1x4x256xbf16>
    %50 = vector.shape_cast %49 : vector<1x4x256xbf16> to vector<4x256xbf16>
    %51 = vector.shape_cast %48 : vector<4x256xbf16> to vector<1x4x256xbf16>
    tpu.vector_store %arg4[%c0_19, %c1, %c64], %51 {strides = array<i32>} : memref<1x6x384xbf16, #tpu.memory_space<vmem>>, vector<1x4x256xbf16>,
    return
  }
  func.func @transform_0(%arg0: i32) -> (i32, i32, i32) {
    %c0_i32 = arith.constant 0 : i32
    %c0_i32_0 = arith.constant 0 : i32
    %c0_i32_1 = arith.constant 0 : i32
    return %arg0, %c0_i32, %c0_i32_0 : i32, i32, i32
  }
  func.func @transform_1(%arg0: i32) -> (i32, i32) {
    %c0_i32 = arith.constant 0 : i32
    %c0_i32_0 = arith.constant 0 : i32
    %c0_i32_1 = arith.constant 0 : i32
    return %c0_i32, %c0_i32_0 : i32, i32
  }
  func.func @transform_2(%arg0: i32) -> (i32, i32) {
    %c0_i32 = arith.constant 0 : i32
    %c0_i32_0 = arith.constant 0 : i32
    %c0_i32_1 = arith.constant 0 : i32
    return %c0_i32, %c0_i32_0 : i32, i32
  }
  func.func @transform_3(%arg0: i32) -> (i32, i32, i32) {
    %c0_i32 = arith.constant 0 : i32
    %c0_i32_0 = arith.constant 0 : i32
    %c0_i32_1 = arith.constant 0 : i32
    return %arg0, %c0_i32, %c0_i32_0 : i32, i32, i32
  }
}

module attributes {stable_mosaic.version = 11 : i64} {
  func.func @_conv_pool_kernel(%arg0: i32, %arg1: memref<1x18x54xbf16, #tpu.memory_space<vmem>>, %arg2: memref<27x32xbf16, #tpu.memory_space<vmem>>, %arg3: memref<1x32xf32, #tpu.memory_space<vmem>>, %arg4: memref<1x10x320xbf16, #tpu.memory_space<vmem>>) attributes {dimension_semantics = [#tpu.dimension_semantics<parallel>], iteration_bounds = array<i64: 2>, scalar_prefetch = 0 : i64, scratch_operands = 0 : i64, tpu.core_type = #tpu.core_type<tc>, window_params = [{transform_indices = @transform_0, window_bounds = array<i64: 1, 18, 54>}, {pipeline_mode = #tpu.pipeline_mode<synchronous>, transform_indices = @transform_1, window_bounds = array<i64: 27, 32>}, {pipeline_mode = #tpu.pipeline_mode<synchronous>, transform_indices = @transform_2, window_bounds = array<i64: 1, 32>}, {transform_indices = @transform_3, window_bounds = array<i64: 1, 10, 320>}]} {
    %cst = arith.constant 0.000000e+00 : bf16
    %0 = vector.broadcast %cst : bf16 to vector<1x320xbf16>
    %c0 = arith.constant 0 : index
    %c0_0 = arith.constant 0 : index
    %c0_1 = arith.constant 0 : index
    %1 = vector.load %arg4[%c0, %c0_0, %c0_1] : memref<1x10x320xbf16, #tpu.memory_space<vmem>>, vector<1x1x320xbf16>
    %2 = vector.shape_cast %1 : vector<1x1x320xbf16> to vector<1x320xbf16>
    %3 = vector.shape_cast %0 : vector<1x320xbf16> to vector<1x1x320xbf16>
    tpu.vector_store %arg4[%c0, %c0_0, %c0_1], %3 {strides = array<i32>} : memref<1x10x320xbf16, #tpu.memory_space<vmem>>, vector<1x1x320xbf16>,
    %c0_2 = arith.constant 0 : index
    %c9 = arith.constant 9 : index
    %c0_3 = arith.constant 0 : index
    %4 = vector.load %arg4[%c0_2, %c9, %c0_3] : memref<1x10x320xbf16, #tpu.memory_space<vmem>>, vector<1x1x320xbf16>
    %5 = vector.shape_cast %4 : vector<1x1x320xbf16> to vector<1x320xbf16>
    %6 = vector.shape_cast %0 : vector<1x320xbf16> to vector<1x1x320xbf16>
    tpu.vector_store %arg4[%c0_2, %c9, %c0_3], %6 {strides = array<i32>} : memref<1x10x320xbf16, #tpu.memory_space<vmem>>, vector<1x1x320xbf16>,
    %cst_4 = arith.constant 0.000000e+00 : bf16
    %7 = vector.broadcast %cst_4 : bf16 to vector<10x32xbf16>
    %c0_5 = arith.constant 0 : index
    %c0_6 = arith.constant 0 : index
    %c0_7 = arith.constant 0 : index
    %8 = vector.load %arg4[%c0_5, %c0_6, %c0_7] : memref<1x10x320xbf16, #tpu.memory_space<vmem>>, vector<1x10x32xbf16>
    %9 = vector.shape_cast %8 : vector<1x10x32xbf16> to vector<10x32xbf16>
    %10 = vector.shape_cast %7 : vector<10x32xbf16> to vector<1x10x32xbf16>
    tpu.vector_store %arg4[%c0_5, %c0_6, %c0_7], %10 {strides = array<i32>} : memref<1x10x320xbf16, #tpu.memory_space<vmem>>, vector<1x10x32xbf16>,
    %c0_8 = arith.constant 0 : index
    %c0_9 = arith.constant 0 : index
    %c288 = arith.constant 288 : index
    %11 = vector.load %arg4[%c0_8, %c0_9, %c288] : memref<1x10x320xbf16, #tpu.memory_space<vmem>>, vector<1x10x32xbf16>
    %12 = vector.shape_cast %11 : vector<1x10x32xbf16> to vector<10x32xbf16>
    %13 = vector.shape_cast %7 : vector<10x32xbf16> to vector<1x10x32xbf16>
    tpu.vector_store %arg4[%c0_8, %c0_9, %c288], %13 {strides = array<i32>} : memref<1x10x320xbf16, #tpu.memory_space<vmem>>, vector<1x10x32xbf16>,
    %c0_10 = arith.constant 0 : index
    %c0_11 = arith.constant 0 : index
    %c0_12 = arith.constant 0 : index
    %14 = vector.load %arg1[%c0_10, %c0_11, %c0_12] : memref<1x18x54xbf16, #tpu.memory_space<vmem>>, vector<1x18x54xbf16>
    %15 = vector.shape_cast %14 : vector<1x18x54xbf16> to vector<18x54xbf16>
    %16 = vector.shape_cast %15 : vector<18x54xbf16> to vector<18x18x3xbf16>
    %17 = vector.extract_strided_slice %16 {offsets = [0, 0, 0], sizes = [16, 16, 3], strides = [1, 1, 1]} : vector<18x18x3xbf16> to vector<16x16x3xbf16>
    %18 = vector.extract_strided_slice %16 {offsets = [0, 1, 0], sizes = [16, 16, 3], strides = [1, 1, 1]} : vector<18x18x3xbf16> to vector<16x16x3xbf16>
    %19 = vector.extract_strided_slice %16 {offsets = [0, 2, 0], sizes = [16, 16, 3], strides = [1, 1, 1]} : vector<18x18x3xbf16> to vector<16x16x3xbf16>
    %20 = vector.extract_strided_slice %16 {offsets = [1, 0, 0], sizes = [16, 16, 3], strides = [1, 1, 1]} : vector<18x18x3xbf16> to vector<16x16x3xbf16>
    %21 = vector.extract_strided_slice %16 {offsets = [1, 1, 0], sizes = [16, 16, 3], strides = [1, 1, 1]} : vector<18x18x3xbf16> to vector<16x16x3xbf16>
    %22 = vector.extract_strided_slice %16 {offsets = [1, 2, 0], sizes = [16, 16, 3], strides = [1, 1, 1]} : vector<18x18x3xbf16> to vector<16x16x3xbf16>
    %23 = vector.extract_strided_slice %16 {offsets = [2, 0, 0], sizes = [16, 16, 3], strides = [1, 1, 1]} : vector<18x18x3xbf16> to vector<16x16x3xbf16>
    %24 = vector.extract_strided_slice %16 {offsets = [2, 1, 0], sizes = [16, 16, 3], strides = [1, 1, 1]} : vector<18x18x3xbf16> to vector<16x16x3xbf16>
    %25 = vector.extract_strided_slice %16 {offsets = [2, 2, 0], sizes = [16, 16, 3], strides = [1, 1, 1]} : vector<18x18x3xbf16> to vector<16x16x3xbf16>
    %26 = tpu.concatenate %17, %18, %19, %20, %21, %22, %23, %24, %25 in 2 : vector<16x16x3xbf16>, vector<16x16x3xbf16>, vector<16x16x3xbf16>, vector<16x16x3xbf16>, vector<16x16x3xbf16>, vector<16x16x3xbf16>, vector<16x16x3xbf16>, vector<16x16x3xbf16>, vector<16x16x3xbf16> -> vector<16x16x27xbf16>
    %27 = vector.shape_cast %26 : vector<16x16x27xbf16> to vector<256x27xbf16>
    %c0_13 = arith.constant 0 : index
    %c0_14 = arith.constant 0 : index
    %28 = vector.load %arg2[%c0_13, %c0_14] : memref<27x32xbf16, #tpu.memory_space<vmem>>, vector<27x32xbf16>
    %cst_15 = arith.constant dense<0.000000e+00> : vector<256x32xf32>
    %29 = tpu.matmul %27, %28, %cst_15 {dimension_numbers = #tpu.dot_dimension_numbers<[1], [0], [0], [1], [0, 0, 1, 1], [], []>} : vector<256x27xbf16>, vector<27x32xbf16>, vector<256x32xf32> -> vector<256x32xf32>
    %c0_16 = arith.constant 0 : index
    %c0_17 = arith.constant 0 : index
    %30 = vector.load %arg3[%c0_16, %c0_17] : memref<1x32xf32, #tpu.memory_space<vmem>>, vector<1x32xf32>
    %31 = vector.broadcast %30 : vector<1x32xf32> to vector<256x32xf32>
    %32 = arith.addf %29, %31 : vector<256x32xf32>
    %cst_18 = arith.constant 0.000000e+00 : f32
    %33 = vector.broadcast %cst_18 : f32 to vector<256x32xf32>
    %34 = arith.maximumf %32, %33 : vector<256x32xf32>
    %35 = arith.truncf %34 : vector<256x32xf32> to vector<256x32xbf16>
    %36 = vector.shape_cast %35 : vector<256x32xbf16> to vector<8x2x16x32xbf16>
    %37 = vector.extract_strided_slice %36 {offsets = [0, 0, 0, 0], sizes = [8, 1, 16, 32], strides = [1, 1, 1, 1]} : vector<8x2x16x32xbf16> to vector<8x1x16x32xbf16>
    %38 = vector.shape_cast %37 : vector<8x1x16x32xbf16> to vector<8x16x32xbf16>
    %39 = vector.extract_strided_slice %36 {offsets = [0, 1, 0, 0], sizes = [8, 1, 16, 32], strides = [1, 1, 1, 1]} : vector<8x2x16x32xbf16> to vector<8x1x16x32xbf16>
    %40 = vector.shape_cast %39 : vector<8x1x16x32xbf16> to vector<8x16x32xbf16>
    %41 = arith.maximumf %38, %40 : vector<8x16x32xbf16>
    %42 = vector.shape_cast %41 : vector<8x16x32xbf16> to vector<8x8x2x32xbf16>
    %43 = vector.extract_strided_slice %42 {offsets = [0, 0, 0, 0], sizes = [8, 8, 1, 32], strides = [1, 1, 1, 1]} : vector<8x8x2x32xbf16> to vector<8x8x1x32xbf16>
    %44 = vector.shape_cast %43 : vector<8x8x1x32xbf16> to vector<8x8x32xbf16>
    %45 = vector.extract_strided_slice %42 {offsets = [0, 0, 1, 0], sizes = [8, 8, 1, 32], strides = [1, 1, 1, 1]} : vector<8x8x2x32xbf16> to vector<8x8x1x32xbf16>
    %46 = vector.shape_cast %45 : vector<8x8x1x32xbf16> to vector<8x8x32xbf16>
    %47 = arith.maximumf %44, %46 : vector<8x8x32xbf16>
    %48 = vector.shape_cast %47 : vector<8x8x32xbf16> to vector<8x256xbf16>
    %c0_19 = arith.constant 0 : index
    %c1 = arith.constant 1 : index
    %c32 = arith.constant 32 : index
    %49 = vector.load %arg4[%c0_19, %c1, %c32] : memref<1x10x320xbf16, #tpu.memory_space<vmem>>, vector<1x8x256xbf16>
    %50 = vector.shape_cast %49 : vector<1x8x256xbf16> to vector<8x256xbf16>
    %51 = vector.shape_cast %48 : vector<8x256xbf16> to vector<1x8x256xbf16>
    tpu.vector_store %arg4[%c0_19, %c1, %c32], %51 {strides = array<i32>} : memref<1x10x320xbf16, #tpu.memory_space<vmem>>, vector<1x8x256xbf16>,
    return
  }
  func.func @transform_0(%arg0: i32) -> (i32, i32, i32) {
    %c0_i32 = arith.constant 0 : i32
    %c0_i32_0 = arith.constant 0 : i32
    %c0_i32_1 = arith.constant 0 : i32
    return %arg0, %c0_i32, %c0_i32_0 : i32, i32, i32
  }
  func.func @transform_1(%arg0: i32) -> (i32, i32) {
    %c0_i32 = arith.constant 0 : i32
    %c0_i32_0 = arith.constant 0 : i32
    %c0_i32_1 = arith.constant 0 : i32
    return %c0_i32, %c0_i32_0 : i32, i32
  }
  func.func @transform_2(%arg0: i32) -> (i32, i32) {
    %c0_i32 = arith.constant 0 : i32
    %c0_i32_0 = arith.constant 0 : i32
    %c0_i32_1 = arith.constant 0 : i32
    return %c0_i32, %c0_i32_0 : i32, i32
  }
  func.func @transform_3(%arg0: i32) -> (i32, i32, i32) {
    %c0_i32 = arith.constant 0 : i32
    %c0_i32_0 = arith.constant 0 : i32
    %c0_i32_1 = arith.constant 0 : i32
    return %arg0, %c0_i32, %c0_i32_0 : i32, i32, i32
  }
}

module attributes {stable_mosaic.version = 11 : i64} {
  func.func @_conv_pool_kernel(%arg0: i32, %arg1: memref<1x6x384xbf16, #tpu.memory_space<vmem>>, %arg2: memref<576x128xbf16, #tpu.memory_space<vmem>>, %arg3: memref<1x128xf32, #tpu.memory_space<vmem>>, %arg4: memref<1x4x512xbf16, #tpu.memory_space<vmem>>) attributes {dimension_semantics = [#tpu.dimension_semantics<parallel>], iteration_bounds = array<i64: 2>, scalar_prefetch = 0 : i64, scratch_operands = 0 : i64, tpu.core_type = #tpu.core_type<tc>, window_params = [{transform_indices = @transform_0, window_bounds = array<i64: 1, 6, 384>}, {pipeline_mode = #tpu.pipeline_mode<synchronous>, transform_indices = @transform_1, window_bounds = array<i64: 576, 128>}, {pipeline_mode = #tpu.pipeline_mode<synchronous>, transform_indices = @transform_2, window_bounds = array<i64: 1, 128>}, {transform_indices = @transform_3, window_bounds = array<i64: 1, 4, 512>}]} {
    %cst = arith.constant 0.000000e+00 : bf16
    %0 = vector.broadcast %cst : bf16 to vector<1x512xbf16>
    %c0 = arith.constant 0 : index
    %c0_0 = arith.constant 0 : index
    %c0_1 = arith.constant 0 : index
    %1 = vector.load %arg4[%c0, %c0_0, %c0_1] : memref<1x4x512xbf16, #tpu.memory_space<vmem>>, vector<1x1x512xbf16>
    %2 = vector.shape_cast %1 : vector<1x1x512xbf16> to vector<1x512xbf16>
    %3 = vector.shape_cast %0 : vector<1x512xbf16> to vector<1x1x512xbf16>
    tpu.vector_store %arg4[%c0, %c0_0, %c0_1], %3 {strides = array<i32>} : memref<1x4x512xbf16, #tpu.memory_space<vmem>>, vector<1x1x512xbf16>,
    %c0_2 = arith.constant 0 : index
    %c3 = arith.constant 3 : index
    %c0_3 = arith.constant 0 : index
    %4 = vector.load %arg4[%c0_2, %c3, %c0_3] : memref<1x4x512xbf16, #tpu.memory_space<vmem>>, vector<1x1x512xbf16>
    %5 = vector.shape_cast %4 : vector<1x1x512xbf16> to vector<1x512xbf16>
    %6 = vector.shape_cast %0 : vector<1x512xbf16> to vector<1x1x512xbf16>
    tpu.vector_store %arg4[%c0_2, %c3, %c0_3], %6 {strides = array<i32>} : memref<1x4x512xbf16, #tpu.memory_space<vmem>>, vector<1x1x512xbf16>,
    %cst_4 = arith.constant 0.000000e+00 : bf16
    %7 = vector.broadcast %cst_4 : bf16 to vector<4x128xbf16>
    %c0_5 = arith.constant 0 : index
    %c0_6 = arith.constant 0 : index
    %c0_7 = arith.constant 0 : index
    %8 = vector.load %arg4[%c0_5, %c0_6, %c0_7] : memref<1x4x512xbf16, #tpu.memory_space<vmem>>, vector<1x4x128xbf16>
    %9 = vector.shape_cast %8 : vector<1x4x128xbf16> to vector<4x128xbf16>
    %10 = vector.shape_cast %7 : vector<4x128xbf16> to vector<1x4x128xbf16>
    tpu.vector_store %arg4[%c0_5, %c0_6, %c0_7], %10 {strides = array<i32>} : memref<1x4x512xbf16, #tpu.memory_space<vmem>>, vector<1x4x128xbf16>,
    %c0_8 = arith.constant 0 : index
    %c0_9 = arith.constant 0 : index
    %c384 = arith.constant 384 : index
    %11 = vector.load %arg4[%c0_8, %c0_9, %c384] : memref<1x4x512xbf16, #tpu.memory_space<vmem>>, vector<1x4x128xbf16>
    %12 = vector.shape_cast %11 : vector<1x4x128xbf16> to vector<4x128xbf16>
    %13 = vector.shape_cast %7 : vector<4x128xbf16> to vector<1x4x128xbf16>
    tpu.vector_store %arg4[%c0_8, %c0_9, %c384], %13 {strides = array<i32>} : memref<1x4x512xbf16, #tpu.memory_space<vmem>>, vector<1x4x128xbf16>,
    %c0_10 = arith.constant 0 : index
    %c0_11 = arith.constant 0 : index
    %c0_12 = arith.constant 0 : index
    %14 = vector.load %arg1[%c0_10, %c0_11, %c0_12] : memref<1x6x384xbf16, #tpu.memory_space<vmem>>, vector<1x6x384xbf16>
    %15 = vector.shape_cast %14 : vector<1x6x384xbf16> to vector<6x384xbf16>
    %16 = vector.shape_cast %15 : vector<6x384xbf16> to vector<6x6x64xbf16>
    %17 = vector.extract_strided_slice %16 {offsets = [0, 0, 0], sizes = [4, 4, 64], strides = [1, 1, 1]} : vector<6x6x64xbf16> to vector<4x4x64xbf16>
    %18 = vector.extract_strided_slice %16 {offsets = [0, 1, 0], sizes = [4, 4, 64], strides = [1, 1, 1]} : vector<6x6x64xbf16> to vector<4x4x64xbf16>
    %19 = vector.extract_strided_slice %16 {offsets = [0, 2, 0], sizes = [4, 4, 64], strides = [1, 1, 1]} : vector<6x6x64xbf16> to vector<4x4x64xbf16>
    %20 = vector.extract_strided_slice %16 {offsets = [1, 0, 0], sizes = [4, 4, 64], strides = [1, 1, 1]} : vector<6x6x64xbf16> to vector<4x4x64xbf16>
    %21 = vector.extract_strided_slice %16 {offsets = [1, 1, 0], sizes = [4, 4, 64], strides = [1, 1, 1]} : vector<6x6x64xbf16> to vector<4x4x64xbf16>
    %22 = vector.extract_strided_slice %16 {offsets = [1, 2, 0], sizes = [4, 4, 64], strides = [1, 1, 1]} : vector<6x6x64xbf16> to vector<4x4x64xbf16>
    %23 = vector.extract_strided_slice %16 {offsets = [2, 0, 0], sizes = [4, 4, 64], strides = [1, 1, 1]} : vector<6x6x64xbf16> to vector<4x4x64xbf16>
    %24 = vector.extract_strided_slice %16 {offsets = [2, 1, 0], sizes = [4, 4, 64], strides = [1, 1, 1]} : vector<6x6x64xbf16> to vector<4x4x64xbf16>
    %25 = vector.extract_strided_slice %16 {offsets = [2, 2, 0], sizes = [4, 4, 64], strides = [1, 1, 1]} : vector<6x6x64xbf16> to vector<4x4x64xbf16>
    %26 = tpu.concatenate %17, %18, %19, %20, %21, %22, %23, %24, %25 in 2 : vector<4x4x64xbf16>, vector<4x4x64xbf16>, vector<4x4x64xbf16>, vector<4x4x64xbf16>, vector<4x4x64xbf16>, vector<4x4x64xbf16>, vector<4x4x64xbf16>, vector<4x4x64xbf16>, vector<4x4x64xbf16> -> vector<4x4x576xbf16>
    %27 = vector.shape_cast %26 : vector<4x4x576xbf16> to vector<16x576xbf16>
    %c0_13 = arith.constant 0 : index
    %c0_14 = arith.constant 0 : index
    %28 = vector.load %arg2[%c0_13, %c0_14] : memref<576x128xbf16, #tpu.memory_space<vmem>>, vector<576x128xbf16>
    %cst_15 = arith.constant dense<0.000000e+00> : vector<16x128xf32>
    %29 = tpu.matmul %27, %28, %cst_15 {dimension_numbers = #tpu.dot_dimension_numbers<[1], [0], [0], [1], [0, 0, 1, 1], [], []>} : vector<16x576xbf16>, vector<576x128xbf16>, vector<16x128xf32> -> vector<16x128xf32>
    %c0_16 = arith.constant 0 : index
    %c0_17 = arith.constant 0 : index
    %30 = vector.load %arg3[%c0_16, %c0_17] : memref<1x128xf32, #tpu.memory_space<vmem>>, vector<1x128xf32>
    %31 = vector.broadcast %30 : vector<1x128xf32> to vector<16x128xf32>
    %32 = arith.addf %29, %31 : vector<16x128xf32>
    %cst_18 = arith.constant 0.000000e+00 : f32
    %33 = vector.broadcast %cst_18 : f32 to vector<16x128xf32>
    %34 = arith.maximumf %32, %33 : vector<16x128xf32>
    %35 = arith.truncf %34 : vector<16x128xf32> to vector<16x128xbf16>
    %36 = vector.shape_cast %35 : vector<16x128xbf16> to vector<2x2x4x128xbf16>
    %37 = vector.extract_strided_slice %36 {offsets = [0, 0, 0, 0], sizes = [2, 1, 4, 128], strides = [1, 1, 1, 1]} : vector<2x2x4x128xbf16> to vector<2x1x4x128xbf16>
    %38 = vector.shape_cast %37 : vector<2x1x4x128xbf16> to vector<2x4x128xbf16>
    %39 = vector.extract_strided_slice %36 {offsets = [0, 1, 0, 0], sizes = [2, 1, 4, 128], strides = [1, 1, 1, 1]} : vector<2x2x4x128xbf16> to vector<2x1x4x128xbf16>
    %40 = vector.shape_cast %39 : vector<2x1x4x128xbf16> to vector<2x4x128xbf16>
    %41 = arith.maximumf %38, %40 : vector<2x4x128xbf16>
    %42 = vector.shape_cast %41 : vector<2x4x128xbf16> to vector<2x2x2x128xbf16>
    %43 = vector.extract_strided_slice %42 {offsets = [0, 0, 0, 0], sizes = [2, 2, 1, 128], strides = [1, 1, 1, 1]} : vector<2x2x2x128xbf16> to vector<2x2x1x128xbf16>
    %44 = vector.shape_cast %43 : vector<2x2x1x128xbf16> to vector<2x2x128xbf16>
    %45 = vector.extract_strided_slice %42 {offsets = [0, 0, 1, 0], sizes = [2, 2, 1, 128], strides = [1, 1, 1, 1]} : vector<2x2x2x128xbf16> to vector<2x2x1x128xbf16>
    %46 = vector.shape_cast %45 : vector<2x2x1x128xbf16> to vector<2x2x128xbf16>
    %47 = arith.maximumf %44, %46 : vector<2x2x128xbf16>
    %48 = vector.shape_cast %47 : vector<2x2x128xbf16> to vector<2x256xbf16>
    %c0_19 = arith.constant 0 : index
    %c1 = arith.constant 1 : index
    %c128 = arith.constant 128 : index
    %49 = vector.load %arg4[%c0_19, %c1, %c128] : memref<1x4x512xbf16, #tpu.memory_space<vmem>>, vector<1x2x256xbf16>
    %50 = vector.shape_cast %49 : vector<1x2x256xbf16> to vector<2x256xbf16>
    %51 = vector.shape_cast %48 : vector<2x256xbf16> to vector<1x2x256xbf16>
    tpu.vector_store %arg4[%c0_19, %c1, %c128], %51 {strides = array<i32>} : memref<1x4x512xbf16, #tpu.memory_space<vmem>>, vector<1x2x256xbf16>,
    return
  }
  func.func @transform_0(%arg0: i32) -> (i32, i32, i32) {
    %c0_i32 = arith.constant 0 : i32
    %c0_i32_0 = arith.constant 0 : i32
    %c0_i32_1 = arith.constant 0 : i32
    return %arg0, %c0_i32, %c0_i32_0 : i32, i32, i32
  }
  func.func @transform_1(%arg0: i32) -> (i32, i32) {
    %c0_i32 = arith.constant 0 : i32
    %c0_i32_0 = arith.constant 0 : i32
    %c0_i32_1 = arith.constant 0 : i32
    return %c0_i32, %c0_i32_0 : i32, i32
  }
  func.func @transform_2(%arg0: i32) -> (i32, i32) {
    %c0_i32 = arith.constant 0 : i32
    %c0_i32_0 = arith.constant 0 : i32
    %c0_i32_1 = arith.constant 0 : i32
    return %c0_i32, %c0_i32_0 : i32, i32
  }
  func.func @transform_3(%arg0: i32) -> (i32, i32, i32) {
    %c0_i32 = arith.constant 0 : i32
    %c0_i32_0 = arith.constant 0 : i32
    %c0_i32_1 = arith.constant 0 : i32
    return %arg0, %c0_i32, %c0_i32_0 : i32, i32, i32
  }
}

module attributes {stable_mosaic.version = 11 : i64} {
  func.func @_mlp_head_kernel(%arg0: i32, %arg1: memref<2x512xbf16, #tpu.memory_space<vmem>>, %arg2: memref<512x128xbf16, #tpu.memory_space<vmem>>, %arg3: memref<1x128xf32, #tpu.memory_space<vmem>>, %arg4: memref<128x1xf32, #tpu.memory_space<vmem>>, %arg5: memref<1x1xf32, #tpu.memory_space<vmem>>, %arg6: memref<2x1xf32, #tpu.memory_space<vmem>>, %arg7: memref<2x128xf32, #tpu.memory_space<vmem>>) attributes {dimension_semantics = [#tpu.dimension_semantics<arbitrary>], iteration_bounds = array<i64: 1>, scalar_prefetch = 0 : i64, scratch_operands = 1 : i64, tpu.core_type = #tpu.core_type<tc>, window_params = [{transform_indices = @transform_0, window_bounds = array<i64: 2, 512>}, {transform_indices = @transform_1, window_bounds = array<i64: 512, 128>}, {pipeline_mode = #tpu.pipeline_mode<synchronous>, transform_indices = @transform_2, window_bounds = array<i64: 1, 128>}, {pipeline_mode = #tpu.pipeline_mode<synchronous>, transform_indices = @transform_3, window_bounds = array<i64: 128, 1>}, {pipeline_mode = #tpu.pipeline_mode<synchronous>, transform_indices = @transform_4, window_bounds = array<i64: 1, 1>}, {pipeline_mode = #tpu.pipeline_mode<synchronous>, transform_indices = @transform_5, window_bounds = array<i64: 2, 1>}]} {
    %c0_i32 = arith.constant 0 : i32
    %0 = arith.cmpi eq, %arg0, %c0_i32 : i32
    %1 = arith.extui %0 : i1 to i32
    %c0_i32_0 = arith.constant 0 : i32
    %2 = arith.cmpi ne, %1, %c0_i32_0 : i32
    scf.if %2 {
      %cst_10 = arith.constant 0.000000e+00 : f32
      %12 = vector.broadcast %cst_10 : f32 to vector<2x128xf32>
      %c0_11 = arith.constant 0 : index
      %c0_12 = arith.constant 0 : index
      %13 = vector.load %arg7[%c0_11, %c0_12] : memref<2x128xf32, #tpu.memory_space<vmem>>, vector<2x128xf32>
      tpu.vector_store %arg7[%c0_11, %c0_12], %12 {strides = array<i32>} : memref<2x128xf32, #tpu.memory_space<vmem>>, vector<2x128xf32>,
    } else {
    }
    %c0 = arith.constant 0 : index
    %c0_1 = arith.constant 0 : index
    %3 = vector.load %arg7[%c0, %c0_1] : memref<2x128xf32, #tpu.memory_space<vmem>>, vector<2x128xf32>
    %c0_2 = arith.constant 0 : index
    %c0_3 = arith.constant 0 : index
    %4 = vector.load %arg1[%c0_2, %c0_3] : memref<2x512xbf16, #tpu.memory_space<vmem>>, vector<2x512xbf16>
    %c0_4 = arith.constant 0 : index
    %c0_5 = arith.constant 0 : index
    %5 = vector.load %arg2[%c0_4, %c0_5] : memref<512x128xbf16, #tpu.memory_space<vmem>>, vector<512x128xbf16>
    %cst = arith.constant dense<0.000000e+00> : vector<2x128xf32>
    %6 = tpu.matmul %4, %5, %cst {dimension_numbers = #tpu.dot_dimension_numbers<[1], [0], [0], [1], [0, 0, 1, 1], [], []>} : vector<2x512xbf16>, vector<512x128xbf16>, vector<2x128xf32> -> vector<2x128xf32>
    %7 = arith.addf %3, %6 : vector<2x128xf32>
    %c0_6 = arith.constant 0 : index
    %c0_7 = arith.constant 0 : index
    %8 = vector.load %arg7[%c0_6, %c0_7] : memref<2x128xf32, #tpu.memory_space<vmem>>, vector<2x128xf32>
    tpu.vector_store %arg7[%c0_6, %c0_7], %7 {strides = array<i32>} : memref<2x128xf32, #tpu.memory_space<vmem>>, vector<2x128xf32>,
    %c0_i32_8 = arith.constant 0 : i32
    %9 = arith.cmpi eq, %arg0, %c0_i32_8 : i32
    %10 = arith.extui %9 : i1 to i32
    %c0_i32_9 = arith.constant 0 : i32
    %11 = arith.cmpi ne, %10, %c0_i32_9 : i32
    scf.if %11 {
      %c0_10 = arith.constant 0 : index
      %c0_11 = arith.constant 0 : index
      %12 = vector.load %arg7[%c0_10, %c0_11] : memref<2x128xf32, #tpu.memory_space<vmem>>, vector<2x128xf32>
      %c0_12 = arith.constant 0 : index
      %c0_13 = arith.constant 0 : index
      %13 = vector.load %arg3[%c0_12, %c0_13] : memref<1x128xf32, #tpu.memory_space<vmem>>, vector<1x128xf32>
      %14 = vector.broadcast %13 : vector<1x128xf32> to vector<2x128xf32>
      %15 = arith.addf %12, %14 : vector<2x128xf32>
      %cst_14 = arith.constant 0.000000e+00 : f32
      %16 = vector.broadcast %cst_14 : f32 to vector<2x128xf32>
      %17 = arith.maximumf %15, %16 : vector<2x128xf32>
      %c0_15 = arith.constant 0 : index
      %c0_16 = arith.constant 0 : index
      %18 = vector.load %arg4[%c0_15, %c0_16] : memref<128x1xf32, #tpu.memory_space<vmem>>, vector<128x1xf32>
      %cst_17 = arith.constant dense<0.000000e+00> : vector<2x1xf32>
      %19 = tpu.matmul %17, %18, %cst_17 {dimension_numbers = #tpu.dot_dimension_numbers<[1], [0], [0], [1], [0, 0, 1, 1], [], []>} : vector<2x128xf32>, vector<128x1xf32>, vector<2x1xf32> -> vector<2x1xf32>
      %c0_18 = arith.constant 0 : index
      %c0_19 = arith.constant 0 : index
      %20 = vector.load %arg5[%c0_18, %c0_19] : memref<1x1xf32, #tpu.memory_space<vmem>>, vector<1x1xf32>
      %21 = vector.broadcast %20 : vector<1x1xf32> to vector<2x1xf32>
      %22 = arith.addf %19, %21 : vector<2x1xf32>
      %23 = arith.negf %22 : vector<2x1xf32>
      %24 = math.exp %23 : vector<2x1xf32>
      %cst_20 = arith.constant 1.000000e+00 : f32
      %25 = vector.broadcast %cst_20 : f32 to vector<2x1xf32>
      %26 = arith.addf %25, %24 : vector<2x1xf32>
      %27 = arith.divf %25, %26 : vector<2x1xf32>
      %c0_21 = arith.constant 0 : index
      %c0_22 = arith.constant 0 : index
      %28 = vector.load %arg6[%c0_21, %c0_22] : memref<2x1xf32, #tpu.memory_space<vmem>>, vector<2x1xf32>
      tpu.vector_store %arg6[%c0_21, %c0_22], %27 {strides = array<i32>} : memref<2x1xf32, #tpu.memory_space<vmem>>, vector<2x1xf32>,
    } else {
    }
    return
  }
  func.func @transform_0(%arg0: i32) -> (i32, i32) {
    %c0_i32 = arith.constant 0 : i32
    %c0_i32_0 = arith.constant 0 : i32
    return %c0_i32, %arg0 : i32, i32
  }
  func.func @transform_1(%arg0: i32) -> (i32, i32) {
    %c0_i32 = arith.constant 0 : i32
    %c0_i32_0 = arith.constant 0 : i32
    return %arg0, %c0_i32 : i32, i32
  }
  func.func @transform_2(%arg0: i32) -> (i32, i32) {
    %c0_i32 = arith.constant 0 : i32
    %c0_i32_0 = arith.constant 0 : i32
    %c0_i32_1 = arith.constant 0 : i32
    return %c0_i32, %c0_i32_0 : i32, i32
  }
  func.func @transform_3(%arg0: i32) -> (i32, i32) {
    %c0_i32 = arith.constant 0 : i32
    %c0_i32_0 = arith.constant 0 : i32
    %c0_i32_1 = arith.constant 0 : i32
    return %c0_i32, %c0_i32_0 : i32, i32
  }
  func.func @transform_4(%arg0: i32) -> (i32, i32) {
    %c0_i32 = arith.constant 0 : i32
    %c0_i32_0 = arith.constant 0 : i32
    %c0_i32_1 = arith.constant 0 : i32
    return %c0_i32, %c0_i32_0 : i32, i32
  }
  func.func @transform_5(%arg0: i32) -> (i32, i32) {
    %c0_i32 = arith.constant 0 : i32
    %c0_i32_0 = arith.constant 0 : i32
    %c0_i32_1 = arith.constant 0 : i32
    return %c0_i32, %c0_i32_0 : i32, i32
  }
}

</mosaic_0001>

<llo_original>
// kernel: cnn_forward.7
$region0: #{cnn_forward.7}
  #allocation0 [shape = 'u32[]', space=smem, size = 0x4, offset = 0x4, fixed_abs, tag = 'smem constant byte address 0x4 - core index']
  #allocation1 [shape = 'u32[144,128]{1,0:T(1,128)}', space=vmem, size = 0x12000, scoped, tag = 'internal scratch']
  #allocation2 [shape = 'f32[2,128]{1,0:T(2,128)}', space=vmem, size = 0x400, scoped, tag = 'scratch operand']
  #allocation3 [shape = 'f32[1,1]{1,0:T(1,128)S(1)}', space=vmem, size = 0x200, scoped, tag = 'scoped memory for cnn_forward.7']
  %s0 = inlined_call_operand.vmem [shape: bf16[2,512], index: 0, kind: input, shape index: {}]
  %s1 = inlined_call_operand.vmem [shape: bf16[512,128], index: 1, kind: input, shape index: {}]
  %s2 = inlined_call_operand.vmem [shape: f32[1,128], index: 2, kind: input, shape index: {}]
  %s3 = inlined_call_operand.vmem [shape: f32[128,1], index: 3, kind: input, shape index: {}]
  %s4 = inlined_call_operand.<no memory space> [shape: f32[1,1], index: 4, kind: input, shape index: {}]
  %s5 = inlined_call_operand.vmem [shape: f32[2,1], index: 5, kind: output, shape index: {}]
  %s6 = sld [smem:[#allocation0]]
  $region38: #{cnn_forward.7} parent=0
    _
  %s8 = ssub.s32 1, %s6
  %s9 = scalar_select 0, %s8, %s6
  %v10 = vstv %s4
  %11 = vst [vmem:[#allocation3] sm:$0x1] %v10
  // Predicated region
  $region2: #{cnn_forward.7} parent=0 // pred_check
    _
  $region3: #{cnn_forward.7} parent=0 // pred_check_branch
    %13 = sbr.rel (0) target = $region5
  $region4: #{cnn_forward.7} parent=0 // pred_region
    _
  $region5: #{cnn_forward.7} parent=0 // pred_fallthru
    _
  // Predicated region
  $region6: #{cnn_forward.7} parent=0 // pred_check
    _
  $region7: #{cnn_forward.7} parent=0 // pred_check_branch
    %15 = sbr.rel (0) target = $region9
  $region8: #{cnn_forward.7} parent=0 // pred_region
    _
  $region9: #{cnn_forward.7} parent=0 // pred_fallthru
    _
  // Predicated region
  $region10: #{cnn_forward.7} parent=0 // pred_check
    _
  $region11: #{cnn_forward.7} parent=0 // pred_check_branch
    %17 = sbr.rel (0) target = $region13
  $region12: #{cnn_forward.7} parent=0 // pred_region
    _
  $region13: #{cnn_forward.7} parent=0 // pred_fallthru
    _
  // Predicated region
  $region14: #{cnn_forward.7} parent=0 // pred_check
    _
  $region15: #{cnn_forward.7} parent=0 // pred_check_branch
    %19 = sbr.rel (0) target = $region17
  $region16: #{cnn_forward.7} parent=0 // pred_region
    _
  $region17: #{cnn_forward.7} parent=0 // pred_fallthru
    _
  // Predicated region
  $region18: #{cnn_forward.7} parent=0 // pred_check
    _
  $region19: #{cnn_forward.7} parent=0 // pred_check_branch
    %21 = sbr.rel (0) target = $region21
  $region20: #{cnn_forward.7} parent=0 // pred_region
    _
  $region21: #{cnn_forward.7} parent=0 // pred_fallthru
    _
  %p23 = scmp.eq.s32.totalorder 0, 0
  // Predicated region
  $region22: #{cnn_forward.7} parent=0 // pred_check
    %p24 = pneg %p23
  $region23: #{cnn_forward.7} parent=0 // pred_check_branch
    %26 = sbr.rel (%p24) target = $region25
  $region24: #{cnn_forward.7} parent=0 // pred_region
    %27 = vst [vmem:[#allocation2] sm:$0x3] 0.0
  $region25: #{cnn_forward.7} parent=0 // pred_fallthru
    _
  %v28 = vld [vmem:[#allocation2] sm:$0x3]
  %v29 = vld [vmem:[%s0] sm:$0xf]
  %v30 = vld [vmem:[%s1] sm:$0xf]
  %v31 = vld [vmem:[%s1 + $0x4] sm:$0xf]
  %v32 = vld [vmem:[%s1 + $0x8] sm:$0xf]
  %v33 = vld [vmem:[%s1 + $0xc] sm:$0xf]
  %v34 = vld [vmem:[%s1 + $0x10] sm:$0xf]
  %v35 = vld [vmem:[%s1 + $0x14] sm:$0xf]
  %v36 = vld [vmem:[%s1 + $0x18] sm:$0xf]
  %v37 = vld [vmem:[%s1 + $0x1c] sm:$0xf]
  %v38 = vld [vmem:[%s1 + $0x20] sm:$0xf]
  %v39 = vld [vmem:[%s1 + $0x24] sm:$0xf]
  %v40 = vld [vmem:[%s1 + $0x28] sm:$0xf]
  %v41 = vld [vmem:[%s1 + $0x2c] sm:$0xf]
  %v42 = vld [vmem:[%s1 + $0x30] sm:$0xf]
  %v43 = vld [vmem:[%s1 + $0x34] sm:$0xf]
  %v44 = vld [vmem:[%s1 + $0x38] sm:$0xf]
  %v45 = vld [vmem:[%s1 + $0x3c] sm:$0xf]
  %v46 = vld [vmem:[%s1 + $0x40] sm:$0xf]
  %v47 = vld [vmem:[%s1 + $0x44] sm:$0xf]
  %v48 = vld [vmem:[%s1 + $0x48] sm:$0xf]
  %v49 = vld [vmem:[%s1 + $0x4c] sm:$0xf]
  %v50 = vld [vmem:[%s1 + $0x50] sm:$0xf]
  %v51 = vld [vmem:[%s1 + $0x54] sm:$0xf]
  %v52 = vld [vmem:[%s1 + $0x58] sm:$0xf]
  %v53 = vld [vmem:[%s1 + $0x5c] sm:$0xf]
  %v54 = vld [vmem:[%s1 + $0x60] sm:$0xf]
  %v55 = vld [vmem:[%s1 + $0x64] sm:$0xf]
  %v56 = vld [vmem:[%s1 + $0x68] sm:$0xf]
  %v57 = vld [vmem:[%s1 + $0x6c] sm:$0xf]
  %v58 = vld [vmem:[%s1 + $0x70] sm:$0xf]
  %v59 = vld [vmem:[%s1 + $0x74] sm:$0xf]
  %v60 = vld [vmem:[%s1 + $0x78] sm:$0xf]
  %v61 = vld [vmem:[%s1 + $0x7c] sm:$0xf]
  %v62 = vld [vmem:[%s1 + $0x80] sm:$0xf]
  %v63 = vld [vmem:[%s1 + $0x84] sm:$0xf]
  %v64 = vld [vmem:[%s1 + $0x88] sm:$0xf]
  %v65 = vld [vmem:[%s1 + $0x8c] sm:$0xf]
  %v66 = vld [vmem:[%s1 + $0x90] sm:$0xf]
  %v67 = vld [vmem:[%s1 + $0x94] sm:$0xf]
  %v68 = vld [vmem:[%s1 + $0x98] sm:$0xf]
  %v69 = vld [vmem:[%s1 + $0x9c] sm:$0xf]
  %v70 = vld [vmem:[%s1 + $0xa0] sm:$0xf]
  %v71 = vld [vmem:[%s1 + $0xa4] sm:$0xf]
  %v72 = vld [vmem:[%s1 + $0xa8] sm:$0xf]
  %v73 = vld [vmem:[%s1 + $0xac] sm:$0xf]
  %v74 = vld [vmem:[%s1 + $0xb0] sm:$0xf]
  %v75 = vld [vmem:[%s1 + $0xb4] sm:$0xf]
  %v76 = vld [vmem:[%s1 + $0xb8] sm:$0xf]
  %v77 = vld [vmem:[%s1 + $0xbc] sm:$0xf]
  %v78 = vld [vmem:[%s1 + $0xc0] sm:$0xf]
  %v79 = vld [vmem:[%s1 + $0xc4] sm:$0xf]
  %v80 = vld [vmem:[%s1 + $0xc8] sm:$0xf]
  %v81 = vld [vmem:[%s1 + $0xcc] sm:$0xf]
  %v82 = vld [vmem:[%s1 + $0xd0] sm:$0xf]
  %v83 = vld [vmem:[%s1 + $0xd4] sm:$0xf]
  %v84 = vld [vmem:[%s1 + $0xd8] sm:$0xf]
  %v85 = vld [vmem:[%s1 + $0xdc] sm:$0xf]
  %v86 = vld [vmem:[%s1 + $0xe0] sm:$0xf]
  %v87 = vld [vmem:[%s1 + $0xe4] sm:$0xf]
  %v88 = vld [vmem:[%s1 + $0xe8] sm:$0xf]
  %v89 = vld [vmem:[%s1 + $0xec] sm:$0xf]
  %v90 = vld [vmem:[%s1 + $0xf0] sm:$0xf]
  %v91 = vld [vmem:[%s1 + $0xf4] sm:$0xf]
  %v92 = vld [vmem:[%s1 + $0xf8] sm:$0xf]
  %v93 = vld [vmem:[%s1 + $0xfc] sm:$0xf]
  %v96 = vunpack.c.l.s4 1966171168
  %v97 = vunpack.c.0.s8 %v96
  %v98 = vlaneseq
  %v99 = vshrl.u32 %v98, 7
  %v100 = vsub.s32 %v97, %v99
  %v101 = vrot.slane %v29, %v100
  %v102 = vcombine.high %v101, %v101
  %v104 = vunpack.c.l.s4 1966171168
  %v105 = vunpack.c.0.s8 %v104
  %v106 = vlaneseq
  %v107 = vshrl.u32 %v106, 7
  %v108 = vsub.s32 %v105, %v107
  %v109 = vrot.slane %v101, %v108
  %v111 = vunpack.c.l.s4 1966171168
  %v112 = vunpack.c.0.s8 %v111
  %v113 = vlaneseq
  %v114 = vshrl.u32 %v113, 7
  %v115 = vsub.s32 %v112, %v114
  %v116 = vrot.slane %v102, %v115
  %v117 = vcombine.high %v109, %v109
  %v118 = vcombine.high %v116, %v116
  %v187 = vunpack.c.l.b16 %v30
  %v188 = vunpack.c.l.b16 %v31
  %v189 = vunpack.c.l.b16 %v32
  %v190 = vunpack.c.l.b16 %v33
  %v191 = vunpack.c.l.b16 %v34
  %v192 = vunpack.c.l.b16 %v35
  %v193 = vunpack.c.l.b16 %v36
  %v194 = vunpack.c.l.b16 %v37
  %v195 = vunpack.c.l.b16 %v38
  %v196 = vunpack.c.l.b16 %v39
  %v197 = vunpack.c.l.b16 %v40
  %v198 = vunpack.c.l.b16 %v41
  %v199 = vunpack.c.l.b16 %v42
  %v200 = vunpack.c.l.b16 %v43
  %v201 = vunpack.c.l.b16 %v44
  %v202 = vunpack.c.l.b16 %v45
  %v203 = vunpack.c.l.b16 %v46
  %v204 = vunpack.c.l.b16 %v47
  %v205 = vunpack.c.l.b16 %v48
  %v206 = vunpack.c.l.b16 %v49
  %v207 = vunpack.c.l.b16 %v50
  %v208 = vunpack.c.l.b16 %v51
  %v209 = vunpack.c.l.b16 %v52
  %v210 = vunpack.c.l.b16 %v53
  %v211 = vunpack.c.l.b16 %v54
  %v212 = vunpack.c.l.b16 %v55
  %v213 = vunpack.c.l.b16 %v56
  %v214 = vunpack.c.l.b16 %v57
  %v215 = vunpack.c.l.b16 %v58
  %v216 = vunpack.c.l.b16 %v59
  %v217 = vunpack.c.l.b16 %v60
  %v218 = vunpack.c.l.b16 %v61
  %v219 = vunpack.c.l.b16 %v62
  %v220 = vunpack.c.l.b16 %v63
  %v221 = vunpack.c.l.b16 %v64
  %v222 = vunpack.c.l.b16 %v65
  %v223 = vunpack.c.l.b16 %v66
  %v224 = vunpack.c.l.b16 %v67
  %v225 = vunpack.c.l.b16 %v68
  %v226 = vunpack.c.l.b16 %v69
  %v227 = vunpack.c.l.b16 %v70
  %v228 = vunpack.c.l.b16 %v71
  %v229 = vunpack.c.l.b16 %v72
  %v230 = vunpack.c.l.b16 %v73
  %v231 = vunpack.c.l.b16 %v74
  %v232 = vunpack.c.l.b16 %v75
  %v233 = vunpack.c.l.b16 %v76
  %v234 = vunpack.c.l.b16 %v77
  %v235 = vunpack.c.l.b16 %v78
  %v236 = vunpack.c.l.b16 %v79
  %v237 = vunpack.c.l.b16 %v80
  %v238 = vunpack.c.l.b16 %v81
  %v239 = vunpack.c.l.b16 %v82
  %v240 = vunpack.c.l.b16 %v83
  %v241 = vunpack.c.l.b16 %v84
  %v242 = vunpack.c.l.b16 %v85
  %v243 = vunpack.c.l.b16 %v86
  %v244 = vunpack.c.l.b16 %v87
  %v245 = vunpack.c.l.b16 %v88
  %v246 = vunpack.c.l.b16 %v89
  %v247 = vunpack.c.l.b16 %v90
  %v248 = vunpack.c.l.b16 %v91
  %v249 = vunpack.c.l.b16 %v92
  %v250 = vunpack.c.l.b16 %v93
  %v251 = vpack.c.b16 %v188, %v187
  %v252 = vpack.c.b16 %v190, %v189
  %v253 = vpack.c.b16 %v192, %v191
  %v254 = vpack.c.b16 %v194, %v193
  %v255 = vpack.c.b16 %v196, %v195
  %v256 = vpack.c.b16 %v198, %v197
  %v257 = vpack.c.b16 %v200, %v199
  %v258 = vpack.c.b16 %v202, %v201
  %v259 = vpack.c.b16 %v204, %v203
  %v260 = vpack.c.b16 %v206, %v205
  %v261 = vpack.c.b16 %v208, %v207
  %v262 = vpack.c.b16 %v210, %v209
  %v263 = vpack.c.b16 %v212, %v211
  %v264 = vpack.c.b16 %v214, %v213
  %v265 = vpack.c.b16 %v216, %v215
  %v266 = vpack.c.b16 %v218, %v217
  %v267 = vpack.c.b16 %v220, %v219
  %v268 = vpack.c.b16 %v222, %v221
  %v269 = vpack.c.b16 %v224, %v223
  %v270 = vpack.c.b16 %v226, %v225
  %v271 = vpack.c.b16 %v228, %v227
  %v272 = vpack.c.b16 %v230, %v229
  %v273 = vpack.c.b16 %v232, %v231
  %v274 = vpack.c.b16 %v234, %v233
  %v275 = vpack.c.b16 %v236, %v235
  %v276 = vpack.c.b16 %v238, %v237
  %v277 = vpack.c.b16 %v240, %v239
  %v278 = vpack.c.b16 %v242, %v241
  %v279 = vpack.c.b16 %v244, %v243
  %v280 = vpack.c.b16 %v246, %v245
  %v281 = vpack.c.b16 %v248, %v247
  %v282 = vpack.c.b16 %v250, %v249
  %315 = vmatprep.subr.bf16.mxu0 0
  %316 = vmatpush1.bf16.msra.mxu0 %v251
  %317 = vmatprep.subr.bf16.mxu0 0
  %318 = vmatpush1.bf16.msra.mxu0 %v252
  %319 = vmatprep.subr.bf16.mxu0 0
  %320 = vmatpush1.bf16.msra.mxu0 %v253
  %321 = vmatprep.subr.bf16.mxu0 0
  %322 = vmatpush1.bf16.msra.mxu0 %v254
  %323 = vmatprep.subr.bf16.mxu0 0
  %324 = vmatpush1.bf16.msra.mxu0 %v255
  %325 = vmatprep.subr.bf16.mxu0 0
  %326 = vmatpush1.bf16.msra.mxu0 %v256
  %327 = vmatprep.subr.bf16.mxu0 0
  %328 = vmatpush1.bf16.msra.mxu0 %v257
  %329 = vmatprep.subr.bf16.mxu0 0
  %330 = vmatpush1.bf16.msra.mxu0 %v258
  %331 = vmatprep.subr.bf16.mxu0 0
  %332 = vmatpush1.bf16.msra.mxu0 %v259
  %333 = vmatprep.subr.bf16.mxu0 0
  %334 = vmatpush1.bf16.msra.mxu0 %v260
  %335 = vmatprep.subr.bf16.mxu0 0
  %336 = vmatpush1.bf16.msra.mxu0 %v261
  %337 = vmatprep.subr.bf16.mxu0 0
  %338 = vmatpush1.bf16.msra.mxu0 %v262
  %339 = vmatprep.subr.bf16.mxu0 0
  %340 = vmatpush1.bf16.msra.mxu0 %v263
  %341 = vmatprep.subr.bf16.mxu0 0
  %342 = vmatpush1.bf16.msra.mxu0 %v264
  %343 = vmatprep.subr.bf16.mxu0 0
  %344 = vmatpush1.bf16.msra.mxu0 %v265
  %345 = vmatprep.subr.bf16.mxu0 0
  %346 = vmatpush1.bf16.msra.mxu0 %v266
  %347 = vmatprep.mubr.bf16.mxu0 %v116
  %348 = vmatmul.mubr.bf16.gmra.mrb[0].mxu0 %v109
  %v349 = vpop.f32.mrb[0].mxu0
  %v350 = vadd.f32 0.0, %v349
  %v351 = vpop.f32.mrb[0].mxu0
  %v352 = vpop.f32.mrb[0].mxu0
  %v353 = vpop.f32.mrb[0].mxu0
  %354 = vdwg.mxu0
  %355 = vmatprep.subr.bf16.mxu0 0
  %356 = vmatpush1.bf16.msra.mxu0 %v267
  %357 = vmatprep.subr.bf16.mxu0 0
  %358 = vmatpush1.bf16.msra.mxu0 %v268
  %359 = vmatprep.subr.bf16.mxu0 0
  %360 = vmatpush1.bf16.msra.mxu0 %v269
  %361 = vmatprep.subr.bf16.mxu0 0
  %362 = vmatpush1.bf16.msra.mxu0 %v270
  %363 = vmatprep.subr.bf16.mxu0 0
  %364 = vmatpush1.bf16.msra.mxu0 %v271
  %365 = vmatprep.subr.bf16.mxu0 0
  %366 = vmatpush1.bf16.msra.mxu0 %v272
  %367 = vmatprep.subr.bf16.mxu0 0
  %368 = vmatpush1.bf16.msra.mxu0 %v273
  %369 = vmatprep.subr.bf16.mxu0 0
  %370 = vmatpush1.bf16.msra.mxu0 %v274
  %371 = vmatprep.subr.bf16.mxu0 0
  %372 = vmatpush1.bf16.msra.mxu0 %v275
  %373 = vmatprep.subr.bf16.mxu0 0
  %374 = vmatpush1.bf16.msra.mxu0 %v276
  %375 = vmatprep.subr.bf16.mxu0 0
  %376 = vmatpush1.bf16.msra.mxu0 %v277
  %377 = vmatprep.subr.bf16.mxu0 0
  %378 = vmatpush1.bf16.msra.mxu0 %v278
  %379 = vmatprep.subr.bf16.mxu0 0
  %380 = vmatpush1.bf16.msra.mxu0 %v279
  %381 = vmatprep.subr.bf16.mxu0 0
  %382 = vmatpush1.bf16.msra.mxu0 %v280
  %383 = vmatprep.subr.bf16.mxu0 0
  %384 = vmatpush1.bf16.msra.mxu0 %v281
  %385 = vmatprep.subr.bf16.mxu0 0
  %386 = vmatpush1.bf16.msra.mxu0 %v282
  %387 = vmatprep.mubr.bf16.mxu0 %v118
  %388 = vmatmul.mubr.bf16.gmra.mrb[0].mxu0 %v117
  %v389 = vpop.f32.mrb[0].mxu0
  %v390 = vadd.f32 %v350, %v389
  %v391 = vpop.f32.mrb[0].mxu0
  %v392 = vpop.f32.mrb[0].mxu0
  %v393 = vpop.f32.mrb[0].mxu0
  %394 = vdwg.mxu0
  %v395 = vadd.f32 %v28, %v390
  %396 = vst [vmem:[#allocation2] sm:$0x3] %v395
  // Predicated region
  $region26: #{cnn_forward.7} parent=0 // pred_check
    %p397 = pneg %p23
  $region27: #{cnn_forward.7} parent=0 // pred_check_branch
    %399 = sbr.rel (%p397) target = $region29
  $region28: #{cnn_forward.7} parent=0 // pred_region
    %v400 = vld [vmem:[#allocation2] sm:$0x3]
    %v401 = vld [vmem:[%s2] sm:$0x1]
    %v403 = vlaneseq
    %v404 = vshrl.u32 %v403, 7
    %v405 = vsub.s32 0, %v404
    %v406 = vrot.slane %v401, %v405
    %v408 = vadd.f32 %v400, %v406
    %v409 = vmax.f32 %v408, 0.0
    %v410 = vld [vmem:[%s3] sm:$0xff]
    %v411 = vld [vmem:[%s3 + $0x8] sm:$0xff]
    %v412 = vld [vmem:[%s3 + $0x10] sm:$0xff]
    %v413 = vld [vmem:[%s3 + $0x18] sm:$0xff]
    %v414 = vld [vmem:[%s3 + $0x20] sm:$0xff]
    %v415 = vld [vmem:[%s3 + $0x28] sm:$0xff]
    %v416 = vld [vmem:[%s3 + $0x30] sm:$0xff]
    %v417 = vld [vmem:[%s3 + $0x38] sm:$0xff]
    %v418 = vld [vmem:[%s3 + $0x40] sm:$0xff]
    %v419 = vld [vmem:[%s3 + $0x48] sm:$0xff]
    %v420 = vld [vmem:[%s3 + $0x50] sm:$0xff]
    %v421 = vld [vmem:[%s3 + $0x58] sm:$0xff]
    %v422 = vld [vmem:[%s3 + $0x60] sm:$0xff]
    %v423 = vld [vmem:[%s3 + $0x68] sm:$0xff]
    %v424 = vld [vmem:[%s3 + $0x70] sm:$0xff]
    %v425 = vld [vmem:[%s3 + $0x78] sm:$0xff]
    %v426 = vld [vmem:[#allocation3] sm:$0x1]
    %v428 = vlaneseq
    %v429 = vshrl.u32 %v428, 7
    %v430 = vsub.s32 0, %v429
    %v431 = vrot.slane %v426, %v430
    %433 = vmatprep.subr.mxu0 0.0
    %434 = vmatpush1.msra.mxu0 %v410
    %435 = vmatprep.subr.mxu0 0.0
    %436 = vmatpush1.msra.mxu0 %v411
    %437 = vmatprep.subr.mxu0 0.0
    %438 = vmatpush1.msra.mxu0 %v412
    %439 = vmatprep.subr.mxu0 0.0
    %440 = vmatpush1.msra.mxu0 %v413
    %441 = vmatprep.subr.mxu0 0.0
    %442 = vmatpush1.msra.mxu0 %v414
    %443 = vmatprep.subr.mxu0 0.0
    %444 = vmatpush1.msra.mxu0 %v415
    %445 = vmatprep.subr.mxu0 0.0
    %446 = vmatpush1.msra.mxu0 %v416
    %447 = vmatprep.subr.mxu0 0.0
    %448 = vmatpush1.msra.mxu0 %v417
    %449 = vmatprep.subr.mxu0 0.0
    %450 = vmatpush1.msra.mxu0 %v418
    %451 = vmatprep.subr.mxu0 0.0
    %452 = vmatpush1.msra.mxu0 %v419
    %453 = vmatprep.subr.mxu0 0.0
    %454 = vmatpush1.msra.mxu0 %v420
    %455 = vmatprep.subr.mxu0 0.0
    %456 = vmatpush1.msra.mxu0 %v421
    %457 = vmatprep.subr.mxu0 0.0
    %458 = vmatpush1.msra.mxu0 %v422
    %459 = vmatprep.subr.mxu0 0.0
    %460 = vmatpush1.msra.mxu0 %v423
    %461 = vmatprep.subr.mxu0 0.0
    %462 = vmatpush1.msra.mxu0 %v424
    %463 = vmatprep.subr.mxu0 0.0
    %464 = vmatpush1.msra.mxu0 %v425
    %465 = vmatprep.subr.mxu0 0.0
    %466 = vmatpush1.msra.mxu0 0.0
    %467 = vmatprep.subr.mxu0 0.0
    %468 = vmatpush1.msra.mxu0 0.0
    %469 = vmatprep.subr.mxu0 0.0
    %470 = vmatpush1.msra.mxu0 0.0
    %471 = vmatprep.subr.mxu0 0.0
    %472 = vmatpush1.msra.mxu0 0.0
    %473 = vmatprep.subr.mxu0 0.0
    %474 = vmatpush1.msra.mxu0 0.0
    %475 = vmatprep.subr.mxu0 0.0
    %476 = vmatpush1.msra.mxu0 0.0
    %477 = vmatprep.subr.mxu0 0.0
    %478 = vmatpush1.msra.mxu0 0.0
    %479 = vmatprep.subr.mxu0 0.0
    %480 = vmatpush1.msra.mxu0 0.0
    %481 = vmatprep.subr.mxu0 0.0
    %482 = vmatpush1.msra.mxu0 0.0
    %483 = vmatprep.subr.mxu0 0.0
    %484 = vmatpush1.msra.mxu0 0.0
    %485 = vmatprep.subr.mxu0 0.0
    %486 = vmatpush1.msra.mxu0 0.0
    %487 = vmatprep.subr.mxu0 0.0
    %488 = vmatpush1.msra.mxu0 0.0
    %489 = vmatprep.subr.mxu0 0.0
    %490 = vmatpush1.msra.mxu0 0.0
    %491 = vmatprep.subr.mxu0 0.0
    %492 = vmatpush1.msra.mxu0 0.0
    %493 = vmatprep.subr.mxu0 0.0
    %494 = vmatpush1.msra.mxu0 0.0
    %495 = vmatprep.subr.mxu0 0.0
    %496 = vmatpush1.msra.mxu0 0.0
    %497 = vmatprep.mubr.f32.mxu0 0.0
    %498 = vmatmul.mubr.f32.gmra.mrb[0].mxu0 %v409
    %v499 = vpop.f32.mrb[0].mxu0
    %v500 = vadd.f32 %v431, %v499
    %v501 = vpop.f32.mrb[0].mxu0
    %502 = vdwg.mxu0
    %v503 = vxor.u32 %v500, 2147483648
    %v504 = vmul.f32 %v503, 1.442695
    %v505 = vpow.pop %v504
    %v506 = vadd.f32 %v505, 1.0
    %v507 = vrcp.pop %v506
    %v508 = vmul.f32 1.0, %v507
    %vm509 = vcmask 1024
    %510 = vst.msk [vmem:[%s5] sm:$0x3] %vm509, %v508
  $region29: #{cnn_forward.7} parent=0 // pred_fallthru
    _
  // Predicated region
  $region30: #{cnn_forward.7} parent=0 // pred_check
    _
  $region31: #{cnn_forward.7} parent=0 // pred_check_branch
    %512 = sbr.rel (0) target = $region33
  $region32: #{cnn_forward.7} parent=0 // pred_region
    _
  $region33: #{cnn_forward.7} parent=0 // pred_fallthru
    _
  // Predicated region
  $region34: #{cnn_forward.7} parent=0 // pred_check
    _
  $region35: #{cnn_forward.7} parent=0 // pred_check_branch
    %514 = sbr.rel (0) target = $region37
  $region36: #{cnn_forward.7} parent=0 // pred_region
    _
  $region37: #{cnn_forward.7} parent=0 // pred_fallthru
    _

// kernel: cnn_forward.5
$region0: #{cnn_forward.5}
  #allocation0 [shape = 'u32[]', space=smem, size = 0x4, offset = 0x4, fixed_abs, tag = 'smem constant byte address 0x4 - core index']
  #allocation1 [shape = 'u32[144,128]{1,0:T(1,128)}', space=vmem, size = 0x12000, scoped, tag = 'internal scratch']
  %s0 = inlined_call_operand.vmem [shape: bf16[2,10,320], index: 0, kind: input, shape index: {}]
  %s1 = inlined_call_operand.vmem [shape: bf16[288,64], index: 1, kind: input, shape index: {}]
  %s2 = inlined_call_operand.vmem [shape: f32[1,64], index: 2, kind: input, shape index: {}]
  %s3 = inlined_call_operand.vmem [shape: bf16[2,6,384], index: 3, kind: output, shape index: {}]
  %s4 = sld [smem:[#allocation0]]
  $region45: #{cnn_forward.5} parent=0
    _
  %s6 = ssub.s32 1, %s4
  %s7 = scalar_select 0, %s6, %s4
  loop: start=0, step=1, limit=4
  $region2: #{cnn_forward.5} parent=0 // loop_pre_header
    _
  $region3: #{cnn_forward.5} parent=0 // loop_header
    %s9 = sphi 0, %s13
    %p10 = scmp.ge.s32.totalorder %s9, 4
    %s19 = sphi 0, %s21
    %s22 = sphi 0, %s19
    %s23 = sphi 0, %s22
    %s39 = sphi 0, %s23
    %s43 = sphi 0, %s43
    %s45 = sphi 0, %s43
    %s46 = sphi 0, %s45
    %s60 = sphi 0, %s46
    %s64 = sphi 0, %s64
    %s66 = sphi 0, %s64
    %s67 = sphi 0, %s66
    %s81 = sphi 0, %s67
    %s87 = sphi 0, %s89
    %s90 = sphi 0, %s87
    %s91 = sphi 0, %s90
    %s107 = sphi 0, %s91
  $region4: #{cnn_forward.5} parent=0 // loop_header_branch
    %12 = sbr.rel (%p10) target = $region8
  $region5: #{cnn_forward.5} parent=0 // loop_body
    %s14 = ssub.s32 %s9, 1
    %s15 = ssub.s32 %s9, 2
    %s16 = sadd.s32 %s9, 1
    %s17 = ssub.s32 %s9, %s16
    %p18 = scmp.eq.s32.totalorder %s17, 0
    %s20 = sadd.s32 %s19, 1
    %s21 = scalar_select %p18, %s19, %s20
    %p24 = pneg %p18
    %p25 = scmp.eq.s32.totalorder %s9, 1
    %p26 = por %p24, %p25
    %p27 = scmp.ne.s32.totalorder %s19, %s22
    %p28 = scmp.eq.s32.totalorder %s9, 0
    %p29 = por %p27, %p28
    %p30 = scmp.ne.s32.totalorder %s19, %s22
    %p31 = scmp.eq.s32.totalorder %s14, 1
    %p32 = por %p30, %p31
    %p33 = scmp.ne.s32.totalorder %s22, %s23
    %p34 = scmp.eq.s32.totalorder %s14, 0
    %p35 = por %p33, %p34
    %p36 = scmp.ne.s32.totalorder %s22, %s23
    %p37 = scmp.eq.s32.totalorder %s15, 1
    %p38 = por %p36, %p37
    %p40 = scmp.ne.s32.totalorder %s23, %s39
    %p41 = scmp.eq.s32.totalorder %s15, 0
    %p42 = por %p40, %p41
    %s44 = sadd.s32 %s43, 1
    %p47 = scmp.eq.s32.totalorder %s9, 1
    %p48 = scmp.ne.s32.totalorder %s43, %s45
    %p49 = scmp.eq.s32.totalorder %s9, 0
    %p50 = por %p48, %p49
    %p51 = scmp.ne.s32.totalorder %s43, %s45
    %p52 = scmp.eq.s32.totalorder %s14, 1
    %p53 = por %p51, %p52
    %p54 = scmp.ne.s32.totalorder %s45, %s46
    %p55 = scmp.eq.s32.totalorder %s14, 0
    %p56 = por %p54, %p55
    %p57 = scmp.ne.s32.totalorder %s45, %s46
    %p58 = scmp.eq.s32.totalorder %s15, 1
    %p59 = por %p57, %p58
    %p61 = scmp.ne.s32.totalorder %s46, %s60
    %p62 = scmp.eq.s32.totalorder %s15, 0
    %p63 = por %p61, %p62
    %s65 = sadd.s32 %s64, 1
    %p68 = scmp.eq.s32.totalorder %s9, 1
    %p69 = scmp.ne.s32.totalorder %s64, %s66
    %p70 = scmp.eq.s32.totalorder %s9, 0
    %p71 = por %p69, %p70
    %p72 = scmp.ne.s32.totalorder %s64, %s66
    %p73 = scmp.eq.s32.totalorder %s14, 1
    %p74 = por %p72, %p73
    %p75 = scmp.ne.s32.totalorder %s66, %s67
    %p76 = scmp.eq.s32.totalorder %s14, 0
    %p77 = por %p75, %p76
    %p78 = scmp.ne.s32.totalorder %s66, %s67
    %p79 = scmp.eq.s32.totalorder %s15, 1
    %p80 = por %p78, %p79
    %p82 = scmp.ne.s32.totalorder %s67, %s81
    %p83 = scmp.eq.s32.totalorder %s15, 0
    %p84 = por %p82, %p83
    %s85 = ssub.s32 %s9, %s16
    %p86 = scmp.eq.s32.totalorder %s85, 0
    %s88 = sadd.s32 %s87, 1
    %s89 = scalar_select %p86, %s87, %s88
    %p92 = pneg %p86
    %p93 = scmp.eq.s32.totalorder %s9, 1
    %p94 = por %p92, %p93
    %p95 = scmp.ne.s32.totalorder %s87, %s90
    %p96 = scmp.eq.s32.totalorder %s9, 0
    %p97 = por %p95, %p96
    %p98 = scmp.ne.s32.totalorder %s87, %s90
    %p99 = scmp.eq.s32.totalorder %s14, 1
    %p100 = por %p98, %p99
    %p101 = scmp.ne.s32.totalorder %s90, %s91
    %p102 = scmp.eq.s32.totalorder %s14, 0
    %p103 = por %p101, %p102
    %p104 = scmp.ne.s32.totalorder %s90, %s91
    %p105 = scmp.eq.s32.totalorder %s15, 1
    %p106 = por %p104, %p105
    %p108 = scmp.ne.s32.totalorder %s91, %s107
    %p109 = scmp.eq.s32.totalorder %s15, 0
    %p110 = por %p108, %p109
    %p111 = scmp.le.s32.totalorder 1, %s9
    %p112 = scmp.lt.s32.totalorder %s9, 3
    %p113 = pnand %p111, %p112
    %p114 = pneg %p113
    // Predicated region
    $region9: #{cnn_forward.5} parent=5 // pred_check
      _
    $region10: #{cnn_forward.5} parent=5 // pred_check_branch
      %116 = sbr.rel (%p113) target = $region12
    $region11: #{cnn_forward.5} parent=5 // pred_region
      %s117 = ssub.s32 %s9, 1
      // Predicated region
      $region13: #{cnn_forward.5} parent=11 // pred_check
        %p118 = pneg %p56
      $region14: #{cnn_forward.5} parent=11 // pred_check_branch
        %120 = sbr.rel (%p118) target = $region16
      $region15: #{cnn_forward.5} parent=11 // pred_region
        _
      $region16: #{cnn_forward.5} parent=11 // pred_fallthru
        _
      // Predicated region
      $region17: #{cnn_forward.5} parent=11 // pred_check
        %p121 = pneg %p77
      $region18: #{cnn_forward.5} parent=11 // pred_check_branch
        %123 = sbr.rel (%p121) target = $region20
      $region19: #{cnn_forward.5} parent=11 // pred_region
        _
      $region20: #{cnn_forward.5} parent=11 // pred_fallthru
        _
    $region12: #{cnn_forward.5} parent=5 // pred_fallthru
      _
    %p124 = scmp.lt.s32.totalorder %s9, 2
    // Predicated region
    $region21: #{cnn_forward.5} parent=5 // pred_check
      %p125 = pneg %p124
    $region22: #{cnn_forward.5} parent=5 // pred_check_branch
      %127 = sbr.rel (%p125) target = $region24
    $region23: #{cnn_forward.5} parent=5 // pred_region
      // Predicated region
      $region25: #{cnn_forward.5} parent=23 // pred_check
        %p128 = pneg %p29
      $region26: #{cnn_forward.5} parent=23 // pred_check_branch
        %130 = sbr.rel (%p128) target = $region28
      $region27: #{cnn_forward.5} parent=23 // pred_region
        %p131 = scmp.lt.s32.totalorder %s9, 1
        %s132 = scalar_select %p131, %s9, 1
        %s133 = smul.addr %s132, 6
        %s134 = smul.addr %s133, 4
        %s135 = scalar_lea.vmem %s0, %s134
      $region28: #{cnn_forward.5} parent=23 // pred_fallthru
        _
    $region24: #{cnn_forward.5} parent=5 // pred_fallthru
      _
    %p136 = scmp.le.s32.totalorder 1, %s9
    %p137 = scmp.lt.s32.totalorder %s9, 3
    %p138 = pnand %p136, %p137
    %p139 = pneg %p138
    // Predicated region
    $region29: #{cnn_forward.5} parent=5 // pred_check
      _
    $region30: #{cnn_forward.5} parent=5 // pred_check_branch
      %141 = sbr.rel (%p138) target = $region32
    $region31: #{cnn_forward.5} parent=5 // pred_region
      %s142 = ssub.s32 %s9, 1
      %p143 = scmp.lt.s32.totalorder %s14, 1
      %s144 = scalar_select %p143, %s14, 1
      %s145 = smul.addr %s144, 6
      %s146 = smul.addr %s145, 4
      %s147 = scalar_lea.vmem %s0, %s146
      %p148 = pneg %p35
      %p149 = pneg %p32
      %p150 = pneg %p56
      %p151 = pneg %p53
      %p152 = pneg %p77
      %p153 = pneg %p74
      %p154 = pneg %p103
      %p155 = pneg %p100
      %p156 = scmp.lt.s32.totalorder %s14, 1
      %s157 = scalar_select %p156, %s14, 1
      %s158 = smul.addr %s157, 3
      %s159 = smul.addr %s158, 4
      %s160 = scalar_lea.vmem %s3, %s159
      %p161 = scmp.lt.s32.totalorder %s14, 1
      %s162 = scalar_select %p161, %s14, 1
      %s163 = smul.addr %s162, 6
      %s164 = smul.addr %s163, 4
      %s165 = scalar_lea.vmem %s0, %s164
      %p166 = scmp.lt.s32.totalorder %s14, 1
      %s167 = scalar_select %p166, %s14, 1
      %s168 = smul.addr %s167, 3
      %s169 = smul.addr %s168, 4
      %s170 = scalar_lea.vmem %s3, %s169
      %vm172 = vcmask 1040384
      %vm173 = vsmask.f32 256
      %vm174 = vmand %vm172, %vm173
      %vm175 = vcmask 1044484
      %vm176 = vsmask.f32 4352
      %vm177 = vmand %vm175, %vm176
      %vm178 = vmor %vm177, %vm174
      %v179 = vld [vmem:[%s170] sm:$0x11]
      %v180 = vsel %vm178, 0, %v179
      %181 = vst [vmem:[%s170] sm:$0x11] %v180
      %v182 = vld [vmem:[%s170 + $0x8] sm:$0x1]
      %v183 = vsel %vm174, 0, %v182
      %184 = vst [vmem:[%s170 + $0x8] sm:$0x1] %v183
      %vm185 = vcmask 1042434
      %vm186 = vsmask.f32 7946
      %vm187 = vmand %vm185, %vm186
      %vm188 = vcmask 1046534
      %vm189 = vsmask.f32 7962
      %vm190 = vmand %vm188, %vm189
      %vm191 = vmor %vm190, %vm187
      %v192 = vld [vmem:[%s170] sm:$0x44]
      %v193 = vsel %vm191, 0, %v192
      %194 = vst [vmem:[%s170] sm:$0x44] %v193
      %v195 = vld [vmem:[%s170 + $0x8] sm:$0x4]
      %v196 = vsel %vm187, 0, %v195
      %197 = vst [vmem:[%s170 + $0x8] sm:$0x4] %v196
      %vm198 = vcmask 518144
      %199 = vst.msk [vmem:[%s170] sm:$0x7] %vm198, 0
      %vm200 = vcmask 1042944
      %201 = vst.msk [vmem:[%s170 + $0x8] sm:$0x7] %vm200, 0
      %v202 = vld [vmem:[%s165] sm:$0xff]
      %v203 = vld [vmem:[%s165 + $0x8] sm:$0xf]
      %v204 = vld [vmem:[%s165 + $0xc] sm:$0x11]
      %v205 = vld [vmem:[%s165 + $0x14] sm:$0x1]
      %v208 = vrot.slane %v202, 4
      %v209 = vrot.slane %v204, 4
      %212 = vrot.lane.b32.xlu0 %v202, 96
      %v213 = vpop.permute.xlu0 %212
      %214 = vrot.lane.b32.xlu0 %v204, 96
      %v215 = vpop.permute.xlu0 %214
      %v216 = vrot.slane %v213, 4
      %v217 = vrot.slane %v215, 4
      %220 = vrot.lane.b32.xlu0 %v202, 64
      %v221 = vpop.permute.xlu0 %220
      %222 = vrot.lane.b32.xlu0 %v204, 64
      %v223 = vpop.permute.xlu0 %222
      %v224 = vrot.slane %v221, 4
      %v225 = vrot.slane %v223, 4
      %228 = vrot.lane.b32.xlu0 %v202, 32
      %v229 = vpop.permute.xlu0 %228
      %230 = vrot.lane.b32.xlu0 %v204, 32
      %v231 = vpop.permute.xlu0 %230
      %v232 = vrot.slane %v229, 4
      %v233 = vrot.slane %v231, 4
      %244 = vrot.lane.b32.xlu0 %v203, 96
      %v245 = vpop.permute.xlu0 %244
      %246 = vrot.lane.b32.xlu0 %v205, 96
      %v247 = vpop.permute.xlu0 %246
      %v248 = vcombine.low %v202, %v208
      %v250 = vunpack.c.l.s4 1983009808
      %v251 = vunpack.c.0.s8 %v250
      %v252 = vlaneseq
      %v253 = vshrl.u32 %v252, 7
      %v254 = vsub.s32 %v251, %v253
      %v255 = vrot.slane %v248, %v254
      %v256 = vcombine.low %v221, %v224
      %v258 = vunpack.c.l.s4 1983009808
      %v259 = vunpack.c.0.s8 %v258
      %v260 = vlaneseq
      %v261 = vshrl.u32 %v260, 7
      %v262 = vsub.s32 %v259, %v261
      %v263 = vrot.slane %v256, %v262
      %v264 = vcombine.low %v255, %v263
      %v265 = vcombine.high %v255, %v263
      %v267 = vunpack.c.l.s4 1934713408
      %v268 = vunpack.c.0.s8 %v267
      %v269 = vlaneseq
      %v270 = vshrl.u32 %v269, 7
      %v271 = vsub.s32 %v268, %v270
      %v272 = vrot.slane %v264, %v271
      %v274 = vunpack.c.l.s4 1934713408
      %v275 = vunpack.c.0.s8 %v274
      %v276 = vlaneseq
      %v277 = vshrl.u32 %v276, 7
      %v278 = vsub.s32 %v275, %v277
      %v279 = vrot.slane %v265, %v278
      %v280 = vcombine.high %v272, 0
      %v281 = vcombine.high %v279, 0
      %v282 = vcombine.low %v213, %v216
      %v284 = vunpack.c.l.s4 1983009808
      %v285 = vunpack.c.0.s8 %v284
      %v286 = vlaneseq
      %v287 = vshrl.u32 %v286, 7
      %v288 = vsub.s32 %v285, %v287
      %v289 = vrot.slane %v282, %v288
      %v290 = vcombine.low %v229, %v232
      %v292 = vunpack.c.l.s4 1983009808
      %v293 = vunpack.c.0.s8 %v292
      %v294 = vlaneseq
      %v295 = vshrl.u32 %v294, 7
      %v296 = vsub.s32 %v293, %v295
      %v297 = vrot.slane %v290, %v296
      %v298 = vcombine.low %v289, %v297
      %v299 = vcombine.high %v289, %v297
      %v301 = vunpack.c.l.s4 1934713408
      %v302 = vunpack.c.0.s8 %v301
      %v303 = vlaneseq
      %v304 = vshrl.u32 %v303, 7
      %v305 = vsub.s32 %v302, %v304
      %v306 = vrot.slane %v298, %v305
      %v308 = vunpack.c.l.s4 1934713408
      %v309 = vunpack.c.0.s8 %v308
      %v310 = vlaneseq
      %v311 = vshrl.u32 %v310, 7
      %v312 = vsub.s32 %v309, %v311
      %v313 = vrot.slane %v299, %v312
      %v314 = vcombine.high %v306, 0
      %v315 = vcombine.high %v313, 0
      %v317 = vunpack.c.l.s4 1983009808
      %v318 = vunpack.c.0.s8 %v317
      %v319 = vlaneseq
      %v320 = vshrl.u32 %v319, 7
      %v321 = vsub.s32 %v318, %v320
      %v322 = vrot.slane %v203, %v321
      %v323 = vcombine.high %v322, 0
      %v325 = vunpack.c.l.s4 1934713408
      %v326 = vunpack.c.0.s8 %v325
      %v327 = vlaneseq
      %v328 = vshrl.u32 %v327, 7
      %v329 = vsub.s32 %v326, %v328
      %v330 = vrot.slane %v322, %v329
      %v332 = vunpack.c.l.s4 1934713408
      %v333 = vunpack.c.0.s8 %v332
      %v334 = vlaneseq
      %v335 = vshrl.u32 %v334, 7
      %v336 = vsub.s32 %v333, %v335
      %v337 = vrot.slane %v323, %v336
      %v338 = vcombine.high %v330, 0
      %v339 = vcombine.high %v337, 0
      %v342 = vunpack.c.l.s4 1983009808
      %v343 = vunpack.c.0.s8 %v342
      %v344 = vlaneseq
      %v345 = vshrl.u32 %v344, 7
      %v346 = vsub.s32 %v343, %v345
      %v347 = vrot.slane %v245, %v346
      %v348 = vcombine.high %v347, 0
      %v350 = vunpack.c.l.s4 1934713408
      %v351 = vunpack.c.0.s8 %v350
      %v352 = vlaneseq
      %v353 = vshrl.u32 %v352, 7
      %v354 = vsub.s32 %v351, %v353
      %v355 = vrot.slane %v347, %v354
      %v357 = vunpack.c.l.s4 1934713408
      %v358 = vunpack.c.0.s8 %v357
      %v359 = vlaneseq
      %v360 = vshrl.u32 %v359, 7
      %v361 = vsub.s32 %v358, %v360
      %v362 = vrot.slane %v348, %v361
      %v363 = vcombine.high %v355, 0
      %v364 = vcombine.high %v362, 0
      %v365 = vcombine.low %v204, %v209
      %v367 = vunpack.c.l.s4 1983009808
      %v368 = vunpack.c.0.s8 %v367
      %v369 = vlaneseq
      %v370 = vshrl.u32 %v369, 7
      %v371 = vsub.s32 %v368, %v370
      %v372 = vrot.slane %v365, %v371
      %v373 = vcombine.low %v223, %v225
      %v375 = vunpack.c.l.s4 1983009808
      %v376 = vunpack.c.0.s8 %v375
      %v377 = vlaneseq
      %v378 = vshrl.u32 %v377, 7
      %v379 = vsub.s32 %v376, %v378
      %v380 = vrot.slane %v373, %v379
      %v381 = vcombine.low %v372, %v380
      %v383 = vunpack.c.l.s4 1934713408
      %v384 = vunpack.c.0.s8 %v383
      %v385 = vlaneseq
      %v386 = vshrl.u32 %v385, 7
      %v387 = vsub.s32 %v384, %v386
      %v388 = vrot.slane %v381, %v387
      %v389 = vcombine.low %v215, %v217
      %v391 = vunpack.c.l.s4 1983009808
      %v392 = vunpack.c.0.s8 %v391
      %v393 = vlaneseq
      %v394 = vshrl.u32 %v393, 7
      %v395 = vsub.s32 %v392, %v394
      %v396 = vrot.slane %v389, %v395
      %v397 = vcombine.low %v231, %v233
      %v399 = vunpack.c.l.s4 1983009808
      %v400 = vunpack.c.0.s8 %v399
      %v401 = vlaneseq
      %v402 = vshrl.u32 %v401, 7
      %v403 = vsub.s32 %v400, %v402
      %v404 = vrot.slane %v397, %v403
      %v405 = vcombine.low %v396, %v404
      %v407 = vunpack.c.l.s4 1934713408
      %v408 = vunpack.c.0.s8 %v407
      %v409 = vlaneseq
      %v410 = vshrl.u32 %v409, 7
      %v411 = vsub.s32 %v408, %v410
      %v412 = vrot.slane %v405, %v411
      %v415 = vpack.i.b16 %v306, %v272
      %v416 = vshrl.u32 %v272, 16
      %v417 = vshrl.u32 %v306, 16
      %v418 = vpack.i.b16 %v417, %v416
      %v421 = vpack.i.b16 %v314, %v280
      %v422 = vshrl.u32 %v280, 16
      %v423 = vshrl.u32 %v314, 16
      %v424 = vpack.i.b16 %v423, %v422
      %v427 = vpack.i.b16 %v313, %v279
      %v428 = vshrl.u32 %v279, 16
      %v429 = vshrl.u32 %v313, 16
      %v430 = vpack.i.b16 %v429, %v428
      %v433 = vpack.i.b16 %v315, %v281
      %v434 = vshrl.u32 %v281, 16
      %v435 = vshrl.u32 %v315, 16
      %v436 = vpack.i.b16 %v435, %v434
      %v439 = vpack.i.b16 %v412, %v388
      %v440 = vshrl.u32 %v388, 16
      %v441 = vshrl.u32 %v412, 16
      %v442 = vpack.i.b16 %v441, %v440
      %v445 = vpack.i.b16 %v355, %v330
      %v446 = vshrl.u32 %v330, 16
      %v447 = vshrl.u32 %v355, 16
      %v448 = vpack.i.b16 %v447, %v446
      %v451 = vpack.i.b16 %v363, %v338
      %v452 = vshrl.u32 %v338, 16
      %v453 = vshrl.u32 %v363, 16
      %v454 = vpack.i.b16 %v453, %v452
      %v457 = vpack.i.b16 %v362, %v337
      %v458 = vshrl.u32 %v337, 16
      %v459 = vshrl.u32 %v362, 16
      %v460 = vpack.i.b16 %v459, %v458
      %v463 = vpack.i.b16 %v364, %v339
      %v464 = vshrl.u32 %v339, 16
      %v465 = vshrl.u32 %v364, 16
      %v466 = vpack.i.b16 %v465, %v464
      %v469 = vpack.i.b16 %v247, %v205
      %v470 = vshrl.u32 %v205, 16
      %v471 = vshrl.u32 %v247, 16
      %v472 = vpack.i.b16 %v471, %v470
      %v473 = vunpack.c.l.b16 %v415
      %v474 = vunpack.c.l.b16 %v445
      %v475 = vunpack.c.l.b16 %v418
      %v476 = vunpack.c.l.b16 %v448
      %v477 = vunpack.c.l.b16 %v421
      %v478 = vunpack.c.l.b16 %v451
      %v479 = vunpack.c.l.b16 %v424
      %v480 = vunpack.c.l.b16 %v454
      %v481 = vunpack.c.l.b16 %v427
      %v482 = vunpack.c.l.b16 %v457
      %v483 = vunpack.c.l.b16 %v430
      %v484 = vunpack.c.l.b16 %v460
      %v485 = vunpack.c.l.b16 %v433
      %v486 = vunpack.c.l.b16 %v463
      %v487 = vunpack.c.l.b16 %v436
      %v488 = vunpack.c.l.b16 %v466
      %v489 = vpack.c.b16 %v474, %v473
      %v490 = vpack.c.b16 %v476, %v475
      %v491 = vpack.c.b16 %v478, %v477
      %v492 = vpack.c.b16 %v480, %v479
      %v493 = vpack.c.b16 %v482, %v481
      %v494 = vpack.c.b16 %v484, %v483
      %v495 = vpack.c.b16 %v486, %v485
      %v496 = vpack.c.b16 %v488, %v487
      %v498 = vshrl.u32 %v489, 16
      %v500 = vshll.u32 %v489, 16
      %v502 = vrot.slane %v500, 1
      %v503 = vor.u32 %v498, %v502
      %v505 = vshrl.u32 %v490, 16
      %v507 = vshll.u32 %v490, 16
      %v509 = vrot.slane %v507, 1
      %v510 = vor.u32 %v505, %v509
      %v512 = vshrl.u32 %v491, 16
      %v514 = vshll.u32 %v491, 16
      %v516 = vrot.slane %v514, 1
      %v517 = vor.u32 %v512, %v516
      %v519 = vshrl.u32 %v492, 16
      %v521 = vshll.u32 %v492, 16
      %v523 = vrot.slane %v521, 1
      %v524 = vor.u32 %v519, %v523
      %v526 = vshrl.u32 %v493, 16
      %v528 = vshll.u32 %v493, 16
      %v530 = vrot.slane %v528, 1
      %v531 = vor.u32 %v526, %v530
      %v533 = vshrl.u32 %v494, 16
      %v535 = vshll.u32 %v494, 16
      %v537 = vrot.slane %v535, 1
      %v538 = vor.u32 %v533, %v537
      %v540 = vshrl.u32 %v495, 16
      %v542 = vshll.u32 %v495, 16
      %v544 = vrot.slane %v542, 1
      %v545 = vor.u32 %v540, %v544
      %v547 = vshrl.u32 %v496, 16
      %v549 = vshll.u32 %v496, 16
      %v551 = vrot.slane %v549, 1
      %v552 = vor.u32 %v547, %v551
      %553 = vrot.lane.b32.xlu0 %v503, 32
      %v554 = vpop.permute.xlu0 %553
      %555 = vrot.lane.b32.xlu0 %v510, 32
      %v556 = vpop.permute.xlu0 %555
      %557 = vrot.lane.b32.xlu0 %v517, 32
      %v558 = vpop.permute.xlu0 %557
      %559 = vrot.lane.b32.xlu0 %v524, 32
      %v560 = vpop.permute.xlu0 %559
      %561 = vrot.lane.b32.xlu0 %v531, 32
      %v562 = vpop.permute.xlu0 %561
      %563 = vrot.lane.b32.xlu0 %v538, 32
      %v564 = vpop.permute.xlu0 %563
      %565 = vrot.lane.b32.xlu0 %v545, 32
      %v566 = vpop.permute.xlu0 %565
      %567 = vrot.lane.b32.xlu0 %v552, 32
      %v568 = vpop.permute.xlu0 %567
      %v569 = vrot.slane %v489, 1
      %v570 = vrot.slane %v490, 1
      %v571 = vrot.slane %v491, 1
      %v572 = vrot.slane %v492, 1
      %v573 = vrot.slane %v493, 1
      %v574 = vrot.slane %v494, 1
      %v575 = vrot.slane %v495, 1
      %v576 = vrot.slane %v496, 1
      %577 = vrot.lane.b32.xlu0 %v569, 64
      %v578 = vpop.permute.xlu0 %577
      %579 = vrot.lane.b32.xlu0 %v570, 64
      %v580 = vpop.permute.xlu0 %579
      %581 = vrot.lane.b32.xlu0 %v571, 64
      %v582 = vpop.permute.xlu0 %581
      %583 = vrot.lane.b32.xlu0 %v572, 64
      %v584 = vpop.permute.xlu0 %583
      %585 = vrot.lane.b32.xlu0 %v573, 64
      %v586 = vpop.permute.xlu0 %585
      %587 = vrot.lane.b32.xlu0 %v574, 64
      %v588 = vpop.permute.xlu0 %587
      %589 = vrot.lane.b32.xlu0 %v575, 64
      %v590 = vpop.permute.xlu0 %589
      %591 = vrot.lane.b32.xlu0 %v576, 64
      %v592 = vpop.permute.xlu0 %591
      %v593 = vunpack.c.l.b16 %v439
      %v594 = vpack.c.b16 %v475, %v475
      %v595 = vpack.c.b16 %v477, %v477
      %v596 = vpack.c.b16 %v479, %v479
      %v597 = vpack.c.b16 %v481, %v481
      %v598 = vpack.c.b16 %v483, %v483
      %v599 = vpack.c.b16 %v485, %v485
      %v600 = vpack.c.b16 %v487, %v487
      %v601 = vpack.c.b16 %v593, %v593
      %602 = vrot.lane.b32.xlu0 %v594, 96
      %v603 = vpop.permute.xlu0 %602
      %604 = vrot.lane.b32.xlu0 %v595, 96
      %v605 = vpop.permute.xlu0 %604
      %606 = vrot.lane.b32.xlu0 %v596, 96
      %v607 = vpop.permute.xlu0 %606
      %608 = vrot.lane.b32.xlu0 %v597, 96
      %v609 = vpop.permute.xlu0 %608
      %610 = vrot.lane.b32.xlu0 %v598, 96
      %v611 = vpop.permute.xlu0 %610
      %612 = vrot.lane.b32.xlu0 %v599, 96
      %v613 = vpop.permute.xlu0 %612
      %614 = vrot.lane.b32.xlu0 %v600, 96
      %v615 = vpop.permute.xlu0 %614
      %616 = vrot.lane.b32.xlu0 %v601, 96
      %v617 = vpop.permute.xlu0 %616
      %v618 = vunpack.c.l.b16 %v469
      %v619 = vpack.c.b16 %v618, %v593
      %v621 = vshrl.u32 %v619, 16
      %v623 = vshll.u32 %v619, 16
      %v625 = vrot.slane %v623, 1
      %v626 = vor.u32 %v621, %v625
      %v627 = vrot.slane %v619, 1
      %628 = vrot.lane.b32.xlu0 %v570, 32
      %v629 = vpop.permute.xlu0 %628
      %630 = vrot.lane.b32.xlu0 %v571, 32
      %v631 = vpop.permute.xlu0 %630
      %632 = vrot.lane.b32.xlu0 %v572, 32
      %v633 = vpop.permute.xlu0 %632
      %634 = vrot.lane.b32.xlu0 %v573, 32
      %v635 = vpop.permute.xlu0 %634
      %636 = vrot.lane.b32.xlu0 %v574, 32
      %v637 = vpop.permute.xlu0 %636
      %638 = vrot.lane.b32.xlu0 %v575, 32
      %v639 = vpop.permute.xlu0 %638
      %640 = vrot.lane.b32.xlu0 %v576, 32
      %v641 = vpop.permute.xlu0 %640
      %642 = vrot.lane.b32.xlu0 %v627, 32
      %v643 = vpop.permute.xlu0 %642
      %v644 = vunpack.c.l.b16 %v442
      %v645 = vpack.c.b16 %v644, %v644
      %646 = vrot.lane.b32.xlu0 %v595, 64
      %v647 = vpop.permute.xlu0 %646
      %648 = vrot.lane.b32.xlu0 %v596, 64
      %v649 = vpop.permute.xlu0 %648
      %650 = vrot.lane.b32.xlu0 %v597, 64
      %v651 = vpop.permute.xlu0 %650
      %652 = vrot.lane.b32.xlu0 %v598, 64
      %v653 = vpop.permute.xlu0 %652
      %654 = vrot.lane.b32.xlu0 %v599, 64
      %v655 = vpop.permute.xlu0 %654
      %656 = vrot.lane.b32.xlu0 %v600, 64
      %v657 = vpop.permute.xlu0 %656
      %658 = vrot.lane.b32.xlu0 %v601, 64
      %v659 = vpop.permute.xlu0 %658
      %660 = vrot.lane.b32.xlu0 %v645, 64
      %v661 = vpop.permute.xlu0 %660
      %v662 = vunpack.c.l.b16 %v472
      %v663 = vpack.c.b16 %v662, %v644
      %v665 = vshrl.u32 %v663, 16
      %v667 = vshll.u32 %v663, 16
      %v669 = vrot.slane %v667, 1
      %v670 = vor.u32 %v665, %v669
      %671 = vrot.lane.b32.xlu0 %v517, 96
      %v672 = vpop.permute.xlu0 %671
      %673 = vrot.lane.b32.xlu0 %v524, 96
      %v674 = vpop.permute.xlu0 %673
      %675 = vrot.lane.b32.xlu0 %v531, 96
      %v676 = vpop.permute.xlu0 %675
      %677 = vrot.lane.b32.xlu0 %v538, 96
      %v678 = vpop.permute.xlu0 %677
      %679 = vrot.lane.b32.xlu0 %v545, 96
      %v680 = vpop.permute.xlu0 %679
      %681 = vrot.lane.b32.xlu0 %v552, 96
      %v682 = vpop.permute.xlu0 %681
      %683 = vrot.lane.b32.xlu0 %v626, 96
      %v684 = vpop.permute.xlu0 %683
      %685 = vrot.lane.b32.xlu0 %v670, 96
      %v686 = vpop.permute.xlu0 %685
      %v687 = vrot.slane %v663, 1
      %vm688 = vcmask 261120
      %v691 = vsel %vm688, %v415, %v554
      %v694 = vsel %vm688, %v418, %v556
      %v697 = vsel %vm688, %v421, %v558
      %v700 = vsel %vm688, %v424, %v560
      %v703 = vsel %vm688, %v427, %v562
      %v706 = vsel %vm688, %v430, %v564
      %v709 = vsel %vm688, %v433, %v566
      %v712 = vsel %vm688, %v436, %v568
      %vm713 = vcmask 523264
      %v715 = vsel %vm713, %v691, %v578
      %v717 = vsel %vm713, %v694, %v580
      %v719 = vsel %vm713, %v697, %v582
      %v721 = vsel %vm713, %v700, %v584
      %v723 = vsel %vm713, %v703, %v586
      %v725 = vsel %vm713, %v706, %v588
      %v727 = vsel %vm713, %v709, %v590
      %v729 = vsel %vm713, %v712, %v592
      %vm730 = vcmask 785408
      %v732 = vsel %vm730, %v715, %v603
      %v734 = vsel %vm730, %v717, %v605
      %v736 = vsel %vm730, %v719, %v607
      %v738 = vsel %vm730, %v721, %v609
      %v740 = vsel %vm730, %v723, %v611
      %v742 = vsel %vm730, %v725, %v613
      %v744 = vsel %vm730, %v727, %v615
      %v746 = vsel %vm730, %v729, %v617
      %v749 = vsel %vm688, %v510, %v629
      %v752 = vsel %vm688, %v517, %v631
      %v755 = vsel %vm688, %v524, %v633
      %v758 = vsel %vm688, %v531, %v635
      %v761 = vsel %vm688, %v538, %v637
      %v764 = vsel %vm688, %v545, %v639
      %v767 = vsel %vm688, %v552, %v641
      %v770 = vsel %vm688, %v626, %v643
      %v772 = vsel %vm713, %v749, %v647
      %v774 = vsel %vm713, %v752, %v649
      %v776 = vsel %vm713, %v755, %v651
      %v778 = vsel %vm713, %v758, %v653
      %v780 = vsel %vm713, %v761, %v655
      %v782 = vsel %vm713, %v764, %v657
      %v784 = vsel %vm713, %v767, %v659
      %v786 = vsel %vm713, %v770, %v661
      %v788 = vsel %vm730, %v772, %v672
      %v790 = vsel %vm730, %v774, %v674
      %v792 = vsel %vm730, %v776, %v676
      %v794 = vsel %vm730, %v778, %v678
      %v796 = vsel %vm730, %v780, %v680
      %v798 = vsel %vm730, %v782, %v682
      %v800 = vsel %vm730, %v784, %v684
      %v802 = vsel %vm730, %v786, %v686
      %v819 = vunpack.c.l.b16 %v732
      %v820 = vunpack.c.l.b16 %v788
      %v821 = vunpack.c.l.b16 %v571
      %v822 = vunpack.c.l.b16 %v734
      %v823 = vunpack.c.l.b16 %v790
      %v824 = vunpack.c.l.b16 %v572
      %v825 = vunpack.c.l.b16 %v736
      %v826 = vunpack.c.l.b16 %v792
      %v827 = vunpack.c.l.b16 %v573
      %v828 = vunpack.c.l.b16 %v738
      %v829 = vunpack.c.l.b16 %v794
      %v830 = vunpack.c.l.b16 %v574
      %v831 = vunpack.c.l.b16 %v740
      %v832 = vunpack.c.l.b16 %v796
      %v833 = vunpack.c.l.b16 %v575
      %v834 = vunpack.c.l.b16 %v742
      %v835 = vunpack.c.l.b16 %v798
      %v836 = vunpack.c.l.b16 %v576
      %v837 = vunpack.c.l.b16 %v744
      %v838 = vunpack.c.l.b16 %v800
      %v839 = vunpack.c.l.b16 %v627
      %v840 = vunpack.c.l.b16 %v746
      %v841 = vunpack.c.l.b16 %v802
      %v842 = vunpack.c.l.b16 %v687
      %v843 = vld [vmem:[%s1] sm:$0xf]
      %v844 = vld [vmem:[%s1 + $0x4] sm:$0xf]
      %v845 = vld [vmem:[%s1 + $0x8] sm:$0xf]
      %v846 = vld [vmem:[%s1 + $0xc] sm:$0xf]
      %v847 = vld [vmem:[%s1 + $0x10] sm:$0xf]
      %v848 = vld [vmem:[%s1 + $0x14] sm:$0xf]
      %v849 = vld [vmem:[%s1 + $0x18] sm:$0xf]
      %v850 = vld [vmem:[%s1 + $0x1c] sm:$0xf]
      %v851 = vld [vmem:[%s1 + $0x20] sm:$0xf]
      %v852 = vld [vmem:[%s1 + $0x24] sm:$0xf]
      %v853 = vld [vmem:[%s1 + $0x28] sm:$0xf]
      %v854 = vld [vmem:[%s1 + $0x2c] sm:$0xf]
      %v855 = vld [vmem:[%s1 + $0x30] sm:$0xf]
      %v856 = vld [vmem:[%s1 + $0x34] sm:$0xf]
      %v857 = vld [vmem:[%s1 + $0x38] sm:$0xf]
      %v858 = vld [vmem:[%s1 + $0x3c] sm:$0xf]
      %v859 = vld [vmem:[%s1 + $0x40] sm:$0xf]
      %v860 = vld [vmem:[%s1 + $0x44] sm:$0xf]
      %v861 = vld [vmem:[%s1 + $0x48] sm:$0xf]
      %v862 = vld [vmem:[%s1 + $0x4c] sm:$0xf]
      %v863 = vld [vmem:[%s1 + $0x50] sm:$0xf]
      %v864 = vld [vmem:[%s1 + $0x54] sm:$0xf]
      %v865 = vld [vmem:[%s1 + $0x58] sm:$0xf]
      %v866 = vld [vmem:[%s1 + $0x5c] sm:$0xf]
      %v867 = vld [vmem:[%s1 + $0x60] sm:$0xf]
      %v868 = vld [vmem:[%s1 + $0x64] sm:$0xf]
      %v869 = vld [vmem:[%s1 + $0x68] sm:$0xf]
      %v870 = vld [vmem:[%s1 + $0x6c] sm:$0xf]
      %v871 = vld [vmem:[%s1 + $0x70] sm:$0xf]
      %v872 = vld [vmem:[%s1 + $0x74] sm:$0xf]
      %v873 = vld [vmem:[%s1 + $0x78] sm:$0xf]
      %v874 = vld [vmem:[%s1 + $0x7c] sm:$0xf]
      %v875 = vld [vmem:[%s1 + $0x80] sm:$0xf]
      %v876 = vld [vmem:[%s1 + $0x84] sm:$0xf]
      %v877 = vld [vmem:[%s1 + $0x88] sm:$0xf]
      %v878 = vld [vmem:[%s1 + $0x8c] sm:$0xf]
      %v879 = vld [vmem:[%s2] sm:$0x1]
      %v881 = vlaneseq
      %v882 = vshrl.u32 %v881, 7
      %v883 = vsub.s32 0, %v882
      %v884 = vrot.slane %v879, %v883
      %v886 = vpack.c.b16 %v822, %v819
      %v887 = vpack.c.b16 %v823, %v820
      %v888 = vpack.c.b16 %v824, %v821
      %v889 = vpack.c.b16 %v828, %v825
      %v890 = vpack.c.b16 %v829, %v826
      %v891 = vpack.c.b16 %v830, %v827
      %v892 = vpack.c.b16 %v834, %v831
      %v893 = vpack.c.b16 %v835, %v832
      %v894 = vpack.c.b16 %v836, %v833
      %v895 = vpack.c.b16 %v840, %v837
      %v896 = vpack.c.b16 %v841, %v838
      %v897 = vpack.c.b16 %v842, %v839
      %v942 = vunpack.c.l.b16 %v843
      %v943 = vunpack.c.l.b16 %v844
      %v944 = vunpack.c.l.b16 %v845
      %v945 = vunpack.c.l.b16 %v846
      %v946 = vunpack.c.l.b16 %v847
      %v947 = vunpack.c.l.b16 %v848
      %v948 = vunpack.c.l.b16 %v849
      %v949 = vunpack.c.l.b16 %v850
      %v950 = vunpack.c.l.b16 %v851
      %v951 = vunpack.c.l.b16 %v852
      %v952 = vunpack.c.l.b16 %v853
      %v953 = vunpack.c.l.b16 %v854
      %v954 = vunpack.c.l.b16 %v855
      %v955 = vunpack.c.l.b16 %v856
      %v956 = vunpack.c.l.b16 %v857
      %v957 = vunpack.c.l.b16 %v858
      %v958 = vunpack.c.l.b16 %v859
      %v959 = vunpack.c.l.b16 %v860
      %v960 = vunpack.c.l.b16 %v861
      %v961 = vunpack.c.l.b16 %v862
      %v962 = vunpack.c.l.b16 %v863
      %v963 = vunpack.c.l.b16 %v864
      %v964 = vunpack.c.l.b16 %v865
      %v965 = vunpack.c.l.b16 %v866
      %v966 = vunpack.c.l.b16 %v867
      %v967 = vunpack.c.l.b16 %v868
      %v968 = vunpack.c.l.b16 %v869
      %v969 = vunpack.c.l.b16 %v870
      %v970 = vunpack.c.l.b16 %v871
      %v971 = vunpack.c.l.b16 %v872
      %v972 = vunpack.c.l.b16 %v873
      %v973 = vunpack.c.l.b16 %v874
      %v974 = vunpack.c.l.b16 %v875
      %v975 = vunpack.c.l.b16 %v876
      %v976 = vunpack.c.l.b16 %v877
      %v977 = vunpack.c.l.b16 %v878
      %v978 = vpack.c.b16 %v943, %v942
      %v979 = vpack.c.b16 %v945, %v944
      %v980 = vpack.c.b16 %v947, %v946
      %v981 = vpack.c.b16 %v949, %v948
      %v982 = vpack.c.b16 %v951, %v950
      %v983 = vpack.c.b16 %v953, %v952
      %v984 = vpack.c.b16 %v955, %v954
      %v985 = vpack.c.b16 %v957, %v956
      %v986 = vpack.c.b16 %v959, %v958
      %v987 = vpack.c.b16 %v961, %v960
      %v988 = vpack.c.b16 %v963, %v962
      %v989 = vpack.c.b16 %v965, %v964
      %v990 = vpack.c.b16 %v967, %v966
      %v991 = vpack.c.b16 %v969, %v968
      %v992 = vpack.c.b16 %v971, %v970
      %v993 = vpack.c.b16 %v973, %v972
      %v994 = vpack.c.b16 %v975, %v974
      %v995 = vpack.c.b16 %v977, %v976
      %v1015 = vsel %vm688, %v888, 0
      %v1018 = vsel %vm688, %v891, 0
      %v1021 = vsel %vm688, %v894, 0
      %v1024 = vsel %vm688, %v897, 0
      %1026 = vmatprep.subr.bf16.mxu0 0
      %1027 = vmatpush1.bf16.msra.mxu0 %v978
      %1028 = vmatprep.subr.bf16.mxu0 0
      %1029 = vmatpush1.bf16.msra.mxu0 %v979
      %1030 = vmatprep.subr.bf16.mxu0 0
      %1031 = vmatpush1.bf16.msra.mxu0 %v980
      %1032 = vmatprep.subr.bf16.mxu0 0
      %1033 = vmatpush1.bf16.msra.mxu0 %v981
      %1034 = vmatprep.subr.bf16.mxu0 0
      %1035 = vmatpush1.bf16.msra.mxu0 %v982
      %1036 = vmatprep.subr.bf16.mxu0 0
      %1037 = vmatpush1.bf16.msra.mxu0 %v983
      %1038 = vmatprep.subr.bf16.mxu0 0
      %1039 = vmatpush1.bf16.msra.mxu0 %v984
      %1040 = vmatprep.subr.bf16.mxu0 0
      %1041 = vmatpush1.bf16.msra.mxu0 %v985
      %1042 = vmatprep.subr.bf16.mxu0 0
      %1043 = vmatpush1.bf16.msra.mxu0 %v986
      %1044 = vmatprep.subr.bf16.mxu0 0
      %1045 = vmatpush1.bf16.msra.mxu0 %v987
      %1046 = vmatprep.subr.bf16.mxu0 0
      %1047 = vmatpush1.bf16.msra.mxu0 %v988
      %1048 = vmatprep.subr.bf16.mxu0 0
      %1049 = vmatpush1.bf16.msra.mxu0 %v989
      %1050 = vmatprep.subr.bf16.mxu0 0
      %1051 = vmatpush1.bf16.msra.mxu0 %v990
      %1052 = vmatprep.subr.bf16.mxu0 0
      %1053 = vmatpush1.bf16.msra.mxu0 %v991
      %1054 = vmatprep.subr.bf16.mxu0 0
      %1055 = vmatpush1.bf16.msra.mxu0 %v992
      %1056 = vmatprep.subr.bf16.mxu0 0
      %1057 = vmatpush1.bf16.msra.mxu0 %v993
      %1058 = vmatprep.mubr.bf16.mxu0 %v887
      %1059 = vmatmul.mubr.bf16.gmra.mrb[0].mxu0 %v886
      %v1060 = vpop.f32.mrb[0].mxu0
      %v1061 = vadd.f32 %v884, %v1060
      %v1062 = vpop.f32.mrb[0].mxu0
      %v1063 = vpop.f32.mrb[0].mxu0
      %v1064 = vadd.f32 %v884, %v1063
      %v1065 = vpop.f32.mrb[0].mxu0
      %1066 = vmatprep.mubr.bf16.mxu0 %v890
      %1067 = vmatmul.mubr.bf16.gmra.mrb[0].mxu0 %v889
      %v1068 = vpop.f32.mrb[0].mxu0
      %v1069 = vadd.f32 %v884, %v1068
      %v1070 = vpop.f32.mrb[0].mxu0
      %v1071 = vpop.f32.mrb[0].mxu0
      %v1072 = vadd.f32 %v884, %v1071
      %v1073 = vpop.f32.mrb[0].mxu0
      %1074 = vmatprep.mubr.bf16.mxu0 %v893
      %1075 = vmatmul.mubr.bf16.gmra.mrb[0].mxu0 %v892
      %v1076 = vpop.f32.mrb[0].mxu0
      %v1077 = vadd.f32 %v884, %v1076
      %v1078 = vpop.f32.mrb[0].mxu0
      %v1079 = vpop.f32.mrb[0].mxu0
      %v1080 = vadd.f32 %v884, %v1079
      %v1081 = vpop.f32.mrb[0].mxu0
      %1082 = vmatprep.mubr.bf16.mxu0 %v896
      %1083 = vmatmul.mubr.bf16.gmra.mrb[0].mxu0 %v895
      %v1084 = vpop.f32.mrb[0].mxu0
      %v1085 = vadd.f32 %v884, %v1084
      %v1086 = vpop.f32.mrb[0].mxu0
      %v1087 = vpop.f32.mrb[0].mxu0
      %v1088 = vadd.f32 %v884, %v1087
      %v1089 = vpop.f32.mrb[0].mxu0
      %1090 = vdwg.mxu0
      %1091 = vmatprep.subr.bf16.mxu0 0
      %1092 = vmatpush1.bf16.msra.mxu0 %v994
      %1093 = vmatprep.subr.bf16.mxu0 0
      %1094 = vmatpush1.bf16.msra.mxu0 %v995
      %1095 = vmatprep.subr.bf16.mxu0 0
      %1096 = vmatpush1.bf16.msra.mxu0 0
      %1097 = vmatprep.subr.bf16.mxu0 0
      %1098 = vmatpush1.bf16.msra.mxu0 0
      %1099 = vmatprep.subr.bf16.mxu0 0
      %1100 = vmatpush1.bf16.msra.mxu0 0
      %1101 = vmatprep.subr.bf16.mxu0 0
      %1102 = vmatpush1.bf16.msra.mxu0 0
      %1103 = vmatprep.subr.bf16.mxu0 0
      %1104 = vmatpush1.bf16.msra.mxu0 0
      %1105 = vmatprep.subr.bf16.mxu0 0
      %1106 = vmatpush1.bf16.msra.mxu0 0
      %1107 = vmatprep.subr.bf16.mxu0 0
      %1108 = vmatpush1.bf16.msra.mxu0 0
      %1109 = vmatprep.subr.bf16.mxu0 0
      %1110 = vmatpush1.bf16.msra.mxu0 0
      %1111 = vmatprep.subr.bf16.mxu0 0
      %1112 = vmatpush1.bf16.msra.mxu0 0
      %1113 = vmatprep.subr.bf16.mxu0 0
      %1114 = vmatpush1.bf16.msra.mxu0 0
      %1115 = vmatprep.subr.bf16.mxu0 0
      %1116 = vmatpush1.bf16.msra.mxu0 0
      %1117 = vmatprep.subr.bf16.mxu0 0
      %1118 = vmatpush1.bf16.msra.mxu0 0
      %1119 = vmatprep.subr.bf16.mxu0 0
      %1120 = vmatpush1.bf16.msra.mxu0 0
      %1121 = vmatprep.subr.bf16.mxu0 0
      %1122 = vmatpush1.bf16.msra.mxu0 0
      %1123 = vmatprep.mubr.bf16.mxu0 0
      %1124 = vmatmul.mubr.bf16.gmra.mrb[0].mxu0 %v1015
      %v1125 = vpop.f32.mrb[0].mxu0
      %v1126 = vadd.f32 %v1061, %v1125
      %v1127 = vpop.f32.mrb[0].mxu0
      %v1128 = vpop.f32.mrb[0].mxu0
      %v1129 = vadd.f32 %v1064, %v1128
      %v1130 = vpop.f32.mrb[0].mxu0
      %1131 = vmatprep.mubr.bf16.mxu0 0
      %1132 = vmatmul.mubr.bf16.gmra.mrb[0].mxu0 %v1018
      %v1133 = vpop.f32.mrb[0].mxu0
      %v1134 = vadd.f32 %v1069, %v1133
      %v1135 = vpop.f32.mrb[0].mxu0
      %v1136 = vpop.f32.mrb[0].mxu0
      %v1137 = vadd.f32 %v1072, %v1136
      %v1138 = vpop.f32.mrb[0].mxu0
      %1139 = vmatprep.mubr.bf16.mxu0 0
      %1140 = vmatmul.mubr.bf16.gmra.mrb[0].mxu0 %v1021
      %v1141 = vpop.f32.mrb[0].mxu0
      %v1142 = vadd.f32 %v1077, %v1141
      %v1143 = vpop.f32.mrb[0].mxu0
      %v1144 = vpop.f32.mrb[0].mxu0
      %v1145 = vadd.f32 %v1080, %v1144
      %v1146 = vpop.f32.mrb[0].mxu0
      %1147 = vmatprep.mubr.bf16.mxu0 0
      %1148 = vmatmul.mubr.bf16.gmra.mrb[0].mxu0 %v1024
      %v1149 = vpop.f32.mrb[0].mxu0
      %v1150 = vadd.f32 %v1085, %v1149
      %v1151 = vpop.f32.mrb[0].mxu0
      %v1152 = vpop.f32.mrb[0].mxu0
      %v1153 = vadd.f32 %v1088, %v1152
      %v1154 = vpop.f32.mrb[0].mxu0
      %1155 = vdwg.mxu0
      %v1156 = vmax.f32 %v1126, 0.0
      %v1157 = vmax.f32 %v1129, 0.0
      %v1158 = vmax.f32 %v1134, 0.0
      %v1159 = vmax.f32 %v1137, 0.0
      %v1160 = vmax.f32 %v1142, 0.0
      %v1161 = vmax.f32 %v1145, 0.0
      %v1162 = vmax.f32 %v1150, 0.0
      %v1163 = vmax.f32 %v1153, 0.0
      %v1164 = vpack.c.bf16 %v1157, %v1156
      %v1165 = vpack.c.bf16 %v1159, %v1158
      %v1166 = vpack.c.bf16 %v1161, %v1160
      %v1167 = vpack.c.bf16 %v1163, %v1162
      %v1172 = vunpack.c.l.b16 %v1164
      %v1173 = vunpack.c.h.b16 %v1164
      %v1174 = vunpack.c.l.b16 %v1165
      %v1175 = vunpack.c.h.b16 %v1165
      %v1176 = vunpack.c.l.b16 %v1166
      %v1177 = vunpack.c.h.b16 %v1166
      %v1178 = vunpack.c.l.b16 %v1167
      %v1179 = vunpack.c.h.b16 %v1167
      %v1180 = vpack.c.b16 %v1172, %v1172
      %v1181 = vpack.c.b16 %v1173, %v1173
      %v1182 = vpack.c.b16 %v1174, %v1174
      %v1183 = vpack.c.b16 %v1175, %v1175
      %v1184 = vpack.c.b16 %v1176, %v1176
      %v1185 = vpack.c.b16 %v1177, %v1177
      %v1186 = vpack.c.b16 %v1178, %v1178
      %v1187 = vpack.c.b16 %v1179, %v1179
      %v1196 = vmax.bf16 %v1180, %v1181
      %v1197 = vmax.bf16 %v1182, %v1183
      %v1198 = vmax.bf16 %v1184, %v1185
      %v1199 = vmax.bf16 %v1186, %v1187
      %v1205 = vunpack.c.l.s4 1966171168
      %v1206 = vunpack.c.0.s8 %v1205
      %v1207 = vlaneseq
      %v1208 = vshrl.u32 %v1207, 7
      %v1209 = vsub.s32 %v1206, %v1208
      %v1210 = vrot.slane %v1196, %v1209
      %v1211 = vcombine.high %v1210, %v1210
      %v1213 = vunpack.c.l.s4 1966171168
      %v1214 = vunpack.c.0.s8 %v1213
      %v1215 = vlaneseq
      %v1216 = vshrl.u32 %v1215, 7
      %v1217 = vsub.s32 %v1214, %v1216
      %v1218 = vrot.slane %v1210, %v1217
      %v1220 = vunpack.c.l.s4 1966171168
      %v1221 = vunpack.c.0.s8 %v1220
      %v1222 = vlaneseq
      %v1223 = vshrl.u32 %v1222, 7
      %v1224 = vsub.s32 %v1221, %v1223
      %v1225 = vrot.slane %v1211, %v1224
      %v1226 = vcombine.high %v1218, %v1218
      %v1227 = vcombine.high %v1225, %v1225
      %v1229 = vunpack.c.l.s4 1966171168
      %v1230 = vunpack.c.0.s8 %v1229
      %v1231 = vlaneseq
      %v1232 = vshrl.u32 %v1231, 7
      %v1233 = vsub.s32 %v1230, %v1232
      %v1234 = vrot.slane %v1197, %v1233
      %v1235 = vcombine.high %v1234, %v1234
      %v1237 = vunpack.c.l.s4 1966171168
      %v1238 = vunpack.c.0.s8 %v1237
      %v1239 = vlaneseq
      %v1240 = vshrl.u32 %v1239, 7
      %v1241 = vsub.s32 %v1238, %v1240
      %v1242 = vrot.slane %v1234, %v1241
      %v1244 = vunpack.c.l.s4 1966171168
      %v1245 = vunpack.c.0.s8 %v1244
      %v1246 = vlaneseq
      %v1247 = vshrl.u32 %v1246, 7
      %v1248 = vsub.s32 %v1245, %v1247
      %v1249 = vrot.slane %v1235, %v1248
      %v1250 = vcombine.high %v1242, %v1242
      %v1251 = vcombine.high %v1249, %v1249
      %v1253 = vunpack.c.l.s4 1966171168
      %v1254 = vunpack.c.0.s8 %v1253
      %v1255 = vlaneseq
      %v1256 = vshrl.u32 %v1255, 7
      %v1257 = vsub.s32 %v1254, %v1256
      %v1258 = vrot.slane %v1198, %v1257
      %v1259 = vcombine.high %v1258, %v1258
      %v1261 = vunpack.c.l.s4 1966171168
      %v1262 = vunpack.c.0.s8 %v1261
      %v1263 = vlaneseq
      %v1264 = vshrl.u32 %v1263, 7
      %v1265 = vsub.s32 %v1262, %v1264
      %v1266 = vrot.slane %v1258, %v1265
      %v1268 = vunpack.c.l.s4 1966171168
      %v1269 = vunpack.c.0.s8 %v1268
      %v1270 = vlaneseq
      %v1271 = vshrl.u32 %v1270, 7
      %v1272 = vsub.s32 %v1269, %v1271
      %v1273 = vrot.slane %v1259, %v1272
      %v1274 = vcombine.high %v1266, %v1266
      %v1275 = vcombine.high %v1273, %v1273
      %v1277 = vunpack.c.l.s4 1966171168
      %v1278 = vunpack.c.0.s8 %v1277
      %v1279 = vlaneseq
      %v1280 = vshrl.u32 %v1279, 7
      %v1281 = vsub.s32 %v1278, %v1280
      %v1282 = vrot.slane %v1199, %v1281
      %v1283 = vcombine.high %v1282, %v1282
      %v1285 = vunpack.c.l.s4 1966171168
      %v1286 = vunpack.c.0.s8 %v1285
      %v1287 = vlaneseq
      %v1288 = vshrl.u32 %v1287, 7
      %v1289 = vsub.s32 %v1286, %v1288
      %v1290 = vrot.slane %v1282, %v1289
      %v1292 = vunpack.c.l.s4 1966171168
      %v1293 = vunpack.c.0.s8 %v1292
      %v1294 = vlaneseq
      %v1295 = vshrl.u32 %v1294, 7
      %v1296 = vsub.s32 %v1293, %v1295
      %v1297 = vrot.slane %v1283, %v1296
      %v1298 = vcombine.high %v1290, %v1290
      %v1299 = vcombine.high %v1297, %v1297
      %v1317 = vshrl.u32 %v1218, 16
      %v1319 = vrot.slane %v1317, 7
      %v1320 = vrot.slane %v1319, 1
      %v1322 = vshrl.u32 %v1225, 16
      %v1324 = vrot.slane %v1322, 7
      %v1325 = vrot.slane %v1324, 1
      %v1327 = vshrl.u32 %v1226, 16
      %v1329 = vrot.slane %v1327, 7
      %v1330 = vrot.slane %v1329, 1
      %v1332 = vshrl.u32 %v1227, 16
      %v1334 = vrot.slane %v1332, 7
      %v1335 = vrot.slane %v1334, 1
      %v1337 = vshrl.u32 %v1242, 16
      %v1339 = vrot.slane %v1337, 7
      %v1340 = vrot.slane %v1339, 1
      %v1342 = vshrl.u32 %v1249, 16
      %v1344 = vrot.slane %v1342, 7
      %v1345 = vrot.slane %v1344, 1
      %v1347 = vshrl.u32 %v1250, 16
      %v1349 = vrot.slane %v1347, 7
      %v1350 = vrot.slane %v1349, 1
      %v1352 = vshrl.u32 %v1251, 16
      %v1354 = vrot.slane %v1352, 7
      %v1355 = vrot.slane %v1354, 1
      %v1357 = vshrl.u32 %v1266, 16
      %v1359 = vrot.slane %v1357, 7
      %v1360 = vrot.slane %v1359, 1
      %v1362 = vshrl.u32 %v1273, 16
      %v1364 = vrot.slane %v1362, 7
      %v1365 = vrot.slane %v1364, 1
      %v1367 = vshrl.u32 %v1274, 16
      %v1369 = vrot.slane %v1367, 7
      %v1370 = vrot.slane %v1369, 1
      %v1372 = vshrl.u32 %v1275, 16
      %v1374 = vrot.slane %v1372, 7
      %v1375 = vrot.slane %v1374, 1
      %v1377 = vshrl.u32 %v1290, 16
      %v1379 = vrot.slane %v1377, 7
      %v1380 = vrot.slane %v1379, 1
      %v1382 = vshrl.u32 %v1297, 16
      %v1384 = vrot.slane %v1382, 7
      %v1385 = vrot.slane %v1384, 1
      %v1387 = vshrl.u32 %v1298, 16
      %v1389 = vrot.slane %v1387, 7
      %v1390 = vrot.slane %v1389, 1
      %v1392 = vshrl.u32 %v1299, 16
      %v1394 = vrot.slane %v1392, 7
      %v1395 = vrot.slane %v1394, 1
      %v1412 = vmax.bf16 %v1218, %v1320
      %v1413 = vmax.bf16 %v1225, %v1325
      %v1414 = vmax.bf16 %v1226, %v1330
      %v1415 = vmax.bf16 %v1227, %v1335
      %v1416 = vmax.bf16 %v1242, %v1340
      %v1417 = vmax.bf16 %v1249, %v1345
      %v1418 = vmax.bf16 %v1250, %v1350
      %v1419 = vmax.bf16 %v1251, %v1355
      %v1420 = vmax.bf16 %v1266, %v1360
      %v1421 = vmax.bf16 %v1273, %v1365
      %v1422 = vmax.bf16 %v1274, %v1370
      %v1423 = vmax.bf16 %v1275, %v1375
      %v1424 = vmax.bf16 %v1290, %v1380
      %v1425 = vmax.bf16 %v1297, %v1385
      %v1426 = vmax.bf16 %v1298, %v1390
      %v1427 = vmax.bf16 %v1299, %v1395
      %v1445 = vunpack.c.l.s4 1935823168
      %v1446 = vunpack.c.0.s8 %v1445
      %v1447 = vlaneseq
      %v1448 = vshrl.u32 %v1447, 7
      %v1449 = vsub.s32 %v1446, %v1448
      %v1450 = vrot.slane %v1412, %v1449
      %v1452 = vunpack.c.l.s4 1935823168
      %v1453 = vunpack.c.0.s8 %v1452
      %v1454 = vlaneseq
      %v1455 = vshrl.u32 %v1454, 7
      %v1456 = vsub.s32 %v1453, %v1455
      %v1457 = vrot.slane %v1450, %v1456
      %v1459 = vunpack.c.l.s4 1935823168
      %v1460 = vunpack.c.0.s8 %v1459
      %v1461 = vlaneseq
      %v1462 = vshrl.u32 %v1461, 7
      %v1463 = vsub.s32 %v1460, %v1462
      %v1464 = vrot.slane %v1413, %v1463
      %v1466 = vunpack.c.l.s4 1935823168
      %v1467 = vunpack.c.0.s8 %v1466
      %v1468 = vlaneseq
      %v1469 = vshrl.u32 %v1468, 7
      %v1470 = vsub.s32 %v1467, %v1469
      %v1471 = vrot.slane %v1464, %v1470
      %v1473 = vunpack.c.l.s4 1935823168
      %v1474 = vunpack.c.0.s8 %v1473
      %v1475 = vlaneseq
      %v1476 = vshrl.u32 %v1475, 7
      %v1477 = vsub.s32 %v1474, %v1476
      %v1478 = vrot.slane %v1414, %v1477
      %v1480 = vunpack.c.l.s4 1935823168
      %v1481 = vunpack.c.0.s8 %v1480
      %v1482 = vlaneseq
      %v1483 = vshrl.u32 %v1482, 7
      %v1484 = vsub.s32 %v1481, %v1483
      %v1485 = vrot.slane %v1478, %v1484
      %v1487 = vunpack.c.l.s4 1935823168
      %v1488 = vunpack.c.0.s8 %v1487
      %v1489 = vlaneseq
      %v1490 = vshrl.u32 %v1489, 7
      %v1491 = vsub.s32 %v1488, %v1490
      %v1492 = vrot.slane %v1415, %v1491
      %v1494 = vunpack.c.l.s4 1935823168
      %v1495 = vunpack.c.0.s8 %v1494
      %v1496 = vlaneseq
      %v1497 = vshrl.u32 %v1496, 7
      %v1498 = vsub.s32 %v1495, %v1497
      %v1499 = vrot.slane %v1492, %v1498
      %v1501 = vunpack.c.l.s4 1935823168
      %v1502 = vunpack.c.0.s8 %v1501
      %v1503 = vlaneseq
      %v1504 = vshrl.u32 %v1503, 7
      %v1505 = vsub.s32 %v1502, %v1504
      %v1506 = vrot.slane %v1416, %v1505
      %v1508 = vunpack.c.l.s4 1935823168
      %v1509 = vunpack.c.0.s8 %v1508
      %v1510 = vlaneseq
      %v1511 = vshrl.u32 %v1510, 7
      %v1512 = vsub.s32 %v1509, %v1511
      %v1513 = vrot.slane %v1506, %v1512
      %v1515 = vunpack.c.l.s4 1935823168
      %v1516 = vunpack.c.0.s8 %v1515
      %v1517 = vlaneseq
      %v1518 = vshrl.u32 %v1517, 7
      %v1519 = vsub.s32 %v1516, %v1518
      %v1520 = vrot.slane %v1417, %v1519
      %v1522 = vunpack.c.l.s4 1935823168
      %v1523 = vunpack.c.0.s8 %v1522
      %v1524 = vlaneseq
      %v1525 = vshrl.u32 %v1524, 7
      %v1526 = vsub.s32 %v1523, %v1525
      %v1527 = vrot.slane %v1520, %v1526
      %v1529 = vunpack.c.l.s4 1935823168
      %v1530 = vunpack.c.0.s8 %v1529
      %v1531 = vlaneseq
      %v1532 = vshrl.u32 %v1531, 7
      %v1533 = vsub.s32 %v1530, %v1532
      %v1534 = vrot.slane %v1418, %v1533
      %v1536 = vunpack.c.l.s4 1935823168
      %v1537 = vunpack.c.0.s8 %v1536
      %v1538 = vlaneseq
      %v1539 = vshrl.u32 %v1538, 7
      %v1540 = vsub.s32 %v1537, %v1539
      %v1541 = vrot.slane %v1534, %v1540
      %v1543 = vunpack.c.l.s4 1935823168
      %v1544 = vunpack.c.0.s8 %v1543
      %v1545 = vlaneseq
      %v1546 = vshrl.u32 %v1545, 7
      %v1547 = vsub.s32 %v1544, %v1546
      %v1548 = vrot.slane %v1419, %v1547
      %v1550 = vunpack.c.l.s4 1935823168
      %v1551 = vunpack.c.0.s8 %v1550
      %v1552 = vlaneseq
      %v1553 = vshrl.u32 %v1552, 7
      %v1554 = vsub.s32 %v1551, %v1553
      %v1555 = vrot.slane %v1548, %v1554
      %v1557 = vunpack.c.l.s4 1935823168
      %v1558 = vunpack.c.0.s8 %v1557
      %v1559 = vlaneseq
      %v1560 = vshrl.u32 %v1559, 7
      %v1561 = vsub.s32 %v1558, %v1560
      %v1562 = vrot.slane %v1420, %v1561
      %v1564 = vunpack.c.l.s4 1935823168
      %v1565 = vunpack.c.0.s8 %v1564
      %v1566 = vlaneseq
      %v1567 = vshrl.u32 %v1566, 7
      %v1568 = vsub.s32 %v1565, %v1567
      %v1569 = vrot.slane %v1562, %v1568
      %v1571 = vunpack.c.l.s4 1935823168
      %v1572 = vunpack.c.0.s8 %v1571
      %v1573 = vlaneseq
      %v1574 = vshrl.u32 %v1573, 7
      %v1575 = vsub.s32 %v1572, %v1574
      %v1576 = vrot.slane %v1421, %v1575
      %v1578 = vunpack.c.l.s4 1935823168
      %v1579 = vunpack.c.0.s8 %v1578
      %v1580 = vlaneseq
      %v1581 = vshrl.u32 %v1580, 7
      %v1582 = vsub.s32 %v1579, %v1581
      %v1583 = vrot.slane %v1576, %v1582
      %v1585 = vunpack.c.l.s4 1935823168
      %v1586 = vunpack.c.0.s8 %v1585
      %v1587 = vlaneseq
      %v1588 = vshrl.u32 %v1587, 7
      %v1589 = vsub.s32 %v1586, %v1588
      %v1590 = vrot.slane %v1422, %v1589
      %v1592 = vunpack.c.l.s4 1935823168
      %v1593 = vunpack.c.0.s8 %v1592
      %v1594 = vlaneseq
      %v1595 = vshrl.u32 %v1594, 7
      %v1596 = vsub.s32 %v1593, %v1595
      %v1597 = vrot.slane %v1590, %v1596
      %v1599 = vunpack.c.l.s4 1935823168
      %v1600 = vunpack.c.0.s8 %v1599
      %v1601 = vlaneseq
      %v1602 = vshrl.u32 %v1601, 7
      %v1603 = vsub.s32 %v1600, %v1602
      %v1604 = vrot.slane %v1423, %v1603
      %v1606 = vunpack.c.l.s4 1935823168
      %v1607 = vunpack.c.0.s8 %v1606
      %v1608 = vlaneseq
      %v1609 = vshrl.u32 %v1608, 7
      %v1610 = vsub.s32 %v1607, %v1609
      %v1611 = vrot.slane %v1604, %v1610
      %v1613 = vunpack.c.l.s4 1935823168
      %v1614 = vunpack.c.0.s8 %v1613
      %v1615 = vlaneseq
      %v1616 = vshrl.u32 %v1615, 7
      %v1617 = vsub.s32 %v1614, %v1616
      %v1618 = vrot.slane %v1424, %v1617
      %v1620 = vunpack.c.l.s4 1935823168
      %v1621 = vunpack.c.0.s8 %v1620
      %v1622 = vlaneseq
      %v1623 = vshrl.u32 %v1622, 7
      %v1624 = vsub.s32 %v1621, %v1623
      %v1625 = vrot.slane %v1618, %v1624
      %v1627 = vunpack.c.l.s4 1935823168
      %v1628 = vunpack.c.0.s8 %v1627
      %v1629 = vlaneseq
      %v1630 = vshrl.u32 %v1629, 7
      %v1631 = vsub.s32 %v1628, %v1630
      %v1632 = vrot.slane %v1425, %v1631
      %v1634 = vunpack.c.l.s4 1935823168
      %v1635 = vunpack.c.0.s8 %v1634
      %v1636 = vlaneseq
      %v1637 = vshrl.u32 %v1636, 7
      %v1638 = vsub.s32 %v1635, %v1637
      %v1639 = vrot.slane %v1632, %v1638
      %v1641 = vunpack.c.l.s4 1935823168
      %v1642 = vunpack.c.0.s8 %v1641
      %v1643 = vlaneseq
      %v1644 = vshrl.u32 %v1643, 7
      %v1645 = vsub.s32 %v1642, %v1644
      %v1646 = vrot.slane %v1426, %v1645
      %v1648 = vunpack.c.l.s4 1935823168
      %v1649 = vunpack.c.0.s8 %v1648
      %v1650 = vlaneseq
      %v1651 = vshrl.u32 %v1650, 7
      %v1652 = vsub.s32 %v1649, %v1651
      %v1653 = vrot.slane %v1646, %v1652
      %v1655 = vunpack.c.l.s4 1935823168
      %v1656 = vunpack.c.0.s8 %v1655
      %v1657 = vlaneseq
      %v1658 = vshrl.u32 %v1657, 7
      %v1659 = vsub.s32 %v1656, %v1658
      %v1660 = vrot.slane %v1427, %v1659
      %v1662 = vunpack.c.l.s4 1935823168
      %v1663 = vunpack.c.0.s8 %v1662
      %v1664 = vlaneseq
      %v1665 = vshrl.u32 %v1664, 7
      %v1666 = vsub.s32 %v1663, %v1665
      %v1667 = vrot.slane %v1660, %v1666
      %v1668 = vunpack.c.l.b16 %v1457
      %v1669 = vunpack.c.l.b16 %v1471
      %v1670 = vunpack.c.l.b16 %v1485
      %v1671 = vunpack.c.l.b16 %v1499
      %v1672 = vunpack.c.l.b16 %v1513
      %v1673 = vunpack.c.l.b16 %v1527
      %v1674 = vunpack.c.l.b16 %v1541
      %v1675 = vunpack.c.l.b16 %v1555
      %v1676 = vunpack.c.l.b16 %v1569
      %v1677 = vunpack.c.l.b16 %v1583
      %v1678 = vunpack.c.l.b16 %v1597
      %v1679 = vunpack.c.l.b16 %v1611
      %v1680 = vunpack.c.l.b16 %v1625
      %v1681 = vunpack.c.l.b16 %v1639
      %v1682 = vunpack.c.l.b16 %v1653
      %v1683 = vunpack.c.l.b16 %v1667
      %v1684 = vrot.slane %v1669, 7
      %vm1685 = vcmask 1041409
      %v1686 = vsel %vm1685, %v1684, %v1668
      %v1687 = vrot.slane %v1670, 6
      %vm1688 = vcmask 1042434
      %v1689 = vsel %vm1688, %v1687, %v1686
      %v1690 = vrot.slane %v1671, 5
      %vm1691 = vcmask 1043459
      %v1692 = vsel %vm1691, %v1690, %v1689
      %v1693 = vrot.slane %v1673, 7
      %v1694 = vsel %vm1685, %v1693, %v1672
      %v1695 = vrot.slane %v1674, 6
      %v1696 = vsel %vm1688, %v1695, %v1694
      %v1697 = vrot.slane %v1675, 5
      %v1698 = vsel %vm1691, %v1697, %v1696
      %v1699 = vrot.slane %v1677, 7
      %v1700 = vsel %vm1685, %v1699, %v1676
      %v1701 = vrot.slane %v1678, 6
      %v1702 = vsel %vm1688, %v1701, %v1700
      %v1703 = vrot.slane %v1679, 5
      %v1704 = vsel %vm1691, %v1703, %v1702
      %v1705 = vrot.slane %v1681, 7
      %v1706 = vsel %vm1685, %v1705, %v1680
      %v1707 = vrot.slane %v1682, 6
      %v1708 = vsel %vm1688, %v1707, %v1706
      %v1709 = vrot.slane %v1683, 5
      %v1710 = vsel %vm1691, %v1709, %v1708
      %v1711 = vpack.c.b16 %v1692, %v1692
      %v1712 = vpack.c.b16 %v1698, %v1698
      %v1713 = vpack.c.b16 %v1704, %v1704
      %v1714 = vpack.c.b16 %v1710, %v1710
      %v1716 = vunpack.c.l.s4 1966171168
      %v1717 = vunpack.c.0.s8 %v1716
      %v1718 = vlaneseq
      %v1719 = vshrl.u32 %v1718, 7
      %v1720 = vsub.s32 %v1717, %v1719
      %v1721 = vrot.slane %v1711, %v1720
      %v1722 = vcombine.high %v1721, %v1721
      %v1724 = vunpack.c.l.s4 1966171168
      %v1725 = vunpack.c.0.s8 %v1724
      %v1726 = vlaneseq
      %v1727 = vshrl.u32 %v1726, 7
      %v1728 = vsub.s32 %v1725, %v1727
      %v1729 = vrot.slane %v1721, %v1728
      %v1731 = vunpack.c.l.s4 1966171168
      %v1732 = vunpack.c.0.s8 %v1731
      %v1733 = vlaneseq
      %v1734 = vshrl.u32 %v1733, 7
      %v1735 = vsub.s32 %v1732, %v1734
      %v1736 = vrot.slane %v1722, %v1735
      %v1738 = vunpack.c.l.s4 1966171168
      %v1739 = vunpack.c.0.s8 %v1738
      %v1740 = vlaneseq
      %v1741 = vshrl.u32 %v1740, 7
      %v1742 = vsub.s32 %v1739, %v1741
      %v1743 = vrot.slane %v1712, %v1742
      %v1744 = vcombine.high %v1743, %v1743
      %v1746 = vunpack.c.l.s4 1966171168
      %v1747 = vunpack.c.0.s8 %v1746
      %v1748 = vlaneseq
      %v1749 = vshrl.u32 %v1748, 7
      %v1750 = vsub.s32 %v1747, %v1749
      %v1751 = vrot.slane %v1743, %v1750
      %v1753 = vunpack.c.l.s4 1966171168
      %v1754 = vunpack.c.0.s8 %v1753
      %v1755 = vlaneseq
      %v1756 = vshrl.u32 %v1755, 7
      %v1757 = vsub.s32 %v1754, %v1756
      %v1758 = vrot.slane %v1744, %v1757
      %v1760 = vunpack.c.l.s4 1966171168
      %v1761 = vunpack.c.0.s8 %v1760
      %v1762 = vlaneseq
      %v1763 = vshrl.u32 %v1762, 7
      %v1764 = vsub.s32 %v1761, %v1763
      %v1765 = vrot.slane %v1713, %v1764
      %v1766 = vcombine.high %v1765, %v1765
      %v1768 = vunpack.c.l.s4 1966171168
      %v1769 = vunpack.c.0.s8 %v1768
      %v1770 = vlaneseq
      %v1771 = vshrl.u32 %v1770, 7
      %v1772 = vsub.s32 %v1769, %v1771
      %v1773 = vrot.slane %v1765, %v1772
      %v1775 = vunpack.c.l.s4 1966171168
      %v1776 = vunpack.c.0.s8 %v1775
      %v1777 = vlaneseq
      %v1778 = vshrl.u32 %v1777, 7
      %v1779 = vsub.s32 %v1776, %v1778
      %v1780 = vrot.slane %v1766, %v1779
      %v1782 = vunpack.c.l.s4 1966171168
      %v1783 = vunpack.c.0.s8 %v1782
      %v1784 = vlaneseq
      %v1785 = vshrl.u32 %v1784, 7
      %v1786 = vsub.s32 %v1783, %v1785
      %v1787 = vrot.slane %v1714, %v1786
      %v1788 = vcombine.high %v1787, %v1787
      %v1790 = vunpack.c.l.s4 1966171168
      %v1791 = vunpack.c.0.s8 %v1790
      %v1792 = vlaneseq
      %v1793 = vshrl.u32 %v1792, 7
      %v1794 = vsub.s32 %v1791, %v1793
      %v1795 = vrot.slane %v1787, %v1794
      %v1797 = vunpack.c.l.s4 1966171168
      %v1798 = vunpack.c.0.s8 %v1797
      %v1799 = vlaneseq
      %v1800 = vshrl.u32 %v1799, 7
      %v1801 = vsub.s32 %v1798, %v1800
      %v1802 = vrot.slane %v1788, %v1801
      %v1805 = vpack.i.b16 %v1751, %v1729
      %v1806 = vshrl.u32 %v1729, 16
      %v1807 = vshrl.u32 %v1751, 16
      %v1808 = vpack.i.b16 %v1807, %v1806
      %v1811 = vpack.i.b16 %v1758, %v1736
      %v1812 = vshrl.u32 %v1736, 16
      %v1813 = vshrl.u32 %v1758, 16
      %v1814 = vpack.i.b16 %v1813, %v1812
      %v1817 = vpack.i.b16 %v1795, %v1773
      %v1818 = vshrl.u32 %v1773, 16
      %v1819 = vshrl.u32 %v1795, 16
      %v1820 = vpack.i.b16 %v1819, %v1818
      %v1823 = vpack.i.b16 %v1802, %v1780
      %v1824 = vshrl.u32 %v1780, 16
      %v1825 = vshrl.u32 %v1802, 16
      %v1826 = vpack.i.b16 %v1825, %v1824
      %v1827 = vcombine.low %v1805, %v1817
      %v1829 = vunpack.c.l.s4 1966171168
      %v1830 = vunpack.c.0.s8 %v1829
      %v1831 = vlaneseq
      %v1832 = vshrl.u32 %v1831, 7
      %v1833 = vsub.s32 %v1830, %v1832
      %v1834 = vrot.slane %v1827, %v1833
      %v1836 = vunpack.c.l.s4 1966171168
      %v1837 = vunpack.c.0.s8 %v1836
      %v1838 = vlaneseq
      %v1839 = vshrl.u32 %v1838, 7
      %v1840 = vsub.s32 %v1837, %v1839
      %v1841 = vrot.slane %v1834, %v1840
      %v1842 = vcombine.low %v1808, %v1820
      %v1844 = vunpack.c.l.s4 1966171168
      %v1845 = vunpack.c.0.s8 %v1844
      %v1846 = vlaneseq
      %v1847 = vshrl.u32 %v1846, 7
      %v1848 = vsub.s32 %v1845, %v1847
      %v1849 = vrot.slane %v1842, %v1848
      %v1851 = vunpack.c.l.s4 1966171168
      %v1852 = vunpack.c.0.s8 %v1851
      %v1853 = vlaneseq
      %v1854 = vshrl.u32 %v1853, 7
      %v1855 = vsub.s32 %v1852, %v1854
      %v1856 = vrot.slane %v1849, %v1855
      %1857 = vrot.lane.b32.xlu0 %v1856, 64
      %v1858 = vpop.permute.xlu0 %1857
      %v1859 = vcombine.low %v1811, %v1823
      %v1861 = vunpack.c.l.s4 1966171168
      %v1862 = vunpack.c.0.s8 %v1861
      %v1863 = vlaneseq
      %v1864 = vshrl.u32 %v1863, 7
      %v1865 = vsub.s32 %v1862, %v1864
      %v1866 = vrot.slane %v1859, %v1865
      %v1868 = vunpack.c.l.s4 1966171168
      %v1869 = vunpack.c.0.s8 %v1868
      %v1870 = vlaneseq
      %v1871 = vshrl.u32 %v1870, 7
      %v1872 = vsub.s32 %v1869, %v1871
      %v1873 = vrot.slane %v1866, %v1872
      %v1874 = vcombine.low %v1814, %v1826
      %v1876 = vunpack.c.l.s4 1966171168
      %v1877 = vunpack.c.0.s8 %v1876
      %v1878 = vlaneseq
      %v1879 = vshrl.u32 %v1878, 7
      %v1880 = vsub.s32 %v1877, %v1879
      %v1881 = vrot.slane %v1874, %v1880
      %v1883 = vunpack.c.l.s4 1966171168
      %v1884 = vunpack.c.0.s8 %v1883
      %v1885 = vlaneseq
      %v1886 = vshrl.u32 %v1885, 7
      %v1887 = vsub.s32 %v1884, %v1886
      %v1888 = vrot.slane %v1881, %v1887
      %1889 = vrot.lane.b32.xlu0 %v1888, 64
      %v1890 = vpop.permute.xlu0 %1889
      %v1893 = vsel %vm713, %v1841, %v1858
      %v1896 = vsel %vm713, %v1873, %v1890
      %v1899 = vunpack.c.l.b16 %v1893
      %v1900 = vunpack.c.l.b16 %v1896
      %v1901 = vpack.c.b16 %v1900, %v1899
      %v1903 = vshrl.u32 %v1901, 16
      %v1905 = vrot.slane %v1903, 7
      %v1906 = vshll.u32 %v1901, 16
      %v1908 = vor.u32 %v1905, %v1906
      %1909 = vrot.lane.b32.xlu0 %v1908, 64
      %v1910 = vpop.permute.xlu0 %1909
      %v1911 = vrot.slane %v1910, 4
      %vm1912 = vcmask 523264
      %v1913 = vsel %vm1912, %v1911, %v1910
      %vm1916 = vcmask 1042944
      %vm1917 = vsmask.f32 2306
      %vm1918 = vmand %vm1916, %vm1917
      %vm1919 = vcmask 1046532
      %vm1920 = vsmask.f32 6418
      %vm1921 = vmand %vm1919, %vm1920
      %vm1922 = vmor %vm1921, %vm1918
      %v1923 = vld [vmem:[%s170] sm:$0x77]
      %v1924 = vsel %vm1922, %v1913, %v1923
      %1925 = vst [vmem:[%s170] sm:$0x77] %v1924
      %vm1926 = vcmask 518144
      %vm1927 = vmand %vm1926, %vm1917
      %v1928 = vld [vmem:[%s170 + $0x8] sm:$0x7]
      %v1929 = vsel %vm1927, %v1911, %v1928
      %1930 = vst [vmem:[%s170 + $0x8] sm:$0x7] %v1929
      %p1931 = scmp.lt.s32.totalorder %s14, 1
      %s1932 = scalar_select %p1931, %s14, 1
      %s1933 = smul.addr %s1932, 3
      %s1934 = smul.addr %s1933, 4
      %s1935 = scalar_lea.vmem %s3, %s1934
      // Predicated region
      $region33: #{cnn_forward.5} parent=31 // pred_check
        %p1936 = pneg %p100
      $region34: #{cnn_forward.5} parent=31 // pred_check_branch
        %1938 = sbr.rel (%p1936) target = $region36
      $region35: #{cnn_forward.5} parent=31 // pred_region
        _
      $region36: #{cnn_forward.5} parent=31 // pred_fallthru
        _
    $region32: #{cnn_forward.5} parent=5 // pred_fallthru
      _
    %p1939 = scmp.le.s32.totalorder 2, %s9
    // Predicated region
    $region37: #{cnn_forward.5} parent=5 // pred_check
      %p1940 = pneg %p1939
    $region38: #{cnn_forward.5} parent=5 // pred_check_branch
      %1942 = sbr.rel (%p1940) target = $region40
    $region39: #{cnn_forward.5} parent=5 // pred_region
      %s1943 = ssub.s32 %s9, 2
      // Predicated region
      $region41: #{cnn_forward.5} parent=39 // pred_check
        %p1944 = pneg %p106
      $region42: #{cnn_forward.5} parent=39 // pred_check_branch
        %1946 = sbr.rel (%p1944) target = $region44
      $region43: #{cnn_forward.5} parent=39 // pred_region
        %p1947 = scmp.lt.s32.totalorder %s15, 1
        %s1948 = scalar_select %p1947, %s15, 1
        %s1949 = smul.addr %s1948, 3
        %s1950 = smul.addr %s1949, 4
        %s1951 = scalar_lea.vmem %s3, %s1950
      $region44: #{cnn_forward.5} parent=39 // pred_fallthru
        _
    $region40: #{cnn_forward.5} parent=5 // pred_fallthru
      _
  $region6: #{cnn_forward.5} parent=0 // loop_footer
    %s13 = sadd.s32 1, %s9
  $region7: #{cnn_forward.5} parent=0 // loop_footer_branch
    %8 = sbr.rel target = $region3
  $region8: #{cnn_forward.5} parent=0 // loop_exit
    _

// kernel: cnn_forward.6
$region0: #{cnn_forward.6}
  #allocation0 [shape = 'u32[]', space=smem, size = 0x4, offset = 0x4, fixed_abs, tag = 'smem constant byte address 0x4 - core index']
  #allocation1 [shape = 'u32[144,128]{1,0:T(1,128)}', space=vmem, size = 0x12000, scoped, tag = 'internal scratch']
  %s0 = inlined_call_operand.vmem [shape: bf16[2,6,384], index: 0, kind: input, shape index: {}]
  %s1 = inlined_call_operand.vmem [shape: bf16[576,128], index: 1, kind: input, shape index: {}]
  %s2 = inlined_call_operand.vmem [shape: f32[1,128], index: 2, kind: input, shape index: {}]
  %s3 = inlined_call_operand.vmem [shape: bf16[2,4,512], index: 3, kind: output, shape index: {}]
  %s4 = sld [smem:[#allocation0]]
  $region45: #{cnn_forward.6} parent=0
    _
  %s6 = ssub.s32 1, %s4
  %s7 = scalar_select 0, %s6, %s4
  loop: start=0, step=1, limit=4
  $region2: #{cnn_forward.6} parent=0 // loop_pre_header
    _
  $region3: #{cnn_forward.6} parent=0 // loop_header
    %s9 = sphi 0, %s13
    %p10 = scmp.ge.s32.totalorder %s9, 4
    %s19 = sphi 0, %s21
    %s22 = sphi 0, %s19
    %s23 = sphi 0, %s22
    %s39 = sphi 0, %s23
    %s43 = sphi 0, %s43
    %s45 = sphi 0, %s43
    %s46 = sphi 0, %s45
    %s60 = sphi 0, %s46
    %s64 = sphi 0, %s64
    %s66 = sphi 0, %s64
    %s67 = sphi 0, %s66
    %s81 = sphi 0, %s67
    %s87 = sphi 0, %s89
    %s90 = sphi 0, %s87
    %s91 = sphi 0, %s90
    %s107 = sphi 0, %s91
  $region4: #{cnn_forward.6} parent=0 // loop_header_branch
    %12 = sbr.rel (%p10) target = $region8
  $region5: #{cnn_forward.6} parent=0 // loop_body
    %s14 = ssub.s32 %s9, 1
    %s15 = ssub.s32 %s9, 2
    %s16 = sadd.s32 %s9, 1
    %s17 = ssub.s32 %s9, %s16
    %p18 = scmp.eq.s32.totalorder %s17, 0
    %s20 = sadd.s32 %s19, 1
    %s21 = scalar_select %p18, %s19, %s20
    %p24 = pneg %p18
    %p25 = scmp.eq.s32.totalorder %s9, 1
    %p26 = por %p24, %p25
    %p27 = scmp.ne.s32.totalorder %s19, %s22
    %p28 = scmp.eq.s32.totalorder %s9, 0
    %p29 = por %p27, %p28
    %p30 = scmp.ne.s32.totalorder %s19, %s22
    %p31 = scmp.eq.s32.totalorder %s14, 1
    %p32 = por %p30, %p31
    %p33 = scmp.ne.s32.totalorder %s22, %s23
    %p34 = scmp.eq.s32.totalorder %s14, 0
    %p35 = por %p33, %p34
    %p36 = scmp.ne.s32.totalorder %s22, %s23
    %p37 = scmp.eq.s32.totalorder %s15, 1
    %p38 = por %p36, %p37
    %p40 = scmp.ne.s32.totalorder %s23, %s39
    %p41 = scmp.eq.s32.totalorder %s15, 0
    %p42 = por %p40, %p41
    %s44 = sadd.s32 %s43, 1
    %p47 = scmp.eq.s32.totalorder %s9, 1
    %p48 = scmp.ne.s32.totalorder %s43, %s45
    %p49 = scmp.eq.s32.totalorder %s9, 0
    %p50 = por %p48, %p49
    %p51 = scmp.ne.s32.totalorder %s43, %s45
    %p52 = scmp.eq.s32.totalorder %s14, 1
    %p53 = por %p51, %p52
    %p54 = scmp.ne.s32.totalorder %s45, %s46
    %p55 = scmp.eq.s32.totalorder %s14, 0
    %p56 = por %p54, %p55
    %p57 = scmp.ne.s32.totalorder %s45, %s46
    %p58 = scmp.eq.s32.totalorder %s15, 1
    %p59 = por %p57, %p58
    %p61 = scmp.ne.s32.totalorder %s46, %s60
    %p62 = scmp.eq.s32.totalorder %s15, 0
    %p63 = por %p61, %p62
    %s65 = sadd.s32 %s64, 1
    %p68 = scmp.eq.s32.totalorder %s9, 1
    %p69 = scmp.ne.s32.totalorder %s64, %s66
    %p70 = scmp.eq.s32.totalorder %s9, 0
    %p71 = por %p69, %p70
    %p72 = scmp.ne.s32.totalorder %s64, %s66
    %p73 = scmp.eq.s32.totalorder %s14, 1
    %p74 = por %p72, %p73
    %p75 = scmp.ne.s32.totalorder %s66, %s67
    %p76 = scmp.eq.s32.totalorder %s14, 0
    %p77 = por %p75, %p76
    %p78 = scmp.ne.s32.totalorder %s66, %s67
    %p79 = scmp.eq.s32.totalorder %s15, 1
    %p80 = por %p78, %p79
    %p82 = scmp.ne.s32.totalorder %s67, %s81
    %p83 = scmp.eq.s32.totalorder %s15, 0
    %p84 = por %p82, %p83
    %s85 = ssub.s32 %s9, %s16
    %p86 = scmp.eq.s32.totalorder %s85, 0
    %s88 = sadd.s32 %s87, 1
    %s89 = scalar_select %p86, %s87, %s88
    %p92 = pneg %p86
    %p93 = scmp.eq.s32.totalorder %s9, 1
    %p94 = por %p92, %p93
    %p95 = scmp.ne.s32.totalorder %s87, %s90
    %p96 = scmp.eq.s32.totalorder %s9, 0
    %p97 = por %p95, %p96
    %p98 = scmp.ne.s32.totalorder %s87, %s90
    %p99 = scmp.eq.s32.totalorder %s14, 1
    %p100 = por %p98, %p99
    %p101 = scmp.ne.s32.totalorder %s90, %s91
    %p102 = scmp.eq.s32.totalorder %s14, 0
    %p103 = por %p101, %p102
    %p104 = scmp.ne.s32.totalorder %s90, %s91
    %p105 = scmp.eq.s32.totalorder %s15, 1
    %p106 = por %p104, %p105
    %p108 = scmp.ne.s32.totalorder %s91, %s107
    %p109 = scmp.eq.s32.totalorder %s15, 0
    %p110 = por %p108, %p109
    %p111 = scmp.le.s32.totalorder 1, %s9
    %p112 = scmp.lt.s32.totalorder %s9, 3
    %p113 = pnand %p111, %p112
    %p114 = pneg %p113
    // Predicated region
    $region9: #{cnn_forward.6} parent=5 // pred_check
      _
    $region10: #{cnn_forward.6} parent=5 // pred_check_branch
      %116 = sbr.rel (%p113) target = $region12
    $region11: #{cnn_forward.6} parent=5 // pred_region
      %s117 = ssub.s32 %s9, 1
      // Predicated region
      $region13: #{cnn_forward.6} parent=11 // pred_check
        %p118 = pneg %p56
      $region14: #{cnn_forward.6} parent=11 // pred_check_branch
        %120 = sbr.rel (%p118) target = $region16
      $region15: #{cnn_forward.6} parent=11 // pred_region
        _
      $region16: #{cnn_forward.6} parent=11 // pred_fallthru
        _
      // Predicated region
      $region17: #{cnn_forward.6} parent=11 // pred_check
        %p121 = pneg %p77
      $region18: #{cnn_forward.6} parent=11 // pred_check_branch
        %123 = sbr.rel (%p121) target = $region20
      $region19: #{cnn_forward.6} parent=11 // pred_region
        _
      $region20: #{cnn_forward.6} parent=11 // pred_fallthru
        _
    $region12: #{cnn_forward.6} parent=5 // pred_fallthru
      _
    %p124 = scmp.lt.s32.totalorder %s9, 2
    // Predicated region
    $region21: #{cnn_forward.6} parent=5 // pred_check
      %p125 = pneg %p124
    $region22: #{cnn_forward.6} parent=5 // pred_check_branch
      %127 = sbr.rel (%p125) target = $region24
    $region23: #{cnn_forward.6} parent=5 // pred_region
      // Predicated region
      $region25: #{cnn_forward.6} parent=23 // pred_check
        %p128 = pneg %p29
      $region26: #{cnn_forward.6} parent=23 // pred_check_branch
        %130 = sbr.rel (%p128) target = $region28
      $region27: #{cnn_forward.6} parent=23 // pred_region
        %p131 = scmp.lt.s32.totalorder %s9, 1
        %s132 = scalar_select %p131, %s9, 1
        %s133 = smul.addr %s132, 3
        %s134 = smul.addr %s133, 4
        %s135 = scalar_lea.vmem %s0, %s134
      $region28: #{cnn_forward.6} parent=23 // pred_fallthru
        _
    $region24: #{cnn_forward.6} parent=5 // pred_fallthru
      _
    %p136 = scmp.le.s32.totalorder 1, %s9
    %p137 = scmp.lt.s32.totalorder %s9, 3
    %p138 = pnand %p136, %p137
    %p139 = pneg %p138
    // Predicated region
    $region29: #{cnn_forward.6} parent=5 // pred_check
      _
    $region30: #{cnn_forward.6} parent=5 // pred_check_branch
      %141 = sbr.rel (%p138) target = $region32
    $region31: #{cnn_forward.6} parent=5 // pred_region
      %s142 = ssub.s32 %s9, 1
      %p143 = scmp.lt.s32.totalorder %s14, 1
      %s144 = scalar_select %p143, %s14, 1
      %s145 = smul.addr %s144, 3
      %s146 = smul.addr %s145, 4
      %s147 = scalar_lea.vmem %s0, %s146
      %p148 = pneg %p35
      %p149 = pneg %p32
      %p150 = pneg %p56
      %p151 = pneg %p53
      %p152 = pneg %p77
      %p153 = pneg %p74
      %p154 = pneg %p103
      %p155 = pneg %p100
      %p156 = scmp.lt.s32.totalorder %s14, 1
      %s157 = scalar_select %p156, %s14, 1
      %s158 = smul.addr %s157, 4
      %s159 = smul.addr %s158, 2
      %s160 = scalar_lea.vmem %s3, %s159
      %p161 = scmp.lt.s32.totalorder %s14, 1
      %s162 = scalar_select %p161, %s14, 1
      %s163 = smul.addr %s162, 3
      %s164 = smul.addr %s163, 4
      %s165 = scalar_lea.vmem %s0, %s164
      %p166 = scmp.lt.s32.totalorder %s14, 1
      %s167 = scalar_select %p166, %s14, 1
      %s168 = smul.addr %s167, 4
      %s169 = smul.addr %s168, 2
      %s170 = scalar_lea.vmem %s3, %s169
      %vm172 = vcmask 1040384
      %vm173 = vsmask.f32 256
      %vm174 = vmand %vm172, %vm173
      %vm175 = vcmask 1042434
      %vm176 = vsmask.f32 2304
      %vm177 = vmand %vm175, %vm176
      %vm178 = vmor %vm177, %vm174
      %vm179 = vcmask 1044484
      %vm180 = vsmask.f32 4352
      %vm181 = vmand %vm179, %vm180
      %vm182 = vmor %vm181, %vm178
      %vm183 = vcmask 1046534
      %vm184 = vsmask.f32 6400
      %vm185 = vmand %vm183, %vm184
      %vm186 = vmor %vm185, %vm182
      %v187 = vld [vmem:[%s170] sm:$0x55]
      %v188 = vsel %vm186, 0, %v187
      %189 = vst [vmem:[%s170] sm:$0x55] %v188
      %vm190 = vcmask 1041409
      %vm191 = vsmask.f32 7942
      %vm192 = vmand %vm190, %vm191
      %vm193 = vcmask 1043459
      %vm194 = vsmask.f32 7950
      %vm195 = vmand %vm193, %vm194
      %vm196 = vmor %vm195, %vm192
      %vm197 = vcmask 1045509
      %vm198 = vsmask.f32 7958
      %vm199 = vmand %vm197, %vm198
      %vm200 = vmor %vm199, %vm196
      %vm201 = vcmask 1047559
      %vm202 = vsmask.f32 7966
      %vm203 = vmand %vm201, %vm202
      %vm204 = vmor %vm203, %vm200
      %v205 = vld [vmem:[%s170] sm:$0xaa]
      %v206 = vsel %vm204, 0, %v205
      %207 = vst [vmem:[%s170] sm:$0xaa] %v206
      %208 = vst [vmem:[%s170] sm:$0x3] 0
      %209 = vst [vmem:[%s170 + $0x6] sm:$0x3] 0
      %v210 = vld [vmem:[%s165] sm:$0x77]
      %v211 = vld [vmem:[%s165 + $0x8] sm:$0x7]
      %v213 = vrot.slane %v210, 4
      %214 = vrot.lane.b32.xlu0 %v210, 64
      %v215 = vpop.permute.xlu0 %214
      %v216 = vrot.slane %v215, 4
      %219 = vrot.lane.b32.xlu0 %v211, 64
      %v220 = vpop.permute.xlu0 %219
      %v222 = vcombine.low %v210, %v211
      %v224 = vunpack.c.l.s4 1983009808
      %v225 = vunpack.c.0.s8 %v224
      %v226 = vlaneseq
      %v227 = vshrl.u32 %v226, 7
      %v228 = vsub.s32 %v225, %v227
      %v229 = vrot.slane %v222, %v228
      %v232 = vunpack.c.l.s4 1983009808
      %v233 = vunpack.c.0.s8 %v232
      %v234 = vlaneseq
      %v235 = vshrl.u32 %v234, 7
      %v236 = vsub.s32 %v233, %v235
      %v237 = vrot.slane %v213, %v236
      %v238 = vcombine.low %v229, %v237
      %v239 = vcombine.high %v229, %v237
      %v241 = vunpack.c.l.s4 1934713408
      %v242 = vunpack.c.0.s8 %v241
      %v243 = vlaneseq
      %v244 = vshrl.u32 %v243, 7
      %v245 = vsub.s32 %v242, %v244
      %v246 = vrot.slane %v238, %v245
      %v247 = vcombine.high %v246, 0
      %v249 = vunpack.c.l.s4 1934713408
      %v250 = vunpack.c.0.s8 %v249
      %v251 = vlaneseq
      %v252 = vshrl.u32 %v251, 7
      %v253 = vsub.s32 %v250, %v252
      %v254 = vrot.slane %v239, %v253
      %v255 = vcombine.low %v215, %v220
      %v257 = vunpack.c.l.s4 1983009808
      %v258 = vunpack.c.0.s8 %v257
      %v259 = vlaneseq
      %v260 = vshrl.u32 %v259, 7
      %v261 = vsub.s32 %v258, %v260
      %v262 = vrot.slane %v255, %v261
      %v265 = vunpack.c.l.s4 1983009808
      %v266 = vunpack.c.0.s8 %v265
      %v267 = vlaneseq
      %v268 = vshrl.u32 %v267, 7
      %v269 = vsub.s32 %v266, %v268
      %v270 = vrot.slane %v216, %v269
      %v271 = vcombine.low %v262, %v270
      %v272 = vcombine.high %v262, %v270
      %v274 = vunpack.c.l.s4 1934713408
      %v275 = vunpack.c.0.s8 %v274
      %v276 = vlaneseq
      %v277 = vshrl.u32 %v276, 7
      %v278 = vsub.s32 %v275, %v277
      %v279 = vrot.slane %v271, %v278
      %v280 = vcombine.high %v279, 0
      %v282 = vunpack.c.l.s4 1934713408
      %v283 = vunpack.c.0.s8 %v282
      %v284 = vlaneseq
      %v285 = vshrl.u32 %v284, 7
      %v286 = vsub.s32 %v283, %v285
      %v287 = vrot.slane %v272, %v286
      %v290 = vpack.i.b16 %v279, %v246
      %v291 = vshrl.u32 %v246, 16
      %v292 = vshrl.u32 %v279, 16
      %v293 = vpack.i.b16 %v292, %v291
      %v296 = vpack.i.b16 %v280, %v247
      %v297 = vshrl.u32 %v247, 16
      %v298 = vshrl.u32 %v280, 16
      %v299 = vpack.i.b16 %v298, %v297
      %v302 = vpack.i.b16 %v287, %v254
      %v303 = vshrl.u32 %v254, 16
      %v304 = vshrl.u32 %v287, 16
      %v305 = vpack.i.b16 %v304, %v303
      %v306 = vunpack.c.l.b16 %v290
      %v307 = vunpack.c.l.b16 %v293
      %v308 = vunpack.c.l.b16 %v296
      %v309 = vunpack.c.l.b16 %v299
      %v310 = vpack.c.b16 %v306, %v306
      %v311 = vpack.c.b16 %v307, %v307
      %v312 = vpack.c.b16 %v308, %v308
      %v313 = vpack.c.b16 %v309, %v309
      %v315 = vshrl.u32 %v310, 16
      %v317 = vshll.u32 %v310, 16
      %v319 = vrot.slane %v317, 1
      %v320 = vor.u32 %v315, %v319
      %v322 = vshrl.u32 %v311, 16
      %v324 = vshll.u32 %v311, 16
      %v326 = vrot.slane %v324, 1
      %v327 = vor.u32 %v322, %v326
      %v329 = vshrl.u32 %v312, 16
      %v331 = vshll.u32 %v312, 16
      %v333 = vrot.slane %v331, 1
      %v334 = vor.u32 %v329, %v333
      %v336 = vshrl.u32 %v313, 16
      %v338 = vshll.u32 %v313, 16
      %v340 = vrot.slane %v338, 1
      %v341 = vor.u32 %v336, %v340
      %342 = vrot.lane.b32.xlu0 %v320, 64
      %v343 = vpop.permute.xlu0 %342
      %344 = vrot.lane.b32.xlu0 %v327, 64
      %v345 = vpop.permute.xlu0 %344
      %346 = vrot.lane.b32.xlu0 %v334, 64
      %v347 = vpop.permute.xlu0 %346
      %348 = vrot.lane.b32.xlu0 %v341, 64
      %v349 = vpop.permute.xlu0 %348
      %v350 = vrot.slane %v310, 1
      %v351 = vrot.slane %v311, 1
      %v352 = vrot.slane %v312, 1
      %v353 = vrot.slane %v313, 1
      %v354 = vunpack.c.l.b16 %v302
      %v355 = vpack.c.b16 %v354, %v354
      %356 = vrot.lane.b32.xlu0 %v311, 64
      %v357 = vpop.permute.xlu0 %356
      %358 = vrot.lane.b32.xlu0 %v312, 64
      %v359 = vpop.permute.xlu0 %358
      %360 = vrot.lane.b32.xlu0 %v313, 64
      %v361 = vpop.permute.xlu0 %360
      %362 = vrot.lane.b32.xlu0 %v355, 64
      %v363 = vpop.permute.xlu0 %362
      %v365 = vshrl.u32 %v355, 16
      %v367 = vshll.u32 %v355, 16
      %v369 = vrot.slane %v367, 1
      %v370 = vor.u32 %v365, %v369
      %v371 = vrot.slane %v355, 1
      %372 = vrot.lane.b32.xlu0 %v351, 64
      %v373 = vpop.permute.xlu0 %372
      %374 = vrot.lane.b32.xlu0 %v352, 64
      %v375 = vpop.permute.xlu0 %374
      %376 = vrot.lane.b32.xlu0 %v353, 64
      %v377 = vpop.permute.xlu0 %376
      %378 = vrot.lane.b32.xlu0 %v371, 64
      %v379 = vpop.permute.xlu0 %378
      %v380 = vunpack.c.l.b16 %v305
      %v381 = vpack.c.b16 %v380, %v380
      %v383 = vshrl.u32 %v381, 16
      %v385 = vshll.u32 %v381, 16
      %v387 = vrot.slane %v385, 1
      %v388 = vor.u32 %v383, %v387
      %389 = vrot.lane.b32.xlu0 %v370, 64
      %v390 = vpop.permute.xlu0 %389
      %391 = vrot.lane.b32.xlu0 %v388, 64
      %v392 = vpop.permute.xlu0 %391
      %v393 = vrot.slane %v381, 1
      %vm394 = vcmask 523264
      %v397 = vsel %vm394, %v290, %v343
      %v400 = vsel %vm394, %v293, %v345
      %v403 = vsel %vm394, %v296, %v347
      %v406 = vsel %vm394, %v299, %v349
      %v409 = vsel %vm394, %v350, %v357
      %v412 = vsel %vm394, %v351, %v359
      %v415 = vsel %vm394, %v352, %v361
      %v418 = vsel %vm394, %v353, %v363
      %v421 = vsel %vm394, %v327, %v373
      %v424 = vsel %vm394, %v334, %v375
      %v427 = vsel %vm394, %v341, %v377
      %v430 = vsel %vm394, %v370, %v379
      %v433 = vsel %vm394, %v302, %v390
      %v436 = vsel %vm394, %v305, %v392
      %v451 = vcombine.low %v397, %v409
      %v452 = vcombine.low %v421, %v403
      %v454 = vunpack.c.l.s4 1983009808
      %v455 = vunpack.c.0.s8 %v454
      %v456 = vlaneseq
      %v457 = vshrl.u32 %v456, 7
      %v458 = vsub.s32 %v455, %v457
      %v459 = vrot.slane %v451, %v458
      %v461 = vunpack.c.l.s4 1983009808
      %v462 = vunpack.c.0.s8 %v461
      %v463 = vlaneseq
      %v464 = vshrl.u32 %v463, 7
      %v465 = vsub.s32 %v462, %v464
      %v466 = vrot.slane %v452, %v465
      %v467 = vcombine.low %v459, %v466
      %v469 = vunpack.c.l.s4 1983009808
      %v470 = vunpack.c.0.s8 %v469
      %v471 = vlaneseq
      %v472 = vshrl.u32 %v471, 7
      %v473 = vsub.s32 %v470, %v472
      %v474 = vrot.slane %v352, %v473
      %v475 = vcombine.low %v400, %v412
      %v476 = vcombine.low %v424, %v406
      %v478 = vunpack.c.l.s4 1983009808
      %v479 = vunpack.c.0.s8 %v478
      %v480 = vlaneseq
      %v481 = vshrl.u32 %v480, 7
      %v482 = vsub.s32 %v479, %v481
      %v483 = vrot.slane %v475, %v482
      %v485 = vunpack.c.l.s4 1983009808
      %v486 = vunpack.c.0.s8 %v485
      %v487 = vlaneseq
      %v488 = vshrl.u32 %v487, 7
      %v489 = vsub.s32 %v486, %v488
      %v490 = vrot.slane %v476, %v489
      %v491 = vcombine.low %v483, %v490
      %v493 = vunpack.c.l.s4 1983009808
      %v494 = vunpack.c.0.s8 %v493
      %v495 = vlaneseq
      %v496 = vshrl.u32 %v495, 7
      %v497 = vsub.s32 %v494, %v496
      %v498 = vrot.slane %v353, %v497
      %v499 = vcombine.low %v403, %v415
      %v500 = vcombine.low %v427, %v433
      %v502 = vunpack.c.l.s4 1983009808
      %v503 = vunpack.c.0.s8 %v502
      %v504 = vlaneseq
      %v505 = vshrl.u32 %v504, 7
      %v506 = vsub.s32 %v503, %v505
      %v507 = vrot.slane %v499, %v506
      %v509 = vunpack.c.l.s4 1983009808
      %v510 = vunpack.c.0.s8 %v509
      %v511 = vlaneseq
      %v512 = vshrl.u32 %v511, 7
      %v513 = vsub.s32 %v510, %v512
      %v514 = vrot.slane %v500, %v513
      %v515 = vcombine.low %v507, %v514
      %v517 = vunpack.c.l.s4 1983009808
      %v518 = vunpack.c.0.s8 %v517
      %v519 = vlaneseq
      %v520 = vshrl.u32 %v519, 7
      %v521 = vsub.s32 %v518, %v520
      %v522 = vrot.slane %v371, %v521
      %v523 = vcombine.low %v406, %v418
      %v524 = vcombine.low %v430, %v436
      %v526 = vunpack.c.l.s4 1983009808
      %v527 = vunpack.c.0.s8 %v526
      %v528 = vlaneseq
      %v529 = vshrl.u32 %v528, 7
      %v530 = vsub.s32 %v527, %v529
      %v531 = vrot.slane %v523, %v530
      %v533 = vunpack.c.l.s4 1983009808
      %v534 = vunpack.c.0.s8 %v533
      %v535 = vlaneseq
      %v536 = vshrl.u32 %v535, 7
      %v537 = vsub.s32 %v534, %v536
      %v538 = vrot.slane %v524, %v537
      %v539 = vcombine.low %v531, %v538
      %v541 = vunpack.c.l.s4 1983009808
      %v542 = vunpack.c.0.s8 %v541
      %v543 = vlaneseq
      %v544 = vshrl.u32 %v543, 7
      %v545 = vsub.s32 %v542, %v544
      %v546 = vrot.slane %v393, %v545
      %v547 = vld [vmem:[%s1] sm:$0xf]
      %v548 = vld [vmem:[%s1 + $0x4] sm:$0xf]
      %v549 = vld [vmem:[%s1 + $0x8] sm:$0xf]
      %v550 = vld [vmem:[%s1 + $0xc] sm:$0xf]
      %v551 = vld [vmem:[%s1 + $0x10] sm:$0xf]
      %v552 = vld [vmem:[%s1 + $0x14] sm:$0xf]
      %v553 = vld [vmem:[%s1 + $0x18] sm:$0xf]
      %v554 = vld [vmem:[%s1 + $0x1c] sm:$0xf]
      %v555 = vld [vmem:[%s1 + $0x20] sm:$0xf]
      %v556 = vld [vmem:[%s1 + $0x24] sm:$0xf]
      %v557 = vld [vmem:[%s1 + $0x28] sm:$0xf]
      %v558 = vld [vmem:[%s1 + $0x2c] sm:$0xf]
      %v559 = vld [vmem:[%s1 + $0x30] sm:$0xf]
      %v560 = vld [vmem:[%s1 + $0x34] sm:$0xf]
      %v561 = vld [vmem:[%s1 + $0x38] sm:$0xf]
      %v562 = vld [vmem:[%s1 + $0x3c] sm:$0xf]
      %v563 = vld [vmem:[%s1 + $0x40] sm:$0xf]
      %v564 = vld [vmem:[%s1 + $0x44] sm:$0xf]
      %v565 = vld [vmem:[%s1 + $0x48] sm:$0xf]
      %v566 = vld [vmem:[%s1 + $0x4c] sm:$0xf]
      %v567 = vld [vmem:[%s1 + $0x50] sm:$0xf]
      %v568 = vld [vmem:[%s1 + $0x54] sm:$0xf]
      %v569 = vld [vmem:[%s1 + $0x58] sm:$0xf]
      %v570 = vld [vmem:[%s1 + $0x5c] sm:$0xf]
      %v571 = vld [vmem:[%s1 + $0x60] sm:$0xf]
      %v572 = vld [vmem:[%s1 + $0x64] sm:$0xf]
      %v573 = vld [vmem:[%s1 + $0x68] sm:$0xf]
      %v574 = vld [vmem:[%s1 + $0x6c] sm:$0xf]
      %v575 = vld [vmem:[%s1 + $0x70] sm:$0xf]
      %v576 = vld [vmem:[%s1 + $0x74] sm:$0xf]
      %v577 = vld [vmem:[%s1 + $0x78] sm:$0xf]
      %v578 = vld [vmem:[%s1 + $0x7c] sm:$0xf]
      %v579 = vld [vmem:[%s1 + $0x80] sm:$0xf]
      %v580 = vld [vmem:[%s1 + $0x84] sm:$0xf]
      %v581 = vld [vmem:[%s1 + $0x88] sm:$0xf]
      %v582 = vld [vmem:[%s1 + $0x8c] sm:$0xf]
      %v583 = vld [vmem:[%s1 + $0x90] sm:$0xf]
      %v584 = vld [vmem:[%s1 + $0x94] sm:$0xf]
      %v585 = vld [vmem:[%s1 + $0x98] sm:$0xf]
      %v586 = vld [vmem:[%s1 + $0x9c] sm:$0xf]
      %v587 = vld [vmem:[%s1 + $0xa0] sm:$0xf]
      %v588 = vld [vmem:[%s1 + $0xa4] sm:$0xf]
      %v589 = vld [vmem:[%s1 + $0xa8] sm:$0xf]
      %v590 = vld [vmem:[%s1 + $0xac] sm:$0xf]
      %v591 = vld [vmem:[%s1 + $0xb0] sm:$0xf]
      %v592 = vld [vmem:[%s1 + $0xb4] sm:$0xf]
      %v593 = vld [vmem:[%s1 + $0xb8] sm:$0xf]
      %v594 = vld [vmem:[%s1 + $0xbc] sm:$0xf]
      %v595 = vld [vmem:[%s1 + $0xc0] sm:$0xf]
      %v596 = vld [vmem:[%s1 + $0xc4] sm:$0xf]
      %v597 = vld [vmem:[%s1 + $0xc8] sm:$0xf]
      %v598 = vld [vmem:[%s1 + $0xcc] sm:$0xf]
      %v599 = vld [vmem:[%s1 + $0xd0] sm:$0xf]
      %v600 = vld [vmem:[%s1 + $0xd4] sm:$0xf]
      %v601 = vld [vmem:[%s1 + $0xd8] sm:$0xf]
      %v602 = vld [vmem:[%s1 + $0xdc] sm:$0xf]
      %v603 = vld [vmem:[%s1 + $0xe0] sm:$0xf]
      %v604 = vld [vmem:[%s1 + $0xe4] sm:$0xf]
      %v605 = vld [vmem:[%s1 + $0xe8] sm:$0xf]
      %v606 = vld [vmem:[%s1 + $0xec] sm:$0xf]
      %v607 = vld [vmem:[%s1 + $0xf0] sm:$0xf]
      %v608 = vld [vmem:[%s1 + $0xf4] sm:$0xf]
      %v609 = vld [vmem:[%s1 + $0xf8] sm:$0xf]
      %v610 = vld [vmem:[%s1 + $0xfc] sm:$0xf]
      %v611 = vld [vmem:[%s1 + $0x100] sm:$0xf]
      %v612 = vld [vmem:[%s1 + $0x104] sm:$0xf]
      %v613 = vld [vmem:[%s1 + $0x108] sm:$0xf]
      %v614 = vld [vmem:[%s1 + $0x10c] sm:$0xf]
      %v615 = vld [vmem:[%s1 + $0x110] sm:$0xf]
      %v616 = vld [vmem:[%s1 + $0x114] sm:$0xf]
      %v617 = vld [vmem:[%s1 + $0x118] sm:$0xf]
      %v618 = vld [vmem:[%s1 + $0x11c] sm:$0xf]
      %v619 = vld [vmem:[%s2] sm:$0x1]
      %v621 = vlaneseq
      %v622 = vshrl.u32 %v621, 7
      %v623 = vsub.s32 0, %v622
      %v624 = vrot.slane %v619, %v623
      %v626 = vcombine.low %v467, %v491
      %v627 = vcombine.high %v467, %v491
      %v628 = vcombine.low %v515, %v539
      %v629 = vcombine.high %v515, %v539
      %v631 = vunpack.c.l.s4 1983009808
      %v632 = vunpack.c.0.s8 %v631
      %v633 = vlaneseq
      %v634 = vshrl.u32 %v633, 7
      %v635 = vsub.s32 %v632, %v634
      %v636 = vrot.slane %v626, %v635
      %v638 = vunpack.c.l.s4 1983009808
      %v639 = vunpack.c.0.s8 %v638
      %v640 = vlaneseq
      %v641 = vshrl.u32 %v640, 7
      %v642 = vsub.s32 %v639, %v641
      %v643 = vrot.slane %v627, %v642
      %v645 = vunpack.c.l.s4 1983009808
      %v646 = vunpack.c.0.s8 %v645
      %v647 = vlaneseq
      %v648 = vshrl.u32 %v647, 7
      %v649 = vsub.s32 %v646, %v648
      %v650 = vrot.slane %v628, %v649
      %v652 = vunpack.c.l.s4 1983009808
      %v653 = vunpack.c.0.s8 %v652
      %v654 = vlaneseq
      %v655 = vshrl.u32 %v654, 7
      %v656 = vsub.s32 %v653, %v655
      %v657 = vrot.slane %v629, %v656
      %v658 = vcombine.low %v636, %v650
      %v659 = vcombine.high %v636, %v650
      %v660 = vcombine.low %v643, %v657
      %v661 = vcombine.high %v643, %v657
      %v662 = vcombine.low %v474, %v498
      %v663 = vcombine.low %v522, %v546
      %v665 = vunpack.c.l.s4 1983009808
      %v666 = vunpack.c.0.s8 %v665
      %v667 = vlaneseq
      %v668 = vshrl.u32 %v667, 7
      %v669 = vsub.s32 %v666, %v668
      %v670 = vrot.slane %v662, %v669
      %v672 = vunpack.c.l.s4 1983009808
      %v673 = vunpack.c.0.s8 %v672
      %v674 = vlaneseq
      %v675 = vshrl.u32 %v674, 7
      %v676 = vsub.s32 %v673, %v675
      %v677 = vrot.slane %v663, %v676
      %v678 = vcombine.low %v670, %v677
      %v755 = vunpack.c.l.b16 %v547
      %v756 = vunpack.c.l.b16 %v548
      %v757 = vunpack.c.l.b16 %v549
      %v758 = vunpack.c.l.b16 %v550
      %v759 = vunpack.c.l.b16 %v551
      %v760 = vunpack.c.l.b16 %v552
      %v761 = vunpack.c.l.b16 %v553
      %v762 = vunpack.c.l.b16 %v554
      %v763 = vunpack.c.l.b16 %v555
      %v764 = vunpack.c.l.b16 %v556
      %v765 = vunpack.c.l.b16 %v557
      %v766 = vunpack.c.l.b16 %v558
      %v767 = vunpack.c.l.b16 %v559
      %v768 = vunpack.c.l.b16 %v560
      %v769 = vunpack.c.l.b16 %v561
      %v770 = vunpack.c.l.b16 %v562
      %v771 = vunpack.c.l.b16 %v563
      %v772 = vunpack.c.l.b16 %v564
      %v773 = vunpack.c.l.b16 %v565
      %v774 = vunpack.c.l.b16 %v566
      %v775 = vunpack.c.l.b16 %v567
      %v776 = vunpack.c.l.b16 %v568
      %v777 = vunpack.c.l.b16 %v569
      %v778 = vunpack.c.l.b16 %v570
      %v779 = vunpack.c.l.b16 %v571
      %v780 = vunpack.c.l.b16 %v572
      %v781 = vunpack.c.l.b16 %v573
      %v782 = vunpack.c.l.b16 %v574
      %v783 = vunpack.c.l.b16 %v575
      %v784 = vunpack.c.l.b16 %v576
      %v785 = vunpack.c.l.b16 %v577
      %v786 = vunpack.c.l.b16 %v578
      %v787 = vunpack.c.l.b16 %v579
      %v788 = vunpack.c.l.b16 %v580
      %v789 = vunpack.c.l.b16 %v581
      %v790 = vunpack.c.l.b16 %v582
      %v791 = vunpack.c.l.b16 %v583
      %v792 = vunpack.c.l.b16 %v584
      %v793 = vunpack.c.l.b16 %v585
      %v794 = vunpack.c.l.b16 %v586
      %v795 = vunpack.c.l.b16 %v587
      %v796 = vunpack.c.l.b16 %v588
      %v797 = vunpack.c.l.b16 %v589
      %v798 = vunpack.c.l.b16 %v590
      %v799 = vunpack.c.l.b16 %v591
      %v800 = vunpack.c.l.b16 %v592
      %v801 = vunpack.c.l.b16 %v593
      %v802 = vunpack.c.l.b16 %v594
      %v803 = vunpack.c.l.b16 %v595
      %v804 = vunpack.c.l.b16 %v596
      %v805 = vunpack.c.l.b16 %v597
      %v806 = vunpack.c.l.b16 %v598
      %v807 = vunpack.c.l.b16 %v599
      %v808 = vunpack.c.l.b16 %v600
      %v809 = vunpack.c.l.b16 %v601
      %v810 = vunpack.c.l.b16 %v602
      %v811 = vunpack.c.l.b16 %v603
      %v812 = vunpack.c.l.b16 %v604
      %v813 = vunpack.c.l.b16 %v605
      %v814 = vunpack.c.l.b16 %v606
      %v815 = vunpack.c.l.b16 %v607
      %v816 = vunpack.c.l.b16 %v608
      %v817 = vunpack.c.l.b16 %v609
      %v818 = vunpack.c.l.b16 %v610
      %v819 = vunpack.c.l.b16 %v611
      %v820 = vunpack.c.l.b16 %v612
      %v821 = vunpack.c.l.b16 %v613
      %v822 = vunpack.c.l.b16 %v614
      %v823 = vunpack.c.l.b16 %v615
      %v824 = vunpack.c.l.b16 %v616
      %v825 = vunpack.c.l.b16 %v617
      %v826 = vunpack.c.l.b16 %v618
      %v827 = vpack.c.b16 %v756, %v755
      %v828 = vpack.c.b16 %v758, %v757
      %v829 = vpack.c.b16 %v760, %v759
      %v830 = vpack.c.b16 %v762, %v761
      %v831 = vpack.c.b16 %v764, %v763
      %v832 = vpack.c.b16 %v766, %v765
      %v833 = vpack.c.b16 %v768, %v767
      %v834 = vpack.c.b16 %v770, %v769
      %v835 = vpack.c.b16 %v772, %v771
      %v836 = vpack.c.b16 %v774, %v773
      %v837 = vpack.c.b16 %v776, %v775
      %v838 = vpack.c.b16 %v778, %v777
      %v839 = vpack.c.b16 %v780, %v779
      %v840 = vpack.c.b16 %v782, %v781
      %v841 = vpack.c.b16 %v784, %v783
      %v842 = vpack.c.b16 %v786, %v785
      %v843 = vpack.c.b16 %v788, %v787
      %v844 = vpack.c.b16 %v790, %v789
      %v845 = vpack.c.b16 %v792, %v791
      %v846 = vpack.c.b16 %v794, %v793
      %v847 = vpack.c.b16 %v796, %v795
      %v848 = vpack.c.b16 %v798, %v797
      %v849 = vpack.c.b16 %v800, %v799
      %v850 = vpack.c.b16 %v802, %v801
      %v851 = vpack.c.b16 %v804, %v803
      %v852 = vpack.c.b16 %v806, %v805
      %v853 = vpack.c.b16 %v808, %v807
      %v854 = vpack.c.b16 %v810, %v809
      %v855 = vpack.c.b16 %v812, %v811
      %v856 = vpack.c.b16 %v814, %v813
      %v857 = vpack.c.b16 %v816, %v815
      %v858 = vpack.c.b16 %v818, %v817
      %v859 = vpack.c.b16 %v820, %v819
      %v860 = vpack.c.b16 %v822, %v821
      %v861 = vpack.c.b16 %v824, %v823
      %v862 = vpack.c.b16 %v826, %v825
      %v900 = vsel %vm394, %v678, 0
      %902 = vmatprep.subr.bf16.mxu0 0
      %903 = vmatpush1.bf16.msra.mxu0 %v827
      %904 = vmatprep.subr.bf16.mxu0 0
      %905 = vmatpush1.bf16.msra.mxu0 %v828
      %906 = vmatprep.subr.bf16.mxu0 0
      %907 = vmatpush1.bf16.msra.mxu0 %v829
      %908 = vmatprep.subr.bf16.mxu0 0
      %909 = vmatpush1.bf16.msra.mxu0 %v830
      %910 = vmatprep.subr.bf16.mxu0 0
      %911 = vmatpush1.bf16.msra.mxu0 %v831
      %912 = vmatprep.subr.bf16.mxu0 0
      %913 = vmatpush1.bf16.msra.mxu0 %v832
      %914 = vmatprep.subr.bf16.mxu0 0
      %915 = vmatpush1.bf16.msra.mxu0 %v833
      %916 = vmatprep.subr.bf16.mxu0 0
      %917 = vmatpush1.bf16.msra.mxu0 %v834
      %918 = vmatprep.subr.bf16.mxu0 0
      %919 = vmatpush1.bf16.msra.mxu0 %v835
      %920 = vmatprep.subr.bf16.mxu0 0
      %921 = vmatpush1.bf16.msra.mxu0 %v836
      %922 = vmatprep.subr.bf16.mxu0 0
      %923 = vmatpush1.bf16.msra.mxu0 %v837
      %924 = vmatprep.subr.bf16.mxu0 0
      %925 = vmatpush1.bf16.msra.mxu0 %v838
      %926 = vmatprep.subr.bf16.mxu0 0
      %927 = vmatpush1.bf16.msra.mxu0 %v839
      %928 = vmatprep.subr.bf16.mxu0 0
      %929 = vmatpush1.bf16.msra.mxu0 %v840
      %930 = vmatprep.subr.bf16.mxu0 0
      %931 = vmatpush1.bf16.msra.mxu0 %v841
      %932 = vmatprep.subr.bf16.mxu0 0
      %933 = vmatpush1.bf16.msra.mxu0 %v842
      %934 = vmatprep.mubr.bf16.mxu0 %v659
      %935 = vmatmul.mubr.bf16.gmra.mrb[0].mxu0 %v658
      %v936 = vpop.f32.mrb[0].mxu0
      %v937 = vadd.f32 %v624, %v936
      %v938 = vpop.f32.mrb[0].mxu0
      %v939 = vpop.f32.mrb[0].mxu0
      %v940 = vadd.f32 %v624, %v939
      %v941 = vpop.f32.mrb[0].mxu0
      %942 = vdwg.mxu0
      %943 = vmatprep.subr.bf16.mxu0 0
      %944 = vmatpush1.bf16.msra.mxu0 %v843
      %945 = vmatprep.subr.bf16.mxu0 0
      %946 = vmatpush1.bf16.msra.mxu0 %v844
      %947 = vmatprep.subr.bf16.mxu0 0
      %948 = vmatpush1.bf16.msra.mxu0 %v845
      %949 = vmatprep.subr.bf16.mxu0 0
      %950 = vmatpush1.bf16.msra.mxu0 %v846
      %951 = vmatprep.subr.bf16.mxu0 0
      %952 = vmatpush1.bf16.msra.mxu0 %v847
      %953 = vmatprep.subr.bf16.mxu0 0
      %954 = vmatpush1.bf16.msra.mxu0 %v848
      %955 = vmatprep.subr.bf16.mxu0 0
      %956 = vmatpush1.bf16.msra.mxu0 %v849
      %957 = vmatprep.subr.bf16.mxu0 0
      %958 = vmatpush1.bf16.msra.mxu0 %v850
      %959 = vmatprep.subr.bf16.mxu0 0
      %960 = vmatpush1.bf16.msra.mxu0 %v851
      %961 = vmatprep.subr.bf16.mxu0 0
      %962 = vmatpush1.bf16.msra.mxu0 %v852
      %963 = vmatprep.subr.bf16.mxu0 0
      %964 = vmatpush1.bf16.msra.mxu0 %v853
      %965 = vmatprep.subr.bf16.mxu0 0
      %966 = vmatpush1.bf16.msra.mxu0 %v854
      %967 = vmatprep.subr.bf16.mxu0 0
      %968 = vmatpush1.bf16.msra.mxu0 %v855
      %969 = vmatprep.subr.bf16.mxu0 0
      %970 = vmatpush1.bf16.msra.mxu0 %v856
      %971 = vmatprep.subr.bf16.mxu0 0
      %972 = vmatpush1.bf16.msra.mxu0 %v857
      %973 = vmatprep.subr.bf16.mxu0 0
      %974 = vmatpush1.bf16.msra.mxu0 %v858
      %975 = vmatprep.mubr.bf16.mxu0 %v661
      %976 = vmatmul.mubr.bf16.gmra.mrb[0].mxu0 %v660
      %v977 = vpop.f32.mrb[0].mxu0
      %v978 = vadd.f32 %v937, %v977
      %v979 = vpop.f32.mrb[0].mxu0
      %v980 = vpop.f32.mrb[0].mxu0
      %v981 = vadd.f32 %v940, %v980
      %v982 = vpop.f32.mrb[0].mxu0
      %983 = vdwg.mxu0
      %984 = vmatprep.subr.bf16.mxu0 0
      %985 = vmatpush1.bf16.msra.mxu0 %v859
      %986 = vmatprep.subr.bf16.mxu0 0
      %987 = vmatpush1.bf16.msra.mxu0 %v860
      %988 = vmatprep.subr.bf16.mxu0 0
      %989 = vmatpush1.bf16.msra.mxu0 %v861
      %990 = vmatprep.subr.bf16.mxu0 0
      %991 = vmatpush1.bf16.msra.mxu0 %v862
      %992 = vmatprep.subr.bf16.mxu0 0
      %993 = vmatpush1.bf16.msra.mxu0 0
      %994 = vmatprep.subr.bf16.mxu0 0
      %995 = vmatpush1.bf16.msra.mxu0 0
      %996 = vmatprep.subr.bf16.mxu0 0
      %997 = vmatpush1.bf16.msra.mxu0 0
      %998 = vmatprep.subr.bf16.mxu0 0
      %999 = vmatpush1.bf16.msra.mxu0 0
      %1000 = vmatprep.subr.bf16.mxu0 0
      %1001 = vmatpush1.bf16.msra.mxu0 0
      %1002 = vmatprep.subr.bf16.mxu0 0
      %1003 = vmatpush1.bf16.msra.mxu0 0
      %1004 = vmatprep.subr.bf16.mxu0 0
      %1005 = vmatpush1.bf16.msra.mxu0 0
      %1006 = vmatprep.subr.bf16.mxu0 0
      %1007 = vmatpush1.bf16.msra.mxu0 0
      %1008 = vmatprep.subr.bf16.mxu0 0
      %1009 = vmatpush1.bf16.msra.mxu0 0
      %1010 = vmatprep.subr.bf16.mxu0 0
      %1011 = vmatpush1.bf16.msra.mxu0 0
      %1012 = vmatprep.subr.bf16.mxu0 0
      %1013 = vmatpush1.bf16.msra.mxu0 0
      %1014 = vmatprep.subr.bf16.mxu0 0
      %1015 = vmatpush1.bf16.msra.mxu0 0
      %1016 = vmatprep.mubr.bf16.mxu0 0
      %1017 = vmatmul.mubr.bf16.gmra.mrb[0].mxu0 %v900
      %v1018 = vpop.f32.mrb[0].mxu0
      %v1019 = vadd.f32 %v978, %v1018
      %v1020 = vpop.f32.mrb[0].mxu0
      %v1021 = vpop.f32.mrb[0].mxu0
      %v1022 = vadd.f32 %v981, %v1021
      %v1023 = vpop.f32.mrb[0].mxu0
      %1024 = vdwg.mxu0
      %v1025 = vmax.f32 %v1019, 0.0
      %v1026 = vmax.f32 %v1022, 0.0
      %v1027 = vpack.c.bf16 %v1026, %v1025
      %v1029 = vcombine.high %v1027, %v1027
      %v1031 = vunpack.c.l.s4 1983009808
      %v1032 = vunpack.c.0.s8 %v1031
      %v1033 = vlaneseq
      %v1034 = vshrl.u32 %v1033, 7
      %v1035 = vsub.s32 %v1032, %v1034
      %v1036 = vrot.slane %v1027, %v1035
      %v1038 = vunpack.c.l.s4 1983009808
      %v1039 = vunpack.c.0.s8 %v1038
      %v1040 = vlaneseq
      %v1041 = vshrl.u32 %v1040, 7
      %v1042 = vsub.s32 %v1039, %v1041
      %v1043 = vrot.slane %v1029, %v1042
      %v1044 = vcombine.high %v1036, %v1036
      %v1045 = vcombine.high %v1043, %v1043
      %v1050 = vmax.bf16 %v1036, %v1044
      %v1051 = vmax.bf16 %v1043, %v1045
      %v1055 = vunpack.c.l.s4 1966171168
      %v1056 = vunpack.c.0.s8 %v1055
      %v1057 = vlaneseq
      %v1058 = vshrl.u32 %v1057, 7
      %v1059 = vsub.s32 %v1056, %v1058
      %v1060 = vrot.slane %v1050, %v1059
      %v1061 = vcombine.high %v1060, %v1060
      %v1063 = vunpack.c.l.s4 1966171168
      %v1064 = vunpack.c.0.s8 %v1063
      %v1065 = vlaneseq
      %v1066 = vshrl.u32 %v1065, 7
      %v1067 = vsub.s32 %v1064, %v1066
      %v1068 = vrot.slane %v1051, %v1067
      %v1069 = vcombine.high %v1068, %v1068
      %v1075 = vshrl.u32 %v1060, 16
      %v1077 = vrot.slane %v1075, 7
      %v1078 = vrot.slane %v1077, 1
      %v1080 = vshrl.u32 %v1061, 16
      %v1082 = vrot.slane %v1080, 7
      %v1083 = vrot.slane %v1082, 1
      %v1085 = vshrl.u32 %v1068, 16
      %v1087 = vrot.slane %v1085, 7
      %v1088 = vrot.slane %v1087, 1
      %v1090 = vshrl.u32 %v1069, 16
      %v1092 = vrot.slane %v1090, 7
      %v1093 = vrot.slane %v1092, 1
      %v1098 = vmax.bf16 %v1060, %v1078
      %v1099 = vmax.bf16 %v1061, %v1083
      %v1100 = vmax.bf16 %v1068, %v1088
      %v1101 = vmax.bf16 %v1069, %v1093
      %v1107 = vunpack.c.l.s4 1935823168
      %v1108 = vunpack.c.0.s8 %v1107
      %v1109 = vlaneseq
      %v1110 = vshrl.u32 %v1109, 7
      %v1111 = vsub.s32 %v1108, %v1110
      %v1112 = vrot.slane %v1098, %v1111
      %v1114 = vunpack.c.l.s4 1935823168
      %v1115 = vunpack.c.0.s8 %v1114
      %v1116 = vlaneseq
      %v1117 = vshrl.u32 %v1116, 7
      %v1118 = vsub.s32 %v1115, %v1117
      %v1119 = vrot.slane %v1112, %v1118
      %v1121 = vunpack.c.l.s4 1935823168
      %v1122 = vunpack.c.0.s8 %v1121
      %v1123 = vlaneseq
      %v1124 = vshrl.u32 %v1123, 7
      %v1125 = vsub.s32 %v1122, %v1124
      %v1126 = vrot.slane %v1099, %v1125
      %v1128 = vunpack.c.l.s4 1935823168
      %v1129 = vunpack.c.0.s8 %v1128
      %v1130 = vlaneseq
      %v1131 = vshrl.u32 %v1130, 7
      %v1132 = vsub.s32 %v1129, %v1131
      %v1133 = vrot.slane %v1126, %v1132
      %v1135 = vunpack.c.l.s4 1935823168
      %v1136 = vunpack.c.0.s8 %v1135
      %v1137 = vlaneseq
      %v1138 = vshrl.u32 %v1137, 7
      %v1139 = vsub.s32 %v1136, %v1138
      %v1140 = vrot.slane %v1100, %v1139
      %v1142 = vunpack.c.l.s4 1935823168
      %v1143 = vunpack.c.0.s8 %v1142
      %v1144 = vlaneseq
      %v1145 = vshrl.u32 %v1144, 7
      %v1146 = vsub.s32 %v1143, %v1145
      %v1147 = vrot.slane %v1140, %v1146
      %v1149 = vunpack.c.l.s4 1935823168
      %v1150 = vunpack.c.0.s8 %v1149
      %v1151 = vlaneseq
      %v1152 = vshrl.u32 %v1151, 7
      %v1153 = vsub.s32 %v1150, %v1152
      %v1154 = vrot.slane %v1101, %v1153
      %v1156 = vunpack.c.l.s4 1935823168
      %v1157 = vunpack.c.0.s8 %v1156
      %v1158 = vlaneseq
      %v1159 = vshrl.u32 %v1158, 7
      %v1160 = vsub.s32 %v1157, %v1159
      %v1161 = vrot.slane %v1154, %v1160
      %v1162 = vunpack.c.l.b16 %v1119
      %v1163 = vunpack.c.l.b16 %v1133
      %v1164 = vunpack.c.l.b16 %v1147
      %v1165 = vunpack.c.l.b16 %v1161
      %v1166 = vrot.slane %v1163, 7
      %vm1167 = vcmask 1041409
      %v1168 = vsel %vm1167, %v1166, %v1162
      %v1169 = vrot.slane %v1165, 7
      %v1170 = vsel %vm1167, %v1169, %v1164
      %v1171 = vpack.c.b16 %v1168, %v1168
      %v1172 = vpack.c.b16 %v1170, %v1170
      %v1174 = vunpack.c.l.s4 1966171168
      %v1175 = vunpack.c.0.s8 %v1174
      %v1176 = vlaneseq
      %v1177 = vshrl.u32 %v1176, 7
      %v1178 = vsub.s32 %v1175, %v1177
      %v1179 = vrot.slane %v1171, %v1178
      %v1181 = vunpack.c.l.s4 1966171168
      %v1182 = vunpack.c.0.s8 %v1181
      %v1183 = vlaneseq
      %v1184 = vshrl.u32 %v1183, 7
      %v1185 = vsub.s32 %v1182, %v1184
      %v1186 = vrot.slane %v1179, %v1185
      %v1188 = vunpack.c.l.s4 1966171168
      %v1189 = vunpack.c.0.s8 %v1188
      %v1190 = vlaneseq
      %v1191 = vshrl.u32 %v1190, 7
      %v1192 = vsub.s32 %v1189, %v1191
      %v1193 = vrot.slane %v1172, %v1192
      %v1195 = vunpack.c.l.s4 1966171168
      %v1196 = vunpack.c.0.s8 %v1195
      %v1197 = vlaneseq
      %v1198 = vshrl.u32 %v1197, 7
      %v1199 = vsub.s32 %v1196, %v1198
      %v1200 = vrot.slane %v1193, %v1199
      %v1203 = vpack.i.b16 %v1200, %v1186
      %v1204 = vshrl.u32 %v1186, 16
      %v1205 = vshrl.u32 %v1200, 16
      %v1206 = vpack.i.b16 %v1205, %v1204
      %v1207 = vcombine.low %v1203, %v1206
      %v1209 = vunpack.c.l.s4 1983009808
      %v1210 = vunpack.c.0.s8 %v1209
      %v1211 = vlaneseq
      %v1212 = vshrl.u32 %v1211, 7
      %v1213 = vsub.s32 %v1210, %v1212
      %v1214 = vrot.slane %v1207, %v1213
      %v1216 = vshrl.u32 %v1214, 16
      %v1218 = vrot.slane %v1216, 7
      %v1219 = vshll.u32 %v1214, 16
      %v1221 = vor.u32 %v1218, %v1219
      %vm1223 = vcmask 1041408
      %vm1224 = vsmask.f32 1282
      %vm1225 = vmand %vm1223, %vm1224
      %vm1226 = vcmask 1043458
      %vm1227 = vsmask.f32 3338
      %vm1228 = vmand %vm1226, %vm1227
      %vm1229 = vmor %vm1228, %vm1225
      %v1230 = vld [vmem:[%s170 + $0x2] sm:$0xf]
      %v1231 = vsel %vm1229, %v1221, %v1230
      %1232 = vst [vmem:[%s170 + $0x2] sm:$0xf] %v1231
      %p1233 = scmp.lt.s32.totalorder %s14, 1
      %s1234 = scalar_select %p1233, %s14, 1
      %s1235 = smul.addr %s1234, 4
      %s1236 = smul.addr %s1235, 2
      %s1237 = scalar_lea.vmem %s3, %s1236
      // Predicated region
      $region33: #{cnn_forward.6} parent=31 // pred_check
        %p1238 = pneg %p100
      $region34: #{cnn_forward.6} parent=31 // pred_check_branch
        %1240 = sbr.rel (%p1238) target = $region36
      $region35: #{cnn_forward.6} parent=31 // pred_region
        _
      $region36: #{cnn_forward.6} parent=31 // pred_fallthru
        _
    $region32: #{cnn_forward.6} parent=5 // pred_fallthru
      _
    %p1241 = scmp.le.s32.totalorder 2, %s9
    // Predicated region
    $region37: #{cnn_forward.6} parent=5 // pred_check
      %p1242 = pneg %p1241
    $region38: #{cnn_forward.6} parent=5 // pred_check_branch
      %1244 = sbr.rel (%p1242) target = $region40
    $region39: #{cnn_forward.6} parent=5 // pred_region
      %s1245 = ssub.s32 %s9, 2
      // Predicated region
      $region41: #{cnn_forward.6} parent=39 // pred_check
        %p1246 = pneg %p106
      $region42: #{cnn_forward.6} parent=39 // pred_check_branch
        %1248 = sbr.rel (%p1246) target = $region44
      $region43: #{cnn_forward.6} parent=39 // pred_region
        %p1249 = scmp.lt.s32.totalorder %s15, 1
        %s1250 = scalar_select %p1249, %s15, 1
        %s1251 = smul.addr %s1250, 4
        %s1252 = smul.addr %s1251, 2
        %s1253 = scalar_lea.vmem %s3, %s1252
      $region44: #{cnn_forward.6} parent=39 // pred_fallthru
        _
    $region40: #{cnn_forward.6} parent=5 // pred_fallthru
      _
  $region6: #{cnn_forward.6} parent=0 // loop_footer
    %s13 = sadd.s32 1, %s9
  $region7: #{cnn_forward.6} parent=0 // loop_footer_branch
    %8 = sbr.rel target = $region3
  $region8: #{cnn_forward.6} parent=0 // loop_exit
    _

// kernel: cnn_forward.4
$region0: #{cnn_forward.4}
  #allocation0 [shape = 'u32[]', space=smem, size = 0x4, offset = 0x4, fixed_abs, tag = 'smem constant byte address 0x4 - core index']
  #allocation1 [shape = 'u32[144,128]{1,0:T(1,128)}', space=vmem, size = 0x12000, scoped, tag = 'internal scratch']
  %s0 = inlined_call_operand.vmem [shape: bf16[2,18,54], index: 0, kind: input, shape index: {}]
  %s1 = inlined_call_operand.vmem [shape: bf16[27,32], index: 1, kind: input, shape index: {}]
  %s2 = inlined_call_operand.vmem [shape: f32[1,32], index: 2, kind: input, shape index: {}]
  %s3 = inlined_call_operand.vmem [shape: bf16[2,10,320], index: 3, kind: output, shape index: {}]
  %s4 = sld [smem:[#allocation0]]
  $region45: #{cnn_forward.4} parent=0
    _
  %s6 = ssub.s32 1, %s4
  %s7 = scalar_select 0, %s6, %s4
  loop: start=0, step=1, limit=4
  $region2: #{cnn_forward.4} parent=0 // loop_pre_header
    _
  $region3: #{cnn_forward.4} parent=0 // loop_header
    %s9 = sphi 0, %s13
    %p10 = scmp.ge.s32.totalorder %s9, 4
    %s19 = sphi 0, %s21
    %s22 = sphi 0, %s19
    %s23 = sphi 0, %s22
    %s39 = sphi 0, %s23
    %s43 = sphi 0, %s43
    %s45 = sphi 0, %s43
    %s46 = sphi 0, %s45
    %s60 = sphi 0, %s46
    %s64 = sphi 0, %s64
    %s66 = sphi 0, %s64
    %s67 = sphi 0, %s66
    %s81 = sphi 0, %s67
    %s87 = sphi 0, %s89
    %s90 = sphi 0, %s87
    %s91 = sphi 0, %s90
    %s107 = sphi 0, %s91
  $region4: #{cnn_forward.4} parent=0 // loop_header_branch
    %12 = sbr.rel (%p10) target = $region8
  $region5: #{cnn_forward.4} parent=0 // loop_body
    %s14 = ssub.s32 %s9, 1
    %s15 = ssub.s32 %s9, 2
    %s16 = sadd.s32 %s9, 1
    %s17 = ssub.s32 %s9, %s16
    %p18 = scmp.eq.s32.totalorder %s17, 0
    %s20 = sadd.s32 %s19, 1
    %s21 = scalar_select %p18, %s19, %s20
    %p24 = pneg %p18
    %p25 = scmp.eq.s32.totalorder %s9, 1
    %p26 = por %p24, %p25
    %p27 = scmp.ne.s32.totalorder %s19, %s22
    %p28 = scmp.eq.s32.totalorder %s9, 0
    %p29 = por %p27, %p28
    %p30 = scmp.ne.s32.totalorder %s19, %s22
    %p31 = scmp.eq.s32.totalorder %s14, 1
    %p32 = por %p30, %p31
    %p33 = scmp.ne.s32.totalorder %s22, %s23
    %p34 = scmp.eq.s32.totalorder %s14, 0
    %p35 = por %p33, %p34
    %p36 = scmp.ne.s32.totalorder %s22, %s23
    %p37 = scmp.eq.s32.totalorder %s15, 1
    %p38 = por %p36, %p37
    %p40 = scmp.ne.s32.totalorder %s23, %s39
    %p41 = scmp.eq.s32.totalorder %s15, 0
    %p42 = por %p40, %p41
    %s44 = sadd.s32 %s43, 1
    %p47 = scmp.eq.s32.totalorder %s9, 1
    %p48 = scmp.ne.s32.totalorder %s43, %s45
    %p49 = scmp.eq.s32.totalorder %s9, 0
    %p50 = por %p48, %p49
    %p51 = scmp.ne.s32.totalorder %s43, %s45
    %p52 = scmp.eq.s32.totalorder %s14, 1
    %p53 = por %p51, %p52
    %p54 = scmp.ne.s32.totalorder %s45, %s46
    %p55 = scmp.eq.s32.totalorder %s14, 0
    %p56 = por %p54, %p55
    %p57 = scmp.ne.s32.totalorder %s45, %s46
    %p58 = scmp.eq.s32.totalorder %s15, 1
    %p59 = por %p57, %p58
    %p61 = scmp.ne.s32.totalorder %s46, %s60
    %p62 = scmp.eq.s32.totalorder %s15, 0
    %p63 = por %p61, %p62
    %s65 = sadd.s32 %s64, 1
    %p68 = scmp.eq.s32.totalorder %s9, 1
    %p69 = scmp.ne.s32.totalorder %s64, %s66
    %p70 = scmp.eq.s32.totalorder %s9, 0
    %p71 = por %p69, %p70
    %p72 = scmp.ne.s32.totalorder %s64, %s66
    %p73 = scmp.eq.s32.totalorder %s14, 1
    %p74 = por %p72, %p73
    %p75 = scmp.ne.s32.totalorder %s66, %s67
    %p76 = scmp.eq.s32.totalorder %s14, 0
    %p77 = por %p75, %p76
    %p78 = scmp.ne.s32.totalorder %s66, %s67
    %p79 = scmp.eq.s32.totalorder %s15, 1
    %p80 = por %p78, %p79
    %p82 = scmp.ne.s32.totalorder %s67, %s81
    %p83 = scmp.eq.s32.totalorder %s15, 0
    %p84 = por %p82, %p83
    %s85 = ssub.s32 %s9, %s16
    %p86 = scmp.eq.s32.totalorder %s85, 0
    %s88 = sadd.s32 %s87, 1
    %s89 = scalar_select %p86, %s87, %s88
    %p92 = pneg %p86
    %p93 = scmp.eq.s32.totalorder %s9, 1
    %p94 = por %p92, %p93
    %p95 = scmp.ne.s32.totalorder %s87, %s90
    %p96 = scmp.eq.s32.totalorder %s9, 0
    %p97 = por %p95, %p96
    %p98 = scmp.ne.s32.totalorder %s87, %s90
    %p99 = scmp.eq.s32.totalorder %s14, 1
    %p100 = por %p98, %p99
    %p101 = scmp.ne.s32.totalorder %s90, %s91
    %p102 = scmp.eq.s32.totalorder %s14, 0
    %p103 = por %p101, %p102
    %p104 = scmp.ne.s32.totalorder %s90, %s91
    %p105 = scmp.eq.s32.totalorder %s15, 1
    %p106 = por %p104, %p105
    %p108 = scmp.ne.s32.totalorder %s91, %s107
    %p109 = scmp.eq.s32.totalorder %s15, 0
    %p110 = por %p108, %p109
    %p111 = scmp.le.s32.totalorder 1, %s9
    %p112 = scmp.lt.s32.totalorder %s9, 3
    %p113 = pnand %p111, %p112
    %p114 = pneg %p113
    // Predicated region
    $region9: #{cnn_forward.4} parent=5 // pred_check
      _
    $region10: #{cnn_forward.4} parent=5 // pred_check_branch
      %116 = sbr.rel (%p113) target = $region12
    $region11: #{cnn_forward.4} parent=5 // pred_region
      %s117 = ssub.s32 %s9, 1
      // Predicated region
      $region13: #{cnn_forward.4} parent=11 // pred_check
        %p118 = pneg %p56
      $region14: #{cnn_forward.4} parent=11 // pred_check_branch
        %120 = sbr.rel (%p118) target = $region16
      $region15: #{cnn_forward.4} parent=11 // pred_region
        _
      $region16: #{cnn_forward.4} parent=11 // pred_fallthru
        _
      // Predicated region
      $region17: #{cnn_forward.4} parent=11 // pred_check
        %p121 = pneg %p77
      $region18: #{cnn_forward.4} parent=11 // pred_check_branch
        %123 = sbr.rel (%p121) target = $region20
      $region19: #{cnn_forward.4} parent=11 // pred_region
        _
      $region20: #{cnn_forward.4} parent=11 // pred_fallthru
        _
    $region12: #{cnn_forward.4} parent=5 // pred_fallthru
      _
    %p124 = scmp.lt.s32.totalorder %s9, 2
    // Predicated region
    $region21: #{cnn_forward.4} parent=5 // pred_check
      %p125 = pneg %p124
    $region22: #{cnn_forward.4} parent=5 // pred_check_branch
      %127 = sbr.rel (%p125) target = $region24
    $region23: #{cnn_forward.4} parent=5 // pred_region
      // Predicated region
      $region25: #{cnn_forward.4} parent=23 // pred_check
        %p128 = pneg %p29
      $region26: #{cnn_forward.4} parent=23 // pred_check_branch
        %130 = sbr.rel (%p128) target = $region28
      $region27: #{cnn_forward.4} parent=23 // pred_region
        %p131 = scmp.lt.s32.totalorder %s9, 1
        %s132 = scalar_select %p131, %s9, 1
        %s133 = smul.addr %s132, 3
        %s134 = smul.addr %s133, 4
        %s135 = scalar_lea.vmem %s0, %s134
      $region28: #{cnn_forward.4} parent=23 // pred_fallthru
        _
    $region24: #{cnn_forward.4} parent=5 // pred_fallthru
      _
    %p136 = scmp.le.s32.totalorder 1, %s9
    %p137 = scmp.lt.s32.totalorder %s9, 3
    %p138 = pnand %p136, %p137
    %p139 = pneg %p138
    // Predicated region
    $region29: #{cnn_forward.4} parent=5 // pred_check
      _
    $region30: #{cnn_forward.4} parent=5 // pred_check_branch
      %141 = sbr.rel (%p138) target = $region32
    $region31: #{cnn_forward.4} parent=5 // pred_region
      %s142 = ssub.s32 %s9, 1
      %p143 = scmp.lt.s32.totalorder %s14, 1
      %s144 = scalar_select %p143, %s14, 1
      %s145 = smul.addr %s144, 3
      %s146 = smul.addr %s145, 4
      %s147 = scalar_lea.vmem %s0, %s146
      %p148 = pneg %p35
      %p149 = pneg %p32
      %p150 = pneg %p56
      %p151 = pneg %p53
      %p152 = pneg %p77
      %p153 = pneg %p74
      %p154 = pneg %p103
      %p155 = pneg %p100
      %p156 = scmp.lt.s32.totalorder %s14, 1
      %s157 = scalar_select %p156, %s14, 1
      %s158 = smul.addr %s157, 6
      %s159 = smul.addr %s158, 4
      %s160 = scalar_lea.vmem %s3, %s159
      %p161 = scmp.lt.s32.totalorder %s14, 1
      %s162 = scalar_select %p161, %s14, 1
      %s163 = smul.addr %s162, 3
      %s164 = smul.addr %s163, 4
      %s165 = scalar_lea.vmem %s0, %s164
      %p166 = scmp.lt.s32.totalorder %s14, 1
      %s167 = scalar_select %p166, %s14, 1
      %s168 = smul.addr %s167, 6
      %s169 = smul.addr %s168, 4
      %s170 = scalar_lea.vmem %s3, %s169
      %vm172 = vcmask 1040384
      %vm173 = vsmask.f32 256
      %vm174 = vmand %vm172, %vm173
      %vm175 = vcmask 1044484
      %vm176 = vsmask.f32 4352
      %vm177 = vmand %vm175, %vm176
      %vm178 = vmor %vm177, %vm174
      %v179 = vld [vmem:[%s170] sm:$0x11]
      %v180 = vsel %vm178, 0, %v179
      %181 = vst [vmem:[%s170] sm:$0x11] %v180
      %vm182 = vcmask 516096
      %vm183 = vmand %vm182, %vm173
      %v184 = vld [vmem:[%s170 + $0x8] sm:$0x1]
      %v185 = vsel %vm183, 0, %v184
      %186 = vst [vmem:[%s170 + $0x8] sm:$0x1] %v185
      %vm187 = vsmask.f32 7938
      %vm188 = vmand %vm172, %vm187
      %vm189 = vsmask.f32 7954
      %vm190 = vmand %vm175, %vm189
      %vm191 = vmor %vm190, %vm188
      %v192 = vld [vmem:[%s170 + $0xc] sm:$0x11]
      %v193 = vsel %vm191, 0, %v192
      %194 = vst [vmem:[%s170 + $0xc] sm:$0x11] %v193
      %vm195 = vmand %vm182, %vm187
      %v196 = vld [vmem:[%s170 + $0x14] sm:$0x1]
      %v197 = vsel %vm195, 0, %v196
      %198 = vst [vmem:[%s170 + $0x14] sm:$0x1] %v197
      %vm199 = vcmask 257024
      %200 = vst.msk [vmem:[%s170] sm:$0xf] %vm199, 0
      %vm201 = vcmask 253952
      %202 = vst.msk [vmem:[%s170 + $0xc] sm:$0x1] %vm201, 0
      %vm203 = vcmask 519424
      %204 = vst.msk [vmem:[%s170 + $0x8] sm:$0xf] %vm203, 0
      %vm205 = vcmask 516352
      %206 = vst.msk [vmem:[%s170 + $0x14] sm:$0x1] %vm205, 0
      %v207 = vld [vmem:[%s165] sm:$0xf]
      %v208 = vld [vmem:[%s165 + $0x4] sm:$0xf]
      %v209 = vld [vmem:[%s165 + $0x8] sm:$0x1]
      %213 = vrot.lane.b32.xlu0 %v207, 125
      %v214 = vpop.permute.xlu0 %213
      %215 = vrot.lane.b32.xlu0 %v208, 125
      %v216 = vpop.permute.xlu0 %215
      %217 = vrot.lane.b32.xlu0 %v209, 125
      %v218 = vpop.permute.xlu0 %217
      %222 = vrot.lane.b32.xlu0 %v207, 122
      %v223 = vpop.permute.xlu0 %222
      %224 = vrot.lane.b32.xlu0 %v208, 122
      %v225 = vpop.permute.xlu0 %224
      %226 = vrot.lane.b32.xlu0 %v209, 122
      %v227 = vpop.permute.xlu0 %226
      %231 = vrot.lane.b32.xlu0 %v207, 119
      %v232 = vpop.permute.xlu0 %231
      %233 = vrot.lane.b32.xlu0 %v208, 119
      %v234 = vpop.permute.xlu0 %233
      %235 = vrot.lane.b32.xlu0 %v209, 119
      %v236 = vpop.permute.xlu0 %235
      %240 = vrot.lane.b32.xlu0 %v207, 116
      %v241 = vpop.permute.xlu0 %240
      %242 = vrot.lane.b32.xlu0 %v208, 116
      %v243 = vpop.permute.xlu0 %242
      %244 = vrot.lane.b32.xlu0 %v209, 116
      %v245 = vpop.permute.xlu0 %244
      %249 = vrot.lane.b32.xlu0 %v207, 113
      %v250 = vpop.permute.xlu0 %249
      %251 = vrot.lane.b32.xlu0 %v208, 113
      %v252 = vpop.permute.xlu0 %251
      %253 = vrot.lane.b32.xlu0 %v209, 113
      %v254 = vpop.permute.xlu0 %253
      %258 = vrot.lane.b32.xlu0 %v207, 110
      %v259 = vpop.permute.xlu0 %258
      %260 = vrot.lane.b32.xlu0 %v208, 110
      %v261 = vpop.permute.xlu0 %260
      %262 = vrot.lane.b32.xlu0 %v209, 110
      %v263 = vpop.permute.xlu0 %262
      %267 = vrot.lane.b32.xlu0 %v207, 107
      %v268 = vpop.permute.xlu0 %267
      %269 = vrot.lane.b32.xlu0 %v208, 107
      %v270 = vpop.permute.xlu0 %269
      %271 = vrot.lane.b32.xlu0 %v209, 107
      %v272 = vpop.permute.xlu0 %271
      %276 = vrot.lane.b32.xlu0 %v207, 104
      %v277 = vpop.permute.xlu0 %276
      %278 = vrot.lane.b32.xlu0 %v208, 104
      %v279 = vpop.permute.xlu0 %278
      %280 = vrot.lane.b32.xlu0 %v209, 104
      %v281 = vpop.permute.xlu0 %280
      %285 = vrot.lane.b32.xlu0 %v207, 101
      %v286 = vpop.permute.xlu0 %285
      %287 = vrot.lane.b32.xlu0 %v208, 101
      %v288 = vpop.permute.xlu0 %287
      %289 = vrot.lane.b32.xlu0 %v209, 101
      %v290 = vpop.permute.xlu0 %289
      %294 = vrot.lane.b32.xlu0 %v207, 98
      %v295 = vpop.permute.xlu0 %294
      %296 = vrot.lane.b32.xlu0 %v208, 98
      %v297 = vpop.permute.xlu0 %296
      %298 = vrot.lane.b32.xlu0 %v209, 98
      %v299 = vpop.permute.xlu0 %298
      %303 = vrot.lane.b32.xlu0 %v207, 95
      %v304 = vpop.permute.xlu0 %303
      %305 = vrot.lane.b32.xlu0 %v208, 95
      %v306 = vpop.permute.xlu0 %305
      %307 = vrot.lane.b32.xlu0 %v209, 95
      %v308 = vpop.permute.xlu0 %307
      %312 = vrot.lane.b32.xlu0 %v207, 92
      %v313 = vpop.permute.xlu0 %312
      %314 = vrot.lane.b32.xlu0 %v208, 92
      %v315 = vpop.permute.xlu0 %314
      %316 = vrot.lane.b32.xlu0 %v209, 92
      %v317 = vpop.permute.xlu0 %316
      %321 = vrot.lane.b32.xlu0 %v207, 89
      %v322 = vpop.permute.xlu0 %321
      %323 = vrot.lane.b32.xlu0 %v208, 89
      %v324 = vpop.permute.xlu0 %323
      %325 = vrot.lane.b32.xlu0 %v209, 89
      %v326 = vpop.permute.xlu0 %325
      %330 = vrot.lane.b32.xlu0 %v207, 86
      %v331 = vpop.permute.xlu0 %330
      %332 = vrot.lane.b32.xlu0 %v208, 86
      %v333 = vpop.permute.xlu0 %332
      %334 = vrot.lane.b32.xlu0 %v209, 86
      %v335 = vpop.permute.xlu0 %334
      %339 = vrot.lane.b32.xlu0 %v207, 83
      %v340 = vpop.permute.xlu0 %339
      %341 = vrot.lane.b32.xlu0 %v208, 83
      %v342 = vpop.permute.xlu0 %341
      %343 = vrot.lane.b32.xlu0 %v209, 83
      %v344 = vpop.permute.xlu0 %343
      %348 = vrot.lane.b32.xlu0 %v207, 80
      %v349 = vpop.permute.xlu0 %348
      %350 = vrot.lane.b32.xlu0 %v208, 80
      %v351 = vpop.permute.xlu0 %350
      %352 = vrot.lane.b32.xlu0 %v209, 80
      %v353 = vpop.permute.xlu0 %352
      %354 = vrot.lane.b32.xlu0 %v207, 77
      %v355 = vpop.permute.xlu0 %354
      %356 = vrot.lane.b32.xlu0 %v208, 77
      %v357 = vpop.permute.xlu0 %356
      %358 = vrot.lane.b32.xlu0 %v209, 77
      %v359 = vpop.permute.xlu0 %358
      %v360 = vcombine.low %v207, %v241
      %v362 = vunpack.c.l.s4 1983009808
      %v363 = vunpack.c.0.s8 %v362
      %v364 = vlaneseq
      %v365 = vshrl.u32 %v364, 7
      %v366 = vsub.s32 %v363, %v365
      %v367 = vrot.slane %v360, %v366
      %v368 = vcombine.low %v223, %v259
      %v370 = vunpack.c.l.s4 1983009808
      %v371 = vunpack.c.0.s8 %v370
      %v372 = vlaneseq
      %v373 = vshrl.u32 %v372, 7
      %v374 = vsub.s32 %v371, %v373
      %v375 = vrot.slane %v368, %v374
      %v376 = vcombine.low %v367, %v375
      %v377 = vcombine.high %v367, %v375
      %v379 = vunpack.c.l.s4 1934713408
      %v380 = vunpack.c.0.s8 %v379
      %v381 = vlaneseq
      %v382 = vshrl.u32 %v381, 7
      %v383 = vsub.s32 %v380, %v382
      %v384 = vrot.slane %v376, %v383
      %v386 = vunpack.c.l.s4 1934713408
      %v387 = vunpack.c.0.s8 %v386
      %v388 = vlaneseq
      %v389 = vshrl.u32 %v388, 7
      %v390 = vsub.s32 %v387, %v389
      %v391 = vrot.slane %v377, %v390
      %v392 = vcombine.high %v384, 0
      %v393 = vcombine.high %v391, 0
      %v394 = vcombine.low %v214, %v250
      %v396 = vunpack.c.l.s4 1983009808
      %v397 = vunpack.c.0.s8 %v396
      %v398 = vlaneseq
      %v399 = vshrl.u32 %v398, 7
      %v400 = vsub.s32 %v397, %v399
      %v401 = vrot.slane %v394, %v400
      %v402 = vcombine.low %v232, %v268
      %v404 = vunpack.c.l.s4 1983009808
      %v405 = vunpack.c.0.s8 %v404
      %v406 = vlaneseq
      %v407 = vshrl.u32 %v406, 7
      %v408 = vsub.s32 %v405, %v407
      %v409 = vrot.slane %v402, %v408
      %v410 = vcombine.low %v401, %v409
      %v411 = vcombine.high %v401, %v409
      %v413 = vunpack.c.l.s4 1934713408
      %v414 = vunpack.c.0.s8 %v413
      %v415 = vlaneseq
      %v416 = vshrl.u32 %v415, 7
      %v417 = vsub.s32 %v414, %v416
      %v418 = vrot.slane %v410, %v417
      %v420 = vunpack.c.l.s4 1934713408
      %v421 = vunpack.c.0.s8 %v420
      %v422 = vlaneseq
      %v423 = vshrl.u32 %v422, 7
      %v424 = vsub.s32 %v421, %v423
      %v425 = vrot.slane %v411, %v424
      %v426 = vcombine.high %v418, 0
      %v427 = vcombine.high %v425, 0
      %v428 = vcombine.low %v277, %v313
      %v430 = vunpack.c.l.s4 1983009808
      %v431 = vunpack.c.0.s8 %v430
      %v432 = vlaneseq
      %v433 = vshrl.u32 %v432, 7
      %v434 = vsub.s32 %v431, %v433
      %v435 = vrot.slane %v428, %v434
      %v436 = vcombine.low %v295, %v331
      %v438 = vunpack.c.l.s4 1983009808
      %v439 = vunpack.c.0.s8 %v438
      %v440 = vlaneseq
      %v441 = vshrl.u32 %v440, 7
      %v442 = vsub.s32 %v439, %v441
      %v443 = vrot.slane %v436, %v442
      %v444 = vcombine.low %v435, %v443
      %v445 = vcombine.high %v435, %v443
      %v447 = vunpack.c.l.s4 1934713408
      %v448 = vunpack.c.0.s8 %v447
      %v449 = vlaneseq
      %v450 = vshrl.u32 %v449, 7
      %v451 = vsub.s32 %v448, %v450
      %v452 = vrot.slane %v444, %v451
      %v454 = vunpack.c.l.s4 1934713408
      %v455 = vunpack.c.0.s8 %v454
      %v456 = vlaneseq
      %v457 = vshrl.u32 %v456, 7
      %v458 = vsub.s32 %v455, %v457
      %v459 = vrot.slane %v445, %v458
      %v460 = vcombine.high %v452, 0
      %v461 = vcombine.high %v459, 0
      %v462 = vcombine.low %v286, %v322
      %v464 = vunpack.c.l.s4 1983009808
      %v465 = vunpack.c.0.s8 %v464
      %v466 = vlaneseq
      %v467 = vshrl.u32 %v466, 7
      %v468 = vsub.s32 %v465, %v467
      %v469 = vrot.slane %v462, %v468
      %v470 = vcombine.low %v304, %v340
      %v472 = vunpack.c.l.s4 1983009808
      %v473 = vunpack.c.0.s8 %v472
      %v474 = vlaneseq
      %v475 = vshrl.u32 %v474, 7
      %v476 = vsub.s32 %v473, %v475
      %v477 = vrot.slane %v470, %v476
      %v478 = vcombine.low %v469, %v477
      %v479 = vcombine.high %v469, %v477
      %v481 = vunpack.c.l.s4 1934713408
      %v482 = vunpack.c.0.s8 %v481
      %v483 = vlaneseq
      %v484 = vshrl.u32 %v483, 7
      %v485 = vsub.s32 %v482, %v484
      %v486 = vrot.slane %v478, %v485
      %v488 = vunpack.c.l.s4 1934713408
      %v489 = vunpack.c.0.s8 %v488
      %v490 = vlaneseq
      %v491 = vshrl.u32 %v490, 7
      %v492 = vsub.s32 %v489, %v491
      %v493 = vrot.slane %v479, %v492
      %v494 = vcombine.high %v486, 0
      %v495 = vcombine.high %v493, 0
      %v498 = vunpack.c.l.s4 1983009808
      %v499 = vunpack.c.0.s8 %v498
      %v500 = vlaneseq
      %v501 = vshrl.u32 %v500, 7
      %v502 = vsub.s32 %v499, %v501
      %v503 = vrot.slane %v349, %v502
      %v504 = vcombine.high %v503, 0
      %v506 = vunpack.c.l.s4 1934713408
      %v507 = vunpack.c.0.s8 %v506
      %v508 = vlaneseq
      %v509 = vshrl.u32 %v508, 7
      %v510 = vsub.s32 %v507, %v509
      %v511 = vrot.slane %v503, %v510
      %v513 = vunpack.c.l.s4 1934713408
      %v514 = vunpack.c.0.s8 %v513
      %v515 = vlaneseq
      %v516 = vshrl.u32 %v515, 7
      %v517 = vsub.s32 %v514, %v516
      %v518 = vrot.slane %v504, %v517
      %v519 = vcombine.high %v511, 0
      %v520 = vcombine.high %v518, 0
      %v523 = vunpack.c.l.s4 1983009808
      %v524 = vunpack.c.0.s8 %v523
      %v525 = vlaneseq
      %v526 = vshrl.u32 %v525, 7
      %v527 = vsub.s32 %v524, %v526
      %v528 = vrot.slane %v355, %v527
      %v529 = vcombine.high %v528, 0
      %v531 = vunpack.c.l.s4 1934713408
      %v532 = vunpack.c.0.s8 %v531
      %v533 = vlaneseq
      %v534 = vshrl.u32 %v533, 7
      %v535 = vsub.s32 %v532, %v534
      %v536 = vrot.slane %v528, %v535
      %v538 = vunpack.c.l.s4 1934713408
      %v539 = vunpack.c.0.s8 %v538
      %v540 = vlaneseq
      %v541 = vshrl.u32 %v540, 7
      %v542 = vsub.s32 %v539, %v541
      %v543 = vrot.slane %v529, %v542
      %v544 = vcombine.high %v536, 0
      %v545 = vcombine.high %v543, 0
      %v546 = vcombine.low %v208, %v243
      %v548 = vunpack.c.l.s4 1983009808
      %v549 = vunpack.c.0.s8 %v548
      %v550 = vlaneseq
      %v551 = vshrl.u32 %v550, 7
      %v552 = vsub.s32 %v549, %v551
      %v553 = vrot.slane %v546, %v552
      %v554 = vcombine.low %v225, %v261
      %v556 = vunpack.c.l.s4 1983009808
      %v557 = vunpack.c.0.s8 %v556
      %v558 = vlaneseq
      %v559 = vshrl.u32 %v558, 7
      %v560 = vsub.s32 %v557, %v559
      %v561 = vrot.slane %v554, %v560
      %v562 = vcombine.low %v553, %v561
      %v563 = vcombine.high %v553, %v561
      %v565 = vunpack.c.l.s4 1934713408
      %v566 = vunpack.c.0.s8 %v565
      %v567 = vlaneseq
      %v568 = vshrl.u32 %v567, 7
      %v569 = vsub.s32 %v566, %v568
      %v570 = vrot.slane %v562, %v569
      %v572 = vunpack.c.l.s4 1934713408
      %v573 = vunpack.c.0.s8 %v572
      %v574 = vlaneseq
      %v575 = vshrl.u32 %v574, 7
      %v576 = vsub.s32 %v573, %v575
      %v577 = vrot.slane %v563, %v576
      %v578 = vcombine.high %v570, 0
      %v579 = vcombine.high %v577, 0
      %v580 = vcombine.low %v216, %v252
      %v582 = vunpack.c.l.s4 1983009808
      %v583 = vunpack.c.0.s8 %v582
      %v584 = vlaneseq
      %v585 = vshrl.u32 %v584, 7
      %v586 = vsub.s32 %v583, %v585
      %v587 = vrot.slane %v580, %v586
      %v588 = vcombine.low %v234, %v270
      %v590 = vunpack.c.l.s4 1983009808
      %v591 = vunpack.c.0.s8 %v590
      %v592 = vlaneseq
      %v593 = vshrl.u32 %v592, 7
      %v594 = vsub.s32 %v591, %v593
      %v595 = vrot.slane %v588, %v594
      %v596 = vcombine.low %v587, %v595
      %v597 = vcombine.high %v587, %v595
      %v599 = vunpack.c.l.s4 1934713408
      %v600 = vunpack.c.0.s8 %v599
      %v601 = vlaneseq
      %v602 = vshrl.u32 %v601, 7
      %v603 = vsub.s32 %v600, %v602
      %v604 = vrot.slane %v596, %v603
      %v606 = vunpack.c.l.s4 1934713408
      %v607 = vunpack.c.0.s8 %v606
      %v608 = vlaneseq
      %v609 = vshrl.u32 %v608, 7
      %v610 = vsub.s32 %v607, %v609
      %v611 = vrot.slane %v597, %v610
      %v612 = vcombine.high %v604, 0
      %v613 = vcombine.high %v611, 0
      %v614 = vcombine.low %v279, %v315
      %v616 = vunpack.c.l.s4 1983009808
      %v617 = vunpack.c.0.s8 %v616
      %v618 = vlaneseq
      %v619 = vshrl.u32 %v618, 7
      %v620 = vsub.s32 %v617, %v619
      %v621 = vrot.slane %v614, %v620
      %v622 = vcombine.low %v297, %v333
      %v624 = vunpack.c.l.s4 1983009808
      %v625 = vunpack.c.0.s8 %v624
      %v626 = vlaneseq
      %v627 = vshrl.u32 %v626, 7
      %v628 = vsub.s32 %v625, %v627
      %v629 = vrot.slane %v622, %v628
      %v630 = vcombine.low %v621, %v629
      %v631 = vcombine.high %v621, %v629
      %v633 = vunpack.c.l.s4 1934713408
      %v634 = vunpack.c.0.s8 %v633
      %v635 = vlaneseq
      %v636 = vshrl.u32 %v635, 7
      %v637 = vsub.s32 %v634, %v636
      %v638 = vrot.slane %v630, %v637
      %v640 = vunpack.c.l.s4 1934713408
      %v641 = vunpack.c.0.s8 %v640
      %v642 = vlaneseq
      %v643 = vshrl.u32 %v642, 7
      %v644 = vsub.s32 %v641, %v643
      %v645 = vrot.slane %v631, %v644
      %v646 = vcombine.high %v638, 0
      %v647 = vcombine.high %v645, 0
      %v648 = vcombine.low %v288, %v324
      %v650 = vunpack.c.l.s4 1983009808
      %v651 = vunpack.c.0.s8 %v650
      %v652 = vlaneseq
      %v653 = vshrl.u32 %v652, 7
      %v654 = vsub.s32 %v651, %v653
      %v655 = vrot.slane %v648, %v654
      %v656 = vcombine.low %v306, %v342
      %v658 = vunpack.c.l.s4 1983009808
      %v659 = vunpack.c.0.s8 %v658
      %v660 = vlaneseq
      %v661 = vshrl.u32 %v660, 7
      %v662 = vsub.s32 %v659, %v661
      %v663 = vrot.slane %v656, %v662
      %v664 = vcombine.low %v655, %v663
      %v665 = vcombine.high %v655, %v663
      %v667 = vunpack.c.l.s4 1934713408
      %v668 = vunpack.c.0.s8 %v667
      %v669 = vlaneseq
      %v670 = vshrl.u32 %v669, 7
      %v671 = vsub.s32 %v668, %v670
      %v672 = vrot.slane %v664, %v671
      %v674 = vunpack.c.l.s4 1934713408
      %v675 = vunpack.c.0.s8 %v674
      %v676 = vlaneseq
      %v677 = vshrl.u32 %v676, 7
      %v678 = vsub.s32 %v675, %v677
      %v679 = vrot.slane %v665, %v678
      %v680 = vcombine.high %v672, 0
      %v681 = vcombine.high %v679, 0
      %v684 = vunpack.c.l.s4 1983009808
      %v685 = vunpack.c.0.s8 %v684
      %v686 = vlaneseq
      %v687 = vshrl.u32 %v686, 7
      %v688 = vsub.s32 %v685, %v687
      %v689 = vrot.slane %v351, %v688
      %v690 = vcombine.high %v689, 0
      %v692 = vunpack.c.l.s4 1934713408
      %v693 = vunpack.c.0.s8 %v692
      %v694 = vlaneseq
      %v695 = vshrl.u32 %v694, 7
      %v696 = vsub.s32 %v693, %v695
      %v697 = vrot.slane %v689, %v696
      %v699 = vunpack.c.l.s4 1934713408
      %v700 = vunpack.c.0.s8 %v699
      %v701 = vlaneseq
      %v702 = vshrl.u32 %v701, 7
      %v703 = vsub.s32 %v700, %v702
      %v704 = vrot.slane %v690, %v703
      %v705 = vcombine.high %v697, 0
      %v706 = vcombine.high %v704, 0
      %v709 = vunpack.c.l.s4 1983009808
      %v710 = vunpack.c.0.s8 %v709
      %v711 = vlaneseq
      %v712 = vshrl.u32 %v711, 7
      %v713 = vsub.s32 %v710, %v712
      %v714 = vrot.slane %v357, %v713
      %v715 = vcombine.high %v714, 0
      %v717 = vunpack.c.l.s4 1934713408
      %v718 = vunpack.c.0.s8 %v717
      %v719 = vlaneseq
      %v720 = vshrl.u32 %v719, 7
      %v721 = vsub.s32 %v718, %v720
      %v722 = vrot.slane %v714, %v721
      %v724 = vunpack.c.l.s4 1934713408
      %v725 = vunpack.c.0.s8 %v724
      %v726 = vlaneseq
      %v727 = vshrl.u32 %v726, 7
      %v728 = vsub.s32 %v725, %v727
      %v729 = vrot.slane %v715, %v728
      %v730 = vcombine.high %v722, 0
      %v731 = vcombine.high %v729, 0
      %v732 = vcombine.low %v209, %v245
      %v734 = vunpack.c.l.s4 1983009808
      %v735 = vunpack.c.0.s8 %v734
      %v736 = vlaneseq
      %v737 = vshrl.u32 %v736, 7
      %v738 = vsub.s32 %v735, %v737
      %v739 = vrot.slane %v732, %v738
      %v740 = vcombine.low %v227, %v263
      %v742 = vunpack.c.l.s4 1983009808
      %v743 = vunpack.c.0.s8 %v742
      %v744 = vlaneseq
      %v745 = vshrl.u32 %v744, 7
      %v746 = vsub.s32 %v743, %v745
      %v747 = vrot.slane %v740, %v746
      %v748 = vcombine.low %v739, %v747
      %v750 = vunpack.c.l.s4 1934713408
      %v751 = vunpack.c.0.s8 %v750
      %v752 = vlaneseq
      %v753 = vshrl.u32 %v752, 7
      %v754 = vsub.s32 %v751, %v753
      %v755 = vrot.slane %v748, %v754
      %v756 = vcombine.low %v218, %v254
      %v758 = vunpack.c.l.s4 1983009808
      %v759 = vunpack.c.0.s8 %v758
      %v760 = vlaneseq
      %v761 = vshrl.u32 %v760, 7
      %v762 = vsub.s32 %v759, %v761
      %v763 = vrot.slane %v756, %v762
      %v764 = vcombine.low %v236, %v272
      %v766 = vunpack.c.l.s4 1983009808
      %v767 = vunpack.c.0.s8 %v766
      %v768 = vlaneseq
      %v769 = vshrl.u32 %v768, 7
      %v770 = vsub.s32 %v767, %v769
      %v771 = vrot.slane %v764, %v770
      %v772 = vcombine.low %v763, %v771
      %v774 = vunpack.c.l.s4 1934713408
      %v775 = vunpack.c.0.s8 %v774
      %v776 = vlaneseq
      %v777 = vshrl.u32 %v776, 7
      %v778 = vsub.s32 %v775, %v777
      %v779 = vrot.slane %v772, %v778
      %v780 = vcombine.low %v281, %v317
      %v782 = vunpack.c.l.s4 1983009808
      %v783 = vunpack.c.0.s8 %v782
      %v784 = vlaneseq
      %v785 = vshrl.u32 %v784, 7
      %v786 = vsub.s32 %v783, %v785
      %v787 = vrot.slane %v780, %v786
      %v788 = vcombine.low %v299, %v335
      %v790 = vunpack.c.l.s4 1983009808
      %v791 = vunpack.c.0.s8 %v790
      %v792 = vlaneseq
      %v793 = vshrl.u32 %v792, 7
      %v794 = vsub.s32 %v791, %v793
      %v795 = vrot.slane %v788, %v794
      %v796 = vcombine.low %v787, %v795
      %v798 = vunpack.c.l.s4 1934713408
      %v799 = vunpack.c.0.s8 %v798
      %v800 = vlaneseq
      %v801 = vshrl.u32 %v800, 7
      %v802 = vsub.s32 %v799, %v801
      %v803 = vrot.slane %v796, %v802
      %v804 = vcombine.low %v290, %v326
      %v806 = vunpack.c.l.s4 1983009808
      %v807 = vunpack.c.0.s8 %v806
      %v808 = vlaneseq
      %v809 = vshrl.u32 %v808, 7
      %v810 = vsub.s32 %v807, %v809
      %v811 = vrot.slane %v804, %v810
      %v812 = vcombine.low %v308, %v344
      %v814 = vunpack.c.l.s4 1983009808
      %v815 = vunpack.c.0.s8 %v814
      %v816 = vlaneseq
      %v817 = vshrl.u32 %v816, 7
      %v818 = vsub.s32 %v815, %v817
      %v819 = vrot.slane %v812, %v818
      %v820 = vcombine.low %v811, %v819
      %v822 = vunpack.c.l.s4 1934713408
      %v823 = vunpack.c.0.s8 %v822
      %v824 = vlaneseq
      %v825 = vshrl.u32 %v824, 7
      %v826 = vsub.s32 %v823, %v825
      %v827 = vrot.slane %v820, %v826
      %v830 = vpack.i.b16 %v418, %v384
      %v831 = vshrl.u32 %v384, 16
      %v832 = vshrl.u32 %v418, 16
      %v833 = vpack.i.b16 %v832, %v831
      %v836 = vpack.i.b16 %v426, %v392
      %v837 = vshrl.u32 %v392, 16
      %v838 = vshrl.u32 %v426, 16
      %v839 = vpack.i.b16 %v838, %v837
      %v842 = vpack.i.b16 %v425, %v391
      %v843 = vshrl.u32 %v391, 16
      %v844 = vshrl.u32 %v425, 16
      %v845 = vpack.i.b16 %v844, %v843
      %v848 = vpack.i.b16 %v427, %v393
      %v849 = vshrl.u32 %v393, 16
      %v850 = vshrl.u32 %v427, 16
      %v851 = vpack.i.b16 %v850, %v849
      %v854 = vpack.i.b16 %v604, %v570
      %v855 = vshrl.u32 %v570, 16
      %v856 = vshrl.u32 %v604, 16
      %v857 = vpack.i.b16 %v856, %v855
      %v860 = vpack.i.b16 %v612, %v578
      %v861 = vshrl.u32 %v578, 16
      %v862 = vshrl.u32 %v612, 16
      %v863 = vpack.i.b16 %v862, %v861
      %v866 = vpack.i.b16 %v611, %v577
      %v867 = vshrl.u32 %v577, 16
      %v868 = vshrl.u32 %v611, 16
      %v869 = vpack.i.b16 %v868, %v867
      %v872 = vpack.i.b16 %v613, %v579
      %v873 = vshrl.u32 %v579, 16
      %v874 = vshrl.u32 %v613, 16
      %v875 = vpack.i.b16 %v874, %v873
      %v878 = vpack.i.b16 %v779, %v755
      %v879 = vshrl.u32 %v755, 16
      %v880 = vshrl.u32 %v779, 16
      %v881 = vpack.i.b16 %v880, %v879
      %v884 = vpack.i.b16 %v486, %v452
      %v885 = vshrl.u32 %v452, 16
      %v886 = vshrl.u32 %v486, 16
      %v887 = vpack.i.b16 %v886, %v885
      %v890 = vpack.i.b16 %v494, %v460
      %v891 = vshrl.u32 %v460, 16
      %v892 = vshrl.u32 %v494, 16
      %v893 = vpack.i.b16 %v892, %v891
      %v896 = vpack.i.b16 %v493, %v459
      %v897 = vshrl.u32 %v459, 16
      %v898 = vshrl.u32 %v493, 16
      %v899 = vpack.i.b16 %v898, %v897
      %v902 = vpack.i.b16 %v495, %v461
      %v903 = vshrl.u32 %v461, 16
      %v904 = vshrl.u32 %v495, 16
      %v905 = vpack.i.b16 %v904, %v903
      %v908 = vpack.i.b16 %v672, %v638
      %v909 = vshrl.u32 %v638, 16
      %v910 = vshrl.u32 %v672, 16
      %v911 = vpack.i.b16 %v910, %v909
      %v914 = vpack.i.b16 %v680, %v646
      %v915 = vshrl.u32 %v646, 16
      %v916 = vshrl.u32 %v680, 16
      %v917 = vpack.i.b16 %v916, %v915
      %v920 = vpack.i.b16 %v679, %v645
      %v921 = vshrl.u32 %v645, 16
      %v922 = vshrl.u32 %v679, 16
      %v923 = vpack.i.b16 %v922, %v921
      %v926 = vpack.i.b16 %v681, %v647
      %v927 = vshrl.u32 %v647, 16
      %v928 = vshrl.u32 %v681, 16
      %v929 = vpack.i.b16 %v928, %v927
      %v932 = vpack.i.b16 %v827, %v803
      %v933 = vshrl.u32 %v803, 16
      %v934 = vshrl.u32 %v827, 16
      %v935 = vpack.i.b16 %v934, %v933
      %v938 = vpack.i.b16 %v536, %v511
      %v939 = vshrl.u32 %v511, 16
      %v940 = vshrl.u32 %v536, 16
      %v941 = vpack.i.b16 %v940, %v939
      %v944 = vpack.i.b16 %v544, %v519
      %v945 = vshrl.u32 %v519, 16
      %v946 = vshrl.u32 %v544, 16
      %v947 = vpack.i.b16 %v946, %v945
      %v950 = vpack.i.b16 %v543, %v518
      %v951 = vshrl.u32 %v518, 16
      %v952 = vshrl.u32 %v543, 16
      %v953 = vpack.i.b16 %v952, %v951
      %v956 = vpack.i.b16 %v545, %v520
      %v957 = vshrl.u32 %v520, 16
      %v958 = vshrl.u32 %v545, 16
      %v959 = vpack.i.b16 %v958, %v957
      %v962 = vpack.i.b16 %v722, %v697
      %v963 = vshrl.u32 %v697, 16
      %v964 = vshrl.u32 %v722, 16
      %v965 = vpack.i.b16 %v964, %v963
      %v968 = vpack.i.b16 %v730, %v705
      %v969 = vshrl.u32 %v705, 16
      %v970 = vshrl.u32 %v730, 16
      %v971 = vpack.i.b16 %v970, %v969
      %v974 = vpack.i.b16 %v729, %v704
      %v975 = vshrl.u32 %v704, 16
      %v976 = vshrl.u32 %v729, 16
      %v977 = vpack.i.b16 %v976, %v975
      %v980 = vpack.i.b16 %v731, %v706
      %v981 = vshrl.u32 %v706, 16
      %v982 = vshrl.u32 %v731, 16
      %v983 = vpack.i.b16 %v982, %v981
      %v986 = vpack.i.b16 %v359, %v353
      %v987 = vshrl.u32 %v353, 16
      %v988 = vshrl.u32 %v359, 16
      %v989 = vpack.i.b16 %v988, %v987
      %v990 = vunpack.c.l.b16 %v830
      %v991 = vunpack.c.l.b16 %v884
      %v992 = vunpack.c.l.b16 %v833
      %v993 = vunpack.c.l.b16 %v887
      %v994 = vunpack.c.l.b16 %v836
      %v995 = vunpack.c.l.b16 %v890
      %v996 = vunpack.c.l.b16 %v839
      %v997 = vunpack.c.l.b16 %v893
      %v998 = vunpack.c.l.b16 %v842
      %v999 = vunpack.c.l.b16 %v896
      %v1000 = vunpack.c.l.b16 %v845
      %v1001 = vunpack.c.l.b16 %v899
      %v1002 = vunpack.c.l.b16 %v848
      %v1003 = vunpack.c.l.b16 %v902
      %v1004 = vunpack.c.l.b16 %v851
      %v1005 = vunpack.c.l.b16 %v905
      %v1006 = vunpack.c.l.b16 %v854
      %v1007 = vunpack.c.l.b16 %v908
      %v1008 = vunpack.c.l.b16 %v857
      %v1009 = vunpack.c.l.b16 %v911
      %v1010 = vunpack.c.l.b16 %v860
      %v1011 = vunpack.c.l.b16 %v914
      %v1012 = vunpack.c.l.b16 %v863
      %v1013 = vunpack.c.l.b16 %v917
      %v1014 = vunpack.c.l.b16 %v866
      %v1015 = vunpack.c.l.b16 %v920
      %v1016 = vunpack.c.l.b16 %v869
      %v1017 = vunpack.c.l.b16 %v923
      %v1018 = vunpack.c.l.b16 %v872
      %v1019 = vunpack.c.l.b16 %v926
      %v1020 = vunpack.c.l.b16 %v875
      %v1021 = vunpack.c.l.b16 %v929
      %v1022 = vpack.c.b16 %v991, %v990
      %v1023 = vpack.c.b16 %v993, %v992
      %v1024 = vpack.c.b16 %v995, %v994
      %v1025 = vpack.c.b16 %v997, %v996
      %v1026 = vpack.c.b16 %v999, %v998
      %v1027 = vpack.c.b16 %v1001, %v1000
      %v1028 = vpack.c.b16 %v1003, %v1002
      %v1029 = vpack.c.b16 %v1005, %v1004
      %v1030 = vpack.c.b16 %v1007, %v1006
      %v1031 = vpack.c.b16 %v1009, %v1008
      %v1032 = vpack.c.b16 %v1011, %v1010
      %v1033 = vpack.c.b16 %v1013, %v1012
      %v1034 = vpack.c.b16 %v1015, %v1014
      %v1035 = vpack.c.b16 %v1017, %v1016
      %v1036 = vpack.c.b16 %v1019, %v1018
      %v1037 = vpack.c.b16 %v1021, %v1020
      %v1038 = vunpack.c.l.b16 %v938
      %v1039 = vunpack.c.l.b16 %v941
      %v1040 = vunpack.c.l.b16 %v944
      %v1041 = vunpack.c.l.b16 %v947
      %v1042 = vunpack.c.l.b16 %v950
      %v1043 = vunpack.c.l.b16 %v953
      %v1044 = vunpack.c.l.b16 %v956
      %v1045 = vunpack.c.l.b16 %v959
      %v1046 = vunpack.c.l.b16 %v962
      %v1047 = vunpack.c.l.b16 %v965
      %v1048 = vunpack.c.l.b16 %v968
      %v1049 = vunpack.c.l.b16 %v971
      %v1050 = vunpack.c.l.b16 %v974
      %v1051 = vunpack.c.l.b16 %v977
      %v1052 = vunpack.c.l.b16 %v980
      %v1053 = vunpack.c.l.b16 %v983
      %v1054 = vpack.c.b16 %v1038, %v1038
      %v1055 = vpack.c.b16 %v1039, %v1039
      %v1056 = vpack.c.b16 %v1040, %v1040
      %v1057 = vpack.c.b16 %v1041, %v1041
      %v1058 = vpack.c.b16 %v1042, %v1042
      %v1059 = vpack.c.b16 %v1043, %v1043
      %v1060 = vpack.c.b16 %v1044, %v1044
      %v1061 = vpack.c.b16 %v1045, %v1045
      %v1062 = vpack.c.b16 %v1046, %v1046
      %v1063 = vpack.c.b16 %v1047, %v1047
      %v1064 = vpack.c.b16 %v1048, %v1048
      %v1065 = vpack.c.b16 %v1049, %v1049
      %v1066 = vpack.c.b16 %v1050, %v1050
      %v1067 = vpack.c.b16 %v1051, %v1051
      %v1068 = vpack.c.b16 %v1052, %v1052
      %v1069 = vpack.c.b16 %v1053, %v1053
      %vm1070 = vsmask.f32 7424
      %v1072 = vshrl.u32 %v1022, 16
      %v1074 = vshll.u32 %v1022, 16
      %v1076 = vrot.slane %v1074, 1
      %v1077 = vor.u32 %v1072, %v1076
      %v1079 = vshll.u32 %v1054, 16
      %v1081 = vrot.slane %v1079, 1
      %v1082 = vsel %vm1070, %v1077, %v1081
      %v1084 = vshrl.u32 %v1023, 16
      %v1086 = vshll.u32 %v1023, 16
      %v1088 = vrot.slane %v1086, 1
      %v1089 = vor.u32 %v1084, %v1088
      %v1091 = vshll.u32 %v1055, 16
      %v1093 = vrot.slane %v1091, 1
      %v1094 = vsel %vm1070, %v1089, %v1093
      %v1096 = vshrl.u32 %v1024, 16
      %v1098 = vshll.u32 %v1024, 16
      %v1100 = vrot.slane %v1098, 1
      %v1101 = vor.u32 %v1096, %v1100
      %v1103 = vshll.u32 %v1056, 16
      %v1105 = vrot.slane %v1103, 1
      %v1106 = vsel %vm1070, %v1101, %v1105
      %v1108 = vshrl.u32 %v1025, 16
      %v1110 = vshll.u32 %v1025, 16
      %v1112 = vrot.slane %v1110, 1
      %v1113 = vor.u32 %v1108, %v1112
      %v1115 = vshll.u32 %v1057, 16
      %v1117 = vrot.slane %v1115, 1
      %v1118 = vsel %vm1070, %v1113, %v1117
      %v1120 = vshrl.u32 %v1026, 16
      %v1122 = vshll.u32 %v1026, 16
      %v1124 = vrot.slane %v1122, 1
      %v1125 = vor.u32 %v1120, %v1124
      %v1127 = vshll.u32 %v1058, 16
      %v1129 = vrot.slane %v1127, 1
      %v1130 = vsel %vm1070, %v1125, %v1129
      %v1132 = vshrl.u32 %v1027, 16
      %v1134 = vshll.u32 %v1027, 16
      %v1136 = vrot.slane %v1134, 1
      %v1137 = vor.u32 %v1132, %v1136
      %v1139 = vshll.u32 %v1059, 16
      %v1141 = vrot.slane %v1139, 1
      %v1142 = vsel %vm1070, %v1137, %v1141
      %v1144 = vshrl.u32 %v1028, 16
      %v1146 = vshll.u32 %v1028, 16
      %v1148 = vrot.slane %v1146, 1
      %v1149 = vor.u32 %v1144, %v1148
      %v1151 = vshll.u32 %v1060, 16
      %v1153 = vrot.slane %v1151, 1
      %v1154 = vsel %vm1070, %v1149, %v1153
      %v1156 = vshrl.u32 %v1029, 16
      %v1158 = vshll.u32 %v1029, 16
      %v1160 = vrot.slane %v1158, 1
      %v1161 = vor.u32 %v1156, %v1160
      %v1163 = vshll.u32 %v1061, 16
      %v1165 = vrot.slane %v1163, 1
      %v1166 = vsel %vm1070, %v1161, %v1165
      %v1168 = vshrl.u32 %v1030, 16
      %v1170 = vshll.u32 %v1030, 16
      %v1172 = vrot.slane %v1170, 1
      %v1173 = vor.u32 %v1168, %v1172
      %v1175 = vshll.u32 %v1062, 16
      %v1177 = vrot.slane %v1175, 1
      %v1178 = vsel %vm1070, %v1173, %v1177
      %v1180 = vshrl.u32 %v1031, 16
      %v1182 = vshll.u32 %v1031, 16
      %v1184 = vrot.slane %v1182, 1
      %v1185 = vor.u32 %v1180, %v1184
      %v1187 = vshll.u32 %v1063, 16
      %v1189 = vrot.slane %v1187, 1
      %v1190 = vsel %vm1070, %v1185, %v1189
      %v1192 = vshrl.u32 %v1032, 16
      %v1194 = vshll.u32 %v1032, 16
      %v1196 = vrot.slane %v1194, 1
      %v1197 = vor.u32 %v1192, %v1196
      %v1199 = vshll.u32 %v1064, 16
      %v1201 = vrot.slane %v1199, 1
      %v1202 = vsel %vm1070, %v1197, %v1201
      %v1204 = vshrl.u32 %v1033, 16
      %v1206 = vshll.u32 %v1033, 16
      %v1208 = vrot.slane %v1206, 1
      %v1209 = vor.u32 %v1204, %v1208
      %v1211 = vshll.u32 %v1065, 16
      %v1213 = vrot.slane %v1211, 1
      %v1214 = vsel %vm1070, %v1209, %v1213
      %v1216 = vshrl.u32 %v1034, 16
      %v1218 = vshll.u32 %v1034, 16
      %v1220 = vrot.slane %v1218, 1
      %v1221 = vor.u32 %v1216, %v1220
      %v1223 = vshll.u32 %v1066, 16
      %v1225 = vrot.slane %v1223, 1
      %v1226 = vsel %vm1070, %v1221, %v1225
      %v1228 = vshrl.u32 %v1035, 16
      %v1230 = vshll.u32 %v1035, 16
      %v1232 = vrot.slane %v1230, 1
      %v1233 = vor.u32 %v1228, %v1232
      %v1235 = vshll.u32 %v1067, 16
      %v1237 = vrot.slane %v1235, 1
      %v1238 = vsel %vm1070, %v1233, %v1237
      %v1240 = vshrl.u32 %v1036, 16
      %v1242 = vshll.u32 %v1036, 16
      %v1244 = vrot.slane %v1242, 1
      %v1245 = vor.u32 %v1240, %v1244
      %v1247 = vshll.u32 %v1068, 16
      %v1249 = vrot.slane %v1247, 1
      %v1250 = vsel %vm1070, %v1245, %v1249
      %v1252 = vshrl.u32 %v1037, 16
      %v1254 = vshll.u32 %v1037, 16
      %v1256 = vrot.slane %v1254, 1
      %v1257 = vor.u32 %v1252, %v1256
      %v1259 = vshll.u32 %v1069, 16
      %v1261 = vrot.slane %v1259, 1
      %v1262 = vsel %vm1070, %v1257, %v1261
      %1263 = vrot.lane.b32.xlu0 %v1082, 3
      %v1264 = vpop.permute.xlu0 %1263
      %1265 = vrot.lane.b32.xlu0 %v1094, 3
      %v1266 = vpop.permute.xlu0 %1265
      %1267 = vrot.lane.b32.xlu0 %v1106, 3
      %v1268 = vpop.permute.xlu0 %1267
      %1269 = vrot.lane.b32.xlu0 %v1118, 3
      %v1270 = vpop.permute.xlu0 %1269
      %1271 = vrot.lane.b32.xlu0 %v1130, 3
      %v1272 = vpop.permute.xlu0 %1271
      %1273 = vrot.lane.b32.xlu0 %v1142, 3
      %v1274 = vpop.permute.xlu0 %1273
      %1275 = vrot.lane.b32.xlu0 %v1154, 3
      %v1276 = vpop.permute.xlu0 %1275
      %1277 = vrot.lane.b32.xlu0 %v1166, 3
      %v1278 = vpop.permute.xlu0 %1277
      %1279 = vrot.lane.b32.xlu0 %v1178, 3
      %v1280 = vpop.permute.xlu0 %1279
      %1281 = vrot.lane.b32.xlu0 %v1190, 3
      %v1282 = vpop.permute.xlu0 %1281
      %1283 = vrot.lane.b32.xlu0 %v1202, 3
      %v1284 = vpop.permute.xlu0 %1283
      %1285 = vrot.lane.b32.xlu0 %v1214, 3
      %v1286 = vpop.permute.xlu0 %1285
      %1287 = vrot.lane.b32.xlu0 %v1226, 3
      %v1288 = vpop.permute.xlu0 %1287
      %1289 = vrot.lane.b32.xlu0 %v1238, 3
      %v1290 = vpop.permute.xlu0 %1289
      %1291 = vrot.lane.b32.xlu0 %v1250, 3
      %v1292 = vpop.permute.xlu0 %1291
      %1293 = vrot.lane.b32.xlu0 %v1262, 3
      %v1294 = vpop.permute.xlu0 %1293
      %vm1295 = vcmask 1046528
      %v1296 = vrot.slane %v1022, 1
      %v1297 = vrot.slane %v1054, 1
      %v1298 = vsel %vm1295, %v1296, %v1297
      %v1299 = vrot.slane %v1023, 1
      %v1300 = vrot.slane %v1055, 1
      %v1301 = vsel %vm1295, %v1299, %v1300
      %v1302 = vrot.slane %v1024, 1
      %v1303 = vrot.slane %v1056, 1
      %v1304 = vsel %vm1295, %v1302, %v1303
      %v1305 = vrot.slane %v1025, 1
      %v1306 = vrot.slane %v1057, 1
      %v1307 = vsel %vm1295, %v1305, %v1306
      %v1308 = vrot.slane %v1026, 1
      %v1309 = vrot.slane %v1058, 1
      %v1310 = vsel %vm1295, %v1308, %v1309
      %v1311 = vrot.slane %v1027, 1
      %v1312 = vrot.slane %v1059, 1
      %v1313 = vsel %vm1295, %v1311, %v1312
      %v1314 = vrot.slane %v1028, 1
      %v1315 = vrot.slane %v1060, 1
      %v1316 = vsel %vm1295, %v1314, %v1315
      %v1317 = vrot.slane %v1029, 1
      %v1318 = vrot.slane %v1061, 1
      %v1319 = vsel %vm1295, %v1317, %v1318
      %v1320 = vrot.slane %v1030, 1
      %v1321 = vrot.slane %v1062, 1
      %v1322 = vsel %vm1295, %v1320, %v1321
      %v1323 = vrot.slane %v1031, 1
      %v1324 = vrot.slane %v1063, 1
      %v1325 = vsel %vm1295, %v1323, %v1324
      %v1326 = vrot.slane %v1032, 1
      %v1327 = vrot.slane %v1064, 1
      %v1328 = vsel %vm1295, %v1326, %v1327
      %v1329 = vrot.slane %v1033, 1
      %v1330 = vrot.slane %v1065, 1
      %v1331 = vsel %vm1295, %v1329, %v1330
      %v1332 = vrot.slane %v1034, 1
      %v1333 = vrot.slane %v1066, 1
      %v1334 = vsel %vm1295, %v1332, %v1333
      %v1335 = vrot.slane %v1035, 1
      %v1336 = vrot.slane %v1067, 1
      %v1337 = vsel %vm1295, %v1335, %v1336
      %v1338 = vrot.slane %v1036, 1
      %v1339 = vrot.slane %v1068, 1
      %v1340 = vsel %vm1295, %v1338, %v1339
      %v1341 = vrot.slane %v1037, 1
      %v1342 = vrot.slane %v1069, 1
      %v1343 = vsel %vm1295, %v1341, %v1342
      %1344 = vrot.lane.b32.xlu0 %v1298, 6
      %v1345 = vpop.permute.xlu0 %1344
      %1346 = vrot.lane.b32.xlu0 %v1301, 6
      %v1347 = vpop.permute.xlu0 %1346
      %1348 = vrot.lane.b32.xlu0 %v1304, 6
      %v1349 = vpop.permute.xlu0 %1348
      %1350 = vrot.lane.b32.xlu0 %v1307, 6
      %v1351 = vpop.permute.xlu0 %1350
      %1352 = vrot.lane.b32.xlu0 %v1310, 6
      %v1353 = vpop.permute.xlu0 %1352
      %1354 = vrot.lane.b32.xlu0 %v1313, 6
      %v1355 = vpop.permute.xlu0 %1354
      %1356 = vrot.lane.b32.xlu0 %v1316, 6
      %v1357 = vpop.permute.xlu0 %1356
      %1358 = vrot.lane.b32.xlu0 %v1319, 6
      %v1359 = vpop.permute.xlu0 %1358
      %1360 = vrot.lane.b32.xlu0 %v1322, 6
      %v1361 = vpop.permute.xlu0 %1360
      %1362 = vrot.lane.b32.xlu0 %v1325, 6
      %v1363 = vpop.permute.xlu0 %1362
      %1364 = vrot.lane.b32.xlu0 %v1328, 6
      %v1365 = vpop.permute.xlu0 %1364
      %1366 = vrot.lane.b32.xlu0 %v1331, 6
      %v1367 = vpop.permute.xlu0 %1366
      %1368 = vrot.lane.b32.xlu0 %v1334, 6
      %v1369 = vpop.permute.xlu0 %1368
      %1370 = vrot.lane.b32.xlu0 %v1337, 6
      %v1371 = vpop.permute.xlu0 %1370
      %1372 = vrot.lane.b32.xlu0 %v1340, 6
      %v1373 = vpop.permute.xlu0 %1372
      %1374 = vrot.lane.b32.xlu0 %v1343, 6
      %v1375 = vpop.permute.xlu0 %1374
      %v1376 = vunpack.c.l.b16 %v878
      %v1377 = vunpack.c.l.b16 %v932
      %v1378 = vpack.c.b16 %v1377, %v1376
      %1379 = vrot.lane.b32.xlu0 %v1023, 9
      %v1380 = vpop.permute.xlu0 %1379
      %1381 = vrot.lane.b32.xlu0 %v1024, 9
      %v1382 = vpop.permute.xlu0 %1381
      %1383 = vrot.lane.b32.xlu0 %v1025, 9
      %v1384 = vpop.permute.xlu0 %1383
      %1385 = vrot.lane.b32.xlu0 %v1026, 9
      %v1386 = vpop.permute.xlu0 %1385
      %1387 = vrot.lane.b32.xlu0 %v1027, 9
      %v1388 = vpop.permute.xlu0 %1387
      %1389 = vrot.lane.b32.xlu0 %v1028, 9
      %v1390 = vpop.permute.xlu0 %1389
      %1391 = vrot.lane.b32.xlu0 %v1029, 9
      %v1392 = vpop.permute.xlu0 %1391
      %1393 = vrot.lane.b32.xlu0 %v1030, 9
      %v1394 = vpop.permute.xlu0 %1393
      %1395 = vrot.lane.b32.xlu0 %v1031, 9
      %v1396 = vpop.permute.xlu0 %1395
      %1397 = vrot.lane.b32.xlu0 %v1032, 9
      %v1398 = vpop.permute.xlu0 %1397
      %1399 = vrot.lane.b32.xlu0 %v1033, 9
      %v1400 = vpop.permute.xlu0 %1399
      %1401 = vrot.lane.b32.xlu0 %v1034, 9
      %v1402 = vpop.permute.xlu0 %1401
      %1403 = vrot.lane.b32.xlu0 %v1035, 9
      %v1404 = vpop.permute.xlu0 %1403
      %1405 = vrot.lane.b32.xlu0 %v1036, 9
      %v1406 = vpop.permute.xlu0 %1405
      %1407 = vrot.lane.b32.xlu0 %v1037, 9
      %v1408 = vpop.permute.xlu0 %1407
      %1409 = vrot.lane.b32.xlu0 %v1378, 9
      %v1410 = vpop.permute.xlu0 %1409
      %v1411 = vunpack.c.l.b16 %v986
      %v1412 = vpack.c.b16 %v1411, %v1411
      %v1414 = vshrl.u32 %v1378, 16
      %v1416 = vshll.u32 %v1378, 16
      %v1418 = vrot.slane %v1416, 1
      %v1419 = vor.u32 %v1414, %v1418
      %v1421 = vshll.u32 %v1412, 16
      %v1423 = vrot.slane %v1421, 1
      %v1424 = vsel %vm1070, %v1419, %v1423
      %1425 = vrot.lane.b32.xlu0 %v1094, 12
      %v1426 = vpop.permute.xlu0 %1425
      %1427 = vrot.lane.b32.xlu0 %v1106, 12
      %v1428 = vpop.permute.xlu0 %1427
      %1429 = vrot.lane.b32.xlu0 %v1118, 12
      %v1430 = vpop.permute.xlu0 %1429
      %1431 = vrot.lane.b32.xlu0 %v1130, 12
      %v1432 = vpop.permute.xlu0 %1431
      %1433 = vrot.lane.b32.xlu0 %v1142, 12
      %v1434 = vpop.permute.xlu0 %1433
      %1435 = vrot.lane.b32.xlu0 %v1154, 12
      %v1436 = vpop.permute.xlu0 %1435
      %1437 = vrot.lane.b32.xlu0 %v1166, 12
      %v1438 = vpop.permute.xlu0 %1437
      %1439 = vrot.lane.b32.xlu0 %v1178, 12
      %v1440 = vpop.permute.xlu0 %1439
      %1441 = vrot.lane.b32.xlu0 %v1190, 12
      %v1442 = vpop.permute.xlu0 %1441
      %1443 = vrot.lane.b32.xlu0 %v1202, 12
      %v1444 = vpop.permute.xlu0 %1443
      %1445 = vrot.lane.b32.xlu0 %v1214, 12
      %v1446 = vpop.permute.xlu0 %1445
      %1447 = vrot.lane.b32.xlu0 %v1226, 12
      %v1448 = vpop.permute.xlu0 %1447
      %1449 = vrot.lane.b32.xlu0 %v1238, 12
      %v1450 = vpop.permute.xlu0 %1449
      %1451 = vrot.lane.b32.xlu0 %v1250, 12
      %v1452 = vpop.permute.xlu0 %1451
      %1453 = vrot.lane.b32.xlu0 %v1262, 12
      %v1454 = vpop.permute.xlu0 %1453
      %1455 = vrot.lane.b32.xlu0 %v1424, 12
      %v1456 = vpop.permute.xlu0 %1455
      %v1457 = vrot.slane %v1378, 1
      %v1458 = vrot.slane %v1412, 1
      %v1459 = vsel %vm1295, %v1457, %v1458
      %1460 = vrot.lane.b32.xlu0 %v1301, 15
      %v1461 = vpop.permute.xlu0 %1460
      %1462 = vrot.lane.b32.xlu0 %v1304, 15
      %v1463 = vpop.permute.xlu0 %1462
      %1464 = vrot.lane.b32.xlu0 %v1307, 15
      %v1465 = vpop.permute.xlu0 %1464
      %1466 = vrot.lane.b32.xlu0 %v1310, 15
      %v1467 = vpop.permute.xlu0 %1466
      %1468 = vrot.lane.b32.xlu0 %v1313, 15
      %v1469 = vpop.permute.xlu0 %1468
      %1470 = vrot.lane.b32.xlu0 %v1316, 15
      %v1471 = vpop.permute.xlu0 %1470
      %1472 = vrot.lane.b32.xlu0 %v1319, 15
      %v1473 = vpop.permute.xlu0 %1472
      %1474 = vrot.lane.b32.xlu0 %v1322, 15
      %v1475 = vpop.permute.xlu0 %1474
      %1476 = vrot.lane.b32.xlu0 %v1325, 15
      %v1477 = vpop.permute.xlu0 %1476
      %1478 = vrot.lane.b32.xlu0 %v1328, 15
      %v1479 = vpop.permute.xlu0 %1478
      %1480 = vrot.lane.b32.xlu0 %v1331, 15
      %v1481 = vpop.permute.xlu0 %1480
      %1482 = vrot.lane.b32.xlu0 %v1334, 15
      %v1483 = vpop.permute.xlu0 %1482
      %1484 = vrot.lane.b32.xlu0 %v1337, 15
      %v1485 = vpop.permute.xlu0 %1484
      %1486 = vrot.lane.b32.xlu0 %v1340, 15
      %v1487 = vpop.permute.xlu0 %1486
      %1488 = vrot.lane.b32.xlu0 %v1343, 15
      %v1489 = vpop.permute.xlu0 %1488
      %1490 = vrot.lane.b32.xlu0 %v1459, 15
      %v1491 = vpop.permute.xlu0 %1490
      %v1492 = vunpack.c.l.b16 %v881
      %v1493 = vunpack.c.l.b16 %v935
      %v1494 = vpack.c.b16 %v1493, %v1492
      %1495 = vrot.lane.b32.xlu0 %v1024, 18
      %v1496 = vpop.permute.xlu0 %1495
      %1497 = vrot.lane.b32.xlu0 %v1025, 18
      %v1498 = vpop.permute.xlu0 %1497
      %1499 = vrot.lane.b32.xlu0 %v1026, 18
      %v1500 = vpop.permute.xlu0 %1499
      %1501 = vrot.lane.b32.xlu0 %v1027, 18
      %v1502 = vpop.permute.xlu0 %1501
      %1503 = vrot.lane.b32.xlu0 %v1028, 18
      %v1504 = vpop.permute.xlu0 %1503
      %1505 = vrot.lane.b32.xlu0 %v1029, 18
      %v1506 = vpop.permute.xlu0 %1505
      %1507 = vrot.lane.b32.xlu0 %v1030, 18
      %v1508 = vpop.permute.xlu0 %1507
      %1509 = vrot.lane.b32.xlu0 %v1031, 18
      %v1510 = vpop.permute.xlu0 %1509
      %1511 = vrot.lane.b32.xlu0 %v1032, 18
      %v1512 = vpop.permute.xlu0 %1511
      %1513 = vrot.lane.b32.xlu0 %v1033, 18
      %v1514 = vpop.permute.xlu0 %1513
      %1515 = vrot.lane.b32.xlu0 %v1034, 18
      %v1516 = vpop.permute.xlu0 %1515
      %1517 = vrot.lane.b32.xlu0 %v1035, 18
      %v1518 = vpop.permute.xlu0 %1517
      %1519 = vrot.lane.b32.xlu0 %v1036, 18
      %v1520 = vpop.permute.xlu0 %1519
      %1521 = vrot.lane.b32.xlu0 %v1037, 18
      %v1522 = vpop.permute.xlu0 %1521
      %1523 = vrot.lane.b32.xlu0 %v1378, 18
      %v1524 = vpop.permute.xlu0 %1523
      %1525 = vrot.lane.b32.xlu0 %v1494, 18
      %v1526 = vpop.permute.xlu0 %1525
      %v1527 = vunpack.c.l.b16 %v989
      %v1528 = vpack.c.b16 %v1527, %v1527
      %v1530 = vshrl.u32 %v1494, 16
      %v1532 = vshll.u32 %v1494, 16
      %v1534 = vrot.slane %v1532, 1
      %v1535 = vor.u32 %v1530, %v1534
      %v1537 = vshll.u32 %v1528, 16
      %v1539 = vrot.slane %v1537, 1
      %v1540 = vsel %vm1070, %v1535, %v1539
      %1541 = vrot.lane.b32.xlu0 %v1106, 21
      %v1542 = vpop.permute.xlu0 %1541
      %1543 = vrot.lane.b32.xlu0 %v1118, 21
      %v1544 = vpop.permute.xlu0 %1543
      %1545 = vrot.lane.b32.xlu0 %v1130, 21
      %v1546 = vpop.permute.xlu0 %1545
      %1547 = vrot.lane.b32.xlu0 %v1142, 21
      %v1548 = vpop.permute.xlu0 %1547
      %1549 = vrot.lane.b32.xlu0 %v1154, 21
      %v1550 = vpop.permute.xlu0 %1549
      %1551 = vrot.lane.b32.xlu0 %v1166, 21
      %v1552 = vpop.permute.xlu0 %1551
      %1553 = vrot.lane.b32.xlu0 %v1178, 21
      %v1554 = vpop.permute.xlu0 %1553
      %1555 = vrot.lane.b32.xlu0 %v1190, 21
      %v1556 = vpop.permute.xlu0 %1555
      %1557 = vrot.lane.b32.xlu0 %v1202, 21
      %v1558 = vpop.permute.xlu0 %1557
      %1559 = vrot.lane.b32.xlu0 %v1214, 21
      %v1560 = vpop.permute.xlu0 %1559
      %1561 = vrot.lane.b32.xlu0 %v1226, 21
      %v1562 = vpop.permute.xlu0 %1561
      %1563 = vrot.lane.b32.xlu0 %v1238, 21
      %v1564 = vpop.permute.xlu0 %1563
      %1565 = vrot.lane.b32.xlu0 %v1250, 21
      %v1566 = vpop.permute.xlu0 %1565
      %1567 = vrot.lane.b32.xlu0 %v1262, 21
      %v1568 = vpop.permute.xlu0 %1567
      %1569 = vrot.lane.b32.xlu0 %v1424, 21
      %v1570 = vpop.permute.xlu0 %1569
      %1571 = vrot.lane.b32.xlu0 %v1540, 21
      %v1572 = vpop.permute.xlu0 %1571
      %v1573 = vrot.slane %v1494, 1
      %v1574 = vrot.slane %v1528, 1
      %v1575 = vsel %vm1295, %v1573, %v1574
      %1576 = vrot.lane.b32.xlu0 %v1304, 24
      %v1577 = vpop.permute.xlu0 %1576
      %1578 = vrot.lane.b32.xlu0 %v1307, 24
      %v1579 = vpop.permute.xlu0 %1578
      %1580 = vrot.lane.b32.xlu0 %v1310, 24
      %v1581 = vpop.permute.xlu0 %1580
      %1582 = vrot.lane.b32.xlu0 %v1313, 24
      %v1583 = vpop.permute.xlu0 %1582
      %1584 = vrot.lane.b32.xlu0 %v1316, 24
      %v1585 = vpop.permute.xlu0 %1584
      %1586 = vrot.lane.b32.xlu0 %v1319, 24
      %v1587 = vpop.permute.xlu0 %1586
      %1588 = vrot.lane.b32.xlu0 %v1322, 24
      %v1589 = vpop.permute.xlu0 %1588
      %1590 = vrot.lane.b32.xlu0 %v1325, 24
      %v1591 = vpop.permute.xlu0 %1590
      %1592 = vrot.lane.b32.xlu0 %v1328, 24
      %v1593 = vpop.permute.xlu0 %1592
      %1594 = vrot.lane.b32.xlu0 %v1331, 24
      %v1595 = vpop.permute.xlu0 %1594
      %1596 = vrot.lane.b32.xlu0 %v1334, 24
      %v1597 = vpop.permute.xlu0 %1596
      %1598 = vrot.lane.b32.xlu0 %v1337, 24
      %v1599 = vpop.permute.xlu0 %1598
      %1600 = vrot.lane.b32.xlu0 %v1340, 24
      %v1601 = vpop.permute.xlu0 %1600
      %1602 = vrot.lane.b32.xlu0 %v1343, 24
      %v1603 = vpop.permute.xlu0 %1602
      %1604 = vrot.lane.b32.xlu0 %v1459, 24
      %v1605 = vpop.permute.xlu0 %1604
      %1606 = vrot.lane.b32.xlu0 %v1575, 24
      %v1607 = vpop.permute.xlu0 %1606
      %vm1608 = vcmask 23552
      %v1610 = vsel %vm1608, %v1022, %v1264
      %v1612 = vsel %vm1608, %v1023, %v1266
      %v1614 = vsel %vm1608, %v1024, %v1268
      %v1616 = vsel %vm1608, %v1025, %v1270
      %v1618 = vsel %vm1608, %v1026, %v1272
      %v1620 = vsel %vm1608, %v1027, %v1274
      %v1622 = vsel %vm1608, %v1028, %v1276
      %v1624 = vsel %vm1608, %v1029, %v1278
      %v1626 = vsel %vm1608, %v1030, %v1280
      %v1628 = vsel %vm1608, %v1031, %v1282
      %v1630 = vsel %vm1608, %v1032, %v1284
      %v1632 = vsel %vm1608, %v1033, %v1286
      %v1634 = vsel %vm1608, %v1034, %v1288
      %v1636 = vsel %vm1608, %v1035, %v1290
      %v1638 = vsel %vm1608, %v1036, %v1292
      %v1640 = vsel %vm1608, %v1037, %v1294
      %vm1641 = vcmask 48128
      %v1643 = vsel %vm1641, %v1610, %v1345
      %v1645 = vsel %vm1641, %v1612, %v1347
      %v1647 = vsel %vm1641, %v1614, %v1349
      %v1649 = vsel %vm1641, %v1616, %v1351
      %v1651 = vsel %vm1641, %v1618, %v1353
      %v1653 = vsel %vm1641, %v1620, %v1355
      %v1655 = vsel %vm1641, %v1622, %v1357
      %v1657 = vsel %vm1641, %v1624, %v1359
      %v1659 = vsel %vm1641, %v1626, %v1361
      %v1661 = vsel %vm1641, %v1628, %v1363
      %v1663 = vsel %vm1641, %v1630, %v1365
      %v1665 = vsel %vm1641, %v1632, %v1367
      %v1667 = vsel %vm1641, %v1634, %v1369
      %v1669 = vsel %vm1641, %v1636, %v1371
      %v1671 = vsel %vm1641, %v1638, %v1373
      %v1673 = vsel %vm1641, %v1640, %v1375
      %vm1674 = vcmask 72704
      %v1676 = vsel %vm1674, %v1643, %v1380
      %v1678 = vsel %vm1674, %v1645, %v1382
      %v1680 = vsel %vm1674, %v1647, %v1384
      %v1682 = vsel %vm1674, %v1649, %v1386
      %v1684 = vsel %vm1674, %v1651, %v1388
      %v1686 = vsel %vm1674, %v1653, %v1390
      %v1688 = vsel %vm1674, %v1655, %v1392
      %v1690 = vsel %vm1674, %v1657, %v1394
      %v1692 = vsel %vm1674, %v1659, %v1396
      %v1694 = vsel %vm1674, %v1661, %v1398
      %v1696 = vsel %vm1674, %v1663, %v1400
      %v1698 = vsel %vm1674, %v1665, %v1402
      %v1700 = vsel %vm1674, %v1667, %v1404
      %v1702 = vsel %vm1674, %v1669, %v1406
      %v1704 = vsel %vm1674, %v1671, %v1408
      %v1706 = vsel %vm1674, %v1673, %v1410
      %vm1707 = vcmask 97280
      %v1709 = vsel %vm1707, %v1676, %v1426
      %v1711 = vsel %vm1707, %v1678, %v1428
      %v1713 = vsel %vm1707, %v1680, %v1430
      %v1715 = vsel %vm1707, %v1682, %v1432
      %v1717 = vsel %vm1707, %v1684, %v1434
      %v1719 = vsel %vm1707, %v1686, %v1436
      %v1721 = vsel %vm1707, %v1688, %v1438
      %v1723 = vsel %vm1707, %v1690, %v1440
      %v1725 = vsel %vm1707, %v1692, %v1442
      %v1727 = vsel %vm1707, %v1694, %v1444
      %v1729 = vsel %vm1707, %v1696, %v1446
      %v1731 = vsel %vm1707, %v1698, %v1448
      %v1733 = vsel %vm1707, %v1700, %v1450
      %v1735 = vsel %vm1707, %v1702, %v1452
      %v1737 = vsel %vm1707, %v1704, %v1454
      %v1739 = vsel %vm1707, %v1706, %v1456
      %vm1740 = vcmask 121856
      %v1742 = vsel %vm1740, %v1709, %v1461
      %v1744 = vsel %vm1740, %v1711, %v1463
      %v1746 = vsel %vm1740, %v1713, %v1465
      %v1748 = vsel %vm1740, %v1715, %v1467
      %v1750 = vsel %vm1740, %v1717, %v1469
      %v1752 = vsel %vm1740, %v1719, %v1471
      %v1754 = vsel %vm1740, %v1721, %v1473
      %v1756 = vsel %vm1740, %v1723, %v1475
      %v1758 = vsel %vm1740, %v1725, %v1477
      %v1760 = vsel %vm1740, %v1727, %v1479
      %v1762 = vsel %vm1740, %v1729, %v1481
      %v1764 = vsel %vm1740, %v1731, %v1483
      %v1766 = vsel %vm1740, %v1733, %v1485
      %v1768 = vsel %vm1740, %v1735, %v1487
      %v1770 = vsel %vm1740, %v1737, %v1489
      %v1772 = vsel %vm1740, %v1739, %v1491
      %vm1773 = vcmask 146432
      %v1775 = vsel %vm1773, %v1742, %v1496
      %v1777 = vsel %vm1773, %v1744, %v1498
      %v1779 = vsel %vm1773, %v1746, %v1500
      %v1781 = vsel %vm1773, %v1748, %v1502
      %v1783 = vsel %vm1773, %v1750, %v1504
      %v1785 = vsel %vm1773, %v1752, %v1506
      %v1787 = vsel %vm1773, %v1754, %v1508
      %v1789 = vsel %vm1773, %v1756, %v1510
      %v1791 = vsel %vm1773, %v1758, %v1512
      %v1793 = vsel %vm1773, %v1760, %v1514
      %v1795 = vsel %vm1773, %v1762, %v1516
      %v1797 = vsel %vm1773, %v1764, %v1518
      %v1799 = vsel %vm1773, %v1766, %v1520
      %v1801 = vsel %vm1773, %v1768, %v1522
      %v1803 = vsel %vm1773, %v1770, %v1524
      %v1805 = vsel %vm1773, %v1772, %v1526
      %vm1806 = vcmask 171008
      %v1808 = vsel %vm1806, %v1775, %v1542
      %v1810 = vsel %vm1806, %v1777, %v1544
      %v1812 = vsel %vm1806, %v1779, %v1546
      %v1814 = vsel %vm1806, %v1781, %v1548
      %v1816 = vsel %vm1806, %v1783, %v1550
      %v1818 = vsel %vm1806, %v1785, %v1552
      %v1820 = vsel %vm1806, %v1787, %v1554
      %v1822 = vsel %vm1806, %v1789, %v1556
      %v1824 = vsel %vm1806, %v1791, %v1558
      %v1826 = vsel %vm1806, %v1793, %v1560
      %v1828 = vsel %vm1806, %v1795, %v1562
      %v1830 = vsel %vm1806, %v1797, %v1564
      %v1832 = vsel %vm1806, %v1799, %v1566
      %v1834 = vsel %vm1806, %v1801, %v1568
      %v1836 = vsel %vm1806, %v1803, %v1570
      %v1838 = vsel %vm1806, %v1805, %v1572
      %vm1839 = vcmask 195584
      %v1841 = vsel %vm1839, %v1808, %v1577
      %v1843 = vsel %vm1839, %v1810, %v1579
      %v1845 = vsel %vm1839, %v1812, %v1581
      %v1847 = vsel %vm1839, %v1814, %v1583
      %v1849 = vsel %vm1839, %v1816, %v1585
      %v1851 = vsel %vm1839, %v1818, %v1587
      %v1853 = vsel %vm1839, %v1820, %v1589
      %v1855 = vsel %vm1839, %v1822, %v1591
      %v1857 = vsel %vm1839, %v1824, %v1593
      %v1859 = vsel %vm1839, %v1826, %v1595
      %v1861 = vsel %vm1839, %v1828, %v1597
      %v1863 = vsel %vm1839, %v1830, %v1599
      %v1865 = vsel %vm1839, %v1832, %v1601
      %v1867 = vsel %vm1839, %v1834, %v1603
      %v1869 = vsel %vm1839, %v1836, %v1605
      %v1871 = vsel %vm1839, %v1838, %v1607
      %v1872 = vld [vmem:[%s1] sm:$0xf]
      %v1873 = vld [vmem:[%s1 + $0x4] sm:$0xf]
      %v1874 = vld [vmem:[%s1 + $0x8] sm:$0xf]
      %v1875 = vld [vmem:[%s1 + $0xc] sm:$0x3]
      %v1876 = vld [vmem:[%s2] sm:$0x1]
      %v1878 = vlaneseq
      %v1879 = vshrl.u32 %v1878, 7
      %v1880 = vsub.s32 0, %v1879
      %v1881 = vrot.slane %v1876, %v1880
      %v1887 = vunpack.c.l.b16 %v1872
      %v1888 = vunpack.c.l.b16 %v1873
      %v1889 = vunpack.c.l.b16 %v1874
      %v1890 = vunpack.c.l.b16 %v1875
      %v1891 = vpack.c.b16 %v1888, %v1887
      %v1892 = vpack.c.b16 %v1890, %v1889
      %vm1894 = vcmask 220160
      %v1895 = vsel %vm1894, %v1841, 0
      %v1897 = vsel %vm1894, %v1843, 0
      %v1899 = vsel %vm1894, %v1845, 0
      %v1901 = vsel %vm1894, %v1847, 0
      %v1903 = vsel %vm1894, %v1849, 0
      %v1905 = vsel %vm1894, %v1851, 0
      %v1907 = vsel %vm1894, %v1853, 0
      %v1909 = vsel %vm1894, %v1855, 0
      %v1911 = vsel %vm1894, %v1857, 0
      %v1913 = vsel %vm1894, %v1859, 0
      %v1915 = vsel %vm1894, %v1861, 0
      %v1917 = vsel %vm1894, %v1863, 0
      %v1919 = vsel %vm1894, %v1865, 0
      %v1921 = vsel %vm1894, %v1867, 0
      %v1923 = vsel %vm1894, %v1869, 0
      %v1925 = vsel %vm1894, %v1871, 0
      %vm1927 = vcmask 1044480
      %vm1928 = vcmask 1045504
      %v1929 = vsel %vm1927, 4294967295, 65535
      %v1930 = vsel %vm1928, %v1929, 0
      %v1932 = vand.u32 %v1892, %v1930
      %1934 = vmatprep.subr.bf16.mxu0 0
      %1935 = vmatpush1.bf16.msra.mxu0 %v1891
      %1936 = vmatprep.subr.bf16.mxu0 0
      %1937 = vmatpush1.bf16.msra.mxu0 %v1932
      %1938 = vmatprep.subr.bf16.mxu0 0
      %1939 = vmatpush1.bf16.msra.mxu0 0
      %1940 = vmatprep.subr.bf16.mxu0 0
      %1941 = vmatpush1.bf16.msra.mxu0 0
      %1942 = vmatprep.subr.bf16.mxu0 0
      %1943 = vmatpush1.bf16.msra.mxu0 0
      %1944 = vmatprep.subr.bf16.mxu0 0
      %1945 = vmatpush1.bf16.msra.mxu0 0
      %1946 = vmatprep.subr.bf16.mxu0 0
      %1947 = vmatpush1.bf16.msra.mxu0 0
      %1948 = vmatprep.subr.bf16.mxu0 0
      %1949 = vmatpush1.bf16.msra.mxu0 0
      %1950 = vmatprep.subr.bf16.mxu0 0
      %1951 = vmatpush1.bf16.msra.mxu0 0
      %1952 = vmatprep.subr.bf16.mxu0 0
      %1953 = vmatpush1.bf16.msra.mxu0 0
      %1954 = vmatprep.subr.bf16.mxu0 0
      %1955 = vmatpush1.bf16.msra.mxu0 0
      %1956 = vmatprep.subr.bf16.mxu0 0
      %1957 = vmatpush1.bf16.msra.mxu0 0
      %1958 = vmatprep.subr.bf16.mxu0 0
      %1959 = vmatpush1.bf16.msra.mxu0 0
      %1960 = vmatprep.subr.bf16.mxu0 0
      %1961 = vmatpush1.bf16.msra.mxu0 0
      %1962 = vmatprep.subr.bf16.mxu0 0
      %1963 = vmatpush1.bf16.msra.mxu0 0
      %1964 = vmatprep.subr.bf16.mxu0 0
      %1965 = vmatpush1.bf16.msra.mxu0 0
      %1966 = vmatprep.mubr.bf16.mxu0 0
      %1967 = vmatmul.mubr.bf16.gmra.mrb[0].mxu0 %v1895
      %v1968 = vpop.f32.mrb[0].mxu0
      %v1969 = vadd.f32 %v1881, %v1968
      %v1970 = vpop.f32.mrb[0].mxu0
      %v1971 = vpop.f32.mrb[0].mxu0
      %v1972 = vadd.f32 %v1881, %v1971
      %v1973 = vpop.f32.mrb[0].mxu0
      %1974 = vmatprep.mubr.bf16.mxu0 0
      %1975 = vmatmul.mubr.bf16.gmra.mrb[0].mxu0 %v1897
      %v1976 = vpop.f32.mrb[0].mxu0
      %v1977 = vadd.f32 %v1881, %v1976
      %v1978 = vpop.f32.mrb[0].mxu0
      %v1979 = vpop.f32.mrb[0].mxu0
      %v1980 = vadd.f32 %v1881, %v1979
      %v1981 = vpop.f32.mrb[0].mxu0
      %1982 = vmatprep.mubr.bf16.mxu0 0
      %1983 = vmatmul.mubr.bf16.gmra.mrb[0].mxu0 %v1899
      %v1984 = vpop.f32.mrb[0].mxu0
      %v1985 = vadd.f32 %v1881, %v1984
      %v1986 = vpop.f32.mrb[0].mxu0
      %v1987 = vpop.f32.mrb[0].mxu0
      %v1988 = vadd.f32 %v1881, %v1987
      %v1989 = vpop.f32.mrb[0].mxu0
      %1990 = vmatprep.mubr.bf16.mxu0 0
      %1991 = vmatmul.mubr.bf16.gmra.mrb[0].mxu0 %v1901
      %v1992 = vpop.f32.mrb[0].mxu0
      %v1993 = vadd.f32 %v1881, %v1992
      %v1994 = vpop.f32.mrb[0].mxu0
      %v1995 = vpop.f32.mrb[0].mxu0
      %v1996 = vadd.f32 %v1881, %v1995
      %v1997 = vpop.f32.mrb[0].mxu0
      %1998 = vmatprep.mubr.bf16.mxu0 0
      %1999 = vmatmul.mubr.bf16.gmra.mrb[0].mxu0 %v1903
      %v2000 = vpop.f32.mrb[0].mxu0
      %v2001 = vadd.f32 %v1881, %v2000
      %v2002 = vpop.f32.mrb[0].mxu0
      %v2003 = vpop.f32.mrb[0].mxu0
      %v2004 = vadd.f32 %v1881, %v2003
      %v2005 = vpop.f32.mrb[0].mxu0
      %2006 = vmatprep.mubr.bf16.mxu0 0
      %2007 = vmatmul.mubr.bf16.gmra.mrb[0].mxu0 %v1905
      %v2008 = vpop.f32.mrb[0].mxu0
      %v2009 = vadd.f32 %v1881, %v2008
      %v2010 = vpop.f32.mrb[0].mxu0
      %v2011 = vpop.f32.mrb[0].mxu0
      %v2012 = vadd.f32 %v1881, %v2011
      %v2013 = vpop.f32.mrb[0].mxu0
      %2014 = vmatprep.mubr.bf16.mxu0 0
      %2015 = vmatmul.mubr.bf16.gmra.mrb[0].mxu0 %v1907
      %v2016 = vpop.f32.mrb[0].mxu0
      %v2017 = vadd.f32 %v1881, %v2016
      %v2018 = vpop.f32.mrb[0].mxu0
      %v2019 = vpop.f32.mrb[0].mxu0
      %v2020 = vadd.f32 %v1881, %v2019
      %v2021 = vpop.f32.mrb[0].mxu0
      %2022 = vmatprep.mubr.bf16.mxu0 0
      %2023 = vmatmul.mubr.bf16.gmra.mrb[0].mxu0 %v1909
      %v2024 = vpop.f32.mrb[0].mxu0
      %v2025 = vadd.f32 %v1881, %v2024
      %v2026 = vpop.f32.mrb[0].mxu0
      %v2027 = vpop.f32.mrb[0].mxu0
      %v2028 = vadd.f32 %v1881, %v2027
      %v2029 = vpop.f32.mrb[0].mxu0
      %2030 = vmatprep.mubr.bf16.mxu0 0
      %2031 = vmatmul.mubr.bf16.gmra.mrb[0].mxu0 %v1911
      %v2032 = vpop.f32.mrb[0].mxu0
      %v2033 = vadd.f32 %v1881, %v2032
      %v2034 = vpop.f32.mrb[0].mxu0
      %v2035 = vpop.f32.mrb[0].mxu0
      %v2036 = vadd.f32 %v1881, %v2035
      %v2037 = vpop.f32.mrb[0].mxu0
      %2038 = vmatprep.mubr.bf16.mxu0 0
      %2039 = vmatmul.mubr.bf16.gmra.mrb[0].mxu0 %v1913
      %v2040 = vpop.f32.mrb[0].mxu0
      %v2041 = vadd.f32 %v1881, %v2040
      %v2042 = vpop.f32.mrb[0].mxu0
      %v2043 = vpop.f32.mrb[0].mxu0
      %v2044 = vadd.f32 %v1881, %v2043
      %v2045 = vpop.f32.mrb[0].mxu0
      %2046 = vmatprep.mubr.bf16.mxu0 0
      %2047 = vmatmul.mubr.bf16.gmra.mrb[0].mxu0 %v1915
      %v2048 = vpop.f32.mrb[0].mxu0
      %v2049 = vadd.f32 %v1881, %v2048
      %v2050 = vpop.f32.mrb[0].mxu0
      %v2051 = vpop.f32.mrb[0].mxu0
      %v2052 = vadd.f32 %v1881, %v2051
      %v2053 = vpop.f32.mrb[0].mxu0
      %2054 = vmatprep.mubr.bf16.mxu0 0
      %2055 = vmatmul.mubr.bf16.gmra.mrb[0].mxu0 %v1917
      %v2056 = vpop.f32.mrb[0].mxu0
      %v2057 = vadd.f32 %v1881, %v2056
      %v2058 = vpop.f32.mrb[0].mxu0
      %v2059 = vpop.f32.mrb[0].mxu0
      %v2060 = vadd.f32 %v1881, %v2059
      %v2061 = vpop.f32.mrb[0].mxu0
      %2062 = vmatprep.mubr.bf16.mxu0 0
      %2063 = vmatmul.mubr.bf16.gmra.mrb[0].mxu0 %v1919
      %v2064 = vpop.f32.mrb[0].mxu0
      %v2065 = vadd.f32 %v1881, %v2064
      %v2066 = vpop.f32.mrb[0].mxu0
      %v2067 = vpop.f32.mrb[0].mxu0
      %v2068 = vadd.f32 %v1881, %v2067
      %v2069 = vpop.f32.mrb[0].mxu0
      %2070 = vmatprep.mubr.bf16.mxu0 0
      %2071 = vmatmul.mubr.bf16.gmra.mrb[0].mxu0 %v1921
      %v2072 = vpop.f32.mrb[0].mxu0
      %v2073 = vadd.f32 %v1881, %v2072
      %v2074 = vpop.f32.mrb[0].mxu0
      %v2075 = vpop.f32.mrb[0].mxu0
      %v2076 = vadd.f32 %v1881, %v2075
      %v2077 = vpop.f32.mrb[0].mxu0
      %2078 = vmatprep.mubr.bf16.mxu0 0
      %2079 = vmatmul.mubr.bf16.gmra.mrb[0].mxu0 %v1923
      %v2080 = vpop.f32.mrb[0].mxu0
      %v2081 = vadd.f32 %v1881, %v2080
      %v2082 = vpop.f32.mrb[0].mxu0
      %v2083 = vpop.f32.mrb[0].mxu0
      %v2084 = vadd.f32 %v1881, %v2083
      %v2085 = vpop.f32.mrb[0].mxu0
      %2086 = vmatprep.mubr.bf16.mxu0 0
      %2087 = vmatmul.mubr.bf16.gmra.mrb[0].mxu0 %v1925
      %v2088 = vpop.f32.mrb[0].mxu0
      %v2089 = vadd.f32 %v1881, %v2088
      %v2090 = vpop.f32.mrb[0].mxu0
      %v2091 = vpop.f32.mrb[0].mxu0
      %v2092 = vadd.f32 %v1881, %v2091
      %v2093 = vpop.f32.mrb[0].mxu0
      %2094 = vdwg.mxu0
      %v2095 = vmax.f32 %v1969, 0.0
      %v2096 = vmax.f32 %v1972, 0.0
      %v2097 = vmax.f32 %v1977, 0.0
      %v2098 = vmax.f32 %v1980, 0.0
      %v2099 = vmax.f32 %v1985, 0.0
      %v2100 = vmax.f32 %v1988, 0.0
      %v2101 = vmax.f32 %v1993, 0.0
      %v2102 = vmax.f32 %v1996, 0.0
      %v2103 = vmax.f32 %v2001, 0.0
      %v2104 = vmax.f32 %v2004, 0.0
      %v2105 = vmax.f32 %v2009, 0.0
      %v2106 = vmax.f32 %v2012, 0.0
      %v2107 = vmax.f32 %v2017, 0.0
      %v2108 = vmax.f32 %v2020, 0.0
      %v2109 = vmax.f32 %v2025, 0.0
      %v2110 = vmax.f32 %v2028, 0.0
      %v2111 = vmax.f32 %v2033, 0.0
      %v2112 = vmax.f32 %v2036, 0.0
      %v2113 = vmax.f32 %v2041, 0.0
      %v2114 = vmax.f32 %v2044, 0.0
      %v2115 = vmax.f32 %v2049, 0.0
      %v2116 = vmax.f32 %v2052, 0.0
      %v2117 = vmax.f32 %v2057, 0.0
      %v2118 = vmax.f32 %v2060, 0.0
      %v2119 = vmax.f32 %v2065, 0.0
      %v2120 = vmax.f32 %v2068, 0.0
      %v2121 = vmax.f32 %v2073, 0.0
      %v2122 = vmax.f32 %v2076, 0.0
      %v2123 = vmax.f32 %v2081, 0.0
      %v2124 = vmax.f32 %v2084, 0.0
      %v2125 = vmax.f32 %v2089, 0.0
      %v2126 = vmax.f32 %v2092, 0.0
      %v2127 = vpack.c.bf16 %v2096, %v2095
      %v2128 = vpack.c.bf16 %v2098, %v2097
      %v2129 = vpack.c.bf16 %v2100, %v2099
      %v2130 = vpack.c.bf16 %v2102, %v2101
      %v2131 = vpack.c.bf16 %v2104, %v2103
      %v2132 = vpack.c.bf16 %v2106, %v2105
      %v2133 = vpack.c.bf16 %v2108, %v2107
      %v2134 = vpack.c.bf16 %v2110, %v2109
      %v2135 = vpack.c.bf16 %v2112, %v2111
      %v2136 = vpack.c.bf16 %v2114, %v2113
      %v2137 = vpack.c.bf16 %v2116, %v2115
      %v2138 = vpack.c.bf16 %v2118, %v2117
      %v2139 = vpack.c.bf16 %v2120, %v2119
      %v2140 = vpack.c.bf16 %v2122, %v2121
      %v2141 = vpack.c.bf16 %v2124, %v2123
      %v2142 = vpack.c.bf16 %v2126, %v2125
      %v2143 = vmax.bf16 %v2127, %v2128
      %v2144 = vmax.bf16 %v2129, %v2130
      %v2145 = vmax.bf16 %v2131, %v2132
      %v2146 = vmax.bf16 %v2133, %v2134
      %v2147 = vmax.bf16 %v2135, %v2136
      %v2148 = vmax.bf16 %v2137, %v2138
      %v2149 = vmax.bf16 %v2139, %v2140
      %v2150 = vmax.bf16 %v2141, %v2142
      %v2159 = vcombine.high %v2143, %v2143
      %v2161 = vunpack.c.l.s4 1966171168
      %v2162 = vunpack.c.0.s8 %v2161
      %v2163 = vlaneseq
      %v2164 = vshrl.u32 %v2163, 7
      %v2165 = vsub.s32 %v2162, %v2164
      %v2166 = vrot.slane %v2143, %v2165
      %v2168 = vunpack.c.l.s4 1966171168
      %v2169 = vunpack.c.0.s8 %v2168
      %v2170 = vlaneseq
      %v2171 = vshrl.u32 %v2170, 7
      %v2172 = vsub.s32 %v2169, %v2171
      %v2173 = vrot.slane %v2159, %v2172
      %v2174 = vcombine.high %v2166, %v2166
      %v2175 = vcombine.high %v2173, %v2173
      %v2177 = vunpack.c.l.s4 1966171168
      %v2178 = vunpack.c.0.s8 %v2177
      %v2179 = vlaneseq
      %v2180 = vshrl.u32 %v2179, 7
      %v2181 = vsub.s32 %v2178, %v2180
      %v2182 = vrot.slane %v2166, %v2181
      %v2184 = vunpack.c.l.s4 1966171168
      %v2185 = vunpack.c.0.s8 %v2184
      %v2186 = vlaneseq
      %v2187 = vshrl.u32 %v2186, 7
      %v2188 = vsub.s32 %v2185, %v2187
      %v2189 = vrot.slane %v2173, %v2188
      %v2191 = vunpack.c.l.s4 1966171168
      %v2192 = vunpack.c.0.s8 %v2191
      %v2193 = vlaneseq
      %v2194 = vshrl.u32 %v2193, 7
      %v2195 = vsub.s32 %v2192, %v2194
      %v2196 = vrot.slane %v2174, %v2195
      %v2198 = vunpack.c.l.s4 1966171168
      %v2199 = vunpack.c.0.s8 %v2198
      %v2200 = vlaneseq
      %v2201 = vshrl.u32 %v2200, 7
      %v2202 = vsub.s32 %v2199, %v2201
      %v2203 = vrot.slane %v2175, %v2202
      %v2204 = vcombine.high %v2182, %v2182
      %v2205 = vcombine.high %v2189, %v2189
      %v2206 = vcombine.high %v2196, %v2196
      %v2207 = vcombine.high %v2203, %v2203
      %v2208 = vcombine.high %v2144, %v2144
      %v2210 = vunpack.c.l.s4 1966171168
      %v2211 = vunpack.c.0.s8 %v2210
      %v2212 = vlaneseq
      %v2213 = vshrl.u32 %v2212, 7
      %v2214 = vsub.s32 %v2211, %v2213
      %v2215 = vrot.slane %v2144, %v2214
      %v2217 = vunpack.c.l.s4 1966171168
      %v2218 = vunpack.c.0.s8 %v2217
      %v2219 = vlaneseq
      %v2220 = vshrl.u32 %v2219, 7
      %v2221 = vsub.s32 %v2218, %v2220
      %v2222 = vrot.slane %v2208, %v2221
      %v2223 = vcombine.high %v2215, %v2215
      %v2224 = vcombine.high %v2222, %v2222
      %v2226 = vunpack.c.l.s4 1966171168
      %v2227 = vunpack.c.0.s8 %v2226
      %v2228 = vlaneseq
      %v2229 = vshrl.u32 %v2228, 7
      %v2230 = vsub.s32 %v2227, %v2229
      %v2231 = vrot.slane %v2215, %v2230
      %v2233 = vunpack.c.l.s4 1966171168
      %v2234 = vunpack.c.0.s8 %v2233
      %v2235 = vlaneseq
      %v2236 = vshrl.u32 %v2235, 7
      %v2237 = vsub.s32 %v2234, %v2236
      %v2238 = vrot.slane %v2222, %v2237
      %v2240 = vunpack.c.l.s4 1966171168
      %v2241 = vunpack.c.0.s8 %v2240
      %v2242 = vlaneseq
      %v2243 = vshrl.u32 %v2242, 7
      %v2244 = vsub.s32 %v2241, %v2243
      %v2245 = vrot.slane %v2223, %v2244
      %v2247 = vunpack.c.l.s4 1966171168
      %v2248 = vunpack.c.0.s8 %v2247
      %v2249 = vlaneseq
      %v2250 = vshrl.u32 %v2249, 7
      %v2251 = vsub.s32 %v2248, %v2250
      %v2252 = vrot.slane %v2224, %v2251
      %v2253 = vcombine.high %v2231, %v2231
      %v2254 = vcombine.high %v2238, %v2238
      %v2255 = vcombine.high %v2245, %v2245
      %v2256 = vcombine.high %v2252, %v2252
      %v2257 = vcombine.high %v2145, %v2145
      %v2259 = vunpack.c.l.s4 1966171168
      %v2260 = vunpack.c.0.s8 %v2259
      %v2261 = vlaneseq
      %v2262 = vshrl.u32 %v2261, 7
      %v2263 = vsub.s32 %v2260, %v2262
      %v2264 = vrot.slane %v2145, %v2263
      %v2266 = vunpack.c.l.s4 1966171168
      %v2267 = vunpack.c.0.s8 %v2266
      %v2268 = vlaneseq
      %v2269 = vshrl.u32 %v2268, 7
      %v2270 = vsub.s32 %v2267, %v2269
      %v2271 = vrot.slane %v2257, %v2270
      %v2272 = vcombine.high %v2264, %v2264
      %v2273 = vcombine.high %v2271, %v2271
      %v2275 = vunpack.c.l.s4 1966171168
      %v2276 = vunpack.c.0.s8 %v2275
      %v2277 = vlaneseq
      %v2278 = vshrl.u32 %v2277, 7
      %v2279 = vsub.s32 %v2276, %v2278
      %v2280 = vrot.slane %v2264, %v2279
      %v2282 = vunpack.c.l.s4 1966171168
      %v2283 = vunpack.c.0.s8 %v2282
      %v2284 = vlaneseq
      %v2285 = vshrl.u32 %v2284, 7
      %v2286 = vsub.s32 %v2283, %v2285
      %v2287 = vrot.slane %v2271, %v2286
      %v2289 = vunpack.c.l.s4 1966171168
      %v2290 = vunpack.c.0.s8 %v2289
      %v2291 = vlaneseq
      %v2292 = vshrl.u32 %v2291, 7
      %v2293 = vsub.s32 %v2290, %v2292
      %v2294 = vrot.slane %v2272, %v2293
      %v2296 = vunpack.c.l.s4 1966171168
      %v2297 = vunpack.c.0.s8 %v2296
      %v2298 = vlaneseq
      %v2299 = vshrl.u32 %v2298, 7
      %v2300 = vsub.s32 %v2297, %v2299
      %v2301 = vrot.slane %v2273, %v2300
      %v2302 = vcombine.high %v2280, %v2280
      %v2303 = vcombine.high %v2287, %v2287
      %v2304 = vcombine.high %v2294, %v2294
      %v2305 = vcombine.high %v2301, %v2301
      %v2306 = vcombine.high %v2146, %v2146
      %v2308 = vunpack.c.l.s4 1966171168
      %v2309 = vunpack.c.0.s8 %v2308
      %v2310 = vlaneseq
      %v2311 = vshrl.u32 %v2310, 7
      %v2312 = vsub.s32 %v2309, %v2311
      %v2313 = vrot.slane %v2146, %v2312
      %v2315 = vunpack.c.l.s4 1966171168
      %v2316 = vunpack.c.0.s8 %v2315
      %v2317 = vlaneseq
      %v2318 = vshrl.u32 %v2317, 7
      %v2319 = vsub.s32 %v2316, %v2318
      %v2320 = vrot.slane %v2306, %v2319
      %v2321 = vcombine.high %v2313, %v2313
      %v2322 = vcombine.high %v2320, %v2320
      %v2324 = vunpack.c.l.s4 1966171168
      %v2325 = vunpack.c.0.s8 %v2324
      %v2326 = vlaneseq
      %v2327 = vshrl.u32 %v2326, 7
      %v2328 = vsub.s32 %v2325, %v2327
      %v2329 = vrot.slane %v2313, %v2328
      %v2331 = vunpack.c.l.s4 1966171168
      %v2332 = vunpack.c.0.s8 %v2331
      %v2333 = vlaneseq
      %v2334 = vshrl.u32 %v2333, 7
      %v2335 = vsub.s32 %v2332, %v2334
      %v2336 = vrot.slane %v2320, %v2335
      %v2338 = vunpack.c.l.s4 1966171168
      %v2339 = vunpack.c.0.s8 %v2338
      %v2340 = vlaneseq
      %v2341 = vshrl.u32 %v2340, 7
      %v2342 = vsub.s32 %v2339, %v2341
      %v2343 = vrot.slane %v2321, %v2342
      %v2345 = vunpack.c.l.s4 1966171168
      %v2346 = vunpack.c.0.s8 %v2345
      %v2347 = vlaneseq
      %v2348 = vshrl.u32 %v2347, 7
      %v2349 = vsub.s32 %v2346, %v2348
      %v2350 = vrot.slane %v2322, %v2349
      %v2351 = vcombine.high %v2329, %v2329
      %v2352 = vcombine.high %v2336, %v2336
      %v2353 = vcombine.high %v2343, %v2343
      %v2354 = vcombine.high %v2350, %v2350
      %v2355 = vcombine.high %v2147, %v2147
      %v2357 = vunpack.c.l.s4 1966171168
      %v2358 = vunpack.c.0.s8 %v2357
      %v2359 = vlaneseq
      %v2360 = vshrl.u32 %v2359, 7
      %v2361 = vsub.s32 %v2358, %v2360
      %v2362 = vrot.slane %v2147, %v2361
      %v2364 = vunpack.c.l.s4 1966171168
      %v2365 = vunpack.c.0.s8 %v2364
      %v2366 = vlaneseq
      %v2367 = vshrl.u32 %v2366, 7
      %v2368 = vsub.s32 %v2365, %v2367
      %v2369 = vrot.slane %v2355, %v2368
      %v2370 = vcombine.high %v2362, %v2362
      %v2371 = vcombine.high %v2369, %v2369
      %v2373 = vunpack.c.l.s4 1966171168
      %v2374 = vunpack.c.0.s8 %v2373
      %v2375 = vlaneseq
      %v2376 = vshrl.u32 %v2375, 7
      %v2377 = vsub.s32 %v2374, %v2376
      %v2378 = vrot.slane %v2362, %v2377
      %v2380 = vunpack.c.l.s4 1966171168
      %v2381 = vunpack.c.0.s8 %v2380
      %v2382 = vlaneseq
      %v2383 = vshrl.u32 %v2382, 7
      %v2384 = vsub.s32 %v2381, %v2383
      %v2385 = vrot.slane %v2369, %v2384
      %v2387 = vunpack.c.l.s4 1966171168
      %v2388 = vunpack.c.0.s8 %v2387
      %v2389 = vlaneseq
      %v2390 = vshrl.u32 %v2389, 7
      %v2391 = vsub.s32 %v2388, %v2390
      %v2392 = vrot.slane %v2370, %v2391
      %v2394 = vunpack.c.l.s4 1966171168
      %v2395 = vunpack.c.0.s8 %v2394
      %v2396 = vlaneseq
      %v2397 = vshrl.u32 %v2396, 7
      %v2398 = vsub.s32 %v2395, %v2397
      %v2399 = vrot.slane %v2371, %v2398
      %v2400 = vcombine.high %v2378, %v2378
      %v2401 = vcombine.high %v2385, %v2385
      %v2402 = vcombine.high %v2392, %v2392
      %v2403 = vcombine.high %v2399, %v2399
      %v2404 = vcombine.high %v2148, %v2148
      %v2406 = vunpack.c.l.s4 1966171168
      %v2407 = vunpack.c.0.s8 %v2406
      %v2408 = vlaneseq
      %v2409 = vshrl.u32 %v2408, 7
      %v2410 = vsub.s32 %v2407, %v2409
      %v2411 = vrot.slane %v2148, %v2410
      %v2413 = vunpack.c.l.s4 1966171168
      %v2414 = vunpack.c.0.s8 %v2413
      %v2415 = vlaneseq
      %v2416 = vshrl.u32 %v2415, 7
      %v2417 = vsub.s32 %v2414, %v2416
      %v2418 = vrot.slane %v2404, %v2417
      %v2419 = vcombine.high %v2411, %v2411
      %v2420 = vcombine.high %v2418, %v2418
      %v2422 = vunpack.c.l.s4 1966171168
      %v2423 = vunpack.c.0.s8 %v2422
      %v2424 = vlaneseq
      %v2425 = vshrl.u32 %v2424, 7
      %v2426 = vsub.s32 %v2423, %v2425
      %v2427 = vrot.slane %v2411, %v2426
      %v2429 = vunpack.c.l.s4 1966171168
      %v2430 = vunpack.c.0.s8 %v2429
      %v2431 = vlaneseq
      %v2432 = vshrl.u32 %v2431, 7
      %v2433 = vsub.s32 %v2430, %v2432
      %v2434 = vrot.slane %v2418, %v2433
      %v2436 = vunpack.c.l.s4 1966171168
      %v2437 = vunpack.c.0.s8 %v2436
      %v2438 = vlaneseq
      %v2439 = vshrl.u32 %v2438, 7
      %v2440 = vsub.s32 %v2437, %v2439
      %v2441 = vrot.slane %v2419, %v2440
      %v2443 = vunpack.c.l.s4 1966171168
      %v2444 = vunpack.c.0.s8 %v2443
      %v2445 = vlaneseq
      %v2446 = vshrl.u32 %v2445, 7
      %v2447 = vsub.s32 %v2444, %v2446
      %v2448 = vrot.slane %v2420, %v2447
      %v2449 = vcombine.high %v2427, %v2427
      %v2450 = vcombine.high %v2434, %v2434
      %v2451 = vcombine.high %v2441, %v2441
      %v2452 = vcombine.high %v2448, %v2448
      %v2453 = vcombine.high %v2149, %v2149
      %v2455 = vunpack.c.l.s4 1966171168
      %v2456 = vunpack.c.0.s8 %v2455
      %v2457 = vlaneseq
      %v2458 = vshrl.u32 %v2457, 7
      %v2459 = vsub.s32 %v2456, %v2458
      %v2460 = vrot.slane %v2149, %v2459
      %v2462 = vunpack.c.l.s4 1966171168
      %v2463 = vunpack.c.0.s8 %v2462
      %v2464 = vlaneseq
      %v2465 = vshrl.u32 %v2464, 7
      %v2466 = vsub.s32 %v2463, %v2465
      %v2467 = vrot.slane %v2453, %v2466
      %v2468 = vcombine.high %v2460, %v2460
      %v2469 = vcombine.high %v2467, %v2467
      %v2471 = vunpack.c.l.s4 1966171168
      %v2472 = vunpack.c.0.s8 %v2471
      %v2473 = vlaneseq
      %v2474 = vshrl.u32 %v2473, 7
      %v2475 = vsub.s32 %v2472, %v2474
      %v2476 = vrot.slane %v2460, %v2475
      %v2478 = vunpack.c.l.s4 1966171168
      %v2479 = vunpack.c.0.s8 %v2478
      %v2480 = vlaneseq
      %v2481 = vshrl.u32 %v2480, 7
      %v2482 = vsub.s32 %v2479, %v2481
      %v2483 = vrot.slane %v2467, %v2482
      %v2485 = vunpack.c.l.s4 1966171168
      %v2486 = vunpack.c.0.s8 %v2485
      %v2487 = vlaneseq
      %v2488 = vshrl.u32 %v2487, 7
      %v2489 = vsub.s32 %v2486, %v2488
      %v2490 = vrot.slane %v2468, %v2489
      %v2492 = vunpack.c.l.s4 1966171168
      %v2493 = vunpack.c.0.s8 %v2492
      %v2494 = vlaneseq
      %v2495 = vshrl.u32 %v2494, 7
      %v2496 = vsub.s32 %v2493, %v2495
      %v2497 = vrot.slane %v2469, %v2496
      %v2498 = vcombine.high %v2476, %v2476
      %v2499 = vcombine.high %v2483, %v2483
      %v2500 = vcombine.high %v2490, %v2490
      %v2501 = vcombine.high %v2497, %v2497
      %v2502 = vcombine.high %v2150, %v2150
      %v2504 = vunpack.c.l.s4 1966171168
      %v2505 = vunpack.c.0.s8 %v2504
      %v2506 = vlaneseq
      %v2507 = vshrl.u32 %v2506, 7
      %v2508 = vsub.s32 %v2505, %v2507
      %v2509 = vrot.slane %v2150, %v2508
      %v2511 = vunpack.c.l.s4 1966171168
      %v2512 = vunpack.c.0.s8 %v2511
      %v2513 = vlaneseq
      %v2514 = vshrl.u32 %v2513, 7
      %v2515 = vsub.s32 %v2512, %v2514
      %v2516 = vrot.slane %v2502, %v2515
      %v2517 = vcombine.high %v2509, %v2509
      %v2518 = vcombine.high %v2516, %v2516
      %v2520 = vunpack.c.l.s4 1966171168
      %v2521 = vunpack.c.0.s8 %v2520
      %v2522 = vlaneseq
      %v2523 = vshrl.u32 %v2522, 7
      %v2524 = vsub.s32 %v2521, %v2523
      %v2525 = vrot.slane %v2509, %v2524
      %v2527 = vunpack.c.l.s4 1966171168
      %v2528 = vunpack.c.0.s8 %v2527
      %v2529 = vlaneseq
      %v2530 = vshrl.u32 %v2529, 7
      %v2531 = vsub.s32 %v2528, %v2530
      %v2532 = vrot.slane %v2516, %v2531
      %v2534 = vunpack.c.l.s4 1966171168
      %v2535 = vunpack.c.0.s8 %v2534
      %v2536 = vlaneseq
      %v2537 = vshrl.u32 %v2536, 7
      %v2538 = vsub.s32 %v2535, %v2537
      %v2539 = vrot.slane %v2517, %v2538
      %v2541 = vunpack.c.l.s4 1966171168
      %v2542 = vunpack.c.0.s8 %v2541
      %v2543 = vlaneseq
      %v2544 = vshrl.u32 %v2543, 7
      %v2545 = vsub.s32 %v2542, %v2544
      %v2546 = vrot.slane %v2518, %v2545
      %v2547 = vcombine.high %v2525, %v2525
      %v2548 = vcombine.high %v2532, %v2532
      %v2549 = vcombine.high %v2539, %v2539
      %v2550 = vcombine.high %v2546, %v2546
      %v2616 = vshrl.u32 %v2182, 16
      %v2618 = vrot.slane %v2616, 7
      %v2619 = vrot.slane %v2618, 1
      %v2621 = vshrl.u32 %v2196, 16
      %v2623 = vrot.slane %v2621, 7
      %v2624 = vrot.slane %v2623, 1
      %v2626 = vshrl.u32 %v2204, 16
      %v2628 = vrot.slane %v2626, 7
      %v2629 = vrot.slane %v2628, 1
      %v2631 = vshrl.u32 %v2206, 16
      %v2633 = vrot.slane %v2631, 7
      %v2634 = vrot.slane %v2633, 1
      %v2636 = vshrl.u32 %v2189, 16
      %v2638 = vrot.slane %v2636, 7
      %v2639 = vrot.slane %v2638, 1
      %v2641 = vshrl.u32 %v2203, 16
      %v2643 = vrot.slane %v2641, 7
      %v2644 = vrot.slane %v2643, 1
      %v2646 = vshrl.u32 %v2205, 16
      %v2648 = vrot.slane %v2646, 7
      %v2649 = vrot.slane %v2648, 1
      %v2651 = vshrl.u32 %v2207, 16
      %v2653 = vrot.slane %v2651, 7
      %v2654 = vrot.slane %v2653, 1
      %v2656 = vshrl.u32 %v2231, 16
      %v2658 = vrot.slane %v2656, 7
      %v2659 = vrot.slane %v2658, 1
      %v2661 = vshrl.u32 %v2245, 16
      %v2663 = vrot.slane %v2661, 7
      %v2664 = vrot.slane %v2663, 1
      %v2666 = vshrl.u32 %v2253, 16
      %v2668 = vrot.slane %v2666, 7
      %v2669 = vrot.slane %v2668, 1
      %v2671 = vshrl.u32 %v2255, 16
      %v2673 = vrot.slane %v2671, 7
      %v2674 = vrot.slane %v2673, 1
      %v2676 = vshrl.u32 %v2238, 16
      %v2678 = vrot.slane %v2676, 7
      %v2679 = vrot.slane %v2678, 1
      %v2681 = vshrl.u32 %v2252, 16
      %v2683 = vrot.slane %v2681, 7
      %v2684 = vrot.slane %v2683, 1
      %v2686 = vshrl.u32 %v2254, 16
      %v2688 = vrot.slane %v2686, 7
      %v2689 = vrot.slane %v2688, 1
      %v2691 = vshrl.u32 %v2256, 16
      %v2693 = vrot.slane %v2691, 7
      %v2694 = vrot.slane %v2693, 1
      %v2696 = vshrl.u32 %v2280, 16
      %v2698 = vrot.slane %v2696, 7
      %v2699 = vrot.slane %v2698, 1
      %v2701 = vshrl.u32 %v2294, 16
      %v2703 = vrot.slane %v2701, 7
      %v2704 = vrot.slane %v2703, 1
      %v2706 = vshrl.u32 %v2302, 16
      %v2708 = vrot.slane %v2706, 7
      %v2709 = vrot.slane %v2708, 1
      %v2711 = vshrl.u32 %v2304, 16
      %v2713 = vrot.slane %v2711, 7
      %v2714 = vrot.slane %v2713, 1
      %v2716 = vshrl.u32 %v2287, 16
      %v2718 = vrot.slane %v2716, 7
      %v2719 = vrot.slane %v2718, 1
      %v2721 = vshrl.u32 %v2301, 16
      %v2723 = vrot.slane %v2721, 7
      %v2724 = vrot.slane %v2723, 1
      %v2726 = vshrl.u32 %v2303, 16
      %v2728 = vrot.slane %v2726, 7
      %v2729 = vrot.slane %v2728, 1
      %v2731 = vshrl.u32 %v2305, 16
      %v2733 = vrot.slane %v2731, 7
      %v2734 = vrot.slane %v2733, 1
      %v2736 = vshrl.u32 %v2329, 16
      %v2738 = vrot.slane %v2736, 7
      %v2739 = vrot.slane %v2738, 1
      %v2741 = vshrl.u32 %v2343, 16
      %v2743 = vrot.slane %v2741, 7
      %v2744 = vrot.slane %v2743, 1
      %v2746 = vshrl.u32 %v2351, 16
      %v2748 = vrot.slane %v2746, 7
      %v2749 = vrot.slane %v2748, 1
      %v2751 = vshrl.u32 %v2353, 16
      %v2753 = vrot.slane %v2751, 7
      %v2754 = vrot.slane %v2753, 1
      %v2756 = vshrl.u32 %v2336, 16
      %v2758 = vrot.slane %v2756, 7
      %v2759 = vrot.slane %v2758, 1
      %v2761 = vshrl.u32 %v2350, 16
      %v2763 = vrot.slane %v2761, 7
      %v2764 = vrot.slane %v2763, 1
      %v2766 = vshrl.u32 %v2352, 16
      %v2768 = vrot.slane %v2766, 7
      %v2769 = vrot.slane %v2768, 1
      %v2771 = vshrl.u32 %v2354, 16
      %v2773 = vrot.slane %v2771, 7
      %v2774 = vrot.slane %v2773, 1
      %v2776 = vshrl.u32 %v2378, 16
      %v2778 = vrot.slane %v2776, 7
      %v2779 = vrot.slane %v2778, 1
      %v2781 = vshrl.u32 %v2392, 16
      %v2783 = vrot.slane %v2781, 7
      %v2784 = vrot.slane %v2783, 1
      %v2786 = vshrl.u32 %v2400, 16
      %v2788 = vrot.slane %v2786, 7
      %v2789 = vrot.slane %v2788, 1
      %v2791 = vshrl.u32 %v2402, 16
      %v2793 = vrot.slane %v2791, 7
      %v2794 = vrot.slane %v2793, 1
      %v2796 = vshrl.u32 %v2385, 16
      %v2798 = vrot.slane %v2796, 7
      %v2799 = vrot.slane %v2798, 1
      %v2801 = vshrl.u32 %v2399, 16
      %v2803 = vrot.slane %v2801, 7
      %v2804 = vrot.slane %v2803, 1
      %v2806 = vshrl.u32 %v2401, 16
      %v2808 = vrot.slane %v2806, 7
      %v2809 = vrot.slane %v2808, 1
      %v2811 = vshrl.u32 %v2403, 16
      %v2813 = vrot.slane %v2811, 7
      %v2814 = vrot.slane %v2813, 1
      %v2816 = vshrl.u32 %v2427, 16
      %v2818 = vrot.slane %v2816, 7
      %v2819 = vrot.slane %v2818, 1
      %v2821 = vshrl.u32 %v2441, 16
      %v2823 = vrot.slane %v2821, 7
      %v2824 = vrot.slane %v2823, 1
      %v2826 = vshrl.u32 %v2449, 16
      %v2828 = vrot.slane %v2826, 7
      %v2829 = vrot.slane %v2828, 1
      %v2831 = vshrl.u32 %v2451, 16
      %v2833 = vrot.slane %v2831, 7
      %v2834 = vrot.slane %v2833, 1
      %v2836 = vshrl.u32 %v2434, 16
      %v2838 = vrot.slane %v2836, 7
      %v2839 = vrot.slane %v2838, 1
      %v2841 = vshrl.u32 %v2448, 16
      %v2843 = vrot.slane %v2841, 7
      %v2844 = vrot.slane %v2843, 1
      %v2846 = vshrl.u32 %v2450, 16
      %v2848 = vrot.slane %v2846, 7
      %v2849 = vrot.slane %v2848, 1
      %v2851 = vshrl.u32 %v2452, 16
      %v2853 = vrot.slane %v2851, 7
      %v2854 = vrot.slane %v2853, 1
      %v2856 = vshrl.u32 %v2476, 16
      %v2858 = vrot.slane %v2856, 7
      %v2859 = vrot.slane %v2858, 1
      %v2861 = vshrl.u32 %v2490, 16
      %v2863 = vrot.slane %v2861, 7
      %v2864 = vrot.slane %v2863, 1
      %v2866 = vshrl.u32 %v2498, 16
      %v2868 = vrot.slane %v2866, 7
      %v2869 = vrot.slane %v2868, 1
      %v2871 = vshrl.u32 %v2500, 16
      %v2873 = vrot.slane %v2871, 7
      %v2874 = vrot.slane %v2873, 1
      %v2876 = vshrl.u32 %v2483, 16
      %v2878 = vrot.slane %v2876, 7
      %v2879 = vrot.slane %v2878, 1
      %v2881 = vshrl.u32 %v2497, 16
      %v2883 = vrot.slane %v2881, 7
      %v2884 = vrot.slane %v2883, 1
      %v2886 = vshrl.u32 %v2499, 16
      %v2888 = vrot.slane %v2886, 7
      %v2889 = vrot.slane %v2888, 1
      %v2891 = vshrl.u32 %v2501, 16
      %v2893 = vrot.slane %v2891, 7
      %v2894 = vrot.slane %v2893, 1
      %v2896 = vshrl.u32 %v2525, 16
      %v2898 = vrot.slane %v2896, 7
      %v2899 = vrot.slane %v2898, 1
      %v2901 = vshrl.u32 %v2539, 16
      %v2903 = vrot.slane %v2901, 7
      %v2904 = vrot.slane %v2903, 1
      %v2906 = vshrl.u32 %v2547, 16
      %v2908 = vrot.slane %v2906, 7
      %v2909 = vrot.slane %v2908, 1
      %v2911 = vshrl.u32 %v2549, 16
      %v2913 = vrot.slane %v2911, 7
      %v2914 = vrot.slane %v2913, 1
      %v2916 = vshrl.u32 %v2532, 16
      %v2918 = vrot.slane %v2916, 7
      %v2919 = vrot.slane %v2918, 1
      %v2921 = vshrl.u32 %v2546, 16
      %v2923 = vrot.slane %v2921, 7
      %v2924 = vrot.slane %v2923, 1
      %v2926 = vshrl.u32 %v2548, 16
      %v2928 = vrot.slane %v2926, 7
      %v2929 = vrot.slane %v2928, 1
      %v2931 = vshrl.u32 %v2550, 16
      %v2933 = vrot.slane %v2931, 7
      %v2934 = vrot.slane %v2933, 1
      %v2999 = vmax.bf16 %v2182, %v2619
      %v3000 = vmax.bf16 %v2196, %v2624
      %v3001 = vmax.bf16 %v2204, %v2629
      %v3002 = vmax.bf16 %v2206, %v2634
      %v3003 = vmax.bf16 %v2189, %v2639
      %v3004 = vmax.bf16 %v2203, %v2644
      %v3005 = vmax.bf16 %v2205, %v2649
      %v3006 = vmax.bf16 %v2207, %v2654
      %v3007 = vmax.bf16 %v2231, %v2659
      %v3008 = vmax.bf16 %v2245, %v2664
      %v3009 = vmax.bf16 %v2253, %v2669
      %v3010 = vmax.bf16 %v2255, %v2674
      %v3011 = vmax.bf16 %v2238, %v2679
      %v3012 = vmax.bf16 %v2252, %v2684
      %v3013 = vmax.bf16 %v2254, %v2689
      %v3014 = vmax.bf16 %v2256, %v2694
      %v3015 = vmax.bf16 %v2280, %v2699
      %v3016 = vmax.bf16 %v2294, %v2704
      %v3017 = vmax.bf16 %v2302, %v2709
      %v3018 = vmax.bf16 %v2304, %v2714
      %v3019 = vmax.bf16 %v2287, %v2719
      %v3020 = vmax.bf16 %v2301, %v2724
      %v3021 = vmax.bf16 %v2303, %v2729
      %v3022 = vmax.bf16 %v2305, %v2734
      %v3023 = vmax.bf16 %v2329, %v2739
      %v3024 = vmax.bf16 %v2343, %v2744
      %v3025 = vmax.bf16 %v2351, %v2749
      %v3026 = vmax.bf16 %v2353, %v2754
      %v3027 = vmax.bf16 %v2336, %v2759
      %v3028 = vmax.bf16 %v2350, %v2764
      %v3029 = vmax.bf16 %v2352, %v2769
      %v3030 = vmax.bf16 %v2354, %v2774
      %v3031 = vmax.bf16 %v2378, %v2779
      %v3032 = vmax.bf16 %v2392, %v2784
      %v3033 = vmax.bf16 %v2400, %v2789
      %v3034 = vmax.bf16 %v2402, %v2794
      %v3035 = vmax.bf16 %v2385, %v2799
      %v3036 = vmax.bf16 %v2399, %v2804
      %v3037 = vmax.bf16 %v2401, %v2809
      %v3038 = vmax.bf16 %v2403, %v2814
      %v3039 = vmax.bf16 %v2427, %v2819
      %v3040 = vmax.bf16 %v2441, %v2824
      %v3041 = vmax.bf16 %v2449, %v2829
      %v3042 = vmax.bf16 %v2451, %v2834
      %v3043 = vmax.bf16 %v2434, %v2839
      %v3044 = vmax.bf16 %v2448, %v2844
      %v3045 = vmax.bf16 %v2450, %v2849
      %v3046 = vmax.bf16 %v2452, %v2854
      %v3047 = vmax.bf16 %v2476, %v2859
      %v3048 = vmax.bf16 %v2490, %v2864
      %v3049 = vmax.bf16 %v2498, %v2869
      %v3050 = vmax.bf16 %v2500, %v2874
      %v3051 = vmax.bf16 %v2483, %v2879
      %v3052 = vmax.bf16 %v2497, %v2884
      %v3053 = vmax.bf16 %v2499, %v2889
      %v3054 = vmax.bf16 %v2501, %v2894
      %v3055 = vmax.bf16 %v2525, %v2899
      %v3056 = vmax.bf16 %v2539, %v2904
      %v3057 = vmax.bf16 %v2547, %v2909
      %v3058 = vmax.bf16 %v2549, %v2914
      %v3059 = vmax.bf16 %v2532, %v2919
      %v3060 = vmax.bf16 %v2546, %v2924
      %v3061 = vmax.bf16 %v2548, %v2929
      %v3062 = vmax.bf16 %v2550, %v2934
      %v3128 = vunpack.c.l.s4 1935823168
      %v3129 = vunpack.c.0.s8 %v3128
      %v3130 = vlaneseq
      %v3131 = vshrl.u32 %v3130, 7
      %v3132 = vsub.s32 %v3129, %v3131
      %v3133 = vrot.slane %v2999, %v3132
      %v3135 = vunpack.c.l.s4 1935823168
      %v3136 = vunpack.c.0.s8 %v3135
      %v3137 = vlaneseq
      %v3138 = vshrl.u32 %v3137, 7
      %v3139 = vsub.s32 %v3136, %v3138
      %v3140 = vrot.slane %v3133, %v3139
      %v3142 = vunpack.c.l.s4 1935823168
      %v3143 = vunpack.c.0.s8 %v3142
      %v3144 = vlaneseq
      %v3145 = vshrl.u32 %v3144, 7
      %v3146 = vsub.s32 %v3143, %v3145
      %v3147 = vrot.slane %v3000, %v3146
      %v3149 = vunpack.c.l.s4 1935823168
      %v3150 = vunpack.c.0.s8 %v3149
      %v3151 = vlaneseq
      %v3152 = vshrl.u32 %v3151, 7
      %v3153 = vsub.s32 %v3150, %v3152
      %v3154 = vrot.slane %v3147, %v3153
      %v3156 = vunpack.c.l.s4 1935823168
      %v3157 = vunpack.c.0.s8 %v3156
      %v3158 = vlaneseq
      %v3159 = vshrl.u32 %v3158, 7
      %v3160 = vsub.s32 %v3157, %v3159
      %v3161 = vrot.slane %v3001, %v3160
      %v3163 = vunpack.c.l.s4 1935823168
      %v3164 = vunpack.c.0.s8 %v3163
      %v3165 = vlaneseq
      %v3166 = vshrl.u32 %v3165, 7
      %v3167 = vsub.s32 %v3164, %v3166
      %v3168 = vrot.slane %v3161, %v3167
      %v3170 = vunpack.c.l.s4 1935823168
      %v3171 = vunpack.c.0.s8 %v3170
      %v3172 = vlaneseq
      %v3173 = vshrl.u32 %v3172, 7
      %v3174 = vsub.s32 %v3171, %v3173
      %v3175 = vrot.slane %v3002, %v3174
      %v3177 = vunpack.c.l.s4 1935823168
      %v3178 = vunpack.c.0.s8 %v3177
      %v3179 = vlaneseq
      %v3180 = vshrl.u32 %v3179, 7
      %v3181 = vsub.s32 %v3178, %v3180
      %v3182 = vrot.slane %v3175, %v3181
      %v3184 = vunpack.c.l.s4 1935823168
      %v3185 = vunpack.c.0.s8 %v3184
      %v3186 = vlaneseq
      %v3187 = vshrl.u32 %v3186, 7
      %v3188 = vsub.s32 %v3185, %v3187
      %v3189 = vrot.slane %v3003, %v3188
      %v3191 = vunpack.c.l.s4 1935823168
      %v3192 = vunpack.c.0.s8 %v3191
      %v3193 = vlaneseq
      %v3194 = vshrl.u32 %v3193, 7
      %v3195 = vsub.s32 %v3192, %v3194
      %v3196 = vrot.slane %v3189, %v3195
      %v3198 = vunpack.c.l.s4 1935823168
      %v3199 = vunpack.c.0.s8 %v3198
      %v3200 = vlaneseq
      %v3201 = vshrl.u32 %v3200, 7
      %v3202 = vsub.s32 %v3199, %v3201
      %v3203 = vrot.slane %v3004, %v3202
      %v3205 = vunpack.c.l.s4 1935823168
      %v3206 = vunpack.c.0.s8 %v3205
      %v3207 = vlaneseq
      %v3208 = vshrl.u32 %v3207, 7
      %v3209 = vsub.s32 %v3206, %v3208
      %v3210 = vrot.slane %v3203, %v3209
      %v3212 = vunpack.c.l.s4 1935823168
      %v3213 = vunpack.c.0.s8 %v3212
      %v3214 = vlaneseq
      %v3215 = vshrl.u32 %v3214, 7
      %v3216 = vsub.s32 %v3213, %v3215
      %v3217 = vrot.slane %v3005, %v3216
      %v3219 = vunpack.c.l.s4 1935823168
      %v3220 = vunpack.c.0.s8 %v3219
      %v3221 = vlaneseq
      %v3222 = vshrl.u32 %v3221, 7
      %v3223 = vsub.s32 %v3220, %v3222
      %v3224 = vrot.slane %v3217, %v3223
      %v3226 = vunpack.c.l.s4 1935823168
      %v3227 = vunpack.c.0.s8 %v3226
      %v3228 = vlaneseq
      %v3229 = vshrl.u32 %v3228, 7
      %v3230 = vsub.s32 %v3227, %v3229
      %v3231 = vrot.slane %v3006, %v3230
      %v3233 = vunpack.c.l.s4 1935823168
      %v3234 = vunpack.c.0.s8 %v3233
      %v3235 = vlaneseq
      %v3236 = vshrl.u32 %v3235, 7
      %v3237 = vsub.s32 %v3234, %v3236
      %v3238 = vrot.slane %v3231, %v3237
      %v3240 = vunpack.c.l.s4 1935823168
      %v3241 = vunpack.c.0.s8 %v3240
      %v3242 = vlaneseq
      %v3243 = vshrl.u32 %v3242, 7
      %v3244 = vsub.s32 %v3241, %v3243
      %v3245 = vrot.slane %v3007, %v3244
      %v3247 = vunpack.c.l.s4 1935823168
      %v3248 = vunpack.c.0.s8 %v3247
      %v3249 = vlaneseq
      %v3250 = vshrl.u32 %v3249, 7
      %v3251 = vsub.s32 %v3248, %v3250
      %v3252 = vrot.slane %v3245, %v3251
      %v3254 = vunpack.c.l.s4 1935823168
      %v3255 = vunpack.c.0.s8 %v3254
      %v3256 = vlaneseq
      %v3257 = vshrl.u32 %v3256, 7
      %v3258 = vsub.s32 %v3255, %v3257
      %v3259 = vrot.slane %v3008, %v3258
      %v3261 = vunpack.c.l.s4 1935823168
      %v3262 = vunpack.c.0.s8 %v3261
      %v3263 = vlaneseq
      %v3264 = vshrl.u32 %v3263, 7
      %v3265 = vsub.s32 %v3262, %v3264
      %v3266 = vrot.slane %v3259, %v3265
      %v3268 = vunpack.c.l.s4 1935823168
      %v3269 = vunpack.c.0.s8 %v3268
      %v3270 = vlaneseq
      %v3271 = vshrl.u32 %v3270, 7
      %v3272 = vsub.s32 %v3269, %v3271
      %v3273 = vrot.slane %v3009, %v3272
      %v3275 = vunpack.c.l.s4 1935823168
      %v3276 = vunpack.c.0.s8 %v3275
      %v3277 = vlaneseq
      %v3278 = vshrl.u32 %v3277, 7
      %v3279 = vsub.s32 %v3276, %v3278
      %v3280 = vrot.slane %v3273, %v3279
      %v3282 = vunpack.c.l.s4 1935823168
      %v3283 = vunpack.c.0.s8 %v3282
      %v3284 = vlaneseq
      %v3285 = vshrl.u32 %v3284, 7
      %v3286 = vsub.s32 %v3283, %v3285
      %v3287 = vrot.slane %v3010, %v3286
      %v3289 = vunpack.c.l.s4 1935823168
      %v3290 = vunpack.c.0.s8 %v3289
      %v3291 = vlaneseq
      %v3292 = vshrl.u32 %v3291, 7
      %v3293 = vsub.s32 %v3290, %v3292
      %v3294 = vrot.slane %v3287, %v3293
      %v3296 = vunpack.c.l.s4 1935823168
      %v3297 = vunpack.c.0.s8 %v3296
      %v3298 = vlaneseq
      %v3299 = vshrl.u32 %v3298, 7
      %v3300 = vsub.s32 %v3297, %v3299
      %v3301 = vrot.slane %v3011, %v3300
      %v3303 = vunpack.c.l.s4 1935823168
      %v3304 = vunpack.c.0.s8 %v3303
      %v3305 = vlaneseq
      %v3306 = vshrl.u32 %v3305, 7
      %v3307 = vsub.s32 %v3304, %v3306
      %v3308 = vrot.slane %v3301, %v3307
      %v3310 = vunpack.c.l.s4 1935823168
      %v3311 = vunpack.c.0.s8 %v3310
      %v3312 = vlaneseq
      %v3313 = vshrl.u32 %v3312, 7
      %v3314 = vsub.s32 %v3311, %v3313
      %v3315 = vrot.slane %v3012, %v3314
      %v3317 = vunpack.c.l.s4 1935823168
      %v3318 = vunpack.c.0.s8 %v3317
      %v3319 = vlaneseq
      %v3320 = vshrl.u32 %v3319, 7
      %v3321 = vsub.s32 %v3318, %v3320
      %v3322 = vrot.slane %v3315, %v3321
      %v3324 = vunpack.c.l.s4 1935823168
      %v3325 = vunpack.c.0.s8 %v3324
      %v3326 = vlaneseq
      %v3327 = vshrl.u32 %v3326, 7
      %v3328 = vsub.s32 %v3325, %v3327
      %v3329 = vrot.slane %v3013, %v3328
      %v3331 = vunpack.c.l.s4 1935823168
      %v3332 = vunpack.c.0.s8 %v3331
      %v3333 = vlaneseq
      %v3334 = vshrl.u32 %v3333, 7
      %v3335 = vsub.s32 %v3332, %v3334
      %v3336 = vrot.slane %v3329, %v3335
      %v3338 = vunpack.c.l.s4 1935823168
      %v3339 = vunpack.c.0.s8 %v3338
      %v3340 = vlaneseq
      %v3341 = vshrl.u32 %v3340, 7
      %v3342 = vsub.s32 %v3339, %v3341
      %v3343 = vrot.slane %v3014, %v3342
      %v3345 = vunpack.c.l.s4 1935823168
      %v3346 = vunpack.c.0.s8 %v3345
      %v3347 = vlaneseq
      %v3348 = vshrl.u32 %v3347, 7
      %v3349 = vsub.s32 %v3346, %v3348
      %v3350 = vrot.slane %v3343, %v3349
      %v3352 = vunpack.c.l.s4 1935823168
      %v3353 = vunpack.c.0.s8 %v3352
      %v3354 = vlaneseq
      %v3355 = vshrl.u32 %v3354, 7
      %v3356 = vsub.s32 %v3353, %v3355
      %v3357 = vrot.slane %v3015, %v3356
      %v3359 = vunpack.c.l.s4 1935823168
      %v3360 = vunpack.c.0.s8 %v3359
      %v3361 = vlaneseq
      %v3362 = vshrl.u32 %v3361, 7
      %v3363 = vsub.s32 %v3360, %v3362
      %v3364 = vrot.slane %v3357, %v3363
      %v3366 = vunpack.c.l.s4 1935823168
      %v3367 = vunpack.c.0.s8 %v3366
      %v3368 = vlaneseq
      %v3369 = vshrl.u32 %v3368, 7
      %v3370 = vsub.s32 %v3367, %v3369
      %v3371 = vrot.slane %v3016, %v3370
      %v3373 = vunpack.c.l.s4 1935823168
      %v3374 = vunpack.c.0.s8 %v3373
      %v3375 = vlaneseq
      %v3376 = vshrl.u32 %v3375, 7
      %v3377 = vsub.s32 %v3374, %v3376
      %v3378 = vrot.slane %v3371, %v3377
      %v3380 = vunpack.c.l.s4 1935823168
      %v3381 = vunpack.c.0.s8 %v3380
      %v3382 = vlaneseq
      %v3383 = vshrl.u32 %v3382, 7
      %v3384 = vsub.s32 %v3381, %v3383
      %v3385 = vrot.slane %v3017, %v3384
      %v3387 = vunpack.c.l.s4 1935823168
      %v3388 = vunpack.c.0.s8 %v3387
      %v3389 = vlaneseq
      %v3390 = vshrl.u32 %v3389, 7
      %v3391 = vsub.s32 %v3388, %v3390
      %v3392 = vrot.slane %v3385, %v3391
      %v3394 = vunpack.c.l.s4 1935823168
      %v3395 = vunpack.c.0.s8 %v3394
      %v3396 = vlaneseq
      %v3397 = vshrl.u32 %v3396, 7
      %v3398 = vsub.s32 %v3395, %v3397
      %v3399 = vrot.slane %v3018, %v3398
      %v3401 = vunpack.c.l.s4 1935823168
      %v3402 = vunpack.c.0.s8 %v3401
      %v3403 = vlaneseq
      %v3404 = vshrl.u32 %v3403, 7
      %v3405 = vsub.s32 %v3402, %v3404
      %v3406 = vrot.slane %v3399, %v3405
      %v3408 = vunpack.c.l.s4 1935823168
      %v3409 = vunpack.c.0.s8 %v3408
      %v3410 = vlaneseq
      %v3411 = vshrl.u32 %v3410, 7
      %v3412 = vsub.s32 %v3409, %v3411
      %v3413 = vrot.slane %v3019, %v3412
      %v3415 = vunpack.c.l.s4 1935823168
      %v3416 = vunpack.c.0.s8 %v3415
      %v3417 = vlaneseq
      %v3418 = vshrl.u32 %v3417, 7
      %v3419 = vsub.s32 %v3416, %v3418
      %v3420 = vrot.slane %v3413, %v3419
      %v3422 = vunpack.c.l.s4 1935823168
      %v3423 = vunpack.c.0.s8 %v3422
      %v3424 = vlaneseq
      %v3425 = vshrl.u32 %v3424, 7
      %v3426 = vsub.s32 %v3423, %v3425
      %v3427 = vrot.slane %v3020, %v3426
      %v3429 = vunpack.c.l.s4 1935823168
      %v3430 = vunpack.c.0.s8 %v3429
      %v3431 = vlaneseq
      %v3432 = vshrl.u32 %v3431, 7
      %v3433 = vsub.s32 %v3430, %v3432
      %v3434 = vrot.slane %v3427, %v3433
      %v3436 = vunpack.c.l.s4 1935823168
      %v3437 = vunpack.c.0.s8 %v3436
      %v3438 = vlaneseq
      %v3439 = vshrl.u32 %v3438, 7
      %v3440 = vsub.s32 %v3437, %v3439
      %v3441 = vrot.slane %v3021, %v3440
      %v3443 = vunpack.c.l.s4 1935823168
      %v3444 = vunpack.c.0.s8 %v3443
      %v3445 = vlaneseq
      %v3446 = vshrl.u32 %v3445, 7
      %v3447 = vsub.s32 %v3444, %v3446
      %v3448 = vrot.slane %v3441, %v3447
      %v3450 = vunpack.c.l.s4 1935823168
      %v3451 = vunpack.c.0.s8 %v3450
      %v3452 = vlaneseq
      %v3453 = vshrl.u32 %v3452, 7
      %v3454 = vsub.s32 %v3451, %v3453
      %v3455 = vrot.slane %v3022, %v3454
      %v3457 = vunpack.c.l.s4 1935823168
      %v3458 = vunpack.c.0.s8 %v3457
      %v3459 = vlaneseq
      %v3460 = vshrl.u32 %v3459, 7
      %v3461 = vsub.s32 %v3458, %v3460
      %v3462 = vrot.slane %v3455, %v3461
      %v3464 = vunpack.c.l.s4 1935823168
      %v3465 = vunpack.c.0.s8 %v3464
      %v3466 = vlaneseq
      %v3467 = vshrl.u32 %v3466, 7
      %v3468 = vsub.s32 %v3465, %v3467
      %v3469 = vrot.slane %v3023, %v3468
      %v3471 = vunpack.c.l.s4 1935823168
      %v3472 = vunpack.c.0.s8 %v3471
      %v3473 = vlaneseq
      %v3474 = vshrl.u32 %v3473, 7
      %v3475 = vsub.s32 %v3472, %v3474
      %v3476 = vrot.slane %v3469, %v3475
      %v3478 = vunpack.c.l.s4 1935823168
      %v3479 = vunpack.c.0.s8 %v3478
      %v3480 = vlaneseq
      %v3481 = vshrl.u32 %v3480, 7
      %v3482 = vsub.s32 %v3479, %v3481
      %v3483 = vrot.slane %v3024, %v3482
      %v3485 = vunpack.c.l.s4 1935823168
      %v3486 = vunpack.c.0.s8 %v3485
      %v3487 = vlaneseq
      %v3488 = vshrl.u32 %v3487, 7
      %v3489 = vsub.s32 %v3486, %v3488
      %v3490 = vrot.slane %v3483, %v3489
      %v3492 = vunpack.c.l.s4 1935823168
      %v3493 = vunpack.c.0.s8 %v3492
      %v3494 = vlaneseq
      %v3495 = vshrl.u32 %v3494, 7
      %v3496 = vsub.s32 %v3493, %v3495
      %v3497 = vrot.slane %v3025, %v3496
      %v3499 = vunpack.c.l.s4 1935823168
      %v3500 = vunpack.c.0.s8 %v3499
      %v3501 = vlaneseq
      %v3502 = vshrl.u32 %v3501, 7
      %v3503 = vsub.s32 %v3500, %v3502
      %v3504 = vrot.slane %v3497, %v3503
      %v3506 = vunpack.c.l.s4 1935823168
      %v3507 = vunpack.c.0.s8 %v3506
      %v3508 = vlaneseq
      %v3509 = vshrl.u32 %v3508, 7
      %v3510 = vsub.s32 %v3507, %v3509
      %v3511 = vrot.slane %v3026, %v3510
      %v3513 = vunpack.c.l.s4 1935823168
      %v3514 = vunpack.c.0.s8 %v3513
      %v3515 = vlaneseq
      %v3516 = vshrl.u32 %v3515, 7
      %v3517 = vsub.s32 %v3514, %v3516
      %v3518 = vrot.slane %v3511, %v3517
      %v3520 = vunpack.c.l.s4 1935823168
      %v3521 = vunpack.c.0.s8 %v3520
      %v3522 = vlaneseq
      %v3523 = vshrl.u32 %v3522, 7
      %v3524 = vsub.s32 %v3521, %v3523
      %v3525 = vrot.slane %v3027, %v3524
      %v3527 = vunpack.c.l.s4 1935823168
      %v3528 = vunpack.c.0.s8 %v3527
      %v3529 = vlaneseq
      %v3530 = vshrl.u32 %v3529, 7
      %v3531 = vsub.s32 %v3528, %v3530
      %v3532 = vrot.slane %v3525, %v3531
      %v3534 = vunpack.c.l.s4 1935823168
      %v3535 = vunpack.c.0.s8 %v3534
      %v3536 = vlaneseq
      %v3537 = vshrl.u32 %v3536, 7
      %v3538 = vsub.s32 %v3535, %v3537
      %v3539 = vrot.slane %v3028, %v3538
      %v3541 = vunpack.c.l.s4 1935823168
      %v3542 = vunpack.c.0.s8 %v3541
      %v3543 = vlaneseq
      %v3544 = vshrl.u32 %v3543, 7
      %v3545 = vsub.s32 %v3542, %v3544
      %v3546 = vrot.slane %v3539, %v3545
      %v3548 = vunpack.c.l.s4 1935823168
      %v3549 = vunpack.c.0.s8 %v3548
      %v3550 = vlaneseq
      %v3551 = vshrl.u32 %v3550, 7
      %v3552 = vsub.s32 %v3549, %v3551
      %v3553 = vrot.slane %v3029, %v3552
      %v3555 = vunpack.c.l.s4 1935823168
      %v3556 = vunpack.c.0.s8 %v3555
      %v3557 = vlaneseq
      %v3558 = vshrl.u32 %v3557, 7
      %v3559 = vsub.s32 %v3556, %v3558
      %v3560 = vrot.slane %v3553, %v3559
      %v3562 = vunpack.c.l.s4 1935823168
      %v3563 = vunpack.c.0.s8 %v3562
      %v3564 = vlaneseq
      %v3565 = vshrl.u32 %v3564, 7
      %v3566 = vsub.s32 %v3563, %v3565
      %v3567 = vrot.slane %v3030, %v3566
      %v3569 = vunpack.c.l.s4 1935823168
      %v3570 = vunpack.c.0.s8 %v3569
      %v3571 = vlaneseq
      %v3572 = vshrl.u32 %v3571, 7
      %v3573 = vsub.s32 %v3570, %v3572
      %v3574 = vrot.slane %v3567, %v3573
      %v3576 = vunpack.c.l.s4 1935823168
      %v3577 = vunpack.c.0.s8 %v3576
      %v3578 = vlaneseq
      %v3579 = vshrl.u32 %v3578, 7
      %v3580 = vsub.s32 %v3577, %v3579
      %v3581 = vrot.slane %v3031, %v3580
      %v3583 = vunpack.c.l.s4 1935823168
      %v3584 = vunpack.c.0.s8 %v3583
      %v3585 = vlaneseq
      %v3586 = vshrl.u32 %v3585, 7
      %v3587 = vsub.s32 %v3584, %v3586
      %v3588 = vrot.slane %v3581, %v3587
      %v3590 = vunpack.c.l.s4 1935823168
      %v3591 = vunpack.c.0.s8 %v3590
      %v3592 = vlaneseq
      %v3593 = vshrl.u32 %v3592, 7
      %v3594 = vsub.s32 %v3591, %v3593
      %v3595 = vrot.slane %v3032, %v3594
      %v3597 = vunpack.c.l.s4 1935823168
      %v3598 = vunpack.c.0.s8 %v3597
      %v3599 = vlaneseq
      %v3600 = vshrl.u32 %v3599, 7
      %v3601 = vsub.s32 %v3598, %v3600
      %v3602 = vrot.slane %v3595, %v3601
      %v3604 = vunpack.c.l.s4 1935823168
      %v3605 = vunpack.c.0.s8 %v3604
      %v3606 = vlaneseq
      %v3607 = vshrl.u32 %v3606, 7
      %v3608 = vsub.s32 %v3605, %v3607
      %v3609 = vrot.slane %v3033, %v3608
      %v3611 = vunpack.c.l.s4 1935823168
      %v3612 = vunpack.c.0.s8 %v3611
      %v3613 = vlaneseq
      %v3614 = vshrl.u32 %v3613, 7
      %v3615 = vsub.s32 %v3612, %v3614
      %v3616 = vrot.slane %v3609, %v3615
      %v3618 = vunpack.c.l.s4 1935823168
      %v3619 = vunpack.c.0.s8 %v3618
      %v3620 = vlaneseq
      %v3621 = vshrl.u32 %v3620, 7
      %v3622 = vsub.s32 %v3619, %v3621
      %v3623 = vrot.slane %v3034, %v3622
      %v3625 = vunpack.c.l.s4 1935823168
      %v3626 = vunpack.c.0.s8 %v3625
      %v3627 = vlaneseq
      %v3628 = vshrl.u32 %v3627, 7
      %v3629 = vsub.s32 %v3626, %v3628
      %v3630 = vrot.slane %v3623, %v3629
      %v3632 = vunpack.c.l.s4 1935823168
      %v3633 = vunpack.c.0.s8 %v3632
      %v3634 = vlaneseq
      %v3635 = vshrl.u32 %v3634, 7
      %v3636 = vsub.s32 %v3633, %v3635
      %v3637 = vrot.slane %v3035, %v3636
      %v3639 = vunpack.c.l.s4 1935823168
      %v3640 = vunpack.c.0.s8 %v3639
      %v3641 = vlaneseq
      %v3642 = vshrl.u32 %v3641, 7
      %v3643 = vsub.s32 %v3640, %v3642
      %v3644 = vrot.slane %v3637, %v3643
      %v3646 = vunpack.c.l.s4 1935823168
      %v3647 = vunpack.c.0.s8 %v3646
      %v3648 = vlaneseq
      %v3649 = vshrl.u32 %v3648, 7
      %v3650 = vsub.s32 %v3647, %v3649
      %v3651 = vrot.slane %v3036, %v3650
      %v3653 = vunpack.c.l.s4 1935823168
      %v3654 = vunpack.c.0.s8 %v3653
      %v3655 = vlaneseq
      %v3656 = vshrl.u32 %v3655, 7
      %v3657 = vsub.s32 %v3654, %v3656
      %v3658 = vrot.slane %v3651, %v3657
      %v3660 = vunpack.c.l.s4 1935823168
      %v3661 = vunpack.c.0.s8 %v3660
      %v3662 = vlaneseq
      %v3663 = vshrl.u32 %v3662, 7
      %v3664 = vsub.s32 %v3661, %v3663
      %v3665 = vrot.slane %v3037, %v3664
      %v3667 = vunpack.c.l.s4 1935823168
      %v3668 = vunpack.c.0.s8 %v3667
      %v3669 = vlaneseq
      %v3670 = vshrl.u32 %v3669, 7
      %v3671 = vsub.s32 %v3668, %v3670
      %v3672 = vrot.slane %v3665, %v3671
      %v3674 = vunpack.c.l.s4 1935823168
      %v3675 = vunpack.c.0.s8 %v3674
      %v3676 = vlaneseq
      %v3677 = vshrl.u32 %v3676, 7
      %v3678 = vsub.s32 %v3675, %v3677
      %v3679 = vrot.slane %v3038, %v3678
      %v3681 = vunpack.c.l.s4 1935823168
      %v3682 = vunpack.c.0.s8 %v3681
      %v3683 = vlaneseq
      %v3684 = vshrl.u32 %v3683, 7
      %v3685 = vsub.s32 %v3682, %v3684
      %v3686 = vrot.slane %v3679, %v3685
      %v3688 = vunpack.c.l.s4 1935823168
      %v3689 = vunpack.c.0.s8 %v3688
      %v3690 = vlaneseq
      %v3691 = vshrl.u32 %v3690, 7
      %v3692 = vsub.s32 %v3689, %v3691
      %v3693 = vrot.slane %v3039, %v3692
      %v3695 = vunpack.c.l.s4 1935823168
      %v3696 = vunpack.c.0.s8 %v3695
      %v3697 = vlaneseq
      %v3698 = vshrl.u32 %v3697, 7
      %v3699 = vsub.s32 %v3696, %v3698
      %v3700 = vrot.slane %v3693, %v3699
      %v3702 = vunpack.c.l.s4 1935823168
      %v3703 = vunpack.c.0.s8 %v3702
      %v3704 = vlaneseq
      %v3705 = vshrl.u32 %v3704, 7
      %v3706 = vsub.s32 %v3703, %v3705
      %v3707 = vrot.slane %v3040, %v3706
      %v3709 = vunpack.c.l.s4 1935823168
      %v3710 = vunpack.c.0.s8 %v3709
      %v3711 = vlaneseq
      %v3712 = vshrl.u32 %v3711, 7
      %v3713 = vsub.s32 %v3710, %v3712
      %v3714 = vrot.slane %v3707, %v3713
      %v3716 = vunpack.c.l.s4 1935823168
      %v3717 = vunpack.c.0.s8 %v3716
      %v3718 = vlaneseq
      %v3719 = vshrl.u32 %v3718, 7
      %v3720 = vsub.s32 %v3717, %v3719
      %v3721 = vrot.slane %v3041, %v3720
      %v3723 = vunpack.c.l.s4 1935823168
      %v3724 = vunpack.c.0.s8 %v3723
      %v3725 = vlaneseq
      %v3726 = vshrl.u32 %v3725, 7
      %v3727 = vsub.s32 %v3724, %v3726
      %v3728 = vrot.slane %v3721, %v3727
      %v3730 = vunpack.c.l.s4 1935823168
      %v3731 = vunpack.c.0.s8 %v3730
      %v3732 = vlaneseq
      %v3733 = vshrl.u32 %v3732, 7
      %v3734 = vsub.s32 %v3731, %v3733
      %v3735 = vrot.slane %v3042, %v3734
      %v3737 = vunpack.c.l.s4 1935823168
      %v3738 = vunpack.c.0.s8 %v3737
      %v3739 = vlaneseq
      %v3740 = vshrl.u32 %v3739, 7
      %v3741 = vsub.s32 %v3738, %v3740
      %v3742 = vrot.slane %v3735, %v3741
      %v3744 = vunpack.c.l.s4 1935823168
      %v3745 = vunpack.c.0.s8 %v3744
      %v3746 = vlaneseq
      %v3747 = vshrl.u32 %v3746, 7
      %v3748 = vsub.s32 %v3745, %v3747
      %v3749 = vrot.slane %v3043, %v3748
      %v3751 = vunpack.c.l.s4 1935823168
      %v3752 = vunpack.c.0.s8 %v3751
      %v3753 = vlaneseq
      %v3754 = vshrl.u32 %v3753, 7
      %v3755 = vsub.s32 %v3752, %v3754
      %v3756 = vrot.slane %v3749, %v3755
      %v3758 = vunpack.c.l.s4 1935823168
      %v3759 = vunpack.c.0.s8 %v3758
      %v3760 = vlaneseq
      %v3761 = vshrl.u32 %v3760, 7
      %v3762 = vsub.s32 %v3759, %v3761
      %v3763 = vrot.slane %v3044, %v3762
      %v3765 = vunpack.c.l.s4 1935823168
      %v3766 = vunpack.c.0.s8 %v3765
      %v3767 = vlaneseq
      %v3768 = vshrl.u32 %v3767, 7
      %v3769 = vsub.s32 %v3766, %v3768
      %v3770 = vrot.slane %v3763, %v3769
      %v3772 = vunpack.c.l.s4 1935823168
      %v3773 = vunpack.c.0.s8 %v3772
      %v3774 = vlaneseq
      %v3775 = vshrl.u32 %v3774, 7
      %v3776 = vsub.s32 %v3773, %v3775
      %v3777 = vrot.slane %v3045, %v3776
      %v3779 = vunpack.c.l.s4 1935823168
      %v3780 = vunpack.c.0.s8 %v3779
      %v3781 = vlaneseq
      %v3782 = vshrl.u32 %v3781, 7
      %v3783 = vsub.s32 %v3780, %v3782
      %v3784 = vrot.slane %v3777, %v3783
      %v3786 = vunpack.c.l.s4 1935823168
      %v3787 = vunpack.c.0.s8 %v3786
      %v3788 = vlaneseq
      %v3789 = vshrl.u32 %v3788, 7
      %v3790 = vsub.s32 %v3787, %v3789
      %v3791 = vrot.slane %v3046, %v3790
      %v3793 = vunpack.c.l.s4 1935823168
      %v3794 = vunpack.c.0.s8 %v3793
      %v3795 = vlaneseq
      %v3796 = vshrl.u32 %v3795, 7
      %v3797 = vsub.s32 %v3794, %v3796
      %v3798 = vrot.slane %v3791, %v3797
      %v3800 = vunpack.c.l.s4 1935823168
      %v3801 = vunpack.c.0.s8 %v3800
      %v3802 = vlaneseq
      %v3803 = vshrl.u32 %v3802, 7
      %v3804 = vsub.s32 %v3801, %v3803
      %v3805 = vrot.slane %v3047, %v3804
      %v3807 = vunpack.c.l.s4 1935823168
      %v3808 = vunpack.c.0.s8 %v3807
      %v3809 = vlaneseq
      %v3810 = vshrl.u32 %v3809, 7
      %v3811 = vsub.s32 %v3808, %v3810
      %v3812 = vrot.slane %v3805, %v3811
      %v3814 = vunpack.c.l.s4 1935823168
      %v3815 = vunpack.c.0.s8 %v3814
      %v3816 = vlaneseq
      %v3817 = vshrl.u32 %v3816, 7
      %v3818 = vsub.s32 %v3815, %v3817
      %v3819 = vrot.slane %v3048, %v3818
      %v3821 = vunpack.c.l.s4 1935823168
      %v3822 = vunpack.c.0.s8 %v3821
      %v3823 = vlaneseq
      %v3824 = vshrl.u32 %v3823, 7
      %v3825 = vsub.s32 %v3822, %v3824
      %v3826 = vrot.slane %v3819, %v3825
      %v3828 = vunpack.c.l.s4 1935823168
      %v3829 = vunpack.c.0.s8 %v3828
      %v3830 = vlaneseq
      %v3831 = vshrl.u32 %v3830, 7
      %v3832 = vsub.s32 %v3829, %v3831
      %v3833 = vrot.slane %v3049, %v3832
      %v3835 = vunpack.c.l.s4 1935823168
      %v3836 = vunpack.c.0.s8 %v3835
      %v3837 = vlaneseq
      %v3838 = vshrl.u32 %v3837, 7
      %v3839 = vsub.s32 %v3836, %v3838
      %v3840 = vrot.slane %v3833, %v3839
      %v3842 = vunpack.c.l.s4 1935823168
      %v3843 = vunpack.c.0.s8 %v3842
      %v3844 = vlaneseq
      %v3845 = vshrl.u32 %v3844, 7
      %v3846 = vsub.s32 %v3843, %v3845
      %v3847 = vrot.slane %v3050, %v3846
      %v3849 = vunpack.c.l.s4 1935823168
      %v3850 = vunpack.c.0.s8 %v3849
      %v3851 = vlaneseq
      %v3852 = vshrl.u32 %v3851, 7
      %v3853 = vsub.s32 %v3850, %v3852
      %v3854 = vrot.slane %v3847, %v3853
      %v3856 = vunpack.c.l.s4 1935823168
      %v3857 = vunpack.c.0.s8 %v3856
      %v3858 = vlaneseq
      %v3859 = vshrl.u32 %v3858, 7
      %v3860 = vsub.s32 %v3857, %v3859
      %v3861 = vrot.slane %v3051, %v3860
      %v3863 = vunpack.c.l.s4 1935823168
      %v3864 = vunpack.c.0.s8 %v3863
      %v3865 = vlaneseq
      %v3866 = vshrl.u32 %v3865, 7
      %v3867 = vsub.s32 %v3864, %v3866
      %v3868 = vrot.slane %v3861, %v3867
      %v3870 = vunpack.c.l.s4 1935823168
      %v3871 = vunpack.c.0.s8 %v3870
      %v3872 = vlaneseq
      %v3873 = vshrl.u32 %v3872, 7
      %v3874 = vsub.s32 %v3871, %v3873
      %v3875 = vrot.slane %v3052, %v3874
      %v3877 = vunpack.c.l.s4 1935823168
      %v3878 = vunpack.c.0.s8 %v3877
      %v3879 = vlaneseq
      %v3880 = vshrl.u32 %v3879, 7
      %v3881 = vsub.s32 %v3878, %v3880
      %v3882 = vrot.slane %v3875, %v3881
      %v3884 = vunpack.c.l.s4 1935823168
      %v3885 = vunpack.c.0.s8 %v3884
      %v3886 = vlaneseq
      %v3887 = vshrl.u32 %v3886, 7
      %v3888 = vsub.s32 %v3885, %v3887
      %v3889 = vrot.slane %v3053, %v3888
      %v3891 = vunpack.c.l.s4 1935823168
      %v3892 = vunpack.c.0.s8 %v3891
      %v3893 = vlaneseq
      %v3894 = vshrl.u32 %v3893, 7
      %v3895 = vsub.s32 %v3892, %v3894
      %v3896 = vrot.slane %v3889, %v3895
      %v3898 = vunpack.c.l.s4 1935823168
      %v3899 = vunpack.c.0.s8 %v3898
      %v3900 = vlaneseq
      %v3901 = vshrl.u32 %v3900, 7
      %v3902 = vsub.s32 %v3899, %v3901
      %v3903 = vrot.slane %v3054, %v3902
      %v3905 = vunpack.c.l.s4 1935823168
      %v3906 = vunpack.c.0.s8 %v3905
      %v3907 = vlaneseq
      %v3908 = vshrl.u32 %v3907, 7
      %v3909 = vsub.s32 %v3906, %v3908
      %v3910 = vrot.slane %v3903, %v3909
      %v3912 = vunpack.c.l.s4 1935823168
      %v3913 = vunpack.c.0.s8 %v3912
      %v3914 = vlaneseq
      %v3915 = vshrl.u32 %v3914, 7
      %v3916 = vsub.s32 %v3913, %v3915
      %v3917 = vrot.slane %v3055, %v3916
      %v3919 = vunpack.c.l.s4 1935823168
      %v3920 = vunpack.c.0.s8 %v3919
      %v3921 = vlaneseq
      %v3922 = vshrl.u32 %v3921, 7
      %v3923 = vsub.s32 %v3920, %v3922
      %v3924 = vrot.slane %v3917, %v3923
      %v3926 = vunpack.c.l.s4 1935823168
      %v3927 = vunpack.c.0.s8 %v3926
      %v3928 = vlaneseq
      %v3929 = vshrl.u32 %v3928, 7
      %v3930 = vsub.s32 %v3927, %v3929
      %v3931 = vrot.slane %v3056, %v3930
      %v3933 = vunpack.c.l.s4 1935823168
      %v3934 = vunpack.c.0.s8 %v3933
      %v3935 = vlaneseq
      %v3936 = vshrl.u32 %v3935, 7
      %v3937 = vsub.s32 %v3934, %v3936
      %v3938 = vrot.slane %v3931, %v3937
      %v3940 = vunpack.c.l.s4 1935823168
      %v3941 = vunpack.c.0.s8 %v3940
      %v3942 = vlaneseq
      %v3943 = vshrl.u32 %v3942, 7
      %v3944 = vsub.s32 %v3941, %v3943
      %v3945 = vrot.slane %v3057, %v3944
      %v3947 = vunpack.c.l.s4 1935823168
      %v3948 = vunpack.c.0.s8 %v3947
      %v3949 = vlaneseq
      %v3950 = vshrl.u32 %v3949, 7
      %v3951 = vsub.s32 %v3948, %v3950
      %v3952 = vrot.slane %v3945, %v3951
      %v3954 = vunpack.c.l.s4 1935823168
      %v3955 = vunpack.c.0.s8 %v3954
      %v3956 = vlaneseq
      %v3957 = vshrl.u32 %v3956, 7
      %v3958 = vsub.s32 %v3955, %v3957
      %v3959 = vrot.slane %v3058, %v3958
      %v3961 = vunpack.c.l.s4 1935823168
      %v3962 = vunpack.c.0.s8 %v3961
      %v3963 = vlaneseq
      %v3964 = vshrl.u32 %v3963, 7
      %v3965 = vsub.s32 %v3962, %v3964
      %v3966 = vrot.slane %v3959, %v3965
      %v3968 = vunpack.c.l.s4 1935823168
      %v3969 = vunpack.c.0.s8 %v3968
      %v3970 = vlaneseq
      %v3971 = vshrl.u32 %v3970, 7
      %v3972 = vsub.s32 %v3969, %v3971
      %v3973 = vrot.slane %v3059, %v3972
      %v3975 = vunpack.c.l.s4 1935823168
      %v3976 = vunpack.c.0.s8 %v3975
      %v3977 = vlaneseq
      %v3978 = vshrl.u32 %v3977, 7
      %v3979 = vsub.s32 %v3976, %v3978
      %v3980 = vrot.slane %v3973, %v3979
      %v3982 = vunpack.c.l.s4 1935823168
      %v3983 = vunpack.c.0.s8 %v3982
      %v3984 = vlaneseq
      %v3985 = vshrl.u32 %v3984, 7
      %v3986 = vsub.s32 %v3983, %v3985
      %v3987 = vrot.slane %v3060, %v3986
      %v3989 = vunpack.c.l.s4 1935823168
      %v3990 = vunpack.c.0.s8 %v3989
      %v3991 = vlaneseq
      %v3992 = vshrl.u32 %v3991, 7
      %v3993 = vsub.s32 %v3990, %v3992
      %v3994 = vrot.slane %v3987, %v3993
      %v3996 = vunpack.c.l.s4 1935823168
      %v3997 = vunpack.c.0.s8 %v3996
      %v3998 = vlaneseq
      %v3999 = vshrl.u32 %v3998, 7
      %v4000 = vsub.s32 %v3997, %v3999
      %v4001 = vrot.slane %v3061, %v4000
      %v4003 = vunpack.c.l.s4 1935823168
      %v4004 = vunpack.c.0.s8 %v4003
      %v4005 = vlaneseq
      %v4006 = vshrl.u32 %v4005, 7
      %v4007 = vsub.s32 %v4004, %v4006
      %v4008 = vrot.slane %v4001, %v4007
      %v4010 = vunpack.c.l.s4 1935823168
      %v4011 = vunpack.c.0.s8 %v4010
      %v4012 = vlaneseq
      %v4013 = vshrl.u32 %v4012, 7
      %v4014 = vsub.s32 %v4011, %v4013
      %v4015 = vrot.slane %v3062, %v4014
      %v4017 = vunpack.c.l.s4 1935823168
      %v4018 = vunpack.c.0.s8 %v4017
      %v4019 = vlaneseq
      %v4020 = vshrl.u32 %v4019, 7
      %v4021 = vsub.s32 %v4018, %v4020
      %v4022 = vrot.slane %v4015, %v4021
      %v4023 = vunpack.c.l.b16 %v3140
      %v4024 = vunpack.c.l.b16 %v3154
      %v4025 = vunpack.c.l.b16 %v3168
      %v4026 = vunpack.c.l.b16 %v3182
      %v4027 = vunpack.c.l.b16 %v3196
      %v4028 = vunpack.c.l.b16 %v3210
      %v4029 = vunpack.c.l.b16 %v3224
      %v4030 = vunpack.c.l.b16 %v3238
      %v4031 = vunpack.c.l.b16 %v3252
      %v4032 = vunpack.c.l.b16 %v3266
      %v4033 = vunpack.c.l.b16 %v3280
      %v4034 = vunpack.c.l.b16 %v3294
      %v4035 = vunpack.c.l.b16 %v3308
      %v4036 = vunpack.c.l.b16 %v3322
      %v4037 = vunpack.c.l.b16 %v3336
      %v4038 = vunpack.c.l.b16 %v3350
      %v4039 = vunpack.c.l.b16 %v3364
      %v4040 = vunpack.c.l.b16 %v3378
      %v4041 = vunpack.c.l.b16 %v3392
      %v4042 = vunpack.c.l.b16 %v3406
      %v4043 = vunpack.c.l.b16 %v3420
      %v4044 = vunpack.c.l.b16 %v3434
      %v4045 = vunpack.c.l.b16 %v3448
      %v4046 = vunpack.c.l.b16 %v3462
      %v4047 = vunpack.c.l.b16 %v3476
      %v4048 = vunpack.c.l.b16 %v3490
      %v4049 = vunpack.c.l.b16 %v3504
      %v4050 = vunpack.c.l.b16 %v3518
      %v4051 = vunpack.c.l.b16 %v3532
      %v4052 = vunpack.c.l.b16 %v3546
      %v4053 = vunpack.c.l.b16 %v3560
      %v4054 = vunpack.c.l.b16 %v3574
      %v4055 = vunpack.c.l.b16 %v3588
      %v4056 = vunpack.c.l.b16 %v3602
      %v4057 = vunpack.c.l.b16 %v3616
      %v4058 = vunpack.c.l.b16 %v3630
      %v4059 = vunpack.c.l.b16 %v3644
      %v4060 = vunpack.c.l.b16 %v3658
      %v4061 = vunpack.c.l.b16 %v3672
      %v4062 = vunpack.c.l.b16 %v3686
      %v4063 = vunpack.c.l.b16 %v3700
      %v4064 = vunpack.c.l.b16 %v3714
      %v4065 = vunpack.c.l.b16 %v3728
      %v4066 = vunpack.c.l.b16 %v3742
      %v4067 = vunpack.c.l.b16 %v3756
      %v4068 = vunpack.c.l.b16 %v3770
      %v4069 = vunpack.c.l.b16 %v3784
      %v4070 = vunpack.c.l.b16 %v3798
      %v4071 = vunpack.c.l.b16 %v3812
      %v4072 = vunpack.c.l.b16 %v3826
      %v4073 = vunpack.c.l.b16 %v3840
      %v4074 = vunpack.c.l.b16 %v3854
      %v4075 = vunpack.c.l.b16 %v3868
      %v4076 = vunpack.c.l.b16 %v3882
      %v4077 = vunpack.c.l.b16 %v3896
      %v4078 = vunpack.c.l.b16 %v3910
      %v4079 = vunpack.c.l.b16 %v3924
      %v4080 = vunpack.c.l.b16 %v3938
      %v4081 = vunpack.c.l.b16 %v3952
      %v4082 = vunpack.c.l.b16 %v3966
      %v4083 = vunpack.c.l.b16 %v3980
      %v4084 = vunpack.c.l.b16 %v3994
      %v4085 = vunpack.c.l.b16 %v4008
      %v4086 = vunpack.c.l.b16 %v4022
      %v4087 = vrot.slane %v4024, 7
      %vm4088 = vcmask 1041409
      %v4089 = vsel %vm4088, %v4087, %v4023
      %v4090 = vrot.slane %v4025, 6
      %vm4091 = vcmask 1042434
      %v4092 = vsel %vm4091, %v4090, %v4089
      %v4093 = vrot.slane %v4026, 5
      %vm4094 = vcmask 1043459
      %v4095 = vsel %vm4094, %v4093, %v4092
      %v4096 = vrot.slane %v4027, 4
      %vm4097 = vcmask 1044484
      %v4098 = vsel %vm4097, %v4096, %v4095
      %v4099 = vrot.slane %v4028, 3
      %vm4100 = vcmask 1045509
      %v4101 = vsel %vm4100, %v4099, %v4098
      %v4102 = vrot.slane %v4029, 2
      %vm4103 = vcmask 1046534
      %v4104 = vsel %vm4103, %v4102, %v4101
      %v4105 = vrot.slane %v4030, 1
      %vm4106 = vcmask 1047559
      %v4107 = vsel %vm4106, %v4105, %v4104
      %v4108 = vrot.slane %v4032, 7
      %v4109 = vsel %vm4088, %v4108, %v4031
      %v4110 = vrot.slane %v4033, 6
      %v4111 = vsel %vm4091, %v4110, %v4109
      %v4112 = vrot.slane %v4034, 5
      %v4113 = vsel %vm4094, %v4112, %v4111
      %v4114 = vrot.slane %v4035, 4
      %v4115 = vsel %vm4097, %v4114, %v4113
      %v4116 = vrot.slane %v4036, 3
      %v4117 = vsel %vm4100, %v4116, %v4115
      %v4118 = vrot.slane %v4037, 2
      %v4119 = vsel %vm4103, %v4118, %v4117
      %v4120 = vrot.slane %v4038, 1
      %v4121 = vsel %vm4106, %v4120, %v4119
      %v4122 = vrot.slane %v4040, 7
      %v4123 = vsel %vm4088, %v4122, %v4039
      %v4124 = vrot.slane %v4041, 6
      %v4125 = vsel %vm4091, %v4124, %v4123
      %v4126 = vrot.slane %v4042, 5
      %v4127 = vsel %vm4094, %v4126, %v4125
      %v4128 = vrot.slane %v4043, 4
      %v4129 = vsel %vm4097, %v4128, %v4127
      %v4130 = vrot.slane %v4044, 3
      %v4131 = vsel %vm4100, %v4130, %v4129
      %v4132 = vrot.slane %v4045, 2
      %v4133 = vsel %vm4103, %v4132, %v4131
      %v4134 = vrot.slane %v4046, 1
      %v4135 = vsel %vm4106, %v4134, %v4133
      %v4136 = vrot.slane %v4048, 7
      %v4137 = vsel %vm4088, %v4136, %v4047
      %v4138 = vrot.slane %v4049, 6
      %v4139 = vsel %vm4091, %v4138, %v4137
      %v4140 = vrot.slane %v4050, 5
      %v4141 = vsel %vm4094, %v4140, %v4139
      %v4142 = vrot.slane %v4051, 4
      %v4143 = vsel %vm4097, %v4142, %v4141
      %v4144 = vrot.slane %v4052, 3
      %v4145 = vsel %vm4100, %v4144, %v4143
      %v4146 = vrot.slane %v4053, 2
      %v4147 = vsel %vm4103, %v4146, %v4145
      %v4148 = vrot.slane %v4054, 1
      %v4149 = vsel %vm4106, %v4148, %v4147
      %v4150 = vrot.slane %v4056, 7
      %v4151 = vsel %vm4088, %v4150, %v4055
      %v4152 = vrot.slane %v4057, 6
      %v4153 = vsel %vm4091, %v4152, %v4151
      %v4154 = vrot.slane %v4058, 5
      %v4155 = vsel %vm4094, %v4154, %v4153
      %v4156 = vrot.slane %v4059, 4
      %v4157 = vsel %vm4097, %v4156, %v4155
      %v4158 = vrot.slane %v4060, 3
      %v4159 = vsel %vm4100, %v4158, %v4157
      %v4160 = vrot.slane %v4061, 2
      %v4161 = vsel %vm4103, %v4160, %v4159
      %v4162 = vrot.slane %v4062, 1
      %v4163 = vsel %vm4106, %v4162, %v4161
      %v4164 = vrot.slane %v4064, 7
      %v4165 = vsel %vm4088, %v4164, %v4063
      %v4166 = vrot.slane %v4065, 6
      %v4167 = vsel %vm4091, %v4166, %v4165
      %v4168 = vrot.slane %v4066, 5
      %v4169 = vsel %vm4094, %v4168, %v4167
      %v4170 = vrot.slane %v4067, 4
      %v4171 = vsel %vm4097, %v4170, %v4169
      %v4172 = vrot.slane %v4068, 3
      %v4173 = vsel %vm4100, %v4172, %v4171
      %v4174 = vrot.slane %v4069, 2
      %v4175 = vsel %vm4103, %v4174, %v4173
      %v4176 = vrot.slane %v4070, 1
      %v4177 = vsel %vm4106, %v4176, %v4175
      %v4178 = vrot.slane %v4072, 7
      %v4179 = vsel %vm4088, %v4178, %v4071
      %v4180 = vrot.slane %v4073, 6
      %v4181 = vsel %vm4091, %v4180, %v4179
      %v4182 = vrot.slane %v4074, 5
      %v4183 = vsel %vm4094, %v4182, %v4181
      %v4184 = vrot.slane %v4075, 4
      %v4185 = vsel %vm4097, %v4184, %v4183
      %v4186 = vrot.slane %v4076, 3
      %v4187 = vsel %vm4100, %v4186, %v4185
      %v4188 = vrot.slane %v4077, 2
      %v4189 = vsel %vm4103, %v4188, %v4187
      %v4190 = vrot.slane %v4078, 1
      %v4191 = vsel %vm4106, %v4190, %v4189
      %v4192 = vrot.slane %v4080, 7
      %v4193 = vsel %vm4088, %v4192, %v4079
      %v4194 = vrot.slane %v4081, 6
      %v4195 = vsel %vm4091, %v4194, %v4193
      %v4196 = vrot.slane %v4082, 5
      %v4197 = vsel %vm4094, %v4196, %v4195
      %v4198 = vrot.slane %v4083, 4
      %v4199 = vsel %vm4097, %v4198, %v4197
      %v4200 = vrot.slane %v4084, 3
      %v4201 = vsel %vm4100, %v4200, %v4199
      %v4202 = vrot.slane %v4085, 2
      %v4203 = vsel %vm4103, %v4202, %v4201
      %v4204 = vrot.slane %v4086, 1
      %v4205 = vsel %vm4106, %v4204, %v4203
      %v4206 = vpack.c.b16 %v4107, %v4107
      %v4207 = vpack.c.b16 %v4121, %v4121
      %v4208 = vpack.c.b16 %v4135, %v4135
      %v4209 = vpack.c.b16 %v4149, %v4149
      %v4210 = vpack.c.b16 %v4163, %v4163
      %v4211 = vpack.c.b16 %v4177, %v4177
      %v4212 = vpack.c.b16 %v4191, %v4191
      %v4213 = vpack.c.b16 %v4205, %v4205
      %v4215 = vunpack.c.l.s4 1966171168
      %v4216 = vunpack.c.0.s8 %v4215
      %v4217 = vlaneseq
      %v4218 = vshrl.u32 %v4217, 7
      %v4219 = vsub.s32 %v4216, %v4218
      %v4220 = vrot.slane %v4206, %v4219
      %v4221 = vcombine.high %v4220, %v4220
      %v4223 = vunpack.c.l.s4 1966171168
      %v4224 = vunpack.c.0.s8 %v4223
      %v4225 = vlaneseq
      %v4226 = vshrl.u32 %v4225, 7
      %v4227 = vsub.s32 %v4224, %v4226
      %v4228 = vrot.slane %v4220, %v4227
      %v4230 = vunpack.c.l.s4 1966171168
      %v4231 = vunpack.c.0.s8 %v4230
      %v4232 = vlaneseq
      %v4233 = vshrl.u32 %v4232, 7
      %v4234 = vsub.s32 %v4231, %v4233
      %v4235 = vrot.slane %v4221, %v4234
      %v4236 = vcombine.high %v4228, %v4228
      %v4237 = vcombine.high %v4235, %v4235
      %v4239 = vunpack.c.l.s4 1966171168
      %v4240 = vunpack.c.0.s8 %v4239
      %v4241 = vlaneseq
      %v4242 = vshrl.u32 %v4241, 7
      %v4243 = vsub.s32 %v4240, %v4242
      %v4244 = vrot.slane %v4207, %v4243
      %v4245 = vcombine.high %v4244, %v4244
      %v4247 = vunpack.c.l.s4 1966171168
      %v4248 = vunpack.c.0.s8 %v4247
      %v4249 = vlaneseq
      %v4250 = vshrl.u32 %v4249, 7
      %v4251 = vsub.s32 %v4248, %v4250
      %v4252 = vrot.slane %v4244, %v4251
      %v4254 = vunpack.c.l.s4 1966171168
      %v4255 = vunpack.c.0.s8 %v4254
      %v4256 = vlaneseq
      %v4257 = vshrl.u32 %v4256, 7
      %v4258 = vsub.s32 %v4255, %v4257
      %v4259 = vrot.slane %v4245, %v4258
      %v4260 = vcombine.high %v4252, %v4252
      %v4261 = vcombine.high %v4259, %v4259
      %v4263 = vunpack.c.l.s4 1966171168
      %v4264 = vunpack.c.0.s8 %v4263
      %v4265 = vlaneseq
      %v4266 = vshrl.u32 %v4265, 7
      %v4267 = vsub.s32 %v4264, %v4266
      %v4268 = vrot.slane %v4208, %v4267
      %v4269 = vcombine.high %v4268, %v4268
      %v4271 = vunpack.c.l.s4 1966171168
      %v4272 = vunpack.c.0.s8 %v4271
      %v4273 = vlaneseq
      %v4274 = vshrl.u32 %v4273, 7
      %v4275 = vsub.s32 %v4272, %v4274
      %v4276 = vrot.slane %v4268, %v4275
      %v4278 = vunpack.c.l.s4 1966171168
      %v4279 = vunpack.c.0.s8 %v4278
      %v4280 = vlaneseq
      %v4281 = vshrl.u32 %v4280, 7
      %v4282 = vsub.s32 %v4279, %v4281
      %v4283 = vrot.slane %v4269, %v4282
      %v4284 = vcombine.high %v4276, %v4276
      %v4285 = vcombine.high %v4283, %v4283
      %v4287 = vunpack.c.l.s4 1966171168
      %v4288 = vunpack.c.0.s8 %v4287
      %v4289 = vlaneseq
      %v4290 = vshrl.u32 %v4289, 7
      %v4291 = vsub.s32 %v4288, %v4290
      %v4292 = vrot.slane %v4209, %v4291
      %v4293 = vcombine.high %v4292, %v4292
      %v4295 = vunpack.c.l.s4 1966171168
      %v4296 = vunpack.c.0.s8 %v4295
      %v4297 = vlaneseq
      %v4298 = vshrl.u32 %v4297, 7
      %v4299 = vsub.s32 %v4296, %v4298
      %v4300 = vrot.slane %v4292, %v4299
      %v4302 = vunpack.c.l.s4 1966171168
      %v4303 = vunpack.c.0.s8 %v4302
      %v4304 = vlaneseq
      %v4305 = vshrl.u32 %v4304, 7
      %v4306 = vsub.s32 %v4303, %v4305
      %v4307 = vrot.slane %v4293, %v4306
      %v4308 = vcombine.high %v4300, %v4300
      %v4309 = vcombine.high %v4307, %v4307
      %v4311 = vunpack.c.l.s4 1966171168
      %v4312 = vunpack.c.0.s8 %v4311
      %v4313 = vlaneseq
      %v4314 = vshrl.u32 %v4313, 7
      %v4315 = vsub.s32 %v4312, %v4314
      %v4316 = vrot.slane %v4210, %v4315
      %v4317 = vcombine.high %v4316, %v4316
      %v4319 = vunpack.c.l.s4 1966171168
      %v4320 = vunpack.c.0.s8 %v4319
      %v4321 = vlaneseq
      %v4322 = vshrl.u32 %v4321, 7
      %v4323 = vsub.s32 %v4320, %v4322
      %v4324 = vrot.slane %v4316, %v4323
      %v4326 = vunpack.c.l.s4 1966171168
      %v4327 = vunpack.c.0.s8 %v4326
      %v4328 = vlaneseq
      %v4329 = vshrl.u32 %v4328, 7
      %v4330 = vsub.s32 %v4327, %v4329
      %v4331 = vrot.slane %v4317, %v4330
      %v4332 = vcombine.high %v4324, %v4324
      %v4333 = vcombine.high %v4331, %v4331
      %v4335 = vunpack.c.l.s4 1966171168
      %v4336 = vunpack.c.0.s8 %v4335
      %v4337 = vlaneseq
      %v4338 = vshrl.u32 %v4337, 7
      %v4339 = vsub.s32 %v4336, %v4338
      %v4340 = vrot.slane %v4211, %v4339
      %v4341 = vcombine.high %v4340, %v4340
      %v4343 = vunpack.c.l.s4 1966171168
      %v4344 = vunpack.c.0.s8 %v4343
      %v4345 = vlaneseq
      %v4346 = vshrl.u32 %v4345, 7
      %v4347 = vsub.s32 %v4344, %v4346
      %v4348 = vrot.slane %v4340, %v4347
      %v4350 = vunpack.c.l.s4 1966171168
      %v4351 = vunpack.c.0.s8 %v4350
      %v4352 = vlaneseq
      %v4353 = vshrl.u32 %v4352, 7
      %v4354 = vsub.s32 %v4351, %v4353
      %v4355 = vrot.slane %v4341, %v4354
      %v4356 = vcombine.high %v4348, %v4348
      %v4357 = vcombine.high %v4355, %v4355
      %v4359 = vunpack.c.l.s4 1966171168
      %v4360 = vunpack.c.0.s8 %v4359
      %v4361 = vlaneseq
      %v4362 = vshrl.u32 %v4361, 7
      %v4363 = vsub.s32 %v4360, %v4362
      %v4364 = vrot.slane %v4212, %v4363
      %v4365 = vcombine.high %v4364, %v4364
      %v4367 = vunpack.c.l.s4 1966171168
      %v4368 = vunpack.c.0.s8 %v4367
      %v4369 = vlaneseq
      %v4370 = vshrl.u32 %v4369, 7
      %v4371 = vsub.s32 %v4368, %v4370
      %v4372 = vrot.slane %v4364, %v4371
      %v4374 = vunpack.c.l.s4 1966171168
      %v4375 = vunpack.c.0.s8 %v4374
      %v4376 = vlaneseq
      %v4377 = vshrl.u32 %v4376, 7
      %v4378 = vsub.s32 %v4375, %v4377
      %v4379 = vrot.slane %v4365, %v4378
      %v4380 = vcombine.high %v4372, %v4372
      %v4381 = vcombine.high %v4379, %v4379
      %v4383 = vunpack.c.l.s4 1966171168
      %v4384 = vunpack.c.0.s8 %v4383
      %v4385 = vlaneseq
      %v4386 = vshrl.u32 %v4385, 7
      %v4387 = vsub.s32 %v4384, %v4386
      %v4388 = vrot.slane %v4213, %v4387
      %v4389 = vcombine.high %v4388, %v4388
      %v4391 = vunpack.c.l.s4 1966171168
      %v4392 = vunpack.c.0.s8 %v4391
      %v4393 = vlaneseq
      %v4394 = vshrl.u32 %v4393, 7
      %v4395 = vsub.s32 %v4392, %v4394
      %v4396 = vrot.slane %v4388, %v4395
      %v4398 = vunpack.c.l.s4 1966171168
      %v4399 = vunpack.c.0.s8 %v4398
      %v4400 = vlaneseq
      %v4401 = vshrl.u32 %v4400, 7
      %v4402 = vsub.s32 %v4399, %v4401
      %v4403 = vrot.slane %v4389, %v4402
      %v4404 = vcombine.high %v4396, %v4396
      %v4405 = vcombine.high %v4403, %v4403
      %v4408 = vpack.i.b16 %v4252, %v4228
      %v4409 = vshrl.u32 %v4228, 16
      %v4410 = vshrl.u32 %v4252, 16
      %v4411 = vpack.i.b16 %v4410, %v4409
      %v4414 = vpack.i.b16 %v4259, %v4235
      %v4415 = vshrl.u32 %v4235, 16
      %v4416 = vshrl.u32 %v4259, 16
      %v4417 = vpack.i.b16 %v4416, %v4415
      %v4420 = vpack.i.b16 %v4260, %v4236
      %v4421 = vshrl.u32 %v4236, 16
      %v4422 = vshrl.u32 %v4260, 16
      %v4423 = vpack.i.b16 %v4422, %v4421
      %v4426 = vpack.i.b16 %v4261, %v4237
      %v4427 = vshrl.u32 %v4237, 16
      %v4428 = vshrl.u32 %v4261, 16
      %v4429 = vpack.i.b16 %v4428, %v4427
      %v4432 = vpack.i.b16 %v4300, %v4276
      %v4433 = vshrl.u32 %v4276, 16
      %v4434 = vshrl.u32 %v4300, 16
      %v4435 = vpack.i.b16 %v4434, %v4433
      %v4438 = vpack.i.b16 %v4307, %v4283
      %v4439 = vshrl.u32 %v4283, 16
      %v4440 = vshrl.u32 %v4307, 16
      %v4441 = vpack.i.b16 %v4440, %v4439
      %v4444 = vpack.i.b16 %v4308, %v4284
      %v4445 = vshrl.u32 %v4284, 16
      %v4446 = vshrl.u32 %v4308, 16
      %v4447 = vpack.i.b16 %v4446, %v4445
      %v4450 = vpack.i.b16 %v4309, %v4285
      %v4451 = vshrl.u32 %v4285, 16
      %v4452 = vshrl.u32 %v4309, 16
      %v4453 = vpack.i.b16 %v4452, %v4451
      %v4456 = vpack.i.b16 %v4348, %v4324
      %v4457 = vshrl.u32 %v4324, 16
      %v4458 = vshrl.u32 %v4348, 16
      %v4459 = vpack.i.b16 %v4458, %v4457
      %v4462 = vpack.i.b16 %v4355, %v4331
      %v4463 = vshrl.u32 %v4331, 16
      %v4464 = vshrl.u32 %v4355, 16
      %v4465 = vpack.i.b16 %v4464, %v4463
      %v4468 = vpack.i.b16 %v4356, %v4332
      %v4469 = vshrl.u32 %v4332, 16
      %v4470 = vshrl.u32 %v4356, 16
      %v4471 = vpack.i.b16 %v4470, %v4469
      %v4474 = vpack.i.b16 %v4357, %v4333
      %v4475 = vshrl.u32 %v4333, 16
      %v4476 = vshrl.u32 %v4357, 16
      %v4477 = vpack.i.b16 %v4476, %v4475
      %v4480 = vpack.i.b16 %v4396, %v4372
      %v4481 = vshrl.u32 %v4372, 16
      %v4482 = vshrl.u32 %v4396, 16
      %v4483 = vpack.i.b16 %v4482, %v4481
      %v4486 = vpack.i.b16 %v4403, %v4379
      %v4487 = vshrl.u32 %v4379, 16
      %v4488 = vshrl.u32 %v4403, 16
      %v4489 = vpack.i.b16 %v4488, %v4487
      %v4492 = vpack.i.b16 %v4404, %v4380
      %v4493 = vshrl.u32 %v4380, 16
      %v4494 = vshrl.u32 %v4404, 16
      %v4495 = vpack.i.b16 %v4494, %v4493
      %v4498 = vpack.i.b16 %v4405, %v4381
      %v4499 = vshrl.u32 %v4381, 16
      %v4500 = vshrl.u32 %v4405, 16
      %v4501 = vpack.i.b16 %v4500, %v4499
      %v4502 = vcombine.low %v4408, %v4432
      %v4503 = vcombine.low %v4456, %v4480
      %v4505 = vunpack.c.l.s4 1966171168
      %v4506 = vunpack.c.0.s8 %v4505
      %v4507 = vlaneseq
      %v4508 = vshrl.u32 %v4507, 7
      %v4509 = vsub.s32 %v4506, %v4508
      %v4510 = vrot.slane %v4502, %v4509
      %v4512 = vunpack.c.l.s4 1966171168
      %v4513 = vunpack.c.0.s8 %v4512
      %v4514 = vlaneseq
      %v4515 = vshrl.u32 %v4514, 7
      %v4516 = vsub.s32 %v4513, %v4515
      %v4517 = vrot.slane %v4503, %v4516
      %v4518 = vcombine.low %v4510, %v4517
      %v4520 = vunpack.c.l.s4 1966171168
      %v4521 = vunpack.c.0.s8 %v4520
      %v4522 = vlaneseq
      %v4523 = vshrl.u32 %v4522, 7
      %v4524 = vsub.s32 %v4521, %v4523
      %v4525 = vrot.slane %v4518, %v4524
      %v4526 = vcombine.low %v4411, %v4435
      %v4527 = vcombine.low %v4459, %v4483
      %v4529 = vunpack.c.l.s4 1966171168
      %v4530 = vunpack.c.0.s8 %v4529
      %v4531 = vlaneseq
      %v4532 = vshrl.u32 %v4531, 7
      %v4533 = vsub.s32 %v4530, %v4532
      %v4534 = vrot.slane %v4526, %v4533
      %v4536 = vunpack.c.l.s4 1966171168
      %v4537 = vunpack.c.0.s8 %v4536
      %v4538 = vlaneseq
      %v4539 = vshrl.u32 %v4538, 7
      %v4540 = vsub.s32 %v4537, %v4539
      %v4541 = vrot.slane %v4527, %v4540
      %v4542 = vcombine.low %v4534, %v4541
      %v4544 = vunpack.c.l.s4 1966171168
      %v4545 = vunpack.c.0.s8 %v4544
      %v4546 = vlaneseq
      %v4547 = vshrl.u32 %v4546, 7
      %v4548 = vsub.s32 %v4545, %v4547
      %v4549 = vrot.slane %v4542, %v4548
      %4550 = vrot.lane.b32.xlu0 %v4549, 32
      %v4551 = vpop.permute.xlu0 %4550
      %v4552 = vcombine.low %v4414, %v4438
      %v4553 = vcombine.low %v4462, %v4486
      %v4555 = vunpack.c.l.s4 1966171168
      %v4556 = vunpack.c.0.s8 %v4555
      %v4557 = vlaneseq
      %v4558 = vshrl.u32 %v4557, 7
      %v4559 = vsub.s32 %v4556, %v4558
      %v4560 = vrot.slane %v4552, %v4559
      %v4562 = vunpack.c.l.s4 1966171168
      %v4563 = vunpack.c.0.s8 %v4562
      %v4564 = vlaneseq
      %v4565 = vshrl.u32 %v4564, 7
      %v4566 = vsub.s32 %v4563, %v4565
      %v4567 = vrot.slane %v4553, %v4566
      %v4568 = vcombine.low %v4560, %v4567
      %v4570 = vunpack.c.l.s4 1966171168
      %v4571 = vunpack.c.0.s8 %v4570
      %v4572 = vlaneseq
      %v4573 = vshrl.u32 %v4572, 7
      %v4574 = vsub.s32 %v4571, %v4573
      %v4575 = vrot.slane %v4568, %v4574
      %4576 = vrot.lane.b32.xlu0 %v4575, 64
      %v4577 = vpop.permute.xlu0 %4576
      %v4578 = vcombine.low %v4417, %v4441
      %v4579 = vcombine.low %v4465, %v4489
      %v4581 = vunpack.c.l.s4 1966171168
      %v4582 = vunpack.c.0.s8 %v4581
      %v4583 = vlaneseq
      %v4584 = vshrl.u32 %v4583, 7
      %v4585 = vsub.s32 %v4582, %v4584
      %v4586 = vrot.slane %v4578, %v4585
      %v4588 = vunpack.c.l.s4 1966171168
      %v4589 = vunpack.c.0.s8 %v4588
      %v4590 = vlaneseq
      %v4591 = vshrl.u32 %v4590, 7
      %v4592 = vsub.s32 %v4589, %v4591
      %v4593 = vrot.slane %v4579, %v4592
      %v4594 = vcombine.low %v4586, %v4593
      %v4596 = vunpack.c.l.s4 1966171168
      %v4597 = vunpack.c.0.s8 %v4596
      %v4598 = vlaneseq
      %v4599 = vshrl.u32 %v4598, 7
      %v4600 = vsub.s32 %v4597, %v4599
      %v4601 = vrot.slane %v4594, %v4600
      %4602 = vrot.lane.b32.xlu0 %v4601, 96
      %v4603 = vpop.permute.xlu0 %4602
      %v4604 = vcombine.low %v4420, %v4444
      %v4605 = vcombine.low %v4468, %v4492
      %v4607 = vunpack.c.l.s4 1966171168
      %v4608 = vunpack.c.0.s8 %v4607
      %v4609 = vlaneseq
      %v4610 = vshrl.u32 %v4609, 7
      %v4611 = vsub.s32 %v4608, %v4610
      %v4612 = vrot.slane %v4604, %v4611
      %v4614 = vunpack.c.l.s4 1966171168
      %v4615 = vunpack.c.0.s8 %v4614
      %v4616 = vlaneseq
      %v4617 = vshrl.u32 %v4616, 7
      %v4618 = vsub.s32 %v4615, %v4617
      %v4619 = vrot.slane %v4605, %v4618
      %v4620 = vcombine.low %v4612, %v4619
      %v4622 = vunpack.c.l.s4 1966171168
      %v4623 = vunpack.c.0.s8 %v4622
      %v4624 = vlaneseq
      %v4625 = vshrl.u32 %v4624, 7
      %v4626 = vsub.s32 %v4623, %v4625
      %v4627 = vrot.slane %v4620, %v4626
      %v4628 = vcombine.low %v4423, %v4447
      %v4629 = vcombine.low %v4471, %v4495
      %v4631 = vunpack.c.l.s4 1966171168
      %v4632 = vunpack.c.0.s8 %v4631
      %v4633 = vlaneseq
      %v4634 = vshrl.u32 %v4633, 7
      %v4635 = vsub.s32 %v4632, %v4634
      %v4636 = vrot.slane %v4628, %v4635
      %v4638 = vunpack.c.l.s4 1966171168
      %v4639 = vunpack.c.0.s8 %v4638
      %v4640 = vlaneseq
      %v4641 = vshrl.u32 %v4640, 7
      %v4642 = vsub.s32 %v4639, %v4641
      %v4643 = vrot.slane %v4629, %v4642
      %v4644 = vcombine.low %v4636, %v4643
      %v4646 = vunpack.c.l.s4 1966171168
      %v4647 = vunpack.c.0.s8 %v4646
      %v4648 = vlaneseq
      %v4649 = vshrl.u32 %v4648, 7
      %v4650 = vsub.s32 %v4647, %v4649
      %v4651 = vrot.slane %v4644, %v4650
      %4652 = vrot.lane.b32.xlu0 %v4651, 32
      %v4653 = vpop.permute.xlu0 %4652
      %v4654 = vcombine.low %v4426, %v4450
      %v4655 = vcombine.low %v4474, %v4498
      %v4657 = vunpack.c.l.s4 1966171168
      %v4658 = vunpack.c.0.s8 %v4657
      %v4659 = vlaneseq
      %v4660 = vshrl.u32 %v4659, 7
      %v4661 = vsub.s32 %v4658, %v4660
      %v4662 = vrot.slane %v4654, %v4661
      %v4664 = vunpack.c.l.s4 1966171168
      %v4665 = vunpack.c.0.s8 %v4664
      %v4666 = vlaneseq
      %v4667 = vshrl.u32 %v4666, 7
      %v4668 = vsub.s32 %v4665, %v4667
      %v4669 = vrot.slane %v4655, %v4668
      %v4670 = vcombine.low %v4662, %v4669
      %v4672 = vunpack.c.l.s4 1966171168
      %v4673 = vunpack.c.0.s8 %v4672
      %v4674 = vlaneseq
      %v4675 = vshrl.u32 %v4674, 7
      %v4676 = vsub.s32 %v4673, %v4675
      %v4677 = vrot.slane %v4670, %v4676
      %4678 = vrot.lane.b32.xlu0 %v4677, 64
      %v4679 = vpop.permute.xlu0 %4678
      %v4680 = vcombine.low %v4429, %v4453
      %v4681 = vcombine.low %v4477, %v4501
      %v4683 = vunpack.c.l.s4 1966171168
      %v4684 = vunpack.c.0.s8 %v4683
      %v4685 = vlaneseq
      %v4686 = vshrl.u32 %v4685, 7
      %v4687 = vsub.s32 %v4684, %v4686
      %v4688 = vrot.slane %v4680, %v4687
      %v4690 = vunpack.c.l.s4 1966171168
      %v4691 = vunpack.c.0.s8 %v4690
      %v4692 = vlaneseq
      %v4693 = vshrl.u32 %v4692, 7
      %v4694 = vsub.s32 %v4691, %v4693
      %v4695 = vrot.slane %v4681, %v4694
      %v4696 = vcombine.low %v4688, %v4695
      %v4698 = vunpack.c.l.s4 1966171168
      %v4699 = vunpack.c.0.s8 %v4698
      %v4700 = vlaneseq
      %v4701 = vshrl.u32 %v4700, 7
      %v4702 = vsub.s32 %v4699, %v4701
      %v4703 = vrot.slane %v4696, %v4702
      %4704 = vrot.lane.b32.xlu0 %v4703, 96
      %v4705 = vpop.permute.xlu0 %4704
      %vm4706 = vcmask 261120
      %v4709 = vsel %vm4706, %v4525, %v4551
      %vm4710 = vcmask 523264
      %v4712 = vsel %vm4710, %v4709, %v4577
      %vm4713 = vcmask 785408
      %v4715 = vsel %vm4713, %v4712, %v4603
      %v4718 = vsel %vm4706, %v4627, %v4653
      %v4720 = vsel %vm4710, %v4718, %v4679
      %v4722 = vsel %vm4713, %v4720, %v4705
      %v4725 = vunpack.c.l.b16 %v4715
      %v4726 = vunpack.c.l.b16 %v4722
      %v4727 = vpack.c.b16 %v4726, %v4725
      %v4729 = vshrl.u32 %v4727, 16
      %v4731 = vrot.slane %v4729, 7
      %v4732 = vshll.u32 %v4727, 16
      %v4734 = vor.u32 %v4731, %v4732
      %v4735 = vrot.slane %v4731, 4
      %4736 = vrot.lane.b32.xlu0 %v4734, 32
      %v4737 = vpop.permute.xlu0 %4736
      %4738 = vrot.lane.b32.xlu0 %v4735, 32
      %v4739 = vpop.permute.xlu0 %4738
      %v4740 = vrot.slane %v4737, 4
      %v4741 = vrot.slane %v4739, 4
      %vm4742 = vcmask 261120
      %v4743 = vsel %vm4742, %v4740, %v4737
      %v4744 = vsel %vm4742, %v4741, %v4739
      %vm4749 = vcmask 1043712
      %vm4750 = vmand %vm4749, %vm187
      %vm4751 = vcmask 1047556
      %vm4752 = vmand %vm4751, %vm189
      %vm4753 = vmor %vm4752, %vm4750
      %v4754 = vld [vmem:[%s170] sm:$0xff]
      %v4755 = vsel %vm4753, %v4743, %v4754
      %4756 = vst [vmem:[%s170] sm:$0xff] %v4755
      %vm4757 = vcmask 257024
      %vm4758 = vmand %vm4757, %vm187
      %v4759 = vld [vmem:[%s170 + $0x8] sm:$0xf]
      %v4760 = vsel %vm4758, %v4740, %v4759
      %4761 = vst [vmem:[%s170 + $0x8] sm:$0xf] %v4760
      %vm4762 = vcmask 1040640
      %vm4763 = vmand %vm4762, %vm173
      %vm4764 = vmor %vm177, %vm4763
      %v4765 = vld [vmem:[%s170 + $0xc] sm:$0x11]
      %v4766 = vsel %vm4764, %v4744, %v4765
      %4767 = vst [vmem:[%s170 + $0xc] sm:$0x11] %v4766
      %vm4768 = vcmask 253952
      %vm4769 = vmand %vm4768, %vm173
      %v4770 = vld [vmem:[%s170 + $0x14] sm:$0x1]
      %v4771 = vsel %vm4769, %v4741, %v4770
      %4772 = vst [vmem:[%s170 + $0x14] sm:$0x1] %v4771
      %p4773 = scmp.lt.s32.totalorder %s14, 1
      %s4774 = scalar_select %p4773, %s14, 1
      %s4775 = smul.addr %s4774, 6
      %s4776 = smul.addr %s4775, 4
      %s4777 = scalar_lea.vmem %s3, %s4776
      // Predicated region
      $region33: #{cnn_forward.4} parent=31 // pred_check
        %p4778 = pneg %p100
      $region34: #{cnn_forward.4} parent=31 // pred_check_branch
        %4780 = sbr.rel (%p4778) target = $region36
      $region35: #{cnn_forward.4} parent=31 // pred_region
        _
      $region36: #{cnn_forward.4} parent=31 // pred_fallthru
        _
    $region32: #{cnn_forward.4} parent=5 // pred_fallthru
      _
    %p4781 = scmp.le.s32.totalorder 2, %s9
    // Predicated region
    $region37: #{cnn_forward.4} parent=5 // pred_check
      %p4782 = pneg %p4781
    $region38: #{cnn_forward.4} parent=5 // pred_check_branch
      %4784 = sbr.rel (%p4782) target = $region40
    $region39: #{cnn_forward.4} parent=5 // pred_region
      %s4785 = ssub.s32 %s9, 2
      // Predicated region
      $region41: #{cnn_forward.4} parent=39 // pred_check
        %p4786 = pneg %p106
      $region42: #{cnn_forward.4} parent=39 // pred_check_branch
        %4788 = sbr.rel (%p4786) target = $region44
      $region43: #{cnn_forward.4} parent=39 // pred_region
        %p4789 = scmp.lt.s32.totalorder %s15, 1
        %s4790 = scalar_select %p4789, %s15, 1
        %s4791 = smul.addr %s4790, 6
        %s4792 = smul.addr %s4791, 4
        %s4793 = scalar_lea.vmem %s3, %s4792
      $region44: #{cnn_forward.4} parent=39 // pred_fallthru
        _
    $region40: #{cnn_forward.4} parent=5 // pred_fallthru
      _
  $region6: #{cnn_forward.4} parent=0 // loop_footer
    %s13 = sadd.s32 1, %s9
  $region7: #{cnn_forward.4} parent=0 // loop_footer_branch
    %8 = sbr.rel target = $region3
  $region8: #{cnn_forward.4} parent=0 // loop_exit
    _

</llo_original>
